<compile_context>
chip_gen: v5e
topology: v5e:2x2
jax: 0.10.0
libtpu: 0.0.40
codegen_flags: <defaults>
</compile_context>

<pallas_src>
import jax
import jax.numpy as jnp
from jax.experimental import pallas as pl
from jax.experimental.pallas import tpu as pltpu


# ---------------------------------------------------------------------------
# Fused forward
# ---------------------------------------------------------------------------
def cnn_out1_2_forward(x, params, *, b_tile=2, interpret=False):
    """x: (B, Cin, H, W) float32 -> (B, 1) float32 (eval-mode forward)."""
    B, Cin, H, W = x.shape
    b_tile = max(1, min(b_tile, B))
    G = -(-B // b_tile)                       # grid steps
    B_pad = G * b_tile

    Hp, Wp = H + 2, W + 2
    NF = H * Wp                               # flat conv-output rows / image (incl. garbage cols)
    store_off = Wp + 1                        # (h, w) -> padded (h+1, w+1)
    LEAD = (-store_off) % 8                   # lead rows so store / center tap are 8-aligned
    WRITE0 = LEAD + store_off
    MAXOFF = 2 * Wp + 2                       # largest tap offset
    SEG = ((LEAD + NF + MAXOFF + 7) // 8) * 8 # per-image rows in padded buffers (incl. slack)
    HW = H * W
    M = b_tile * NF                           # matmul M per grid step
    taps = [kh * Wp + kw for kh in range(3) for kw in range(3)]

    # ---- fold BN (eval) into conv weights; reshape to im2col layout (9*Cin, Cout)
    def prep_conv(p, eps=1e-5):
        scale = p["bn"]["gamma"] / jnp.sqrt(p["bn"]["var"] + eps)            # (Cout,)
        shift = (p["b"] - p["bn"]["mean"]) * scale + p["bn"]["beta"]         # (Cout,)
        w = p["w"] * scale[:, None, None, None]                              # (Cout,Cin,3,3)
        cout, cin = w.shape[0], w.shape[1]
        w_t = jnp.transpose(w, (2, 3, 1, 0)).reshape(9 * cin, cout)          # k = (kh,kw,cin)
        return w_t.astype(jnp.bfloat16), shift.reshape(1, -1).astype(jnp.float32)

    w1, s1 = prep_conv(params["conv1"])
    w2, s2 = prep_conv(params["conv2"])
    w3, s3 = prep_conv(params["conv3"])
    wfc = params["fc"]["w"].reshape(1, -1).astype(jnp.float32)               # (1, 256)
    bfc = params["fc"]["b"].reshape(1, 1).astype(jnp.float32)                # (1, 1)
    C1, C2, C3 = s1.shape[1], s2.shape[1], s3.shape[1]

    # ---- network input: channels-last, zero "same" padding, flattened spatial,
    #      one SEG-row segment per image (real padded rows start at LEAD).
    x_nhwc = jnp.transpose(x, (0, 2, 3, 1))
    x_padsp = jnp.pad(x_nhwc, ((0, 0), (1, 1), (1, 1), (0, 0)))
    x_flat = x_padsp.reshape(B, Hp * Wp, Cin)
    x_flat = jnp.pad(x_flat, ((0, B_pad - B), (LEAD, SEG - LEAD - Hp * Wp), (0, 0)))

    def kernel(x_ref, w1_ref, s1_ref, w2_ref, s2_ref, w3_ref, s3_ref,
               wfc_ref, bfc_ref, o_ref,
               pad1_ref, pad2_ref, col1_ref, col2_ref, col3_ref):
        f32 = jnp.float32

        # Valid-row mask (in-kernel iota, no DMA): row r of the stacked conv
        # output lands in horizontal padding iff (r % Wp) >= W (NF % Wp == 0).
        row = jax.lax.broadcasted_iota(jnp.int32, (M, 1), 0)
        maskf = ((row % Wp) < W).astype(f32)

        # Zero only the border rows of the padded activation scratch; rows
        # [WRITE0, WRITE0 + NF) are fully overwritten by the masked stores.
        for b in range(b_tile):
            pad1_ref[b, 0:WRITE0, :] = jnp.zeros((WRITE0, C1), f32)
            pad1_ref[b, WRITE0 + NF:SEG, :] = jnp.zeros((SEG - WRITE0 - NF, C1), f32)
            pad2_ref[b, 0:WRITE0, :] = jnp.zeros((WRITE0, C2), f32)
            pad2_ref[b, WRITE0 + NF:SEG, :] = jnp.zeros((SEG - WRITE0 - NF, C2), f32)

        def build_im2col(read_tap, col_ref, cin):
            # Lane-concatenate the 9 shifted tap slices so the whole layer is a
            # single dense (M, 9*cin) x (9*cin, cout) MXU matmul.
            for b in range(b_tile):
                for t, off in enumerate(taps):
                    col_ref[b * NF:(b + 1) * NF, t * cin:(t + 1) * cin] = (
                        read_tap(b, off).astype(jnp.bfloat16))

        def conv_bn_relu(col_ref, w_ref, s_ref):
            y = jnp.dot(col_ref[...], w_ref[...], preferred_element_type=f32)
            return jnp.maximum(y + s_ref[...], 0.0) * maskf          # (M, Cout) f32

        def store_padded(y, pad_ref):
            for b in range(b_tile):
                pad_ref[b, WRITE0:WRITE0 + NF, :] = y[b * NF:(b + 1) * NF, :]

        # ---- layer 1 (input block straight from the pipelined DMA)
        build_im2col(lambda b, off: x_ref[b, LEAD + off:LEAD + off + NF, :],
                     col1_ref, Cin)
        store_padded(conv_bn_relu(col1_ref, w1_ref, s1_ref), pad1_ref)
        # TODO(synk): Dropout2d is identity in inference mode; no kernel op emitted.

        # ---- layer 2 (activations stay resident in VMEM)
        build_im2col(lambda b, off: pad1_ref[b, LEAD + off:LEAD + off + NF, :],
                     col2_ref, C1)
        store_padded(conv_bn_relu(col2_ref, w2_ref, s2_ref), pad2_ref)

        # ---- layer 3 + masked average pool + Linear(256 -> 1)
        build_im2col(lambda b, off: pad2_ref[b, LEAD + off:LEAD + off + NF, :],
                     col3_ref, C2)
        y3 = conv_bn_relu(col3_ref, w3_ref, s3_ref)                   # (M, C3)
        pooled = jnp.concatenate(
            [jnp.sum(y3[b * NF:(b + 1) * NF, :], axis=0, keepdims=True)
             for b in range(b_tile)], axis=0)                         # (b_tile, C3)
        out = (jnp.sum(pooled * wfc_ref[...], axis=1, keepdims=True) * (1.0 / HW)
               + bfc_ref[...])
        o_ref[...] = out.astype(o_ref.dtype)

    out3 = pl.pallas_call(
        kernel,
        out_shape=jax.ShapeDtypeStruct((G, b_tile, 1), jnp.float32),
        grid=(G,),
        in_specs=[
            pl.BlockSpec((b_tile, SEG, Cin), lambda g: (g, 0, 0)),    # x (B_TILE images)
            pl.BlockSpec((9 * Cin, C1), lambda g: (0, 0)),            # w1 (im2col layout)
            pl.BlockSpec((1, C1), lambda g: (0, 0)),                  # shift1
            pl.BlockSpec((9 * C1, C2), lambda g: (0, 0)),             # w2
            pl.BlockSpec((1, C2), lambda g: (0, 0)),                  # shift2
            pl.BlockSpec((9 * C2, C3), lambda g: (0, 0)),             # w3
            pl.BlockSpec((1, C3), lambda g: (0, 0)),                  # shift3
            pl.BlockSpec((1, C3), lambda g: (0, 0)),                  # fc weight row
            pl.BlockSpec((1, 1), lambda g: (0, 0)),                   # fc bias
        ],
        out_specs=pl.BlockSpec((None, b_tile, 1), lambda g: (g, 0, 0)),
        scratch_shapes=[
            pltpu.VMEM((b_tile, SEG, C1), jnp.float32),   # padded layer-1 activations
            pltpu.VMEM((b_tile, SEG, C2), jnp.float32),   # padded layer-2 activations
            pltpu.VMEM((M, 9 * Cin), jnp.bfloat16),       # im2col LHS, layer 1 (K=144)
            pltpu.VMEM((M, 9 * C1), jnp.bfloat16),        # im2col LHS, layer 2 (K=576)
            pltpu.VMEM((M, 9 * C2), jnp.bfloat16),        # im2col LHS, layer 3 (K=1152)
        ],
        compiler_params=pltpu.CompilerParams(
            dimension_semantics=("parallel",)),
        interpret=interpret,
    )(x_flat, w1, s1, w2, s2, w3, s3, wfc, bfc)
    return out3.reshape(B_pad, 1)[:B]


# ---------------------------------------------------------------------------
# Parameter init (deterministic, PyTorch-default-like uniform scales)
# ---------------------------------------------------------------------------
def init_params(key, num_channels=16):
    keys = jax.random.split(key, 8)

    def conv_init(kw, kb, cout, cin, k):
        bound = 1.0 / (cin * k * k) ** 0.5
        w = jax.random.uniform(kw, (cout, cin, k, k), jnp.float32, -bound, bound)
        b = jax.random.uniform(kb, (cout,), jnp.float32, -bound, bound)
        return w, b

    def bn_init(c):
        # PyTorch BatchNorm2d defaults (eval-mode running stats)
        return dict(gamma=jnp.ones((c,), jnp.float32),
                    beta=jnp.zeros((c,), jnp.float32),
                    mean=jnp.zeros((c,), jnp.float32),
                    var=jnp.ones((c,), jnp.float32))

    w1, b1 = conv_init(keys[0], keys[1], 64, num_channels, 3)
    w2, b2 = conv_init(keys[2], keys[3], 128, 64, 3)
    w3, b3 = conv_init(keys[4], keys[5], 256, 128, 3)
    fb = 1.0 / 256 ** 0.5
    w_fc = jax.random.uniform(keys[6], (1, 256), jnp.float32, -fb, fb)
    b_fc = jax.random.uniform(keys[7], (1,), jnp.float32, -fb, fb)
    return dict(conv1=dict(w=w1, b=b1, bn=bn_init(64)),
                conv2=dict(w=w2, b=b2, bn=bn_init(128)),
                conv3=dict(w=w3, b=b3, bn=bn_init(256)),
                fc=dict(w=w_fc, b=b_fc))


# ---------------------------------------------------------------------------
# Pure-JAX reference (same bf16 rounding points as the kernel)
# ---------------------------------------------------------------------------
def reference_forward(x, params, eps=1e-5):
    h = x
    for name in ("conv1", "conv2", "conv3"):
        p = params[name]
        scale = p["bn"]["gamma"] / jnp.sqrt(p["bn"]["var"] + eps)
        shift = (p["b"] - p["bn"]["mean"]) * scale + p["bn"]["beta"]
        w = (p["w"] * scale[:, None, None, None]).astype(jnp.bfloat16)
        y = jax.lax.conv_general_dilated(
            h.astype(jnp.bfloat16), w, window_strides=(1, 1),
            padding=[(1, 1), (1, 1)],
            dimension_numbers=("NCHW", "OIHW", "NCHW"),
            preferred_element_type=jnp.float32)
        h = jnp.maximum(y + shift[None, :, None, None], 0.0)
    pooled = jnp.mean(h, axis=(2, 3))                        # (B, 256)
    return pooled @ params["fc"]["w"].T + params["fc"]["b"]


if __name__ == "__main__":
    key = jax.random.PRNGKey(0)
    k_param, k_x = jax.random.split(key)

    B, C, H, W = 4, 16, 8, 8
    x = jax.random.normal(k_x, (B, C, H, W), jnp.float32)
    params = init_params(k_param, num_channels=C)

    fwd = jax.jit(lambda xx, pp: cnn_out1_2_forward(xx, pp, b_tile=2))
    out = jax.block_until_ready(fwd(x, params))

    ref = reference_forward(x, params)
    assert out.shape == (B, 1), out.shape
    assert jnp.allclose(out, ref, atol=1e-2, rtol=1e-2), (out, ref)

    print("KERNEL_OK")
</pallas_src>

<mosaic_0001>
module attributes {stable_mosaic.version = 11 : i64} {
  func.func @kernel(%arg0: i32, %arg1: memref<2x112x16xf32, #tpu.memory_space<vmem>>, %arg2: memref<144x64xbf16, #tpu.memory_space<vmem>>, %arg3: memref<1x64xf32, #tpu.memory_space<vmem>>, %arg4: memref<576x128xbf16, #tpu.memory_space<vmem>>, %arg5: memref<1x128xf32, #tpu.memory_space<vmem>>, %arg6: memref<1152x256xbf16, #tpu.memory_space<vmem>>, %arg7: memref<1x256xf32, #tpu.memory_space<vmem>>, %arg8: memref<1x256xf32, #tpu.memory_space<vmem>>, %arg9: memref<1x1xf32, #tpu.memory_space<vmem>>, %arg10: memref<1x2x1xf32, #tpu.memory_space<vmem>>, %arg11: memref<2x112x64xf32, #tpu.memory_space<vmem>>, %arg12: memref<2x112x128xf32, #tpu.memory_space<vmem>>, %arg13: memref<160x144xbf16, #tpu.memory_space<vmem>>, %arg14: memref<160x576xbf16, #tpu.memory_space<vmem>>, %arg15: memref<160x1152xbf16, #tpu.memory_space<vmem>>) attributes {dimension_semantics = [#tpu.dimension_semantics<parallel>], iteration_bounds = array<i64: 2>, scalar_prefetch = 0 : i64, scratch_operands = 5 : i64, tpu.core_type = #tpu.core_type<tc>, window_params = [{transform_indices = @transform_0, window_bounds = array<i64: 2, 112, 16>}, {pipeline_mode = #tpu.pipeline_mode<synchronous>, transform_indices = @transform_1, window_bounds = array<i64: 144, 64>}, {pipeline_mode = #tpu.pipeline_mode<synchronous>, transform_indices = @transform_2, window_bounds = array<i64: 1, 64>}, {pipeline_mode = #tpu.pipeline_mode<synchronous>, transform_indices = @transform_3, window_bounds = array<i64: 576, 128>}, {pipeline_mode = #tpu.pipeline_mode<synchronous>, transform_indices = @transform_4, window_bounds = array<i64: 1, 128>}, {pipeline_mode = #tpu.pipeline_mode<synchronous>, transform_indices = @transform_5, window_bounds = array<i64: 1152, 256>}, {pipeline_mode = #tpu.pipeline_mode<synchronous>, transform_indices = @transform_6, window_bounds = array<i64: 1, 256>}, {pipeline_mode = #tpu.pipeline_mode<synchronous>, transform_indices = @transform_7, window_bounds = array<i64: 1, 256>}, {pipeline_mode = #tpu.pipeline_mode<synchronous>, transform_indices = @transform_8, window_bounds = array<i64: 1, 1>}, {transform_indices = @transform_9, window_bounds = array<i64: 1, 2, 1>}]} {
    %0 = tpu.iota {dimensions = array<i32: 0>} : vector<160x1xi32>
    %c10_i32 = arith.constant 10 : i32
    %c0_i32 = arith.constant 0 : i32
    %1 = arith.cmpi eq, %c10_i32, %c0_i32 : i32
    %c1_i32 = arith.constant 1 : i32
    %2 = arith.select %1, %c1_i32, %c10_i32 : i32
    %3 = vector.broadcast %2 : i32 to vector<160x1xi32>
    %4 = arith.remsi %0, %3 : vector<160x1xi32>
    %c0_i32_0 = arith.constant 0 : i32
    %5 = vector.broadcast %c0_i32_0 : i32 to vector<160x1xi32>
    %6 = arith.cmpi ne, %4, %5 : vector<160x1xi32>
    %c0_i32_1 = arith.constant 0 : i32
    %7 = vector.broadcast %c0_i32_1 : i32 to vector<160x1xi32>
    %8 = arith.cmpi slt, %4, %7 : vector<160x1xi32>
    %c0_i32_2 = arith.constant 0 : i32
    %9 = arith.cmpi slt, %2, %c0_i32_2 : i32
    %10 = vector.broadcast %9 : i1 to vector<160x1xi1>
    %11 = vector.broadcast %10 : vector<160x1xi1> to vector<160x1xi1>
    %12 = arith.xori %8, %11 : vector<160x1xi1>
    %13 = arith.andi %12, %6 : vector<160x1xi1>
    %14 = vector.broadcast %2 : i32 to vector<160x1xi32>
    %15 = arith.addi %4, %14 : vector<160x1xi32>
    %16 = arith.select %13, %15, %4 : vector<160x1xi1>, vector<160x1xi32>
    %c8_i32 = arith.constant 8 : i32
    %17 = vector.broadcast %c8_i32 : i32 to vector<160x1xi32>
    %18 = arith.cmpi slt, %16, %17 : vector<160x1xi32>
    %19 = arith.extui %18 : vector<160x1xi1> to vector<160x1xi32>
    %20 = arith.sitofp %19 : vector<160x1xi32> to vector<160x1xf32>
    %cst = arith.constant 0.000000e+00 : f32
    %21 = vector.broadcast %cst : f32 to vector<16x64xf32>
    %c0 = arith.constant 0 : index
    %c0_3 = arith.constant 0 : index
    %c0_4 = arith.constant 0 : index
    %22 = vector.load %arg11[%c0, %c0_3, %c0_4] : memref<2x112x64xf32, #tpu.memory_space<vmem>>, vector<1x16x64xf32>
    %23 = vector.shape_cast %22 : vector<1x16x64xf32> to vector<16x64xf32>
    %24 = vector.shape_cast %21 : vector<16x64xf32> to vector<1x16x64xf32>
    tpu.vector_store %arg11[%c0, %c0_3, %c0_4], %24 {strides = array<i32>} : memref<2x112x64xf32, #tpu.memory_space<vmem>>, vector<1x16x64xf32>,
    %cst_5 = arith.constant 0.000000e+00 : f32
    %25 = vector.broadcast %cst_5 : f32 to vector<16x64xf32>
    %c0_6 = arith.constant 0 : index
    %c96 = arith.constant 96 : index
    %c0_7 = arith.constant 0 : index
    %26 = vector.load %arg11[%c0_6, %c96, %c0_7] : memref<2x112x64xf32, #tpu.memory_space<vmem>>, vector<1x16x64xf32>
    %27 = vector.shape_cast %26 : vector<1x16x64xf32> to vector<16x64xf32>
    %28 = vector.shape_cast %25 : vector<16x64xf32> to vector<1x16x64xf32>
    tpu.vector_store %arg11[%c0_6, %c96, %c0_7], %28 {strides = array<i32>} : memref<2x112x64xf32, #tpu.memory_space<vmem>>, vector<1x16x64xf32>,
    %cst_8 = arith.constant 0.000000e+00 : f32
    %29 = vector.broadcast %cst_8 : f32 to vector<16x128xf32>
    %c0_9 = arith.constant 0 : index
    %c0_10 = arith.constant 0 : index
    %c0_11 = arith.constant 0 : index
    %30 = vector.load %arg12[%c0_9, %c0_10, %c0_11] : memref<2x112x128xf32, #tpu.memory_space<vmem>>, vector<1x16x128xf32>
    %31 = vector.shape_cast %30 : vector<1x16x128xf32> to vector<16x128xf32>
    %32 = vector.shape_cast %29 : vector<16x128xf32> to vector<1x16x128xf32>
    tpu.vector_store %arg12[%c0_9, %c0_10, %c0_11], %32 {strides = array<i32>} : memref<2x112x128xf32, #tpu.memory_space<vmem>>, vector<1x16x128xf32>,
    %cst_12 = arith.constant 0.000000e+00 : f32
    %33 = vector.broadcast %cst_12 : f32 to vector<16x128xf32>
    %c0_13 = arith.constant 0 : index
    %c96_14 = arith.constant 96 : index
    %c0_15 = arith.constant 0 : index
    %34 = vector.load %arg12[%c0_13, %c96_14, %c0_15] : memref<2x112x128xf32, #tpu.memory_space<vmem>>, vector<1x16x128xf32>
    %35 = vector.shape_cast %34 : vector<1x16x128xf32> to vector<16x128xf32>
    %36 = vector.shape_cast %33 : vector<16x128xf32> to vector<1x16x128xf32>
    tpu.vector_store %arg12[%c0_13, %c96_14, %c0_15], %36 {strides = array<i32>} : memref<2x112x128xf32, #tpu.memory_space<vmem>>, vector<1x16x128xf32>,
    %cst_16 = arith.constant 0.000000e+00 : f32
    %37 = vector.broadcast %cst_16 : f32 to vector<16x64xf32>
    %c1 = arith.constant 1 : index
    %c0_17 = arith.constant 0 : index
    %c0_18 = arith.constant 0 : index
    %38 = vector.load %arg11[%c1, %c0_17, %c0_18] : memref<2x112x64xf32, #tpu.memory_space<vmem>>, vector<1x16x64xf32>
    %39 = vector.shape_cast %38 : vector<1x16x64xf32> to vector<16x64xf32>
    %40 = vector.shape_cast %37 : vector<16x64xf32> to vector<1x16x64xf32>
    tpu.vector_store %arg11[%c1, %c0_17, %c0_18], %40 {strides = array<i32>} : memref<2x112x64xf32, #tpu.memory_space<vmem>>, vector<1x16x64xf32>,
    %cst_19 = arith.constant 0.000000e+00 : f32
    %41 = vector.broadcast %cst_19 : f32 to vector<16x64xf32>
    %c1_20 = arith.constant 1 : index
    %c96_21 = arith.constant 96 : index
    %c0_22 = arith.constant 0 : index
    %42 = vector.load %arg11[%c1_20, %c96_21, %c0_22] : memref<2x112x64xf32, #tpu.memory_space<vmem>>, vector<1x16x64xf32>
    %43 = vector.shape_cast %42 : vector<1x16x64xf32> to vector<16x64xf32>
    %44 = vector.shape_cast %41 : vector<16x64xf32> to vector<1x16x64xf32>
    tpu.vector_store %arg11[%c1_20, %c96_21, %c0_22], %44 {strides = array<i32>} : memref<2x112x64xf32, #tpu.memory_space<vmem>>, vector<1x16x64xf32>,
    %cst_23 = arith.constant 0.000000e+00 : f32
    %45 = vector.broadcast %cst_23 : f32 to vector<16x128xf32>
    %c1_24 = arith.constant 1 : index
    %c0_25 = arith.constant 0 : index
    %c0_26 = arith.constant 0 : index
    %46 = vector.load %arg12[%c1_24, %c0_25, %c0_26] : memref<2x112x128xf32, #tpu.memory_space<vmem>>, vector<1x16x128xf32>
    %47 = vector.shape_cast %46 : vector<1x16x128xf32> to vector<16x128xf32>
    %48 = vector.shape_cast %45 : vector<16x128xf32> to vector<1x16x128xf32>
    tpu.vector_store %arg12[%c1_24, %c0_25, %c0_26], %48 {strides = array<i32>} : memref<2x112x128xf32, #tpu.memory_space<vmem>>, vector<1x16x128xf32>,
    %cst_27 = arith.constant 0.000000e+00 : f32
    %49 = vector.broadcast %cst_27 : f32 to vector<16x128xf32>
    %c1_28 = arith.constant 1 : index
    %c96_29 = arith.constant 96 : index
    %c0_30 = arith.constant 0 : index
    %50 = vector.load %arg12[%c1_28, %c96_29, %c0_30] : memref<2x112x128xf32, #tpu.memory_space<vmem>>, vector<1x16x128xf32>
    %51 = vector.shape_cast %50 : vector<1x16x128xf32> to vector<16x128xf32>
    %52 = vector.shape_cast %49 : vector<16x128xf32> to vector<1x16x128xf32>
    tpu.vector_store %arg12[%c1_28, %c96_29, %c0_30], %52 {strides = array<i32>} : memref<2x112x128xf32, #tpu.memory_space<vmem>>, vector<1x16x128xf32>,
    %c0_31 = arith.constant 0 : index
    %c5 = arith.constant 5 : index
    %c0_32 = arith.constant 0 : index
    %53 = vector.load %arg1[%c0_31, %c5, %c0_32] : memref<2x112x16xf32, #tpu.memory_space<vmem>>, vector<1x80x16xf32>
    %54 = vector.shape_cast %53 : vector<1x80x16xf32> to vector<80x16xf32>
    %55 = arith.truncf %54 : vector<80x16xf32> to vector<80x16xbf16>
    %c0_33 = arith.constant 0 : index
    %c0_34 = arith.constant 0 : index
    %56 = vector.load %arg13[%c0_33, %c0_34] : memref<160x144xbf16, #tpu.memory_space<vmem>>, vector<80x16xbf16>
    tpu.vector_store %arg13[%c0_33, %c0_34], %55 {strides = array<i32>} : memref<160x144xbf16, #tpu.memory_space<vmem>>, vector<80x16xbf16>,
    %c0_35 = arith.constant 0 : index
    %c6 = arith.constant 6 : index
    %c0_36 = arith.constant 0 : index
    %57 = vector.load %arg1[%c0_35, %c6, %c0_36] : memref<2x112x16xf32, #tpu.memory_space<vmem>>, vector<1x80x16xf32>
    %58 = vector.shape_cast %57 : vector<1x80x16xf32> to vector<80x16xf32>
    %59 = arith.truncf %58 : vector<80x16xf32> to vector<80x16xbf16>
    %c0_37 = arith.constant 0 : index
    %c16 = arith.constant 16 : index
    %60 = vector.load %arg13[%c0_37, %c16] : memref<160x144xbf16, #tpu.memory_space<vmem>>, vector<80x16xbf16>
    tpu.vector_store %arg13[%c0_37, %c16], %59 {strides = array<i32>} : memref<160x144xbf16, #tpu.memory_space<vmem>>, vector<80x16xbf16>,
    %c0_38 = arith.constant 0 : index
    %c7 = arith.constant 7 : index
    %c0_39 = arith.constant 0 : index
    %61 = vector.load %arg1[%c0_38, %c7, %c0_39] : memref<2x112x16xf32, #tpu.memory_space<vmem>>, vector<1x80x16xf32>
    %62 = vector.shape_cast %61 : vector<1x80x16xf32> to vector<80x16xf32>
    %63 = arith.truncf %62 : vector<80x16xf32> to vector<80x16xbf16>
    %c0_40 = arith.constant 0 : index
    %c32 = arith.constant 32 : index
    %64 = vector.load %arg13[%c0_40, %c32] : memref<160x144xbf16, #tpu.memory_space<vmem>>, vector<80x16xbf16>
    tpu.vector_store %arg13[%c0_40, %c32], %63 {strides = array<i32>} : memref<160x144xbf16, #tpu.memory_space<vmem>>, vector<80x16xbf16>,
    %c0_41 = arith.constant 0 : index
    %c15 = arith.constant 15 : index
    %c0_42 = arith.constant 0 : index
    %65 = vector.load %arg1[%c0_41, %c15, %c0_42] : memref<2x112x16xf32, #tpu.memory_space<vmem>>, vector<1x80x16xf32>
    %66 = vector.shape_cast %65 : vector<1x80x16xf32> to vector<80x16xf32>
    %67 = arith.truncf %66 : vector<80x16xf32> to vector<80x16xbf16>
    %c0_43 = arith.constant 0 : index
    %c48 = arith.constant 48 : index
    %68 = vector.load %arg13[%c0_43, %c48] : memref<160x144xbf16, #tpu.memory_space<vmem>>, vector<80x16xbf16>
    tpu.vector_store %arg13[%c0_43, %c48], %67 {strides = array<i32>} : memref<160x144xbf16, #tpu.memory_space<vmem>>, vector<80x16xbf16>,
    %c0_44 = arith.constant 0 : index
    %c16_45 = arith.constant 16 : index
    %c0_46 = arith.constant 0 : index
    %69 = vector.load %arg1[%c0_44, %c16_45, %c0_46] : memref<2x112x16xf32, #tpu.memory_space<vmem>>, vector<1x80x16xf32>
    %70 = vector.shape_cast %69 : vector<1x80x16xf32> to vector<80x16xf32>
    %71 = arith.truncf %70 : vector<80x16xf32> to vector<80x16xbf16>
    %c0_47 = arith.constant 0 : index
    %c64 = arith.constant 64 : index
    %72 = vector.load %arg13[%c0_47, %c64] : memref<160x144xbf16, #tpu.memory_space<vmem>>, vector<80x16xbf16>
    tpu.vector_store %arg13[%c0_47, %c64], %71 {strides = array<i32>} : memref<160x144xbf16, #tpu.memory_space<vmem>>, vector<80x16xbf16>,
    %c0_48 = arith.constant 0 : index
    %c17 = arith.constant 17 : index
    %c0_49 = arith.constant 0 : index
    %73 = vector.load %arg1[%c0_48, %c17, %c0_49] : memref<2x112x16xf32, #tpu.memory_space<vmem>>, vector<1x80x16xf32>
    %74 = vector.shape_cast %73 : vector<1x80x16xf32> to vector<80x16xf32>
    %75 = arith.truncf %74 : vector<80x16xf32> to vector<80x16xbf16>
    %c0_50 = arith.constant 0 : index
    %c80 = arith.constant 80 : index
    %76 = vector.load %arg13[%c0_50, %c80] : memref<160x144xbf16, #tpu.memory_space<vmem>>, vector<80x16xbf16>
    tpu.vector_store %arg13[%c0_50, %c80], %75 {strides = array<i32>} : memref<160x144xbf16, #tpu.memory_space<vmem>>, vector<80x16xbf16>,
    %c0_51 = arith.constant 0 : index
    %c25 = arith.constant 25 : index
    %c0_52 = arith.constant 0 : index
    %77 = vector.load %arg1[%c0_51, %c25, %c0_52] : memref<2x112x16xf32, #tpu.memory_space<vmem>>, vector<1x80x16xf32>
    %78 = vector.shape_cast %77 : vector<1x80x16xf32> to vector<80x16xf32>
    %79 = arith.truncf %78 : vector<80x16xf32> to vector<80x16xbf16>
    %c0_53 = arith.constant 0 : index
    %c96_54 = arith.constant 96 : index
    %80 = vector.load %arg13[%c0_53, %c96_54] : memref<160x144xbf16, #tpu.memory_space<vmem>>, vector<80x16xbf16>
    tpu.vector_store %arg13[%c0_53, %c96_54], %79 {strides = array<i32>} : memref<160x144xbf16, #tpu.memory_space<vmem>>, vector<80x16xbf16>,
    %c0_55 = arith.constant 0 : index
    %c26 = arith.constant 26 : index
    %c0_56 = arith.constant 0 : index
    %81 = vector.load %arg1[%c0_55, %c26, %c0_56] : memref<2x112x16xf32, #tpu.memory_space<vmem>>, vector<1x80x16xf32>
    %82 = vector.shape_cast %81 : vector<1x80x16xf32> to vector<80x16xf32>
    %83 = arith.truncf %82 : vector<80x16xf32> to vector<80x16xbf16>
    %c0_57 = arith.constant 0 : index
    %c112 = arith.constant 112 : index
    %84 = vector.load %arg13[%c0_57, %c112] : memref<160x144xbf16, #tpu.memory_space<vmem>>, vector<80x16xbf16>
    tpu.vector_store %arg13[%c0_57, %c112], %83 {strides = array<i32>} : memref<160x144xbf16, #tpu.memory_space<vmem>>, vector<80x16xbf16>,
    %c0_58 = arith.constant 0 : index
    %c27 = arith.constant 27 : index
    %c0_59 = arith.constant 0 : index
    %85 = vector.load %arg1[%c0_58, %c27, %c0_59] : memref<2x112x16xf32, #tpu.memory_space<vmem>>, vector<1x80x16xf32>
    %86 = vector.shape_cast %85 : vector<1x80x16xf32> to vector<80x16xf32>
    %87 = arith.truncf %86 : vector<80x16xf32> to vector<80x16xbf16>
    %c0_60 = arith.constant 0 : index
    %c128 = arith.constant 128 : index
    %88 = vector.load %arg13[%c0_60, %c128] : memref<160x144xbf16, #tpu.memory_space<vmem>>, vector<80x16xbf16>
    tpu.vector_store %arg13[%c0_60, %c128], %87 {strides = array<i32>} : memref<160x144xbf16, #tpu.memory_space<vmem>>, vector<80x16xbf16>,
    %c1_61 = arith.constant 1 : index
    %c5_62 = arith.constant 5 : index
    %c0_63 = arith.constant 0 : index
    %89 = vector.load %arg1[%c1_61, %c5_62, %c0_63] : memref<2x112x16xf32, #tpu.memory_space<vmem>>, vector<1x80x16xf32>
    %90 = vector.shape_cast %89 : vector<1x80x16xf32> to vector<80x16xf32>
    %91 = arith.truncf %90 : vector<80x16xf32> to vector<80x16xbf16>
    %c80_64 = arith.constant 80 : index
    %c0_65 = arith.constant 0 : index
    %92 = vector.load %arg13[%c80_64, %c0_65] : memref<160x144xbf16, #tpu.memory_space<vmem>>, vector<80x16xbf16>
    tpu.vector_store %arg13[%c80_64, %c0_65], %91 {strides = array<i32>} : memref<160x144xbf16, #tpu.memory_space<vmem>>, vector<80x16xbf16>,
    %c1_66 = arith.constant 1 : index
    %c6_67 = arith.constant 6 : index
    %c0_68 = arith.constant 0 : index
    %93 = vector.load %arg1[%c1_66, %c6_67, %c0_68] : memref<2x112x16xf32, #tpu.memory_space<vmem>>, vector<1x80x16xf32>
    %94 = vector.shape_cast %93 : vector<1x80x16xf32> to vector<80x16xf32>
    %95 = arith.truncf %94 : vector<80x16xf32> to vector<80x16xbf16>
    %c80_69 = arith.constant 80 : index
    %c16_70 = arith.constant 16 : index
    %96 = vector.load %arg13[%c80_69, %c16_70] : memref<160x144xbf16, #tpu.memory_space<vmem>>, vector<80x16xbf16>
    tpu.vector_store %arg13[%c80_69, %c16_70], %95 {strides = array<i32>} : memref<160x144xbf16, #tpu.memory_space<vmem>>, vector<80x16xbf16>,
    %c1_71 = arith.constant 1 : index
    %c7_72 = arith.constant 7 : index
    %c0_73 = arith.constant 0 : index
    %97 = vector.load %arg1[%c1_71, %c7_72, %c0_73] : memref<2x112x16xf32, #tpu.memory_space<vmem>>, vector<1x80x16xf32>
    %98 = vector.shape_cast %97 : vector<1x80x16xf32> to vector<80x16xf32>
    %99 = arith.truncf %98 : vector<80x16xf32> to vector<80x16xbf16>
    %c80_74 = arith.constant 80 : index
    %c32_75 = arith.constant 32 : index
    %100 = vector.load %arg13[%c80_74, %c32_75] : memref<160x144xbf16, #tpu.memory_space<vmem>>, vector<80x16xbf16>
    tpu.vector_store %arg13[%c80_74, %c32_75], %99 {strides = array<i32>} : memref<160x144xbf16, #tpu.memory_space<vmem>>, vector<80x16xbf16>,
    %c1_76 = arith.constant 1 : index
    %c15_77 = arith.constant 15 : index
    %c0_78 = arith.constant 0 : index
    %101 = vector.load %arg1[%c1_76, %c15_77, %c0_78] : memref<2x112x16xf32, #tpu.memory_space<vmem>>, vector<1x80x16xf32>
    %102 = vector.shape_cast %101 : vector<1x80x16xf32> to vector<80x16xf32>
    %103 = arith.truncf %102 : vector<80x16xf32> to vector<80x16xbf16>
    %c80_79 = arith.constant 80 : index
    %c48_80 = arith.constant 48 : index
    %104 = vector.load %arg13[%c80_79, %c48_80] : memref<160x144xbf16, #tpu.memory_space<vmem>>, vector<80x16xbf16>
    tpu.vector_store %arg13[%c80_79, %c48_80], %103 {strides = array<i32>} : memref<160x144xbf16, #tpu.memory_space<vmem>>, vector<80x16xbf16>,
    %c1_81 = arith.constant 1 : index
    %c16_82 = arith.constant 16 : index
    %c0_83 = arith.constant 0 : index
    %105 = vector.load %arg1[%c1_81, %c16_82, %c0_83] : memref<2x112x16xf32, #tpu.memory_space<vmem>>, vector<1x80x16xf32>
    %106 = vector.shape_cast %105 : vector<1x80x16xf32> to vector<80x16xf32>
    %107 = arith.truncf %106 : vector<80x16xf32> to vector<80x16xbf16>
    %c80_84 = arith.constant 80 : index
    %c64_85 = arith.constant 64 : index
    %108 = vector.load %arg13[%c80_84, %c64_85] : memref<160x144xbf16, #tpu.memory_space<vmem>>, vector<80x16xbf16>
    tpu.vector_store %arg13[%c80_84, %c64_85], %107 {strides = array<i32>} : memref<160x144xbf16, #tpu.memory_space<vmem>>, vector<80x16xbf16>,
    %c1_86 = arith.constant 1 : index
    %c17_87 = arith.constant 17 : index
    %c0_88 = arith.constant 0 : index
    %109 = vector.load %arg1[%c1_86, %c17_87, %c0_88] : memref<2x112x16xf32, #tpu.memory_space<vmem>>, vector<1x80x16xf32>
    %110 = vector.shape_cast %109 : vector<1x80x16xf32> to vector<80x16xf32>
    %111 = arith.truncf %110 : vector<80x16xf32> to vector<80x16xbf16>
    %c80_89 = arith.constant 80 : index
    %c80_90 = arith.constant 80 : index
    %112 = vector.load %arg13[%c80_89, %c80_90] : memref<160x144xbf16, #tpu.memory_space<vmem>>, vector<80x16xbf16>
    tpu.vector_store %arg13[%c80_89, %c80_90], %111 {strides = array<i32>} : memref<160x144xbf16, #tpu.memory_space<vmem>>, vector<80x16xbf16>,
    %c1_91 = arith.constant 1 : index
    %c25_92 = arith.constant 25 : index
    %c0_93 = arith.constant 0 : index
    %113 = vector.load %arg1[%c1_91, %c25_92, %c0_93] : memref<2x112x16xf32, #tpu.memory_space<vmem>>, vector<1x80x16xf32>
    %114 = vector.shape_cast %113 : vector<1x80x16xf32> to vector<80x16xf32>
    %115 = arith.truncf %114 : vector<80x16xf32> to vector<80x16xbf16>
    %c80_94 = arith.constant 80 : index
    %c96_95 = arith.constant 96 : index
    %116 = vector.load %arg13[%c80_94, %c96_95] : memref<160x144xbf16, #tpu.memory_space<vmem>>, vector<80x16xbf16>
    tpu.vector_store %arg13[%c80_94, %c96_95], %115 {strides = array<i32>} : memref<160x144xbf16, #tpu.memory_space<vmem>>, vector<80x16xbf16>,
    %c1_96 = arith.constant 1 : index
    %c26_97 = arith.constant 26 : index
    %c0_98 = arith.constant 0 : index
    %117 = vector.load %arg1[%c1_96, %c26_97, %c0_98] : memref<2x112x16xf32, #tpu.memory_space<vmem>>, vector<1x80x16xf32>
    %118 = vector.shape_cast %117 : vector<1x80x16xf32> to vector<80x16xf32>
    %119 = arith.truncf %118 : vector<80x16xf32> to vector<80x16xbf16>
    %c80_99 = arith.constant 80 : index
    %c112_100 = arith.constant 112 : index
    %120 = vector.load %arg13[%c80_99, %c112_100] : memref<160x144xbf16, #tpu.memory_space<vmem>>, vector<80x16xbf16>
    tpu.vector_store %arg13[%c80_99, %c112_100], %119 {strides = array<i32>} : memref<160x144xbf16, #tpu.memory_space<vmem>>, vector<80x16xbf16>,
    %c1_101 = arith.constant 1 : index
    %c27_102 = arith.constant 27 : index
    %c0_103 = arith.constant 0 : index
    %121 = vector.load %arg1[%c1_101, %c27_102, %c0_103] : memref<2x112x16xf32, #tpu.memory_space<vmem>>, vector<1x80x16xf32>
    %122 = vector.shape_cast %121 : vector<1x80x16xf32> to vector<80x16xf32>
    %123 = arith.truncf %122 : vector<80x16xf32> to vector<80x16xbf16>
    %c80_104 = arith.constant 80 : index
    %c128_105 = arith.constant 128 : index
    %124 = vector.load %arg13[%c80_104, %c128_105] : memref<160x144xbf16, #tpu.memory_space<vmem>>, vector<80x16xbf16>
    tpu.vector_store %arg13[%c80_104, %c128_105], %123 {strides = array<i32>} : memref<160x144xbf16, #tpu.memory_space<vmem>>, vector<80x16xbf16>,
    %c0_106 = arith.constant 0 : index
    %c0_107 = arith.constant 0 : index
    %125 = vector.load %arg13[%c0_106, %c0_107] : memref<160x144xbf16, #tpu.memory_space<vmem>>, vector<160x144xbf16>
    %c0_108 = arith.constant 0 : index
    %c0_109 = arith.constant 0 : index
    %126 = vector.load %arg2[%c0_108, %c0_109] : memref<144x64xbf16, #tpu.memory_space<vmem>>, vector<144x64xbf16>
    %cst_110 = arith.constant dense<0.000000e+00> : vector<160x64xf32>
    %127 = tpu.matmul %125, %126, %cst_110 {dimension_numbers = #tpu.dot_dimension_numbers<[1], [0], [0], [1], [0, 0, 1, 1], [], []>} : vector<160x144xbf16>, vector<144x64xbf16>, vector<160x64xf32> -> vector<160x64xf32>
    %c0_111 = arith.constant 0 : index
    %c0_112 = arith.constant 0 : index
    %128 = vector.load %arg3[%c0_111, %c0_112] : memref<1x64xf32, #tpu.memory_space<vmem>>, vector<1x64xf32>
    %129 = vector.broadcast %128 : vector<1x64xf32> to vector<160x64xf32>
    %130 = arith.addf %127, %129 : vector<160x64xf32>
    %cst_113 = arith.constant 0.000000e+00 : f32
    %131 = vector.broadcast %cst_113 : f32 to vector<160x64xf32>
    %132 = arith.maximumf %130, %131 : vector<160x64xf32>
    %133 = vector.broadcast %20 : vector<160x1xf32> to vector<160x64xf32>
    %134 = arith.mulf %132, %133 : vector<160x64xf32>
    %135 = vector.extract_strided_slice %134 {offsets = [0, 0], sizes = [80, 64], strides = [1, 1]} : vector<160x64xf32> to vector<80x64xf32>
    %c0_114 = arith.constant 0 : index
    %c16_115 = arith.constant 16 : index
    %c0_116 = arith.constant 0 : index
    %136 = vector.load %arg11[%c0_114, %c16_115, %c0_116] : memref<2x112x64xf32, #tpu.memory_space<vmem>>, vector<1x80x64xf32>
    %137 = vector.shape_cast %136 : vector<1x80x64xf32> to vector<80x64xf32>
    %138 = vector.shape_cast %135 : vector<80x64xf32> to vector<1x80x64xf32>
    tpu.vector_store %arg11[%c0_114, %c16_115, %c0_116], %138 {strides = array<i32>} : memref<2x112x64xf32, #tpu.memory_space<vmem>>, vector<1x80x64xf32>,
    %139 = vector.extract_strided_slice %134 {offsets = [80, 0], sizes = [80, 64], strides = [1, 1]} : vector<160x64xf32> to vector<80x64xf32>
    %c1_117 = arith.constant 1 : index
    %c16_118 = arith.constant 16 : index
    %c0_119 = arith.constant 0 : index
    %140 = vector.load %arg11[%c1_117, %c16_118, %c0_119] : memref<2x112x64xf32, #tpu.memory_space<vmem>>, vector<1x80x64xf32>
    %141 = vector.shape_cast %140 : vector<1x80x64xf32> to vector<80x64xf32>
    %142 = vector.shape_cast %139 : vector<80x64xf32> to vector<1x80x64xf32>
    tpu.vector_store %arg11[%c1_117, %c16_118, %c0_119], %142 {strides = array<i32>} : memref<2x112x64xf32, #tpu.memory_space<vmem>>, vector<1x80x64xf32>,
    %c0_120 = arith.constant 0 : index
    %c5_121 = arith.constant 5 : index
    %c0_122 = arith.constant 0 : index
    %143 = vector.load %arg11[%c0_120, %c5_121, %c0_122] : memref<2x112x64xf32, #tpu.memory_space<vmem>>, vector<1x80x64xf32>
    %144 = vector.shape_cast %143 : vector<1x80x64xf32> to vector<80x64xf32>
    %145 = arith.truncf %144 : vector<80x64xf32> to vector<80x64xbf16>
    %c0_123 = arith.constant 0 : index
    %c0_124 = arith.constant 0 : index
    %146 = vector.load %arg14[%c0_123, %c0_124] : memref<160x576xbf16, #tpu.memory_space<vmem>>, vector<80x64xbf16>
    tpu.vector_store %arg14[%c0_123, %c0_124], %145 {strides = array<i32>} : memref<160x576xbf16, #tpu.memory_space<vmem>>, vector<80x64xbf16>,
    %c0_125 = arith.constant 0 : index
    %c6_126 = arith.constant 6 : index
    %c0_127 = arith.constant 0 : index
    %147 = vector.load %arg11[%c0_125, %c6_126, %c0_127] : memref<2x112x64xf32, #tpu.memory_space<vmem>>, vector<1x80x64xf32>
    %148 = vector.shape_cast %147 : vector<1x80x64xf32> to vector<80x64xf32>
    %149 = arith.truncf %148 : vector<80x64xf32> to vector<80x64xbf16>
    %c0_128 = arith.constant 0 : index
    %c64_129 = arith.constant 64 : index
    %150 = vector.load %arg14[%c0_128, %c64_129] : memref<160x576xbf16, #tpu.memory_space<vmem>>, vector<80x64xbf16>
    tpu.vector_store %arg14[%c0_128, %c64_129], %149 {strides = array<i32>} : memref<160x576xbf16, #tpu.memory_space<vmem>>, vector<80x64xbf16>,
    %c0_130 = arith.constant 0 : index
    %c7_131 = arith.constant 7 : index
    %c0_132 = arith.constant 0 : index
    %151 = vector.load %arg11[%c0_130, %c7_131, %c0_132] : memref<2x112x64xf32, #tpu.memory_space<vmem>>, vector<1x80x64xf32>
    %152 = vector.shape_cast %151 : vector<1x80x64xf32> to vector<80x64xf32>
    %153 = arith.truncf %152 : vector<80x64xf32> to vector<80x64xbf16>
    %c0_133 = arith.constant 0 : index
    %c128_134 = arith.constant 128 : index
    %154 = vector.load %arg14[%c0_133, %c128_134] : memref<160x576xbf16, #tpu.memory_space<vmem>>, vector<80x64xbf16>
    tpu.vector_store %arg14[%c0_133, %c128_134], %153 {strides = array<i32>} : memref<160x576xbf16, #tpu.memory_space<vmem>>, vector<80x64xbf16>,
    %c0_135 = arith.constant 0 : index
    %c15_136 = arith.constant 15 : index
    %c0_137 = arith.constant 0 : index
    %155 = vector.load %arg11[%c0_135, %c15_136, %c0_137] : memref<2x112x64xf32, #tpu.memory_space<vmem>>, vector<1x80x64xf32>
    %156 = vector.shape_cast %155 : vector<1x80x64xf32> to vector<80x64xf32>
    %157 = arith.truncf %156 : vector<80x64xf32> to vector<80x64xbf16>
    %c0_138 = arith.constant 0 : index
    %c192 = arith.constant 192 : index
    %158 = vector.load %arg14[%c0_138, %c192] : memref<160x576xbf16, #tpu.memory_space<vmem>>, vector<80x64xbf16>
    tpu.vector_store %arg14[%c0_138, %c192], %157 {strides = array<i32>} : memref<160x576xbf16, #tpu.memory_space<vmem>>, vector<80x64xbf16>,
    %c0_139 = arith.constant 0 : index
    %c16_140 = arith.constant 16 : index
    %c0_141 = arith.constant 0 : index
    %159 = vector.load %arg11[%c0_139, %c16_140, %c0_141] : memref<2x112x64xf32, #tpu.memory_space<vmem>>, vector<1x80x64xf32>
    %160 = vector.shape_cast %159 : vector<1x80x64xf32> to vector<80x64xf32>
    %161 = arith.truncf %160 : vector<80x64xf32> to vector<80x64xbf16>
    %c0_142 = arith.constant 0 : index
    %c256 = arith.constant 256 : index
    %162 = vector.load %arg14[%c0_142, %c256] : memref<160x576xbf16, #tpu.memory_space<vmem>>, vector<80x64xbf16>
    tpu.vector_store %arg14[%c0_142, %c256], %161 {strides = array<i32>} : memref<160x576xbf16, #tpu.memory_space<vmem>>, vector<80x64xbf16>,
    %c0_143 = arith.constant 0 : index
    %c17_144 = arith.constant 17 : index
    %c0_145 = arith.constant 0 : index
    %163 = vector.load %arg11[%c0_143, %c17_144, %c0_145] : memref<2x112x64xf32, #tpu.memory_space<vmem>>, vector<1x80x64xf32>
    %164 = vector.shape_cast %163 : vector<1x80x64xf32> to vector<80x64xf32>
    %165 = arith.truncf %164 : vector<80x64xf32> to vector<80x64xbf16>
    %c0_146 = arith.constant 0 : index
    %c320 = arith.constant 320 : index
    %166 = vector.load %arg14[%c0_146, %c320] : memref<160x576xbf16, #tpu.memory_space<vmem>>, vector<80x64xbf16>
    tpu.vector_store %arg14[%c0_146, %c320], %165 {strides = array<i32>} : memref<160x576xbf16, #tpu.memory_space<vmem>>, vector<80x64xbf16>,
    %c0_147 = arith.constant 0 : index
    %c25_148 = arith.constant 25 : index
    %c0_149 = arith.constant 0 : index
    %167 = vector.load %arg11[%c0_147, %c25_148, %c0_149] : memref<2x112x64xf32, #tpu.memory_space<vmem>>, vector<1x80x64xf32>
    %168 = vector.shape_cast %167 : vector<1x80x64xf32> to vector<80x64xf32>
    %169 = arith.truncf %168 : vector<80x64xf32> to vector<80x64xbf16>
    %c0_150 = arith.constant 0 : index
    %c384 = arith.constant 384 : index
    %170 = vector.load %arg14[%c0_150, %c384] : memref<160x576xbf16, #tpu.memory_space<vmem>>, vector<80x64xbf16>
    tpu.vector_store %arg14[%c0_150, %c384], %169 {strides = array<i32>} : memref<160x576xbf16, #tpu.memory_space<vmem>>, vector<80x64xbf16>,
    %c0_151 = arith.constant 0 : index
    %c26_152 = arith.constant 26 : index
    %c0_153 = arith.constant 0 : index
    %171 = vector.load %arg11[%c0_151, %c26_152, %c0_153] : memref<2x112x64xf32, #tpu.memory_space<vmem>>, vector<1x80x64xf32>
    %172 = vector.shape_cast %171 : vector<1x80x64xf32> to vector<80x64xf32>
    %173 = arith.truncf %172 : vector<80x64xf32> to vector<80x64xbf16>
    %c0_154 = arith.constant 0 : index
    %c448 = arith.constant 448 : index
    %174 = vector.load %arg14[%c0_154, %c448] : memref<160x576xbf16, #tpu.memory_space<vmem>>, vector<80x64xbf16>
    tpu.vector_store %arg14[%c0_154, %c448], %173 {strides = array<i32>} : memref<160x576xbf16, #tpu.memory_space<vmem>>, vector<80x64xbf16>,
    %c0_155 = arith.constant 0 : index
    %c27_156 = arith.constant 27 : index
    %c0_157 = arith.constant 0 : index
    %175 = vector.load %arg11[%c0_155, %c27_156, %c0_157] : memref<2x112x64xf32, #tpu.memory_space<vmem>>, vector<1x80x64xf32>
    %176 = vector.shape_cast %175 : vector<1x80x64xf32> to vector<80x64xf32>
    %177 = arith.truncf %176 : vector<80x64xf32> to vector<80x64xbf16>
    %c0_158 = arith.constant 0 : index
    %c512 = arith.constant 512 : index
    %178 = vector.load %arg14[%c0_158, %c512] : memref<160x576xbf16, #tpu.memory_space<vmem>>, vector<80x64xbf16>
    tpu.vector_store %arg14[%c0_158, %c512], %177 {strides = array<i32>} : memref<160x576xbf16, #tpu.memory_space<vmem>>, vector<80x64xbf16>,
    %c1_159 = arith.constant 1 : index
    %c5_160 = arith.constant 5 : index
    %c0_161 = arith.constant 0 : index
    %179 = vector.load %arg11[%c1_159, %c5_160, %c0_161] : memref<2x112x64xf32, #tpu.memory_space<vmem>>, vector<1x80x64xf32>
    %180 = vector.shape_cast %179 : vector<1x80x64xf32> to vector<80x64xf32>
    %181 = arith.truncf %180 : vector<80x64xf32> to vector<80x64xbf16>
    %c80_162 = arith.constant 80 : index
    %c0_163 = arith.constant 0 : index
    %182 = vector.load %arg14[%c80_162, %c0_163] : memref<160x576xbf16, #tpu.memory_space<vmem>>, vector<80x64xbf16>
    tpu.vector_store %arg14[%c80_162, %c0_163], %181 {strides = array<i32>} : memref<160x576xbf16, #tpu.memory_space<vmem>>, vector<80x64xbf16>,
    %c1_164 = arith.constant 1 : index
    %c6_165 = arith.constant 6 : index
    %c0_166 = arith.constant 0 : index
    %183 = vector.load %arg11[%c1_164, %c6_165, %c0_166] : memref<2x112x64xf32, #tpu.memory_space<vmem>>, vector<1x80x64xf32>
    %184 = vector.shape_cast %183 : vector<1x80x64xf32> to vector<80x64xf32>
    %185 = arith.truncf %184 : vector<80x64xf32> to vector<80x64xbf16>
    %c80_167 = arith.constant 80 : index
    %c64_168 = arith.constant 64 : index
    %186 = vector.load %arg14[%c80_167, %c64_168] : memref<160x576xbf16, #tpu.memory_space<vmem>>, vector<80x64xbf16>
    tpu.vector_store %arg14[%c80_167, %c64_168], %185 {strides = array<i32>} : memref<160x576xbf16, #tpu.memory_space<vmem>>, vector<80x64xbf16>,
    %c1_169 = arith.constant 1 : index
    %c7_170 = arith.constant 7 : index
    %c0_171 = arith.constant 0 : index
    %187 = vector.load %arg11[%c1_169, %c7_170, %c0_171] : memref<2x112x64xf32, #tpu.memory_space<vmem>>, vector<1x80x64xf32>
    %188 = vector.shape_cast %187 : vector<1x80x64xf32> to vector<80x64xf32>
    %189 = arith.truncf %188 : vector<80x64xf32> to vector<80x64xbf16>
    %c80_172 = arith.constant 80 : index
    %c128_173 = arith.constant 128 : index
    %190 = vector.load %arg14[%c80_172, %c128_173] : memref<160x576xbf16, #tpu.memory_space<vmem>>, vector<80x64xbf16>
    tpu.vector_store %arg14[%c80_172, %c128_173], %189 {strides = array<i32>} : memref<160x576xbf16, #tpu.memory_space<vmem>>, vector<80x64xbf16>,
    %c1_174 = arith.constant 1 : index
    %c15_175 = arith.constant 15 : index
    %c0_176 = arith.constant 0 : index
    %191 = vector.load %arg11[%c1_174, %c15_175, %c0_176] : memref<2x112x64xf32, #tpu.memory_space<vmem>>, vector<1x80x64xf32>
    %192 = vector.shape_cast %191 : vector<1x80x64xf32> to vector<80x64xf32>
    %193 = arith.truncf %192 : vector<80x64xf32> to vector<80x64xbf16>
    %c80_177 = arith.constant 80 : index
    %c192_178 = arith.constant 192 : index
    %194 = vector.load %arg14[%c80_177, %c192_178] : memref<160x576xbf16, #tpu.memory_space<vmem>>, vector<80x64xbf16>
    tpu.vector_store %arg14[%c80_177, %c192_178], %193 {strides = array<i32>} : memref<160x576xbf16, #tpu.memory_space<vmem>>, vector<80x64xbf16>,
    %c1_179 = arith.constant 1 : index
    %c16_180 = arith.constant 16 : index
    %c0_181 = arith.constant 0 : index
    %195 = vector.load %arg11[%c1_179, %c16_180, %c0_181] : memref<2x112x64xf32, #tpu.memory_space<vmem>>, vector<1x80x64xf32>
    %196 = vector.shape_cast %195 : vector<1x80x64xf32> to vector<80x64xf32>
    %197 = arith.truncf %196 : vector<80x64xf32> to vector<80x64xbf16>
    %c80_182 = arith.constant 80 : index
    %c256_183 = arith.constant 256 : index
    %198 = vector.load %arg14[%c80_182, %c256_183] : memref<160x576xbf16, #tpu.memory_space<vmem>>, vector<80x64xbf16>
    tpu.vector_store %arg14[%c80_182, %c256_183], %197 {strides = array<i32>} : memref<160x576xbf16, #tpu.memory_space<vmem>>, vector<80x64xbf16>,
    %c1_184 = arith.constant 1 : index
    %c17_185 = arith.constant 17 : index
    %c0_186 = arith.constant 0 : index
    %199 = vector.load %arg11[%c1_184, %c17_185, %c0_186] : memref<2x112x64xf32, #tpu.memory_space<vmem>>, vector<1x80x64xf32>
    %200 = vector.shape_cast %199 : vector<1x80x64xf32> to vector<80x64xf32>
    %201 = arith.truncf %200 : vector<80x64xf32> to vector<80x64xbf16>
    %c80_187 = arith.constant 80 : index
    %c320_188 = arith.constant 320 : index
    %202 = vector.load %arg14[%c80_187, %c320_188] : memref<160x576xbf16, #tpu.memory_space<vmem>>, vector<80x64xbf16>
    tpu.vector_store %arg14[%c80_187, %c320_188], %201 {strides = array<i32>} : memref<160x576xbf16, #tpu.memory_space<vmem>>, vector<80x64xbf16>,
    %c1_189 = arith.constant 1 : index
    %c25_190 = arith.constant 25 : index
    %c0_191 = arith.constant 0 : index
    %203 = vector.load %arg11[%c1_189, %c25_190, %c0_191] : memref<2x112x64xf32, #tpu.memory_space<vmem>>, vector<1x80x64xf32>
    %204 = vector.shape_cast %203 : vector<1x80x64xf32> to vector<80x64xf32>
    %205 = arith.truncf %204 : vector<80x64xf32> to vector<80x64xbf16>
    %c80_192 = arith.constant 80 : index
    %c384_193 = arith.constant 384 : index
    %206 = vector.load %arg14[%c80_192, %c384_193] : memref<160x576xbf16, #tpu.memory_space<vmem>>, vector<80x64xbf16>
    tpu.vector_store %arg14[%c80_192, %c384_193], %205 {strides = array<i32>} : memref<160x576xbf16, #tpu.memory_space<vmem>>, vector<80x64xbf16>,
    %c1_194 = arith.constant 1 : index
    %c26_195 = arith.constant 26 : index
    %c0_196 = arith.constant 0 : index
    %207 = vector.load %arg11[%c1_194, %c26_195, %c0_196] : memref<2x112x64xf32, #tpu.memory_space<vmem>>, vector<1x80x64xf32>
    %208 = vector.shape_cast %207 : vector<1x80x64xf32> to vector<80x64xf32>
    %209 = arith.truncf %208 : vector<80x64xf32> to vector<80x64xbf16>
    %c80_197 = arith.constant 80 : index
    %c448_198 = arith.constant 448 : index
    %210 = vector.load %arg14[%c80_197, %c448_198] : memref<160x576xbf16, #tpu.memory_space<vmem>>, vector<80x64xbf16>
    tpu.vector_store %arg14[%c80_197, %c448_198], %209 {strides = array<i32>} : memref<160x576xbf16, #tpu.memory_space<vmem>>, vector<80x64xbf16>,
    %c1_199 = arith.constant 1 : index
    %c27_200 = arith.constant 27 : index
    %c0_201 = arith.constant 0 : index
    %211 = vector.load %arg11[%c1_199, %c27_200, %c0_201] : memref<2x112x64xf32, #tpu.memory_space<vmem>>, vector<1x80x64xf32>
    %212 = vector.shape_cast %211 : vector<1x80x64xf32> to vector<80x64xf32>
    %213 = arith.truncf %212 : vector<80x64xf32> to vector<80x64xbf16>
    %c80_202 = arith.constant 80 : index
    %c512_203 = arith.constant 512 : index
    %214 = vector.load %arg14[%c80_202, %c512_203] : memref<160x576xbf16, #tpu.memory_space<vmem>>, vector<80x64xbf16>
    tpu.vector_store %arg14[%c80_202, %c512_203], %213 {strides = array<i32>} : memref<160x576xbf16, #tpu.memory_space<vmem>>, vector<80x64xbf16>,
    %c0_204 = arith.constant 0 : index
    %c0_205 = arith.constant 0 : index
    %215 = vector.load %arg14[%c0_204, %c0_205] : memref<160x576xbf16, #tpu.memory_space<vmem>>, vector<160x576xbf16>
    %c0_206 = arith.constant 0 : index
    %c0_207 = arith.constant 0 : index
    %216 = vector.load %arg4[%c0_206, %c0_207] : memref<576x128xbf16, #tpu.memory_space<vmem>>, vector<576x128xbf16>
    %cst_208 = arith.constant dense<0.000000e+00> : vector<160x128xf32>
    %217 = tpu.matmul %215, %216, %cst_208 {dimension_numbers = #tpu.dot_dimension_numbers<[1], [0], [0], [1], [0, 0, 1, 1], [], []>} : vector<160x576xbf16>, vector<576x128xbf16>, vector<160x128xf32> -> vector<160x128xf32>
    %c0_209 = arith.constant 0 : index
    %c0_210 = arith.constant 0 : index
    %218 = vector.load %arg5[%c0_209, %c0_210] : memref<1x128xf32, #tpu.memory_space<vmem>>, vector<1x128xf32>
    %219 = vector.broadcast %218 : vector<1x128xf32> to vector<160x128xf32>
    %220 = arith.addf %217, %219 : vector<160x128xf32>
    %cst_211 = arith.constant 0.000000e+00 : f32
    %221 = vector.broadcast %cst_211 : f32 to vector<160x128xf32>
    %222 = arith.maximumf %220, %221 : vector<160x128xf32>
    %223 = vector.broadcast %20 : vector<160x1xf32> to vector<160x128xf32>
    %224 = arith.mulf %222, %223 : vector<160x128xf32>
    %225 = vector.extract_strided_slice %224 {offsets = [0, 0], sizes = [80, 128], strides = [1, 1]} : vector<160x128xf32> to vector<80x128xf32>
    %c0_212 = arith.constant 0 : index
    %c16_213 = arith.constant 16 : index
    %c0_214 = arith.constant 0 : index
    %226 = vector.load %arg12[%c0_212, %c16_213, %c0_214] : memref<2x112x128xf32, #tpu.memory_space<vmem>>, vector<1x80x128xf32>
    %227 = vector.shape_cast %226 : vector<1x80x128xf32> to vector<80x128xf32>
    %228 = vector.shape_cast %225 : vector<80x128xf32> to vector<1x80x128xf32>
    tpu.vector_store %arg12[%c0_212, %c16_213, %c0_214], %228 {strides = array<i32>} : memref<2x112x128xf32, #tpu.memory_space<vmem>>, vector<1x80x128xf32>,
    %229 = vector.extract_strided_slice %224 {offsets = [80, 0], sizes = [80, 128], strides = [1, 1]} : vector<160x128xf32> to vector<80x128xf32>
    %c1_215 = arith.constant 1 : index
    %c16_216 = arith.constant 16 : index
    %c0_217 = arith.constant 0 : index
    %230 = vector.load %arg12[%c1_215, %c16_216, %c0_217] : memref<2x112x128xf32, #tpu.memory_space<vmem>>, vector<1x80x128xf32>
    %231 = vector.shape_cast %230 : vector<1x80x128xf32> to vector<80x128xf32>
    %232 = vector.shape_cast %229 : vector<80x128xf32> to vector<1x80x128xf32>
    tpu.vector_store %arg12[%c1_215, %c16_216, %c0_217], %232 {strides = array<i32>} : memref<2x112x128xf32, #tpu.memory_space<vmem>>, vector<1x80x128xf32>,
    %c0_218 = arith.constant 0 : index
    %c5_219 = arith.constant 5 : index
    %c0_220 = arith.constant 0 : index
    %233 = vector.load %arg12[%c0_218, %c5_219, %c0_220] : memref<2x112x128xf32, #tpu.memory_space<vmem>>, vector<1x80x128xf32>
    %234 = vector.shape_cast %233 : vector<1x80x128xf32> to vector<80x128xf32>
    %235 = arith.truncf %234 : vector<80x128xf32> to vector<80x128xbf16>
    %c0_221 = arith.constant 0 : index
    %c0_222 = arith.constant 0 : index
    %236 = vector.load %arg15[%c0_221, %c0_222] : memref<160x1152xbf16, #tpu.memory_space<vmem>>, vector<80x128xbf16>
    tpu.vector_store %arg15[%c0_221, %c0_222], %235 {strides = array<i32>} : memref<160x1152xbf16, #tpu.memory_space<vmem>>, vector<80x128xbf16>,
    %c0_223 = arith.constant 0 : index
    %c6_224 = arith.constant 6 : index
    %c0_225 = arith.constant 0 : index
    %237 = vector.load %arg12[%c0_223, %c6_224, %c0_225] : memref<2x112x128xf32, #tpu.memory_space<vmem>>, vector<1x80x128xf32>
    %238 = vector.shape_cast %237 : vector<1x80x128xf32> to vector<80x128xf32>
    %239 = arith.truncf %238 : vector<80x128xf32> to vector<80x128xbf16>
    %c0_226 = arith.constant 0 : index
    %c128_227 = arith.constant 128 : index
    %240 = vector.load %arg15[%c0_226, %c128_227] : memref<160x1152xbf16, #tpu.memory_space<vmem>>, vector<80x128xbf16>
    tpu.vector_store %arg15[%c0_226, %c128_227], %239 {strides = array<i32>} : memref<160x1152xbf16, #tpu.memory_space<vmem>>, vector<80x128xbf16>,
    %c0_228 = arith.constant 0 : index
    %c7_229 = arith.constant 7 : index
    %c0_230 = arith.constant 0 : index
    %241 = vector.load %arg12[%c0_228, %c7_229, %c0_230] : memref<2x112x128xf32, #tpu.memory_space<vmem>>, vector<1x80x128xf32>
    %242 = vector.shape_cast %241 : vector<1x80x128xf32> to vector<80x128xf32>
    %243 = arith.truncf %242 : vector<80x128xf32> to vector<80x128xbf16>
    %c0_231 = arith.constant 0 : index
    %c256_232 = arith.constant 256 : index
    %244 = vector.load %arg15[%c0_231, %c256_232] : memref<160x1152xbf16, #tpu.memory_space<vmem>>, vector<80x128xbf16>
    tpu.vector_store %arg15[%c0_231, %c256_232], %243 {strides = array<i32>} : memref<160x1152xbf16, #tpu.memory_space<vmem>>, vector<80x128xbf16>,
    %c0_233 = arith.constant 0 : index
    %c15_234 = arith.constant 15 : index
    %c0_235 = arith.constant 0 : index
    %245 = vector.load %arg12[%c0_233, %c15_234, %c0_235] : memref<2x112x128xf32, #tpu.memory_space<vmem>>, vector<1x80x128xf32>
    %246 = vector.shape_cast %245 : vector<1x80x128xf32> to vector<80x128xf32>
    %247 = arith.truncf %246 : vector<80x128xf32> to vector<80x128xbf16>
    %c0_236 = arith.constant 0 : index
    %c384_237 = arith.constant 384 : index
    %248 = vector.load %arg15[%c0_236, %c384_237] : memref<160x1152xbf16, #tpu.memory_space<vmem>>, vector<80x128xbf16>
    tpu.vector_store %arg15[%c0_236, %c384_237], %247 {strides = array<i32>} : memref<160x1152xbf16, #tpu.memory_space<vmem>>, vector<80x128xbf16>,
    %c0_238 = arith.constant 0 : index
    %c16_239 = arith.constant 16 : index
    %c0_240 = arith.constant 0 : index
    %249 = vector.load %arg12[%c0_238, %c16_239, %c0_240] : memref<2x112x128xf32, #tpu.memory_space<vmem>>, vector<1x80x128xf32>
    %250 = vector.shape_cast %249 : vector<1x80x128xf32> to vector<80x128xf32>
    %251 = arith.truncf %250 : vector<80x128xf32> to vector<80x128xbf16>
    %c0_241 = arith.constant 0 : index
    %c512_242 = arith.constant 512 : index
    %252 = vector.load %arg15[%c0_241, %c512_242] : memref<160x1152xbf16, #tpu.memory_space<vmem>>, vector<80x128xbf16>
    tpu.vector_store %arg15[%c0_241, %c512_242], %251 {strides = array<i32>} : memref<160x1152xbf16, #tpu.memory_space<vmem>>, vector<80x128xbf16>,
    %c0_243 = arith.constant 0 : index
    %c17_244 = arith.constant 17 : index
    %c0_245 = arith.constant 0 : index
    %253 = vector.load %arg12[%c0_243, %c17_244, %c0_245] : memref<2x112x128xf32, #tpu.memory_space<vmem>>, vector<1x80x128xf32>
    %254 = vector.shape_cast %253 : vector<1x80x128xf32> to vector<80x128xf32>
    %255 = arith.truncf %254 : vector<80x128xf32> to vector<80x128xbf16>
    %c0_246 = arith.constant 0 : index
    %c640 = arith.constant 640 : index
    %256 = vector.load %arg15[%c0_246, %c640] : memref<160x1152xbf16, #tpu.memory_space<vmem>>, vector<80x128xbf16>
    tpu.vector_store %arg15[%c0_246, %c640], %255 {strides = array<i32>} : memref<160x1152xbf16, #tpu.memory_space<vmem>>, vector<80x128xbf16>,
    %c0_247 = arith.constant 0 : index
    %c25_248 = arith.constant 25 : index
    %c0_249 = arith.constant 0 : index
    %257 = vector.load %arg12[%c0_247, %c25_248, %c0_249] : memref<2x112x128xf32, #tpu.memory_space<vmem>>, vector<1x80x128xf32>
    %258 = vector.shape_cast %257 : vector<1x80x128xf32> to vector<80x128xf32>
    %259 = arith.truncf %258 : vector<80x128xf32> to vector<80x128xbf16>
    %c0_250 = arith.constant 0 : index
    %c768 = arith.constant 768 : index
    %260 = vector.load %arg15[%c0_250, %c768] : memref<160x1152xbf16, #tpu.memory_space<vmem>>, vector<80x128xbf16>
    tpu.vector_store %arg15[%c0_250, %c768], %259 {strides = array<i32>} : memref<160x1152xbf16, #tpu.memory_space<vmem>>, vector<80x128xbf16>,
    %c0_251 = arith.constant 0 : index
    %c26_252 = arith.constant 26 : index
    %c0_253 = arith.constant 0 : index
    %261 = vector.load %arg12[%c0_251, %c26_252, %c0_253] : memref<2x112x128xf32, #tpu.memory_space<vmem>>, vector<1x80x128xf32>
    %262 = vector.shape_cast %261 : vector<1x80x128xf32> to vector<80x128xf32>
    %263 = arith.truncf %262 : vector<80x128xf32> to vector<80x128xbf16>
    %c0_254 = arith.constant 0 : index
    %c896 = arith.constant 896 : index
    %264 = vector.load %arg15[%c0_254, %c896] : memref<160x1152xbf16, #tpu.memory_space<vmem>>, vector<80x128xbf16>
    tpu.vector_store %arg15[%c0_254, %c896], %263 {strides = array<i32>} : memref<160x1152xbf16, #tpu.memory_space<vmem>>, vector<80x128xbf16>,
    %c0_255 = arith.constant 0 : index
    %c27_256 = arith.constant 27 : index
    %c0_257 = arith.constant 0 : index
    %265 = vector.load %arg12[%c0_255, %c27_256, %c0_257] : memref<2x112x128xf32, #tpu.memory_space<vmem>>, vector<1x80x128xf32>
    %266 = vector.shape_cast %265 : vector<1x80x128xf32> to vector<80x128xf32>
    %267 = arith.truncf %266 : vector<80x128xf32> to vector<80x128xbf16>
    %c0_258 = arith.constant 0 : index
    %c1024 = arith.constant 1024 : index
    %268 = vector.load %arg15[%c0_258, %c1024] : memref<160x1152xbf16, #tpu.memory_space<vmem>>, vector<80x128xbf16>
    tpu.vector_store %arg15[%c0_258, %c1024], %267 {strides = array<i32>} : memref<160x1152xbf16, #tpu.memory_space<vmem>>, vector<80x128xbf16>,
    %c1_259 = arith.constant 1 : index
    %c5_260 = arith.constant 5 : index
    %c0_261 = arith.constant 0 : index
    %269 = vector.load %arg12[%c1_259, %c5_260, %c0_261] : memref<2x112x128xf32, #tpu.memory_space<vmem>>, vector<1x80x128xf32>
    %270 = vector.shape_cast %269 : vector<1x80x128xf32> to vector<80x128xf32>
    %271 = arith.truncf %270 : vector<80x128xf32> to vector<80x128xbf16>
    %c80_262 = arith.constant 80 : index
    %c0_263 = arith.constant 0 : index
    %272 = vector.load %arg15[%c80_262, %c0_263] : memref<160x1152xbf16, #tpu.memory_space<vmem>>, vector<80x128xbf16>
    tpu.vector_store %arg15[%c80_262, %c0_263], %271 {strides = array<i32>} : memref<160x1152xbf16, #tpu.memory_space<vmem>>, vector<80x128xbf16>,
    %c1_264 = arith.constant 1 : index
    %c6_265 = arith.constant 6 : index
    %c0_266 = arith.constant 0 : index
    %273 = vector.load %arg12[%c1_264, %c6_265, %c0_266] : memref<2x112x128xf32, #tpu.memory_space<vmem>>, vector<1x80x128xf32>
    %274 = vector.shape_cast %273 : vector<1x80x128xf32> to vector<80x128xf32>
    %275 = arith.truncf %274 : vector<80x128xf32> to vector<80x128xbf16>
    %c80_267 = arith.constant 80 : index
    %c128_268 = arith.constant 128 : index
    %276 = vector.load %arg15[%c80_267, %c128_268] : memref<160x1152xbf16, #tpu.memory_space<vmem>>, vector<80x128xbf16>
    tpu.vector_store %arg15[%c80_267, %c128_268], %275 {strides = array<i32>} : memref<160x1152xbf16, #tpu.memory_space<vmem>>, vector<80x128xbf16>,
    %c1_269 = arith.constant 1 : index
    %c7_270 = arith.constant 7 : index
    %c0_271 = arith.constant 0 : index
    %277 = vector.load %arg12[%c1_269, %c7_270, %c0_271] : memref<2x112x128xf32, #tpu.memory_space<vmem>>, vector<1x80x128xf32>
    %278 = vector.shape_cast %277 : vector<1x80x128xf32> to vector<80x128xf32>
    %279 = arith.truncf %278 : vector<80x128xf32> to vector<80x128xbf16>
    %c80_272 = arith.constant 80 : index
    %c256_273 = arith.constant 256 : index
    %280 = vector.load %arg15[%c80_272, %c256_273] : memref<160x1152xbf16, #tpu.memory_space<vmem>>, vector<80x128xbf16>
    tpu.vector_store %arg15[%c80_272, %c256_273], %279 {strides = array<i32>} : memref<160x1152xbf16, #tpu.memory_space<vmem>>, vector<80x128xbf16>,
    %c1_274 = arith.constant 1 : index
    %c15_275 = arith.constant 15 : index
    %c0_276 = arith.constant 0 : index
    %281 = vector.load %arg12[%c1_274, %c15_275, %c0_276] : memref<2x112x128xf32, #tpu.memory_space<vmem>>, vector<1x80x128xf32>
    %282 = vector.shape_cast %281 : vector<1x80x128xf32> to vector<80x128xf32>
    %283 = arith.truncf %282 : vector<80x128xf32> to vector<80x128xbf16>
    %c80_277 = arith.constant 80 : index
    %c384_278 = arith.constant 384 : index
    %284 = vector.load %arg15[%c80_277, %c384_278] : memref<160x1152xbf16, #tpu.memory_space<vmem>>, vector<80x128xbf16>
    tpu.vector_store %arg15[%c80_277, %c384_278], %283 {strides = array<i32>} : memref<160x1152xbf16, #tpu.memory_space<vmem>>, vector<80x128xbf16>,
    %c1_279 = arith.constant 1 : index
    %c16_280 = arith.constant 16 : index
    %c0_281 = arith.constant 0 : index
    %285 = vector.load %arg12[%c1_279, %c16_280, %c0_281] : memref<2x112x128xf32, #tpu.memory_space<vmem>>, vector<1x80x128xf32>
    %286 = vector.shape_cast %285 : vector<1x80x128xf32> to vector<80x128xf32>
    %287 = arith.truncf %286 : vector<80x128xf32> to vector<80x128xbf16>
    %c80_282 = arith.constant 80 : index
    %c512_283 = arith.constant 512 : index
    %288 = vector.load %arg15[%c80_282, %c512_283] : memref<160x1152xbf16, #tpu.memory_space<vmem>>, vector<80x128xbf16>
    tpu.vector_store %arg15[%c80_282, %c512_283], %287 {strides = array<i32>} : memref<160x1152xbf16, #tpu.memory_space<vmem>>, vector<80x128xbf16>,
    %c1_284 = arith.constant 1 : index
    %c17_285 = arith.constant 17 : index
    %c0_286 = arith.constant 0 : index
    %289 = vector.load %arg12[%c1_284, %c17_285, %c0_286] : memref<2x112x128xf32, #tpu.memory_space<vmem>>, vector<1x80x128xf32>
    %290 = vector.shape_cast %289 : vector<1x80x128xf32> to vector<80x128xf32>
    %291 = arith.truncf %290 : vector<80x128xf32> to vector<80x128xbf16>
    %c80_287 = arith.constant 80 : index
    %c640_288 = arith.constant 640 : index
    %292 = vector.load %arg15[%c80_287, %c640_288] : memref<160x1152xbf16, #tpu.memory_space<vmem>>, vector<80x128xbf16>
    tpu.vector_store %arg15[%c80_287, %c640_288], %291 {strides = array<i32>} : memref<160x1152xbf16, #tpu.memory_space<vmem>>, vector<80x128xbf16>,
    %c1_289 = arith.constant 1 : index
    %c25_290 = arith.constant 25 : index
    %c0_291 = arith.constant 0 : index
    %293 = vector.load %arg12[%c1_289, %c25_290, %c0_291] : memref<2x112x128xf32, #tpu.memory_space<vmem>>, vector<1x80x128xf32>
    %294 = vector.shape_cast %293 : vector<1x80x128xf32> to vector<80x128xf32>
    %295 = arith.truncf %294 : vector<80x128xf32> to vector<80x128xbf16>
    %c80_292 = arith.constant 80 : index
    %c768_293 = arith.constant 768 : index
    %296 = vector.load %arg15[%c80_292, %c768_293] : memref<160x1152xbf16, #tpu.memory_space<vmem>>, vector<80x128xbf16>
    tpu.vector_store %arg15[%c80_292, %c768_293], %295 {strides = array<i32>} : memref<160x1152xbf16, #tpu.memory_space<vmem>>, vector<80x128xbf16>,
    %c1_294 = arith.constant 1 : index
    %c26_295 = arith.constant 26 : index
    %c0_296 = arith.constant 0 : index
    %297 = vector.load %arg12[%c1_294, %c26_295, %c0_296] : memref<2x112x128xf32, #tpu.memory_space<vmem>>, vector<1x80x128xf32>
    %298 = vector.shape_cast %297 : vector<1x80x128xf32> to vector<80x128xf32>
    %299 = arith.truncf %298 : vector<80x128xf32> to vector<80x128xbf16>
    %c80_297 = arith.constant 80 : index
    %c896_298 = arith.constant 896 : index
    %300 = vector.load %arg15[%c80_297, %c896_298] : memref<160x1152xbf16, #tpu.memory_space<vmem>>, vector<80x128xbf16>
    tpu.vector_store %arg15[%c80_297, %c896_298], %299 {strides = array<i32>} : memref<160x1152xbf16, #tpu.memory_space<vmem>>, vector<80x128xbf16>,
    %c1_299 = arith.constant 1 : index
    %c27_300 = arith.constant 27 : index
    %c0_301 = arith.constant 0 : index
    %301 = vector.load %arg12[%c1_299, %c27_300, %c0_301] : memref<2x112x128xf32, #tpu.memory_space<vmem>>, vector<1x80x128xf32>
    %302 = vector.shape_cast %301 : vector<1x80x128xf32> to vector<80x128xf32>
    %303 = arith.truncf %302 : vector<80x128xf32> to vector<80x128xbf16>
    %c80_302 = arith.constant 80 : index
    %c1024_303 = arith.constant 1024 : index
    %304 = vector.load %arg15[%c80_302, %c1024_303] : memref<160x1152xbf16, #tpu.memory_space<vmem>>, vector<80x128xbf16>
    tpu.vector_store %arg15[%c80_302, %c1024_303], %303 {strides = array<i32>} : memref<160x1152xbf16, #tpu.memory_space<vmem>>, vector<80x128xbf16>,
    %c0_304 = arith.constant 0 : index
    %c0_305 = arith.constant 0 : index
    %305 = vector.load %arg15[%c0_304, %c0_305] : memref<160x1152xbf16, #tpu.memory_space<vmem>>, vector<160x1152xbf16>
    %c0_306 = arith.constant 0 : index
    %c0_307 = arith.constant 0 : index
    %306 = vector.load %arg6[%c0_306, %c0_307] : memref<1152x256xbf16, #tpu.memory_space<vmem>>, vector<1152x256xbf16>
    %cst_308 = arith.constant dense<0.000000e+00> : vector<160x256xf32>
    %307 = tpu.matmul %305, %306, %cst_308 {dimension_numbers = #tpu.dot_dimension_numbers<[1], [0], [0], [1], [0, 0, 1, 1], [], []>} : vector<160x1152xbf16>, vector<1152x256xbf16>, vector<160x256xf32> -> vector<160x256xf32>
    %c0_309 = arith.constant 0 : index
    %c0_310 = arith.constant 0 : index
    %308 = vector.load %arg7[%c0_309, %c0_310] : memref<1x256xf32, #tpu.memory_space<vmem>>, vector<1x256xf32>
    %309 = vector.broadcast %308 : vector<1x256xf32> to vector<160x256xf32>
    %310 = arith.addf %307, %309 : vector<160x256xf32>
    %cst_311 = arith.constant 0.000000e+00 : f32
    %311 = vector.broadcast %cst_311 : f32 to vector<160x256xf32>
    %312 = arith.maximumf %310, %311 : vector<160x256xf32>
    %313 = vector.broadcast %20 : vector<160x1xf32> to vector<160x256xf32>
    %314 = arith.mulf %312, %313 : vector<160x256xf32>
    %315 = vector.extract_strided_slice %314 {offsets = [0, 0], sizes = [80, 256], strides = [1, 1]} : vector<160x256xf32> to vector<80x256xf32>
    %cst_312 = arith.constant dense<0.000000e+00> : vector<256xf32>
    %316 = vector.multi_reduction <add>, %315, %cst_312 [0] : vector<80x256xf32> to vector<256xf32>
    %317 = vector.shape_cast %316 : vector<256xf32> to vector<1x256xf32>
    %318 = vector.extract_strided_slice %314 {offsets = [80, 0], sizes = [80, 256], strides = [1, 1]} : vector<160x256xf32> to vector<80x256xf32>
    %cst_313 = arith.constant dense<0.000000e+00> : vector<256xf32>
    %319 = vector.multi_reduction <add>, %318, %cst_313 [0] : vector<80x256xf32> to vector<256xf32>
    %320 = vector.shape_cast %319 : vector<256xf32> to vector<1x256xf32>
    %321 = tpu.concatenate %317, %320 in 0 : vector<1x256xf32>, vector<1x256xf32> -> vector<2x256xf32>
    %c0_314 = arith.constant 0 : index
    %c0_315 = arith.constant 0 : index
    %322 = vector.load %arg8[%c0_314, %c0_315] : memref<1x256xf32, #tpu.memory_space<vmem>>, vector<1x256xf32>
    %323 = vector.broadcast %322 : vector<1x256xf32> to vector<2x256xf32>
    %324 = arith.mulf %321, %323 : vector<2x256xf32>
    %cst_316 = arith.constant dense<0.000000e+00> : vector<2xf32>
    %325 = vector.multi_reduction <add>, %324, %cst_316 [1] : vector<2x256xf32> to vector<2xf32>
    %326 = vector.shape_cast %325 : vector<2xf32> to vector<2x1xf32>
    %cst_317 = arith.constant 1.562500e-02 : f32
    %327 = vector.broadcast %cst_317 : f32 to vector<2x1xf32>
    %328 = arith.mulf %326, %327 : vector<2x1xf32>
    %c0_318 = arith.constant 0 : index
    %c0_319 = arith.constant 0 : index
    %329 = vector.load %arg9[%c0_318, %c0_319] : memref<1x1xf32, #tpu.memory_space<vmem>>, vector<1x1xf32>
    %330 = vector.broadcast %329 : vector<1x1xf32> to vector<2x1xf32>
    %331 = arith.addf %328, %330 : vector<2x1xf32>
    %c0_320 = arith.constant 0 : index
    %c0_321 = arith.constant 0 : index
    %c0_322 = arith.constant 0 : index
    %332 = vector.load %arg10[%c0_320, %c0_321, %c0_322] : memref<1x2x1xf32, #tpu.memory_space<vmem>>, vector<1x2x1xf32>
    %333 = vector.shape_cast %332 : vector<1x2x1xf32> to vector<2x1xf32>
    %334 = vector.shape_cast %331 : vector<2x1xf32> to vector<1x2x1xf32>
    tpu.vector_store %arg10[%c0_320, %c0_321, %c0_322], %334 {strides = array<i32>} : memref<1x2x1xf32, #tpu.memory_space<vmem>>, vector<1x2x1xf32>,
    return
  }
  func.func @transform_0(%arg0: i32) -> (i32, i32, i32) {
    %c0_i32 = arith.constant 0 : i32
    %c0_i32_0 = arith.constant 0 : i32
    %c0_i32_1 = arith.constant 0 : i32
    return %arg0, %c0_i32, %c0_i32_0 : i32, i32, i32
  }
  func.func @transform_1(%arg0: i32) -> (i32, i32) {
    %c0_i32 = arith.constant 0 : i32
    %c0_i32_0 = arith.constant 0 : i32
    %c0_i32_1 = arith.constant 0 : i32
    return %c0_i32, %c0_i32_0 : i32, i32
  }
  func.func @transform_2(%arg0: i32) -> (i32, i32) {
    %c0_i32 = arith.constant 0 : i32
    %c0_i32_0 = arith.constant 0 : i32
    %c0_i32_1 = arith.constant 0 : i32
    return %c0_i32, %c0_i32_0 : i32, i32
  }
  func.func @transform_3(%arg0: i32) -> (i32, i32) {
    %c0_i32 = arith.constant 0 : i32
    %c0_i32_0 = arith.constant 0 : i32
    %c0_i32_1 = arith.constant 0 : i32
    return %c0_i32, %c0_i32_0 : i32, i32
  }
  func.func @transform_4(%arg0: i32) -> (i32, i32) {
    %c0_i32 = arith.constant 0 : i32
    %c0_i32_0 = arith.constant 0 : i32
    %c0_i32_1 = arith.constant 0 : i32
    return %c0_i32, %c0_i32_0 : i32, i32
  }
  func.func @transform_5(%arg0: i32) -> (i32, i32) {
    %c0_i32 = arith.constant 0 : i32
    %c0_i32_0 = arith.constant 0 : i32
    %c0_i32_1 = arith.constant 0 : i32
    return %c0_i32, %c0_i32_0 : i32, i32
  }
  func.func @transform_6(%arg0: i32) -> (i32, i32) {
    %c0_i32 = arith.constant 0 : i32
    %c0_i32_0 = arith.constant 0 : i32
    %c0_i32_1 = arith.constant 0 : i32
    return %c0_i32, %c0_i32_0 : i32, i32
  }
  func.func @transform_7(%arg0: i32) -> (i32, i32) {
    %c0_i32 = arith.constant 0 : i32
    %c0_i32_0 = arith.constant 0 : i32
    %c0_i32_1 = arith.constant 0 : i32
    return %c0_i32, %c0_i32_0 : i32, i32
  }
  func.func @transform_8(%arg0: i32) -> (i32, i32) {
    %c0_i32 = arith.constant 0 : i32
    %c0_i32_0 = arith.constant 0 : i32
    %c0_i32_1 = arith.constant 0 : i32
    return %c0_i32, %c0_i32_0 : i32, i32
  }
  func.func @transform_9(%arg0: i32) -> (i32, i32, i32) {
    %c0_i32 = arith.constant 0 : i32
    %c0_i32_0 = arith.constant 0 : i32
    %c0_i32_1 = arith.constant 0 : i32
    return %arg0, %c0_i32, %c0_i32_0 : i32, i32, i32
  }
}

</mosaic_0001>

<llo_original>
// kernel: _lambda_.1
$region0: #{_lambda_.1}
  #allocation0 [shape = 'u32[]', space=smem, size = 0x4, offset = 0x4, fixed_abs, tag = 'smem constant byte address 0x4 - core index']
  #allocation1 [shape = 'u32[72,128]{1,0:T(1,128)}', space=vmem, size = 0x9000, scoped, tag = 'internal scratch']
  #allocation2 [shape = 'f32[2,112,64]{2,1,0:T(8,128)}', space=vmem, size = 0x1c000, scoped, tag = 'scratch operand']
  #allocation3 [shape = 'f32[2,112,128]{2,1,0:T(8,128)}', space=vmem, size = 0x1c000, scoped, tag = 'scratch operand']
  #allocation4 [shape = 'bf16[160,144]{1,0:T(8,128)(2,1)}', space=vmem, size = 0x14000, scoped, tag = 'scratch operand']
  #allocation5 [shape = 'bf16[160,576]{1,0:T(8,128)(2,1)}', space=vmem, size = 0x32000, scoped, tag = 'scratch operand']
  #allocation6 [shape = 'bf16[160,1152]{1,0:T(8,128)(2,1)}', space=vmem, size = 0x5a000, scoped, tag = 'scratch operand']
  #allocation7 [shape = 'f32[1,1]{1,0:T(1,128)S(1)}', space=vmem, size = 0x200, scoped, tag = 'scoped memory for _lambda_.1']
  %s0 = inlined_call_operand.vmem [shape: f32[4,112,16], index: 0, kind: input, shape index: {}]
  %s1 = inlined_call_operand.vmem [shape: bf16[144,64], index: 1, kind: input, shape index: {}]
  %s2 = inlined_call_operand.vmem [shape: f32[1,64], index: 2, kind: input, shape index: {}]
  %s3 = inlined_call_operand.vmem [shape: bf16[576,128], index: 3, kind: input, shape index: {}]
  %s4 = inlined_call_operand.vmem [shape: f32[1,128], index: 4, kind: input, shape index: {}]
  %s5 = inlined_call_operand.vmem [shape: bf16[1152,256], index: 5, kind: input, shape index: {}]
  %s6 = inlined_call_operand.vmem [shape: f32[1,256], index: 6, kind: input, shape index: {}]
  %s7 = inlined_call_operand.vmem [shape: f32[1,256], index: 7, kind: input, shape index: {}]
  %s8 = inlined_call_operand.<no memory space> [shape: f32[1,1], index: 8, kind: input, shape index: {}]
  %s9 = inlined_call_operand.vmem [shape: f32[2,2,1], index: 9, kind: output, shape index: {}]
  %s10 = sld [smem:[#allocation0]]
  $region69: #{_lambda_.1} parent=0
    _
  %s12 = ssub.s32 1, %s10
  %s13 = scalar_select 0, %s12, %s10
  %v14 = vstv %s8
  %15 = vst [vmem:[#allocation7] sm:$0x1] %v14
  loop: start=0, step=1, limit=4
  $region2: #{_lambda_.1} parent=0 // loop_pre_header
    _
  $region3: #{_lambda_.1} parent=0 // loop_header
    %s17 = sphi 0, %s21
    %p18 = scmp.ge.s32.totalorder %s17, 4
    %s27 = sphi 0, %s29
    %s30 = sphi 0, %s27
    %s31 = sphi 0, %s30
    %s47 = sphi 0, %s31
    %s51 = sphi 0, %s51
    %s53 = sphi 0, %s51
    %s54 = sphi 0, %s53
    %s68 = sphi 0, %s54
    %s72 = sphi 0, %s72
    %s74 = sphi 0, %s72
    %s75 = sphi 0, %s74
    %s89 = sphi 0, %s75
    %s93 = sphi 0, %s93
    %s95 = sphi 0, %s93
    %s96 = sphi 0, %s95
    %s110 = sphi 0, %s96
    %s114 = sphi 0, %s114
    %s116 = sphi 0, %s114
    %s117 = sphi 0, %s116
    %s131 = sphi 0, %s117
    %s135 = sphi 0, %s135
    %s137 = sphi 0, %s135
    %s138 = sphi 0, %s137
    %s152 = sphi 0, %s138
    %s156 = sphi 0, %s156
    %s158 = sphi 0, %s156
    %s159 = sphi 0, %s158
    %s173 = sphi 0, %s159
    %s177 = sphi 0, %s177
    %s179 = sphi 0, %s177
    %s180 = sphi 0, %s179
    %s194 = sphi 0, %s180
    %s198 = sphi 0, %s198
    %s200 = sphi 0, %s198
    %s201 = sphi 0, %s200
    %s215 = sphi 0, %s201
    %s221 = sphi 0, %s223
    %s224 = sphi 0, %s221
    %s225 = sphi 0, %s224
    %s241 = sphi 0, %s225
  $region4: #{_lambda_.1} parent=0 // loop_header_branch
    %20 = sbr.rel (%p18) target = $region8
  $region5: #{_lambda_.1} parent=0 // loop_body
    %s22 = ssub.s32 %s17, 1
    %s23 = ssub.s32 %s17, 2
    %s24 = sadd.s32 %s17, 1
    %s25 = ssub.s32 %s17, %s24
    %p26 = scmp.eq.s32.totalorder %s25, 0
    %s28 = sadd.s32 %s27, 1
    %s29 = scalar_select %p26, %s27, %s28
    %p32 = pneg %p26
    %p33 = scmp.eq.s32.totalorder %s17, 1
    %p34 = por %p32, %p33
    %p35 = scmp.ne.s32.totalorder %s27, %s30
    %p36 = scmp.eq.s32.totalorder %s17, 0
    %p37 = por %p35, %p36
    %p38 = scmp.ne.s32.totalorder %s27, %s30
    %p39 = scmp.eq.s32.totalorder %s22, 1
    %p40 = por %p38, %p39
    %p41 = scmp.ne.s32.totalorder %s30, %s31
    %p42 = scmp.eq.s32.totalorder %s22, 0
    %p43 = por %p41, %p42
    %p44 = scmp.ne.s32.totalorder %s30, %s31
    %p45 = scmp.eq.s32.totalorder %s23, 1
    %p46 = por %p44, %p45
    %p48 = scmp.ne.s32.totalorder %s31, %s47
    %p49 = scmp.eq.s32.totalorder %s23, 0
    %p50 = por %p48, %p49
    %s52 = sadd.s32 %s51, 1
    %p55 = scmp.eq.s32.totalorder %s17, 1
    %p56 = scmp.ne.s32.totalorder %s51, %s53
    %p57 = scmp.eq.s32.totalorder %s17, 0
    %p58 = por %p56, %p57
    %p59 = scmp.ne.s32.totalorder %s51, %s53
    %p60 = scmp.eq.s32.totalorder %s22, 1
    %p61 = por %p59, %p60
    %p62 = scmp.ne.s32.totalorder %s53, %s54
    %p63 = scmp.eq.s32.totalorder %s22, 0
    %p64 = por %p62, %p63
    %p65 = scmp.ne.s32.totalorder %s53, %s54
    %p66 = scmp.eq.s32.totalorder %s23, 1
    %p67 = por %p65, %p66
    %p69 = scmp.ne.s32.totalorder %s54, %s68
    %p70 = scmp.eq.s32.totalorder %s23, 0
    %p71 = por %p69, %p70
    %s73 = sadd.s32 %s72, 1
    %p76 = scmp.eq.s32.totalorder %s17, 1
    %p77 = scmp.ne.s32.totalorder %s72, %s74
    %p78 = scmp.eq.s32.totalorder %s17, 0
    %p79 = por %p77, %p78
    %p80 = scmp.ne.s32.totalorder %s72, %s74
    %p81 = scmp.eq.s32.totalorder %s22, 1
    %p82 = por %p80, %p81
    %p83 = scmp.ne.s32.totalorder %s74, %s75
    %p84 = scmp.eq.s32.totalorder %s22, 0
    %p85 = por %p83, %p84
    %p86 = scmp.ne.s32.totalorder %s74, %s75
    %p87 = scmp.eq.s32.totalorder %s23, 1
    %p88 = por %p86, %p87
    %p90 = scmp.ne.s32.totalorder %s75, %s89
    %p91 = scmp.eq.s32.totalorder %s23, 0
    %p92 = por %p90, %p91
    %s94 = sadd.s32 %s93, 1
    %p97 = scmp.eq.s32.totalorder %s17, 1
    %p98 = scmp.ne.s32.totalorder %s93, %s95
    %p99 = scmp.eq.s32.totalorder %s17, 0
    %p100 = por %p98, %p99
    %p101 = scmp.ne.s32.totalorder %s93, %s95
    %p102 = scmp.eq.s32.totalorder %s22, 1
    %p103 = por %p101, %p102
    %p104 = scmp.ne.s32.totalorder %s95, %s96
    %p105 = scmp.eq.s32.totalorder %s22, 0
    %p106 = por %p104, %p105
    %p107 = scmp.ne.s32.totalorder %s95, %s96
    %p108 = scmp.eq.s32.totalorder %s23, 1
    %p109 = por %p107, %p108
    %p111 = scmp.ne.s32.totalorder %s96, %s110
    %p112 = scmp.eq.s32.totalorder %s23, 0
    %p113 = por %p111, %p112
    %s115 = sadd.s32 %s114, 1
    %p118 = scmp.eq.s32.totalorder %s17, 1
    %p119 = scmp.ne.s32.totalorder %s114, %s116
    %p120 = scmp.eq.s32.totalorder %s17, 0
    %p121 = por %p119, %p120
    %p122 = scmp.ne.s32.totalorder %s114, %s116
    %p123 = scmp.eq.s32.totalorder %s22, 1
    %p124 = por %p122, %p123
    %p125 = scmp.ne.s32.totalorder %s116, %s117
    %p126 = scmp.eq.s32.totalorder %s22, 0
    %p127 = por %p125, %p126
    %p128 = scmp.ne.s32.totalorder %s116, %s117
    %p129 = scmp.eq.s32.totalorder %s23, 1
    %p130 = por %p128, %p129
    %p132 = scmp.ne.s32.totalorder %s117, %s131
    %p133 = scmp.eq.s32.totalorder %s23, 0
    %p134 = por %p132, %p133
    %s136 = sadd.s32 %s135, 1
    %p139 = scmp.eq.s32.totalorder %s17, 1
    %p140 = scmp.ne.s32.totalorder %s135, %s137
    %p141 = scmp.eq.s32.totalorder %s17, 0
    %p142 = por %p140, %p141
    %p143 = scmp.ne.s32.totalorder %s135, %s137
    %p144 = scmp.eq.s32.totalorder %s22, 1
    %p145 = por %p143, %p144
    %p146 = scmp.ne.s32.totalorder %s137, %s138
    %p147 = scmp.eq.s32.totalorder %s22, 0
    %p148 = por %p146, %p147
    %p149 = scmp.ne.s32.totalorder %s137, %s138
    %p150 = scmp.eq.s32.totalorder %s23, 1
    %p151 = por %p149, %p150
    %p153 = scmp.ne.s32.totalorder %s138, %s152
    %p154 = scmp.eq.s32.totalorder %s23, 0
    %p155 = por %p153, %p154
    %s157 = sadd.s32 %s156, 1
    %p160 = scmp.eq.s32.totalorder %s17, 1
    %p161 = scmp.ne.s32.totalorder %s156, %s158
    %p162 = scmp.eq.s32.totalorder %s17, 0
    %p163 = por %p161, %p162
    %p164 = scmp.ne.s32.totalorder %s156, %s158
    %p165 = scmp.eq.s32.totalorder %s22, 1
    %p166 = por %p164, %p165
    %p167 = scmp.ne.s32.totalorder %s158, %s159
    %p168 = scmp.eq.s32.totalorder %s22, 0
    %p169 = por %p167, %p168
    %p170 = scmp.ne.s32.totalorder %s158, %s159
    %p171 = scmp.eq.s32.totalorder %s23, 1
    %p172 = por %p170, %p171
    %p174 = scmp.ne.s32.totalorder %s159, %s173
    %p175 = scmp.eq.s32.totalorder %s23, 0
    %p176 = por %p174, %p175
    %s178 = sadd.s32 %s177, 1
    %p181 = scmp.eq.s32.totalorder %s17, 1
    %p182 = scmp.ne.s32.totalorder %s177, %s179
    %p183 = scmp.eq.s32.totalorder %s17, 0
    %p184 = por %p182, %p183
    %p185 = scmp.ne.s32.totalorder %s177, %s179
    %p186 = scmp.eq.s32.totalorder %s22, 1
    %p187 = por %p185, %p186
    %p188 = scmp.ne.s32.totalorder %s179, %s180
    %p189 = scmp.eq.s32.totalorder %s22, 0
    %p190 = por %p188, %p189
    %p191 = scmp.ne.s32.totalorder %s179, %s180
    %p192 = scmp.eq.s32.totalorder %s23, 1
    %p193 = por %p191, %p192
    %p195 = scmp.ne.s32.totalorder %s180, %s194
    %p196 = scmp.eq.s32.totalorder %s23, 0
    %p197 = por %p195, %p196
    %s199 = sadd.s32 %s198, 1
    %p202 = scmp.eq.s32.totalorder %s17, 1
    %p203 = scmp.ne.s32.totalorder %s198, %s200
    %p204 = scmp.eq.s32.totalorder %s17, 0
    %p205 = por %p203, %p204
    %p206 = scmp.ne.s32.totalorder %s198, %s200
    %p207 = scmp.eq.s32.totalorder %s22, 1
    %p208 = por %p206, %p207
    %p209 = scmp.ne.s32.totalorder %s200, %s201
    %p210 = scmp.eq.s32.totalorder %s22, 0
    %p211 = por %p209, %p210
    %p212 = scmp.ne.s32.totalorder %s200, %s201
    %p213 = scmp.eq.s32.totalorder %s23, 1
    %p214 = por %p212, %p213
    %p216 = scmp.ne.s32.totalorder %s201, %s215
    %p217 = scmp.eq.s32.totalorder %s23, 0
    %p218 = por %p216, %p217
    %s219 = ssub.s32 %s17, %s24
    %p220 = scmp.eq.s32.totalorder %s219, 0
    %s222 = sadd.s32 %s221, 1
    %s223 = scalar_select %p220, %s221, %s222
    %p226 = pneg %p220
    %p227 = scmp.eq.s32.totalorder %s17, 1
    %p228 = por %p226, %p227
    %p229 = scmp.ne.s32.totalorder %s221, %s224
    %p230 = scmp.eq.s32.totalorder %s17, 0
    %p231 = por %p229, %p230
    %p232 = scmp.ne.s32.totalorder %s221, %s224
    %p233 = scmp.eq.s32.totalorder %s22, 1
    %p234 = por %p232, %p233
    %p235 = scmp.ne.s32.totalorder %s224, %s225
    %p236 = scmp.eq.s32.totalorder %s22, 0
    %p237 = por %p235, %p236
    %p238 = scmp.ne.s32.totalorder %s224, %s225
    %p239 = scmp.eq.s32.totalorder %s23, 1
    %p240 = por %p238, %p239
    %p242 = scmp.ne.s32.totalorder %s225, %s241
    %p243 = scmp.eq.s32.totalorder %s23, 0
    %p244 = por %p242, %p243
    %p245 = scmp.le.s32.totalorder 1, %s17
    %p246 = scmp.lt.s32.totalorder %s17, 3
    %p247 = pnand %p245, %p246
    %p248 = pneg %p247
    // Predicated region
    $region9: #{_lambda_.1} parent=5 // pred_check
      _
    $region10: #{_lambda_.1} parent=5 // pred_check_branch
      %250 = sbr.rel (%p247) target = $region12
    $region11: #{_lambda_.1} parent=5 // pred_region
      %s251 = ssub.s32 %s17, 1
      // Predicated region
      $region13: #{_lambda_.1} parent=11 // pred_check
        %p252 = pneg %p64
      $region14: #{_lambda_.1} parent=11 // pred_check_branch
        %254 = sbr.rel (%p252) target = $region16
      $region15: #{_lambda_.1} parent=11 // pred_region
        _
      $region16: #{_lambda_.1} parent=11 // pred_fallthru
        _
      // Predicated region
      $region17: #{_lambda_.1} parent=11 // pred_check
        %p255 = pneg %p85
      $region18: #{_lambda_.1} parent=11 // pred_check_branch
        %257 = sbr.rel (%p255) target = $region20
      $region19: #{_lambda_.1} parent=11 // pred_region
        _
      $region20: #{_lambda_.1} parent=11 // pred_fallthru
        _
      // Predicated region
      $region21: #{_lambda_.1} parent=11 // pred_check
        %p258 = pneg %p106
      $region22: #{_lambda_.1} parent=11 // pred_check_branch
        %260 = sbr.rel (%p258) target = $region24
      $region23: #{_lambda_.1} parent=11 // pred_region
        _
      $region24: #{_lambda_.1} parent=11 // pred_fallthru
        _
      // Predicated region
      $region25: #{_lambda_.1} parent=11 // pred_check
        %p261 = pneg %p127
      $region26: #{_lambda_.1} parent=11 // pred_check_branch
        %263 = sbr.rel (%p261) target = $region28
      $region27: #{_lambda_.1} parent=11 // pred_region
        _
      $region28: #{_lambda_.1} parent=11 // pred_fallthru
        _
      // Predicated region
      $region29: #{_lambda_.1} parent=11 // pred_check
        %p264 = pneg %p148
      $region30: #{_lambda_.1} parent=11 // pred_check_branch
        %266 = sbr.rel (%p264) target = $region32
      $region31: #{_lambda_.1} parent=11 // pred_region
        _
      $region32: #{_lambda_.1} parent=11 // pred_fallthru
        _
      // Predicated region
      $region33: #{_lambda_.1} parent=11 // pred_check
        %p267 = pneg %p169
      $region34: #{_lambda_.1} parent=11 // pred_check_branch
        %269 = sbr.rel (%p267) target = $region36
      $region35: #{_lambda_.1} parent=11 // pred_region
        _
      $region36: #{_lambda_.1} parent=11 // pred_fallthru
        _
      // Predicated region
      $region37: #{_lambda_.1} parent=11 // pred_check
        %p270 = pneg %p190
      $region38: #{_lambda_.1} parent=11 // pred_check_branch
        %272 = sbr.rel (%p270) target = $region40
      $region39: #{_lambda_.1} parent=11 // pred_region
        _
      $region40: #{_lambda_.1} parent=11 // pred_fallthru
        _
      // Predicated region
      $region41: #{_lambda_.1} parent=11 // pred_check
        %p273 = pneg %p211
      $region42: #{_lambda_.1} parent=11 // pred_check_branch
        %275 = sbr.rel (%p273) target = $region44
      $region43: #{_lambda_.1} parent=11 // pred_region
        _
      $region44: #{_lambda_.1} parent=11 // pred_fallthru
        _
    $region12: #{_lambda_.1} parent=5 // pred_fallthru
      _
    %p276 = scmp.lt.s32.totalorder %s17, 2
    // Predicated region
    $region45: #{_lambda_.1} parent=5 // pred_check
      %p277 = pneg %p276
    $region46: #{_lambda_.1} parent=5 // pred_check_branch
      %279 = sbr.rel (%p277) target = $region48
    $region47: #{_lambda_.1} parent=5 // pred_region
      // Predicated region
      $region49: #{_lambda_.1} parent=47 // pred_check
        %p280 = pneg %p37
      $region50: #{_lambda_.1} parent=47 // pred_check_branch
        %282 = sbr.rel (%p280) target = $region52
      $region51: #{_lambda_.1} parent=47 // pred_region
        %s283 = smul.u32 2, %s17
        %p284 = scmp.lt.s32.totalorder %s283, 3
        %s285 = scalar_select %p284, %s283, 3
        %s286 = smul.addr %s285, 14
        %s287 = smul.addr %s286, 8
        %s288 = scalar_lea.vmem %s0, %s287
        %s289 = smul.u32 2, %s17
      $region52: #{_lambda_.1} parent=47 // pred_fallthru
        _
    $region48: #{_lambda_.1} parent=5 // pred_fallthru
      _
    %p290 = scmp.le.s32.totalorder 1, %s17
    %p291 = scmp.lt.s32.totalorder %s17, 3
    %p292 = pnand %p290, %p291
    %p293 = pneg %p292
    // Predicated region
    $region53: #{_lambda_.1} parent=5 // pred_check
      _
    $region54: #{_lambda_.1} parent=5 // pred_check_branch
      %295 = sbr.rel (%p292) target = $region56
    $region55: #{_lambda_.1} parent=5 // pred_region
      %s296 = ssub.s32 %s17, 1
      %s297 = smul.u32 2, %s22
      %p298 = scmp.lt.s32.totalorder %s297, 3
      %s299 = scalar_select %p298, %s297, 3
      %s300 = smul.addr %s299, 14
      %s301 = smul.addr %s300, 8
      %s302 = scalar_lea.vmem %s0, %s301
      %p303 = pneg %p43
      %p304 = pneg %p40
      %p305 = pneg %p64
      %p306 = pneg %p61
      %p307 = pneg %p85
      %p308 = pneg %p82
      %p309 = pneg %p106
      %p310 = pneg %p103
      %p311 = pneg %p127
      %p312 = pneg %p124
      %p313 = pneg %p148
      %p314 = pneg %p145
      %p315 = pneg %p169
      %p316 = pneg %p166
      %p317 = pneg %p190
      %p318 = pneg %p187
      %p319 = pneg %p211
      %p320 = pneg %p208
      %p321 = pneg %p237
      %p322 = pneg %p234
      %p323 = scmp.lt.s32.totalorder %s22, 1
      %s324 = scalar_select %p323, %s22, 1
      %s325 = smul.addr %s324, 2
      %s326 = scalar_lea.vmem %s9, %s325
      %s327 = smul.u32 2, %s22
      %p328 = scmp.lt.s32.totalorder %s327, 3
      %s329 = scalar_select %p328, %s327, 3
      %s330 = smul.addr %s329, 14
      %s331 = smul.addr %s330, 8
      %s332 = scalar_lea.vmem %s0, %s331
      %s333 = smul.u32 2, %s22
      %p334 = scmp.lt.s32.totalorder %s22, 1
      %s335 = scalar_select %p334, %s22, 1
      %s336 = smul.addr %s335, 2
      %s337 = scalar_lea.vmem %s9, %s336
      %v339 = vlaneseq
      %v340 = vshrl.u32 %v339, 7
      %v341 = vadd.s32 %v340, 8
      %v342 = vadd.s32 %v340, 16
      %v343 = vadd.s32 %v340, 24
      %v344 = vadd.s32 %v340, 32
      %v345 = vadd.s32 %v340, 40
      %v346 = vadd.s32 %v340, 48
      %v347 = vadd.s32 %v340, 56
      %v348 = vadd.s32 %v340, 64
      %v349 = vadd.s32 %v340, 72
      %v350 = vadd.s32 %v340, 80
      %v351 = vadd.s32 %v340, 88
      %v352 = vadd.s32 %v340, 96
      %v353 = vadd.s32 %v340, 104
      %v354 = vadd.s32 %v340, 112
      %v355 = vadd.s32 %v340, 120
      %v356 = vadd.s32 %v340, 128
      %v357 = vadd.s32 %v340, 136
      %v358 = vadd.s32 %v340, 144
      %v359 = vadd.s32 %v340, 152
      %vm360 = vcmp.lt.s32.totalorder %v340, 0
      %v361 = vsub.s32 0, %v340
      %v362 = vsel %vm360, %v361, %v340
      %v363 = vand.u32 %v362, 65535
      %v364 = vshrl.u32 %v362, 16
      %v366 = vmul.u32 %v363, 52429
      %v367 = vmul.u32 %v363, 52428
      %v368 = vmul.u32 %v364, 52429
      %v369 = vmul.u32 %v364, 52428
      %v370 = vshll.u32 %v367, 16
      %v371 = vshrl.u32 %v367, 16
      %v372 = vshll.u32 %v368, 16
      %v373 = vshrl.u32 %v368, 16
      %vm374 = vc.u32 %v366, %v370
      %v375 = vsel %vm374, 1, 0
      %v376 = vadd.s32 %v366, %v370
      %v377 = vadd.s32 %v369, %v375
      %vm378 = vc.u32 %v376, %v372
      %v379 = vsel %vm378, 1, 0
      %v380 = vadd.s32 %v376, %v372
      %v381 = vadd.s32 %v377, %v379
      %v382 = vadd.s32 %v381, %v371
      %v383 = vadd.s32 %v382, %v373
      %v384 = vshrl.u32 %v383, 3
      %v385 = vmul.u32 %v384, 10
      %v386 = vsub.s32 %v362, %v385
      %v387 = vsub.s32 0, %v386
      %v388 = vsel %vm360, %v387, %v386
      %vm389 = vcmp.lt.s32.totalorder %v341, 0
      %v390 = vsub.s32 0, %v341
      %v391 = vsel %vm389, %v390, %v341
      %v392 = vand.u32 %v391, 65535
      %v393 = vshrl.u32 %v391, 16
      %v395 = vmul.u32 %v392, 52429
      %v396 = vmul.u32 %v392, 52428
      %v397 = vmul.u32 %v393, 52429
      %v398 = vmul.u32 %v393, 52428
      %v399 = vshll.u32 %v396, 16
      %v400 = vshrl.u32 %v396, 16
      %v401 = vshll.u32 %v397, 16
      %v402 = vshrl.u32 %v397, 16
      %vm403 = vc.u32 %v395, %v399
      %v404 = vsel %vm403, 1, 0
      %v405 = vadd.s32 %v395, %v399
      %v406 = vadd.s32 %v398, %v404
      %vm407 = vc.u32 %v405, %v401
      %v408 = vsel %vm407, 1, 0
      %v409 = vadd.s32 %v405, %v401
      %v410 = vadd.s32 %v406, %v408
      %v411 = vadd.s32 %v410, %v400
      %v412 = vadd.s32 %v411, %v402
      %v413 = vshrl.u32 %v412, 3
      %v414 = vmul.u32 %v413, 10
      %v415 = vsub.s32 %v391, %v414
      %v416 = vsub.s32 0, %v415
      %v417 = vsel %vm389, %v416, %v415
      %vm418 = vcmp.lt.s32.totalorder %v342, 0
      %v419 = vsub.s32 0, %v342
      %v420 = vsel %vm418, %v419, %v342
      %v421 = vand.u32 %v420, 65535
      %v422 = vshrl.u32 %v420, 16
      %v424 = vmul.u32 %v421, 52429
      %v425 = vmul.u32 %v421, 52428
      %v426 = vmul.u32 %v422, 52429
      %v427 = vmul.u32 %v422, 52428
      %v428 = vshll.u32 %v425, 16
      %v429 = vshrl.u32 %v425, 16
      %v430 = vshll.u32 %v426, 16
      %v431 = vshrl.u32 %v426, 16
      %vm432 = vc.u32 %v424, %v428
      %v433 = vsel %vm432, 1, 0
      %v434 = vadd.s32 %v424, %v428
      %v435 = vadd.s32 %v427, %v433
      %vm436 = vc.u32 %v434, %v430
      %v437 = vsel %vm436, 1, 0
      %v438 = vadd.s32 %v434, %v430
      %v439 = vadd.s32 %v435, %v437
      %v440 = vadd.s32 %v439, %v429
      %v441 = vadd.s32 %v440, %v431
      %v442 = vshrl.u32 %v441, 3
      %v443 = vmul.u32 %v442, 10
      %v444 = vsub.s32 %v420, %v443
      %v445 = vsub.s32 0, %v444
      %v446 = vsel %vm418, %v445, %v444
      %vm447 = vcmp.lt.s32.totalorder %v343, 0
      %v448 = vsub.s32 0, %v343
      %v449 = vsel %vm447, %v448, %v343
      %v450 = vand.u32 %v449, 65535
      %v451 = vshrl.u32 %v449, 16
      %v453 = vmul.u32 %v450, 52429
      %v454 = vmul.u32 %v450, 52428
      %v455 = vmul.u32 %v451, 52429
      %v456 = vmul.u32 %v451, 52428
      %v457 = vshll.u32 %v454, 16
      %v458 = vshrl.u32 %v454, 16
      %v459 = vshll.u32 %v455, 16
      %v460 = vshrl.u32 %v455, 16
      %vm461 = vc.u32 %v453, %v457
      %v462 = vsel %vm461, 1, 0
      %v463 = vadd.s32 %v453, %v457
      %v464 = vadd.s32 %v456, %v462
      %vm465 = vc.u32 %v463, %v459
      %v466 = vsel %vm465, 1, 0
      %v467 = vadd.s32 %v463, %v459
      %v468 = vadd.s32 %v464, %v466
      %v469 = vadd.s32 %v468, %v458
      %v470 = vadd.s32 %v469, %v460
      %v471 = vshrl.u32 %v470, 3
      %v472 = vmul.u32 %v471, 10
      %v473 = vsub.s32 %v449, %v472
      %v474 = vsub.s32 0, %v473
      %v475 = vsel %vm447, %v474, %v473
      %vm476 = vcmp.lt.s32.totalorder %v344, 0
      %v477 = vsub.s32 0, %v344
      %v478 = vsel %vm476, %v477, %v344
      %v479 = vand.u32 %v478, 65535
      %v480 = vshrl.u32 %v478, 16
      %v482 = vmul.u32 %v479, 52429
      %v483 = vmul.u32 %v479, 52428
      %v484 = vmul.u32 %v480, 52429
      %v485 = vmul.u32 %v480, 52428
      %v486 = vshll.u32 %v483, 16
      %v487 = vshrl.u32 %v483, 16
      %v488 = vshll.u32 %v484, 16
      %v489 = vshrl.u32 %v484, 16
      %vm490 = vc.u32 %v482, %v486
      %v491 = vsel %vm490, 1, 0
      %v492 = vadd.s32 %v482, %v486
      %v493 = vadd.s32 %v485, %v491
      %vm494 = vc.u32 %v492, %v488
      %v495 = vsel %vm494, 1, 0
      %v496 = vadd.s32 %v492, %v488
      %v497 = vadd.s32 %v493, %v495
      %v498 = vadd.s32 %v497, %v487
      %v499 = vadd.s32 %v498, %v489
      %v500 = vshrl.u32 %v499, 3
      %v501 = vmul.u32 %v500, 10
      %v502 = vsub.s32 %v478, %v501
      %v503 = vsub.s32 0, %v502
      %v504 = vsel %vm476, %v503, %v502
      %vm505 = vcmp.lt.s32.totalorder %v345, 0
      %v506 = vsub.s32 0, %v345
      %v507 = vsel %vm505, %v506, %v345
      %v508 = vand.u32 %v507, 65535
      %v509 = vshrl.u32 %v507, 16
      %v511 = vmul.u32 %v508, 52429
      %v512 = vmul.u32 %v508, 52428
      %v513 = vmul.u32 %v509, 52429
      %v514 = vmul.u32 %v509, 52428
      %v515 = vshll.u32 %v512, 16
      %v516 = vshrl.u32 %v512, 16
      %v517 = vshll.u32 %v513, 16
      %v518 = vshrl.u32 %v513, 16
      %vm519 = vc.u32 %v511, %v515
      %v520 = vsel %vm519, 1, 0
      %v521 = vadd.s32 %v511, %v515
      %v522 = vadd.s32 %v514, %v520
      %vm523 = vc.u32 %v521, %v517
      %v524 = vsel %vm523, 1, 0
      %v525 = vadd.s32 %v521, %v517
      %v526 = vadd.s32 %v522, %v524
      %v527 = vadd.s32 %v526, %v516
      %v528 = vadd.s32 %v527, %v518
      %v529 = vshrl.u32 %v528, 3
      %v530 = vmul.u32 %v529, 10
      %v531 = vsub.s32 %v507, %v530
      %v532 = vsub.s32 0, %v531
      %v533 = vsel %vm505, %v532, %v531
      %vm534 = vcmp.lt.s32.totalorder %v346, 0
      %v535 = vsub.s32 0, %v346
      %v536 = vsel %vm534, %v535, %v346
      %v537 = vand.u32 %v536, 65535
      %v538 = vshrl.u32 %v536, 16
      %v540 = vmul.u32 %v537, 52429
      %v541 = vmul.u32 %v537, 52428
      %v542 = vmul.u32 %v538, 52429
      %v543 = vmul.u32 %v538, 52428
      %v544 = vshll.u32 %v541, 16
      %v545 = vshrl.u32 %v541, 16
      %v546 = vshll.u32 %v542, 16
      %v547 = vshrl.u32 %v542, 16
      %vm548 = vc.u32 %v540, %v544
      %v549 = vsel %vm548, 1, 0
      %v550 = vadd.s32 %v540, %v544
      %v551 = vadd.s32 %v543, %v549
      %vm552 = vc.u32 %v550, %v546
      %v553 = vsel %vm552, 1, 0
      %v554 = vadd.s32 %v550, %v546
      %v555 = vadd.s32 %v551, %v553
      %v556 = vadd.s32 %v555, %v545
      %v557 = vadd.s32 %v556, %v547
      %v558 = vshrl.u32 %v557, 3
      %v559 = vmul.u32 %v558, 10
      %v560 = vsub.s32 %v536, %v559
      %v561 = vsub.s32 0, %v560
      %v562 = vsel %vm534, %v561, %v560
      %vm563 = vcmp.lt.s32.totalorder %v347, 0
      %v564 = vsub.s32 0, %v347
      %v565 = vsel %vm563, %v564, %v347
      %v566 = vand.u32 %v565, 65535
      %v567 = vshrl.u32 %v565, 16
      %v569 = vmul.u32 %v566, 52429
      %v570 = vmul.u32 %v566, 52428
      %v571 = vmul.u32 %v567, 52429
      %v572 = vmul.u32 %v567, 52428
      %v573 = vshll.u32 %v570, 16
      %v574 = vshrl.u32 %v570, 16
      %v575 = vshll.u32 %v571, 16
      %v576 = vshrl.u32 %v571, 16
      %vm577 = vc.u32 %v569, %v573
      %v578 = vsel %vm577, 1, 0
      %v579 = vadd.s32 %v569, %v573
      %v580 = vadd.s32 %v572, %v578
      %vm581 = vc.u32 %v579, %v575
      %v582 = vsel %vm581, 1, 0
      %v583 = vadd.s32 %v579, %v575
      %v584 = vadd.s32 %v580, %v582
      %v585 = vadd.s32 %v584, %v574
      %v586 = vadd.s32 %v585, %v576
      %v587 = vshrl.u32 %v586, 3
      %v588 = vmul.u32 %v587, 10
      %v589 = vsub.s32 %v565, %v588
      %v590 = vsub.s32 0, %v589
      %v591 = vsel %vm563, %v590, %v589
      %vm592 = vcmp.lt.s32.totalorder %v348, 0
      %v593 = vsub.s32 0, %v348
      %v594 = vsel %vm592, %v593, %v348
      %v595 = vand.u32 %v594, 65535
      %v596 = vshrl.u32 %v594, 16
      %v598 = vmul.u32 %v595, 52429
      %v599 = vmul.u32 %v595, 52428
      %v600 = vmul.u32 %v596, 52429
      %v601 = vmul.u32 %v596, 52428
      %v602 = vshll.u32 %v599, 16
      %v603 = vshrl.u32 %v599, 16
      %v604 = vshll.u32 %v600, 16
      %v605 = vshrl.u32 %v600, 16
      %vm606 = vc.u32 %v598, %v602
      %v607 = vsel %vm606, 1, 0
      %v608 = vadd.s32 %v598, %v602
      %v609 = vadd.s32 %v601, %v607
      %vm610 = vc.u32 %v608, %v604
      %v611 = vsel %vm610, 1, 0
      %v612 = vadd.s32 %v608, %v604
      %v613 = vadd.s32 %v609, %v611
      %v614 = vadd.s32 %v613, %v603
      %v615 = vadd.s32 %v614, %v605
      %v616 = vshrl.u32 %v615, 3
      %v617 = vmul.u32 %v616, 10
      %v618 = vsub.s32 %v594, %v617
      %v619 = vsub.s32 0, %v618
      %v620 = vsel %vm592, %v619, %v618
      %vm621 = vcmp.lt.s32.totalorder %v349, 0
      %v622 = vsub.s32 0, %v349
      %v623 = vsel %vm621, %v622, %v349
      %v624 = vand.u32 %v623, 65535
      %v625 = vshrl.u32 %v623, 16
      %v627 = vmul.u32 %v624, 52429
      %v628 = vmul.u32 %v624, 52428
      %v629 = vmul.u32 %v625, 52429
      %v630 = vmul.u32 %v625, 52428
      %v631 = vshll.u32 %v628, 16
      %v632 = vshrl.u32 %v628, 16
      %v633 = vshll.u32 %v629, 16
      %v634 = vshrl.u32 %v629, 16
      %vm635 = vc.u32 %v627, %v631
      %v636 = vsel %vm635, 1, 0
      %v637 = vadd.s32 %v627, %v631
      %v638 = vadd.s32 %v630, %v636
      %vm639 = vc.u32 %v637, %v633
      %v640 = vsel %vm639, 1, 0
      %v641 = vadd.s32 %v637, %v633
      %v642 = vadd.s32 %v638, %v640
      %v643 = vadd.s32 %v642, %v632
      %v644 = vadd.s32 %v643, %v634
      %v645 = vshrl.u32 %v644, 3
      %v646 = vmul.u32 %v645, 10
      %v647 = vsub.s32 %v623, %v646
      %v648 = vsub.s32 0, %v647
      %v649 = vsel %vm621, %v648, %v647
      %vm650 = vcmp.lt.s32.totalorder %v350, 0
      %v651 = vsub.s32 0, %v350
      %v652 = vsel %vm650, %v651, %v350
      %v653 = vand.u32 %v652, 65535
      %v654 = vshrl.u32 %v652, 16
      %v656 = vmul.u32 %v653, 52429
      %v657 = vmul.u32 %v653, 52428
      %v658 = vmul.u32 %v654, 52429
      %v659 = vmul.u32 %v654, 52428
      %v660 = vshll.u32 %v657, 16
      %v661 = vshrl.u32 %v657, 16
      %v662 = vshll.u32 %v658, 16
      %v663 = vshrl.u32 %v658, 16
      %vm664 = vc.u32 %v656, %v660
      %v665 = vsel %vm664, 1, 0
      %v666 = vadd.s32 %v656, %v660
      %v667 = vadd.s32 %v659, %v665
      %vm668 = vc.u32 %v666, %v662
      %v669 = vsel %vm668, 1, 0
      %v670 = vadd.s32 %v666, %v662
      %v671 = vadd.s32 %v667, %v669
      %v672 = vadd.s32 %v671, %v661
      %v673 = vadd.s32 %v672, %v663
      %v674 = vshrl.u32 %v673, 3
      %v675 = vmul.u32 %v674, 10
      %v676 = vsub.s32 %v652, %v675
      %v677 = vsub.s32 0, %v676
      %v678 = vsel %vm650, %v677, %v676
      %vm679 = vcmp.lt.s32.totalorder %v351, 0
      %v680 = vsub.s32 0, %v351
      %v681 = vsel %vm679, %v680, %v351
      %v682 = vand.u32 %v681, 65535
      %v683 = vshrl.u32 %v681, 16
      %v685 = vmul.u32 %v682, 52429
      %v686 = vmul.u32 %v682, 52428
      %v687 = vmul.u32 %v683, 52429
      %v688 = vmul.u32 %v683, 52428
      %v689 = vshll.u32 %v686, 16
      %v690 = vshrl.u32 %v686, 16
      %v691 = vshll.u32 %v687, 16
      %v692 = vshrl.u32 %v687, 16
      %vm693 = vc.u32 %v685, %v689
      %v694 = vsel %vm693, 1, 0
      %v695 = vadd.s32 %v685, %v689
      %v696 = vadd.s32 %v688, %v694
      %vm697 = vc.u32 %v695, %v691
      %v698 = vsel %vm697, 1, 0
      %v699 = vadd.s32 %v695, %v691
      %v700 = vadd.s32 %v696, %v698
      %v701 = vadd.s32 %v700, %v690
      %v702 = vadd.s32 %v701, %v692
      %v703 = vshrl.u32 %v702, 3
      %v704 = vmul.u32 %v703, 10
      %v705 = vsub.s32 %v681, %v704
      %v706 = vsub.s32 0, %v705
      %v707 = vsel %vm679, %v706, %v705
      %vm708 = vcmp.lt.s32.totalorder %v352, 0
      %v709 = vsub.s32 0, %v352
      %v710 = vsel %vm708, %v709, %v352
      %v711 = vand.u32 %v710, 65535
      %v712 = vshrl.u32 %v710, 16
      %v714 = vmul.u32 %v711, 52429
      %v715 = vmul.u32 %v711, 52428
      %v716 = vmul.u32 %v712, 52429
      %v717 = vmul.u32 %v712, 52428
      %v718 = vshll.u32 %v715, 16
      %v719 = vshrl.u32 %v715, 16
      %v720 = vshll.u32 %v716, 16
      %v721 = vshrl.u32 %v716, 16
      %vm722 = vc.u32 %v714, %v718
      %v723 = vsel %vm722, 1, 0
      %v724 = vadd.s32 %v714, %v718
      %v725 = vadd.s32 %v717, %v723
      %vm726 = vc.u32 %v724, %v720
      %v727 = vsel %vm726, 1, 0
      %v728 = vadd.s32 %v724, %v720
      %v729 = vadd.s32 %v725, %v727
      %v730 = vadd.s32 %v729, %v719
      %v731 = vadd.s32 %v730, %v721
      %v732 = vshrl.u32 %v731, 3
      %v733 = vmul.u32 %v732, 10
      %v734 = vsub.s32 %v710, %v733
      %v735 = vsub.s32 0, %v734
      %v736 = vsel %vm708, %v735, %v734
      %vm737 = vcmp.lt.s32.totalorder %v353, 0
      %v738 = vsub.s32 0, %v353
      %v739 = vsel %vm737, %v738, %v353
      %v740 = vand.u32 %v739, 65535
      %v741 = vshrl.u32 %v739, 16
      %v743 = vmul.u32 %v740, 52429
      %v744 = vmul.u32 %v740, 52428
      %v745 = vmul.u32 %v741, 52429
      %v746 = vmul.u32 %v741, 52428
      %v747 = vshll.u32 %v744, 16
      %v748 = vshrl.u32 %v744, 16
      %v749 = vshll.u32 %v745, 16
      %v750 = vshrl.u32 %v745, 16
      %vm751 = vc.u32 %v743, %v747
      %v752 = vsel %vm751, 1, 0
      %v753 = vadd.s32 %v743, %v747
      %v754 = vadd.s32 %v746, %v752
      %vm755 = vc.u32 %v753, %v749
      %v756 = vsel %vm755, 1, 0
      %v757 = vadd.s32 %v753, %v749
      %v758 = vadd.s32 %v754, %v756
      %v759 = vadd.s32 %v758, %v748
      %v760 = vadd.s32 %v759, %v750
      %v761 = vshrl.u32 %v760, 3
      %v762 = vmul.u32 %v761, 10
      %v763 = vsub.s32 %v739, %v762
      %v764 = vsub.s32 0, %v763
      %v765 = vsel %vm737, %v764, %v763
      %vm766 = vcmp.lt.s32.totalorder %v354, 0
      %v767 = vsub.s32 0, %v354
      %v768 = vsel %vm766, %v767, %v354
      %v769 = vand.u32 %v768, 65535
      %v770 = vshrl.u32 %v768, 16
      %v772 = vmul.u32 %v769, 52429
      %v773 = vmul.u32 %v769, 52428
      %v774 = vmul.u32 %v770, 52429
      %v775 = vmul.u32 %v770, 52428
      %v776 = vshll.u32 %v773, 16
      %v777 = vshrl.u32 %v773, 16
      %v778 = vshll.u32 %v774, 16
      %v779 = vshrl.u32 %v774, 16
      %vm780 = vc.u32 %v772, %v776
      %v781 = vsel %vm780, 1, 0
      %v782 = vadd.s32 %v772, %v776
      %v783 = vadd.s32 %v775, %v781
      %vm784 = vc.u32 %v782, %v778
      %v785 = vsel %vm784, 1, 0
      %v786 = vadd.s32 %v782, %v778
      %v787 = vadd.s32 %v783, %v785
      %v788 = vadd.s32 %v787, %v777
      %v789 = vadd.s32 %v788, %v779
      %v790 = vshrl.u32 %v789, 3
      %v791 = vmul.u32 %v790, 10
      %v792 = vsub.s32 %v768, %v791
      %v793 = vsub.s32 0, %v792
      %v794 = vsel %vm766, %v793, %v792
      %vm795 = vcmp.lt.s32.totalorder %v355, 0
      %v796 = vsub.s32 0, %v355
      %v797 = vsel %vm795, %v796, %v355
      %v798 = vand.u32 %v797, 65535
      %v799 = vshrl.u32 %v797, 16
      %v801 = vmul.u32 %v798, 52429
      %v802 = vmul.u32 %v798, 52428
      %v803 = vmul.u32 %v799, 52429
      %v804 = vmul.u32 %v799, 52428
      %v805 = vshll.u32 %v802, 16
      %v806 = vshrl.u32 %v802, 16
      %v807 = vshll.u32 %v803, 16
      %v808 = vshrl.u32 %v803, 16
      %vm809 = vc.u32 %v801, %v805
      %v810 = vsel %vm809, 1, 0
      %v811 = vadd.s32 %v801, %v805
      %v812 = vadd.s32 %v804, %v810
      %vm813 = vc.u32 %v811, %v807
      %v814 = vsel %vm813, 1, 0
      %v815 = vadd.s32 %v811, %v807
      %v816 = vadd.s32 %v812, %v814
      %v817 = vadd.s32 %v816, %v806
      %v818 = vadd.s32 %v817, %v808
      %v819 = vshrl.u32 %v818, 3
      %v820 = vmul.u32 %v819, 10
      %v821 = vsub.s32 %v797, %v820
      %v822 = vsub.s32 0, %v821
      %v823 = vsel %vm795, %v822, %v821
      %vm824 = vcmp.lt.s32.totalorder %v356, 0
      %v825 = vsub.s32 0, %v356
      %v826 = vsel %vm824, %v825, %v356
      %v827 = vand.u32 %v826, 65535
      %v828 = vshrl.u32 %v826, 16
      %v830 = vmul.u32 %v827, 52429
      %v831 = vmul.u32 %v827, 52428
      %v832 = vmul.u32 %v828, 52429
      %v833 = vmul.u32 %v828, 52428
      %v834 = vshll.u32 %v831, 16
      %v835 = vshrl.u32 %v831, 16
      %v836 = vshll.u32 %v832, 16
      %v837 = vshrl.u32 %v832, 16
      %vm838 = vc.u32 %v830, %v834
      %v839 = vsel %vm838, 1, 0
      %v840 = vadd.s32 %v830, %v834
      %v841 = vadd.s32 %v833, %v839
      %vm842 = vc.u32 %v840, %v836
      %v843 = vsel %vm842, 1, 0
      %v844 = vadd.s32 %v840, %v836
      %v845 = vadd.s32 %v841, %v843
      %v846 = vadd.s32 %v845, %v835
      %v847 = vadd.s32 %v846, %v837
      %v848 = vshrl.u32 %v847, 3
      %v849 = vmul.u32 %v848, 10
      %v850 = vsub.s32 %v826, %v849
      %v851 = vsub.s32 0, %v850
      %v852 = vsel %vm824, %v851, %v850
      %vm853 = vcmp.lt.s32.totalorder %v357, 0
      %v854 = vsub.s32 0, %v357
      %v855 = vsel %vm853, %v854, %v357
      %v856 = vand.u32 %v855, 65535
      %v857 = vshrl.u32 %v855, 16
      %v859 = vmul.u32 %v856, 52429
      %v860 = vmul.u32 %v856, 52428
      %v861 = vmul.u32 %v857, 52429
      %v862 = vmul.u32 %v857, 52428
      %v863 = vshll.u32 %v860, 16
      %v864 = vshrl.u32 %v860, 16
      %v865 = vshll.u32 %v861, 16
      %v866 = vshrl.u32 %v861, 16
      %vm867 = vc.u32 %v859, %v863
      %v868 = vsel %vm867, 1, 0
      %v869 = vadd.s32 %v859, %v863
      %v870 = vadd.s32 %v862, %v868
      %vm871 = vc.u32 %v869, %v865
      %v872 = vsel %vm871, 1, 0
      %v873 = vadd.s32 %v869, %v865
      %v874 = vadd.s32 %v870, %v872
      %v875 = vadd.s32 %v874, %v864
      %v876 = vadd.s32 %v875, %v866
      %v877 = vshrl.u32 %v876, 3
      %v878 = vmul.u32 %v877, 10
      %v879 = vsub.s32 %v855, %v878
      %v880 = vsub.s32 0, %v879
      %v881 = vsel %vm853, %v880, %v879
      %vm882 = vcmp.lt.s32.totalorder %v358, 0
      %v883 = vsub.s32 0, %v358
      %v884 = vsel %vm882, %v883, %v358
      %v885 = vand.u32 %v884, 65535
      %v886 = vshrl.u32 %v884, 16
      %v888 = vmul.u32 %v885, 52429
      %v889 = vmul.u32 %v885, 52428
      %v890 = vmul.u32 %v886, 52429
      %v891 = vmul.u32 %v886, 52428
      %v892 = vshll.u32 %v889, 16
      %v893 = vshrl.u32 %v889, 16
      %v894 = vshll.u32 %v890, 16
      %v895 = vshrl.u32 %v890, 16
      %vm896 = vc.u32 %v888, %v892
      %v897 = vsel %vm896, 1, 0
      %v898 = vadd.s32 %v888, %v892
      %v899 = vadd.s32 %v891, %v897
      %vm900 = vc.u32 %v898, %v894
      %v901 = vsel %vm900, 1, 0
      %v902 = vadd.s32 %v898, %v894
      %v903 = vadd.s32 %v899, %v901
      %v904 = vadd.s32 %v903, %v893
      %v905 = vadd.s32 %v904, %v895
      %v906 = vshrl.u32 %v905, 3
      %v907 = vmul.u32 %v906, 10
      %v908 = vsub.s32 %v884, %v907
      %v909 = vsub.s32 0, %v908
      %v910 = vsel %vm882, %v909, %v908
      %vm911 = vcmp.lt.s32.totalorder %v359, 0
      %v912 = vsub.s32 0, %v359
      %v913 = vsel %vm911, %v912, %v359
      %v914 = vand.u32 %v913, 65535
      %v915 = vshrl.u32 %v913, 16
      %v917 = vmul.u32 %v914, 52429
      %v918 = vmul.u32 %v914, 52428
      %v919 = vmul.u32 %v915, 52429
      %v920 = vmul.u32 %v915, 52428
      %v921 = vshll.u32 %v918, 16
      %v922 = vshrl.u32 %v918, 16
      %v923 = vshll.u32 %v919, 16
      %v924 = vshrl.u32 %v919, 16
      %vm925 = vc.u32 %v917, %v921
      %v926 = vsel %vm925, 1, 0
      %v927 = vadd.s32 %v917, %v921
      %v928 = vadd.s32 %v920, %v926
      %vm929 = vc.u32 %v927, %v923
      %v930 = vsel %vm929, 1, 0
      %v931 = vadd.s32 %v927, %v923
      %v932 = vadd.s32 %v928, %v930
      %v933 = vadd.s32 %v932, %v922
      %v934 = vadd.s32 %v933, %v924
      %v935 = vshrl.u32 %v934, 3
      %v936 = vmul.u32 %v935, 10
      %v937 = vsub.s32 %v913, %v936
      %v938 = vsub.s32 0, %v937
      %v939 = vsel %vm911, %v938, %v937
      %vm940 = vcmp.ne.s32.totalorder %v388, 0
      %vm941 = vcmp.ne.s32.totalorder %v417, 0
      %vm942 = vcmp.ne.s32.totalorder %v446, 0
      %vm943 = vcmp.ne.s32.totalorder %v475, 0
      %vm944 = vcmp.ne.s32.totalorder %v504, 0
      %vm945 = vcmp.ne.s32.totalorder %v533, 0
      %vm946 = vcmp.ne.s32.totalorder %v562, 0
      %vm947 = vcmp.ne.s32.totalorder %v591, 0
      %vm948 = vcmp.ne.s32.totalorder %v620, 0
      %vm949 = vcmp.ne.s32.totalorder %v649, 0
      %vm950 = vcmp.ne.s32.totalorder %v678, 0
      %vm951 = vcmp.ne.s32.totalorder %v707, 0
      %vm952 = vcmp.ne.s32.totalorder %v736, 0
      %vm953 = vcmp.ne.s32.totalorder %v765, 0
      %vm954 = vcmp.ne.s32.totalorder %v794, 0
      %vm955 = vcmp.ne.s32.totalorder %v823, 0
      %vm956 = vcmp.ne.s32.totalorder %v852, 0
      %vm957 = vcmp.ne.s32.totalorder %v881, 0
      %vm958 = vcmp.ne.s32.totalorder %v910, 0
      %vm959 = vcmp.ne.s32.totalorder %v939, 0
      %vm960 = vcmp.lt.s32.totalorder %v388, 0
      %vm961 = vcmp.lt.s32.totalorder %v417, 0
      %vm962 = vcmp.lt.s32.totalorder %v446, 0
      %vm963 = vcmp.lt.s32.totalorder %v475, 0
      %vm964 = vcmp.lt.s32.totalorder %v504, 0
      %vm965 = vcmp.lt.s32.totalorder %v533, 0
      %vm966 = vcmp.lt.s32.totalorder %v562, 0
      %vm967 = vcmp.lt.s32.totalorder %v591, 0
      %vm968 = vcmp.lt.s32.totalorder %v620, 0
      %vm969 = vcmp.lt.s32.totalorder %v649, 0
      %vm970 = vcmp.lt.s32.totalorder %v678, 0
      %vm971 = vcmp.lt.s32.totalorder %v707, 0
      %vm972 = vcmp.lt.s32.totalorder %v736, 0
      %vm973 = vcmp.lt.s32.totalorder %v765, 0
      %vm974 = vcmp.lt.s32.totalorder %v794, 0
      %vm975 = vcmp.lt.s32.totalorder %v823, 0
      %vm976 = vcmp.lt.s32.totalorder %v852, 0
      %vm977 = vcmp.lt.s32.totalorder %v881, 0
      %vm978 = vcmp.lt.s32.totalorder %v910, 0
      %vm979 = vcmp.lt.s32.totalorder %v939, 0
      %vm980 = vmand %vm960, %vm940
      %vm981 = vmand %vm961, %vm941
      %vm982 = vmand %vm962, %vm942
      %vm983 = vmand %vm963, %vm943
      %vm984 = vmand %vm964, %vm944
      %vm985 = vmand %vm965, %vm945
      %vm986 = vmand %vm966, %vm946
      %vm987 = vmand %vm967, %vm947
      %vm988 = vmand %vm968, %vm948
      %vm989 = vmand %vm969, %vm949
      %vm990 = vmand %vm970, %vm950
      %vm991 = vmand %vm971, %vm951
      %vm992 = vmand %vm972, %vm952
      %vm993 = vmand %vm973, %vm953
      %vm994 = vmand %vm974, %vm954
      %vm995 = vmand %vm975, %vm955
      %vm996 = vmand %vm976, %vm956
      %vm997 = vmand %vm977, %vm957
      %vm998 = vmand %vm978, %vm958
      %vm999 = vmand %vm979, %vm959
      %v1000 = vadd.s32 %v388, 10
      %v1001 = vadd.s32 %v417, 10
      %v1002 = vadd.s32 %v446, 10
      %v1003 = vadd.s32 %v475, 10
      %v1004 = vadd.s32 %v504, 10
      %v1005 = vadd.s32 %v533, 10
      %v1006 = vadd.s32 %v562, 10
      %v1007 = vadd.s32 %v591, 10
      %v1008 = vadd.s32 %v620, 10
      %v1009 = vadd.s32 %v649, 10
      %v1010 = vadd.s32 %v678, 10
      %v1011 = vadd.s32 %v707, 10
      %v1012 = vadd.s32 %v736, 10
      %v1013 = vadd.s32 %v765, 10
      %v1014 = vadd.s32 %v794, 10
      %v1015 = vadd.s32 %v823, 10
      %v1016 = vadd.s32 %v852, 10
      %v1017 = vadd.s32 %v881, 10
      %v1018 = vadd.s32 %v910, 10
      %v1019 = vadd.s32 %v939, 10
      %v1020 = vsel %vm980, %v1000, %v388
      %v1021 = vsel %vm981, %v1001, %v417
      %v1022 = vsel %vm982, %v1002, %v446
      %v1023 = vsel %vm983, %v1003, %v475
      %v1024 = vsel %vm984, %v1004, %v504
      %v1025 = vsel %vm985, %v1005, %v533
      %v1026 = vsel %vm986, %v1006, %v562
      %v1027 = vsel %vm987, %v1007, %v591
      %v1028 = vsel %vm988, %v1008, %v620
      %v1029 = vsel %vm989, %v1009, %v649
      %v1030 = vsel %vm990, %v1010, %v678
      %v1031 = vsel %vm991, %v1011, %v707
      %v1032 = vsel %vm992, %v1012, %v736
      %v1033 = vsel %vm993, %v1013, %v765
      %v1034 = vsel %vm994, %v1014, %v794
      %v1035 = vsel %vm995, %v1015, %v823
      %v1036 = vsel %vm996, %v1016, %v852
      %v1037 = vsel %vm997, %v1017, %v881
      %v1038 = vsel %vm998, %v1018, %v910
      %v1039 = vsel %vm999, %v1019, %v939
      %vm1040 = vcmp.lt.s32.totalorder %v1020, 8
      %vm1041 = vcmp.lt.s32.totalorder %v1021, 8
      %vm1042 = vcmp.lt.s32.totalorder %v1022, 8
      %vm1043 = vcmp.lt.s32.totalorder %v1023, 8
      %vm1044 = vcmp.lt.s32.totalorder %v1024, 8
      %vm1045 = vcmp.lt.s32.totalorder %v1025, 8
      %vm1046 = vcmp.lt.s32.totalorder %v1026, 8
      %vm1047 = vcmp.lt.s32.totalorder %v1027, 8
      %vm1048 = vcmp.lt.s32.totalorder %v1028, 8
      %vm1049 = vcmp.lt.s32.totalorder %v1029, 8
      %vm1050 = vcmp.lt.s32.totalorder %v1030, 8
      %vm1051 = vcmp.lt.s32.totalorder %v1031, 8
      %vm1052 = vcmp.lt.s32.totalorder %v1032, 8
      %vm1053 = vcmp.lt.s32.totalorder %v1033, 8
      %vm1054 = vcmp.lt.s32.totalorder %v1034, 8
      %vm1055 = vcmp.lt.s32.totalorder %v1035, 8
      %vm1056 = vcmp.lt.s32.totalorder %v1036, 8
      %vm1057 = vcmp.lt.s32.totalorder %v1037, 8
      %vm1058 = vcmp.lt.s32.totalorder %v1038, 8
      %vm1059 = vcmp.lt.s32.totalorder %v1039, 8
      %v1060 = vsel %vm1040, 1, 0
      %v1061 = vsel %vm1041, 1, 0
      %v1062 = vsel %vm1042, 1, 0
      %v1063 = vsel %vm1043, 1, 0
      %v1064 = vsel %vm1044, 1, 0
      %v1065 = vsel %vm1045, 1, 0
      %v1066 = vsel %vm1046, 1, 0
      %v1067 = vsel %vm1047, 1, 0
      %v1068 = vsel %vm1048, 1, 0
      %v1069 = vsel %vm1049, 1, 0
      %v1070 = vsel %vm1050, 1, 0
      %v1071 = vsel %vm1051, 1, 0
      %v1072 = vsel %vm1052, 1, 0
      %v1073 = vsel %vm1053, 1, 0
      %v1074 = vsel %vm1054, 1, 0
      %v1075 = vsel %vm1055, 1, 0
      %v1076 = vsel %vm1056, 1, 0
      %v1077 = vsel %vm1057, 1, 0
      %v1078 = vsel %vm1058, 1, 0
      %v1079 = vsel %vm1059, 1, 0
      %v1080 = vcvt.s32.f32 %v1060
      %v1081 = vcvt.s32.f32 %v1061
      %v1082 = vcvt.s32.f32 %v1062
      %v1083 = vcvt.s32.f32 %v1063
      %v1084 = vcvt.s32.f32 %v1064
      %v1085 = vcvt.s32.f32 %v1065
      %v1086 = vcvt.s32.f32 %v1066
      %v1087 = vcvt.s32.f32 %v1067
      %v1088 = vcvt.s32.f32 %v1068
      %v1089 = vcvt.s32.f32 %v1069
      %v1090 = vcvt.s32.f32 %v1070
      %v1091 = vcvt.s32.f32 %v1071
      %v1092 = vcvt.s32.f32 %v1072
      %v1093 = vcvt.s32.f32 %v1073
      %v1094 = vcvt.s32.f32 %v1074
      %v1095 = vcvt.s32.f32 %v1075
      %v1096 = vcvt.s32.f32 %v1076
      %v1097 = vcvt.s32.f32 %v1077
      %v1098 = vcvt.s32.f32 %v1078
      %v1099 = vcvt.s32.f32 %v1079
      %vm1100 = vcmask 523264
      %1101 = vst.msk [vmem:[#allocation2] sm:$0xff] %vm1100, 0.0
      %1102 = vst.msk [vmem:[#allocation2 + $0x8] sm:$0xff] %vm1100, 0.0
      %1103 = vst.msk [vmem:[#allocation2 + $0x60] sm:$0xff] %vm1100, 0.0
      %1104 = vst.msk [vmem:[#allocation2 + $0x68] sm:$0xff] %vm1100, 0.0
      %1105 = vst [vmem:[#allocation3] sm:$0xff] 0.0
      %1106 = vst [vmem:[#allocation3 + $0x8] sm:$0xff] 0.0
      %1107 = vst [vmem:[#allocation3 + $0x60] sm:$0xff] 0.0
      %1108 = vst [vmem:[#allocation3 + $0x68] sm:$0xff] 0.0
      %s1109 = scalar_lea.vmem [#allocation2], 112
      %1110 = vst.msk [vmem:[%s1109] sm:$0xff] %vm1100, 0.0
      %1111 = vst.msk [vmem:[%s1109 + $0x8] sm:$0xff] %vm1100, 0.0
      %1112 = vst.msk [vmem:[%s1109 + $0x60] sm:$0xff] %vm1100, 0.0
      %1113 = vst.msk [vmem:[%s1109 + $0x68] sm:$0xff] %vm1100, 0.0
      %s1114 = scalar_lea.vmem [#allocation3], 112
      %1115 = vst [vmem:[%s1114] sm:$0xff] 0.0
      %1116 = vst [vmem:[%s1114 + $0x8] sm:$0xff] 0.0
      %1117 = vst [vmem:[%s1114 + $0x60] sm:$0xff] 0.0
      %1118 = vst [vmem:[%s1114 + $0x68] sm:$0xff] 0.0
      %v1119 = vld [vmem:[%s332 + $0x5] sm:$0xff]
      %v1120 = vld [vmem:[%s332 + $0xd] sm:$0xff]
      %v1121 = vld [vmem:[%s332 + $0x15] sm:$0xff]
      %v1122 = vld [vmem:[%s332 + $0x1d] sm:$0xff]
      %v1123 = vld [vmem:[%s332 + $0x25] sm:$0xff]
      %v1124 = vld [vmem:[%s332 + $0x2d] sm:$0xff]
      %v1125 = vld [vmem:[%s332 + $0x35] sm:$0xff]
      %v1126 = vld [vmem:[%s332 + $0x3d] sm:$0xff]
      %v1127 = vld [vmem:[%s332 + $0x45] sm:$0xff]
      %v1128 = vld [vmem:[%s332 + $0x4d] sm:$0xff]
      %v1129 = vpack.c.bf16 %v1119, %v1119
      %v1130 = vpack.c.bf16 %v1120, %v1120
      %v1131 = vpack.c.bf16 %v1121, %v1121
      %v1132 = vpack.c.bf16 %v1122, %v1122
      %v1133 = vpack.c.bf16 %v1123, %v1123
      %v1134 = vpack.c.bf16 %v1124, %v1124
      %v1135 = vpack.c.bf16 %v1125, %v1125
      %v1136 = vpack.c.bf16 %v1126, %v1126
      %v1137 = vpack.c.bf16 %v1127, %v1127
      %v1138 = vpack.c.bf16 %v1128, %v1128
      %vm1139 = vcmask 125952
      %1140 = vst.msk [vmem:[#allocation4] sm:$0xf] %vm1139, %v1129
      %1141 = vst.msk [vmem:[#allocation4 + $0x8] sm:$0xf] %vm1139, %v1130
      %1142 = vst.msk [vmem:[#allocation4 + $0x10] sm:$0xf] %vm1139, %v1131
      %1143 = vst.msk [vmem:[#allocation4 + $0x18] sm:$0xf] %vm1139, %v1132
      %1144 = vst.msk [vmem:[#allocation4 + $0x20] sm:$0xf] %vm1139, %v1133
      %1145 = vst.msk [vmem:[#allocation4 + $0x28] sm:$0xf] %vm1139, %v1134
      %1146 = vst.msk [vmem:[#allocation4 + $0x30] sm:$0xf] %vm1139, %v1135
      %1147 = vst.msk [vmem:[#allocation4 + $0x38] sm:$0xf] %vm1139, %v1136
      %1148 = vst.msk [vmem:[#allocation4 + $0x40] sm:$0xf] %vm1139, %v1137
      %1149 = vst.msk [vmem:[#allocation4 + $0x48] sm:$0xf] %vm1139, %v1138
      %v1150 = vld [vmem:[%s332 + $0x6] sm:$0xff]
      %v1151 = vld [vmem:[%s332 + $0xe] sm:$0xff]
      %v1152 = vld [vmem:[%s332 + $0x16] sm:$0xff]
      %v1153 = vld [vmem:[%s332 + $0x1e] sm:$0xff]
      %v1154 = vld [vmem:[%s332 + $0x26] sm:$0xff]
      %v1155 = vld [vmem:[%s332 + $0x2e] sm:$0xff]
      %v1156 = vld [vmem:[%s332 + $0x36] sm:$0xff]
      %v1157 = vld [vmem:[%s332 + $0x3e] sm:$0xff]
      %v1158 = vld [vmem:[%s332 + $0x46] sm:$0xff]
      %v1159 = vld [vmem:[%s332 + $0x4e] sm:$0xff]
      %v1160 = vpack.c.bf16 %v1150, %v1150
      %v1161 = vpack.c.bf16 %v1151, %v1151
      %v1162 = vpack.c.bf16 %v1152, %v1152
      %v1163 = vpack.c.bf16 %v1153, %v1153
      %v1164 = vpack.c.bf16 %v1154, %v1154
      %v1165 = vpack.c.bf16 %v1155, %v1155
      %v1166 = vpack.c.bf16 %v1156, %v1156
      %v1167 = vpack.c.bf16 %v1157, %v1157
      %v1168 = vpack.c.bf16 %v1158, %v1158
      %v1169 = vpack.c.bf16 %v1159, %v1159
      %1180 = vrot.lane.b32.xlu0 %v1160, 16
      %v1181 = vpop.permute.xlu0 %1180
      %1182 = vrot.lane.b32.xlu0 %v1161, 16
      %v1183 = vpop.permute.xlu0 %1182
      %1184 = vrot.lane.b32.xlu0 %v1162, 16
      %v1185 = vpop.permute.xlu0 %1184
      %1186 = vrot.lane.b32.xlu0 %v1163, 16
      %v1187 = vpop.permute.xlu0 %1186
      %1188 = vrot.lane.b32.xlu0 %v1164, 16
      %v1189 = vpop.permute.xlu0 %1188
      %1190 = vrot.lane.b32.xlu0 %v1165, 16
      %v1191 = vpop.permute.xlu0 %1190
      %1192 = vrot.lane.b32.xlu0 %v1166, 16
      %v1193 = vpop.permute.xlu0 %1192
      %1194 = vrot.lane.b32.xlu0 %v1167, 16
      %v1195 = vpop.permute.xlu0 %1194
      %1196 = vrot.lane.b32.xlu0 %v1168, 16
      %v1197 = vpop.permute.xlu0 %1196
      %1198 = vrot.lane.b32.xlu0 %v1169, 16
      %v1199 = vpop.permute.xlu0 %1198
      %vm1210 = vcmask 257152
      %1211 = vst.msk [vmem:[#allocation4] sm:$0xf] %vm1210, %v1181
      %1212 = vst.msk [vmem:[#allocation4 + $0x8] sm:$0xf] %vm1210, %v1183
      %1213 = vst.msk [vmem:[#allocation4 + $0x10] sm:$0xf] %vm1210, %v1185
      %1214 = vst.msk [vmem:[#allocation4 + $0x18] sm:$0xf] %vm1210, %v1187
      %1215 = vst.msk [vmem:[#allocation4 + $0x20] sm:$0xf] %vm1210, %v1189
      %1216 = vst.msk [vmem:[#allocation4 + $0x28] sm:$0xf] %vm1210, %v1191
      %1217 = vst.msk [vmem:[#allocation4 + $0x30] sm:$0xf] %vm1210, %v1193
      %1218 = vst.msk [vmem:[#allocation4 + $0x38] sm:$0xf] %vm1210, %v1195
      %1219 = vst.msk [vmem:[#allocation4 + $0x40] sm:$0xf] %vm1210, %v1197
      %1220 = vst.msk [vmem:[#allocation4 + $0x48] sm:$0xf] %vm1210, %v1199
      %v1221 = vld [vmem:[%s332 + $0x7] sm:$0xff]
      %v1222 = vld [vmem:[%s332 + $0xf] sm:$0xff]
      %v1223 = vld [vmem:[%s332 + $0x17] sm:$0xff]
      %v1224 = vld [vmem:[%s332 + $0x1f] sm:$0xff]
      %v1225 = vld [vmem:[%s332 + $0x27] sm:$0xff]
      %v1226 = vld [vmem:[%s332 + $0x2f] sm:$0xff]
      %v1227 = vld [vmem:[%s332 + $0x37] sm:$0xff]
      %v1228 = vld [vmem:[%s332 + $0x3f] sm:$0xff]
      %v1229 = vld [vmem:[%s332 + $0x47] sm:$0xff]
      %v1230 = vld [vmem:[%s332 + $0x4f] sm:$0xff]
      %v1231 = vpack.c.bf16 %v1221, %v1221
      %v1232 = vpack.c.bf16 %v1222, %v1222
      %v1233 = vpack.c.bf16 %v1223, %v1223
      %v1234 = vpack.c.bf16 %v1224, %v1224
      %v1235 = vpack.c.bf16 %v1225, %v1225
      %v1236 = vpack.c.bf16 %v1226, %v1226
      %v1237 = vpack.c.bf16 %v1227, %v1227
      %v1238 = vpack.c.bf16 %v1228, %v1228
      %v1239 = vpack.c.bf16 %v1229, %v1229
      %v1240 = vpack.c.bf16 %v1230, %v1230
      %1251 = vrot.lane.b32.xlu0 %v1231, 32
      %v1252 = vpop.permute.xlu0 %1251
      %1253 = vrot.lane.b32.xlu0 %v1232, 32
      %v1254 = vpop.permute.xlu0 %1253
      %1255 = vrot.lane.b32.xlu0 %v1233, 32
      %v1256 = vpop.permute.xlu0 %1255
      %1257 = vrot.lane.b32.xlu0 %v1234, 32
      %v1258 = vpop.permute.xlu0 %1257
      %1259 = vrot.lane.b32.xlu0 %v1235, 32
      %v1260 = vpop.permute.xlu0 %1259
      %1261 = vrot.lane.b32.xlu0 %v1236, 32
      %v1262 = vpop.permute.xlu0 %1261
      %1263 = vrot.lane.b32.xlu0 %v1237, 32
      %v1264 = vpop.permute.xlu0 %1263
      %1265 = vrot.lane.b32.xlu0 %v1238, 32
      %v1266 = vpop.permute.xlu0 %1265
      %1267 = vrot.lane.b32.xlu0 %v1239, 32
      %v1268 = vpop.permute.xlu0 %1267
      %1269 = vrot.lane.b32.xlu0 %v1240, 32
      %v1270 = vpop.permute.xlu0 %1269
      %vm1281 = vcmask 388352
      %1282 = vst.msk [vmem:[#allocation4] sm:$0xf] %vm1281, %v1252
      %1283 = vst.msk [vmem:[#allocation4 + $0x8] sm:$0xf] %vm1281, %v1254
      %1284 = vst.msk [vmem:[#allocation4 + $0x10] sm:$0xf] %vm1281, %v1256
      %1285 = vst.msk [vmem:[#allocation4 + $0x18] sm:$0xf] %vm1281, %v1258
      %1286 = vst.msk [vmem:[#allocation4 + $0x20] sm:$0xf] %vm1281, %v1260
      %1287 = vst.msk [vmem:[#allocation4 + $0x28] sm:$0xf] %vm1281, %v1262
      %1288 = vst.msk [vmem:[#allocation4 + $0x30] sm:$0xf] %vm1281, %v1264
      %1289 = vst.msk [vmem:[#allocation4 + $0x38] sm:$0xf] %vm1281, %v1266
      %1290 = vst.msk [vmem:[#allocation4 + $0x40] sm:$0xf] %vm1281, %v1268
      %1291 = vst.msk [vmem:[#allocation4 + $0x48] sm:$0xf] %vm1281, %v1270
      %v1292 = vld [vmem:[%s332 + $0xf] sm:$0xff]
      %v1293 = vld [vmem:[%s332 + $0x17] sm:$0xff]
      %v1294 = vld [vmem:[%s332 + $0x1f] sm:$0xff]
      %v1295 = vld [vmem:[%s332 + $0x27] sm:$0xff]
      %v1296 = vld [vmem:[%s332 + $0x2f] sm:$0xff]
      %v1297 = vld [vmem:[%s332 + $0x37] sm:$0xff]
      %v1298 = vld [vmem:[%s332 + $0x3f] sm:$0xff]
      %v1299 = vld [vmem:[%s332 + $0x47] sm:$0xff]
      %v1300 = vld [vmem:[%s332 + $0x4f] sm:$0xff]
      %v1301 = vld [vmem:[%s332 + $0x57] sm:$0xff]
      %v1302 = vpack.c.bf16 %v1292, %v1292
      %v1303 = vpack.c.bf16 %v1293, %v1293
      %v1304 = vpack.c.bf16 %v1294, %v1294
      %v1305 = vpack.c.bf16 %v1295, %v1295
      %v1306 = vpack.c.bf16 %v1296, %v1296
      %v1307 = vpack.c.bf16 %v1297, %v1297
      %v1308 = vpack.c.bf16 %v1298, %v1298
      %v1309 = vpack.c.bf16 %v1299, %v1299
      %v1310 = vpack.c.bf16 %v1300, %v1300
      %v1311 = vpack.c.bf16 %v1301, %v1301
      %1322 = vrot.lane.b32.xlu0 %v1302, 48
      %v1323 = vpop.permute.xlu0 %1322
      %1324 = vrot.lane.b32.xlu0 %v1303, 48
      %v1325 = vpop.permute.xlu0 %1324
      %1326 = vrot.lane.b32.xlu0 %v1304, 48
      %v1327 = vpop.permute.xlu0 %1326
      %1328 = vrot.lane.b32.xlu0 %v1305, 48
      %v1329 = vpop.permute.xlu0 %1328
      %1330 = vrot.lane.b32.xlu0 %v1306, 48
      %v1331 = vpop.permute.xlu0 %1330
      %1332 = vrot.lane.b32.xlu0 %v1307, 48
      %v1333 = vpop.permute.xlu0 %1332
      %1334 = vrot.lane.b32.xlu0 %v1308, 48
      %v1335 = vpop.permute.xlu0 %1334
      %1336 = vrot.lane.b32.xlu0 %v1309, 48
      %v1337 = vpop.permute.xlu0 %1336
      %1338 = vrot.lane.b32.xlu0 %v1310, 48
      %v1339 = vpop.permute.xlu0 %1338
      %1340 = vrot.lane.b32.xlu0 %v1311, 48
      %v1341 = vpop.permute.xlu0 %1340
      %vm1352 = vcmask 519552
      %1353 = vst.msk [vmem:[#allocation4] sm:$0xf] %vm1352, %v1323
      %1354 = vst.msk [vmem:[#allocation4 + $0x8] sm:$0xf] %vm1352, %v1325
      %1355 = vst.msk [vmem:[#allocation4 + $0x10] sm:$0xf] %vm1352, %v1327
      %1356 = vst.msk [vmem:[#allocation4 + $0x18] sm:$0xf] %vm1352, %v1329
      %1357 = vst.msk [vmem:[#allocation4 + $0x20] sm:$0xf] %vm1352, %v1331
      %1358 = vst.msk [vmem:[#allocation4 + $0x28] sm:$0xf] %vm1352, %v1333
      %1359 = vst.msk [vmem:[#allocation4 + $0x30] sm:$0xf] %vm1352, %v1335
      %1360 = vst.msk [vmem:[#allocation4 + $0x38] sm:$0xf] %vm1352, %v1337
      %1361 = vst.msk [vmem:[#allocation4 + $0x40] sm:$0xf] %vm1352, %v1339
      %1362 = vst.msk [vmem:[#allocation4 + $0x48] sm:$0xf] %vm1352, %v1341
      %v1363 = vld [vmem:[%s332 + $0x10] sm:$0xff]
      %v1364 = vld [vmem:[%s332 + $0x18] sm:$0xff]
      %v1365 = vld [vmem:[%s332 + $0x20] sm:$0xff]
      %v1366 = vld [vmem:[%s332 + $0x28] sm:$0xff]
      %v1367 = vld [vmem:[%s332 + $0x30] sm:$0xff]
      %v1368 = vld [vmem:[%s332 + $0x38] sm:$0xff]
      %v1369 = vld [vmem:[%s332 + $0x40] sm:$0xff]
      %v1370 = vld [vmem:[%s332 + $0x48] sm:$0xff]
      %v1371 = vld [vmem:[%s332 + $0x50] sm:$0xff]
      %v1372 = vld [vmem:[%s332 + $0x58] sm:$0xff]
      %v1373 = vpack.c.bf16 %v1363, %v1363
      %v1374 = vpack.c.bf16 %v1364, %v1364
      %v1375 = vpack.c.bf16 %v1365, %v1365
      %v1376 = vpack.c.bf16 %v1366, %v1366
      %v1377 = vpack.c.bf16 %v1367, %v1367
      %v1378 = vpack.c.bf16 %v1368, %v1368
      %v1379 = vpack.c.bf16 %v1369, %v1369
      %v1380 = vpack.c.bf16 %v1370, %v1370
      %v1381 = vpack.c.bf16 %v1371, %v1371
      %v1382 = vpack.c.bf16 %v1372, %v1372
      %1393 = vrot.lane.b32.xlu0 %v1373, 64
      %v1394 = vpop.permute.xlu0 %1393
      %1395 = vrot.lane.b32.xlu0 %v1374, 64
      %v1396 = vpop.permute.xlu0 %1395
      %1397 = vrot.lane.b32.xlu0 %v1375, 64
      %v1398 = vpop.permute.xlu0 %1397
      %1399 = vrot.lane.b32.xlu0 %v1376, 64
      %v1400 = vpop.permute.xlu0 %1399
      %1401 = vrot.lane.b32.xlu0 %v1377, 64
      %v1402 = vpop.permute.xlu0 %1401
      %1403 = vrot.lane.b32.xlu0 %v1378, 64
      %v1404 = vpop.permute.xlu0 %1403
      %1405 = vrot.lane.b32.xlu0 %v1379, 64
      %v1406 = vpop.permute.xlu0 %1405
      %1407 = vrot.lane.b32.xlu0 %v1380, 64
      %v1408 = vpop.permute.xlu0 %1407
      %1409 = vrot.lane.b32.xlu0 %v1381, 64
      %v1410 = vpop.permute.xlu0 %1409
      %1411 = vrot.lane.b32.xlu0 %v1382, 64
      %v1412 = vpop.permute.xlu0 %1411
      %vm1423 = vcmask 650752
      %1424 = vst.msk [vmem:[#allocation4] sm:$0xf] %vm1423, %v1394
      %1425 = vst.msk [vmem:[#allocation4 + $0x8] sm:$0xf] %vm1423, %v1396
      %1426 = vst.msk [vmem:[#allocation4 + $0x10] sm:$0xf] %vm1423, %v1398
      %1427 = vst.msk [vmem:[#allocation4 + $0x18] sm:$0xf] %vm1423, %v1400
      %1428 = vst.msk [vmem:[#allocation4 + $0x20] sm:$0xf] %vm1423, %v1402
      %1429 = vst.msk [vmem:[#allocation4 + $0x28] sm:$0xf] %vm1423, %v1404
      %1430 = vst.msk [vmem:[#allocation4 + $0x30] sm:$0xf] %vm1423, %v1406
      %1431 = vst.msk [vmem:[#allocation4 + $0x38] sm:$0xf] %vm1423, %v1408
      %1432 = vst.msk [vmem:[#allocation4 + $0x40] sm:$0xf] %vm1423, %v1410
      %1433 = vst.msk [vmem:[#allocation4 + $0x48] sm:$0xf] %vm1423, %v1412
      %v1434 = vld [vmem:[%s332 + $0x11] sm:$0xff]
      %v1435 = vld [vmem:[%s332 + $0x19] sm:$0xff]
      %v1436 = vld [vmem:[%s332 + $0x21] sm:$0xff]
      %v1437 = vld [vmem:[%s332 + $0x29] sm:$0xff]
      %v1438 = vld [vmem:[%s332 + $0x31] sm:$0xff]
      %v1439 = vld [vmem:[%s332 + $0x39] sm:$0xff]
      %v1440 = vld [vmem:[%s332 + $0x41] sm:$0xff]
      %v1441 = vld [vmem:[%s332 + $0x49] sm:$0xff]
      %v1442 = vld [vmem:[%s332 + $0x51] sm:$0xff]
      %v1443 = vld [vmem:[%s332 + $0x59] sm:$0xff]
      %v1444 = vpack.c.bf16 %v1434, %v1434
      %v1445 = vpack.c.bf16 %v1435, %v1435
      %v1446 = vpack.c.bf16 %v1436, %v1436
      %v1447 = vpack.c.bf16 %v1437, %v1437
      %v1448 = vpack.c.bf16 %v1438, %v1438
      %v1449 = vpack.c.bf16 %v1439, %v1439
      %v1450 = vpack.c.bf16 %v1440, %v1440
      %v1451 = vpack.c.bf16 %v1441, %v1441
      %v1452 = vpack.c.bf16 %v1442, %v1442
      %v1453 = vpack.c.bf16 %v1443, %v1443
      %1464 = vrot.lane.b32.xlu0 %v1444, 80
      %v1465 = vpop.permute.xlu0 %1464
      %1466 = vrot.lane.b32.xlu0 %v1445, 80
      %v1467 = vpop.permute.xlu0 %1466
      %1468 = vrot.lane.b32.xlu0 %v1446, 80
      %v1469 = vpop.permute.xlu0 %1468
      %1470 = vrot.lane.b32.xlu0 %v1447, 80
      %v1471 = vpop.permute.xlu0 %1470
      %1472 = vrot.lane.b32.xlu0 %v1448, 80
      %v1473 = vpop.permute.xlu0 %1472
      %1474 = vrot.lane.b32.xlu0 %v1449, 80
      %v1475 = vpop.permute.xlu0 %1474
      %1476 = vrot.lane.b32.xlu0 %v1450, 80
      %v1477 = vpop.permute.xlu0 %1476
      %1478 = vrot.lane.b32.xlu0 %v1451, 80
      %v1479 = vpop.permute.xlu0 %1478
      %1480 = vrot.lane.b32.xlu0 %v1452, 80
      %v1481 = vpop.permute.xlu0 %1480
      %1482 = vrot.lane.b32.xlu0 %v1453, 80
      %v1483 = vpop.permute.xlu0 %1482
      %vm1494 = vcmask 781952
      %1495 = vst.msk [vmem:[#allocation4] sm:$0xf] %vm1494, %v1465
      %1496 = vst.msk [vmem:[#allocation4 + $0x8] sm:$0xf] %vm1494, %v1467
      %1497 = vst.msk [vmem:[#allocation4 + $0x10] sm:$0xf] %vm1494, %v1469
      %1498 = vst.msk [vmem:[#allocation4 + $0x18] sm:$0xf] %vm1494, %v1471
      %1499 = vst.msk [vmem:[#allocation4 + $0x20] sm:$0xf] %vm1494, %v1473
      %1500 = vst.msk [vmem:[#allocation4 + $0x28] sm:$0xf] %vm1494, %v1475
      %1501 = vst.msk [vmem:[#allocation4 + $0x30] sm:$0xf] %vm1494, %v1477
      %1502 = vst.msk [vmem:[#allocation4 + $0x38] sm:$0xf] %vm1494, %v1479
      %1503 = vst.msk [vmem:[#allocation4 + $0x40] sm:$0xf] %vm1494, %v1481
      %1504 = vst.msk [vmem:[#allocation4 + $0x48] sm:$0xf] %vm1494, %v1483
      %v1505 = vld [vmem:[%s332 + $0x19] sm:$0xff]
      %v1506 = vld [vmem:[%s332 + $0x21] sm:$0xff]
      %v1507 = vld [vmem:[%s332 + $0x29] sm:$0xff]
      %v1508 = vld [vmem:[%s332 + $0x31] sm:$0xff]
      %v1509 = vld [vmem:[%s332 + $0x39] sm:$0xff]
      %v1510 = vld [vmem:[%s332 + $0x41] sm:$0xff]
      %v1511 = vld [vmem:[%s332 + $0x49] sm:$0xff]
      %v1512 = vld [vmem:[%s332 + $0x51] sm:$0xff]
      %v1513 = vld [vmem:[%s332 + $0x59] sm:$0xff]
      %v1514 = vld [vmem:[%s332 + $0x61] sm:$0xff]
      %v1515 = vpack.c.bf16 %v1505, %v1505
      %v1516 = vpack.c.bf16 %v1506, %v1506
      %v1517 = vpack.c.bf16 %v1507, %v1507
      %v1518 = vpack.c.bf16 %v1508, %v1508
      %v1519 = vpack.c.bf16 %v1509, %v1509
      %v1520 = vpack.c.bf16 %v1510, %v1510
      %v1521 = vpack.c.bf16 %v1511, %v1511
      %v1522 = vpack.c.bf16 %v1512, %v1512
      %v1523 = vpack.c.bf16 %v1513, %v1513
      %v1524 = vpack.c.bf16 %v1514, %v1514
      %1535 = vrot.lane.b32.xlu0 %v1515, 96
      %v1536 = vpop.permute.xlu0 %1535
      %1537 = vrot.lane.b32.xlu0 %v1516, 96
      %v1538 = vpop.permute.xlu0 %1537
      %1539 = vrot.lane.b32.xlu0 %v1517, 96
      %v1540 = vpop.permute.xlu0 %1539
      %1541 = vrot.lane.b32.xlu0 %v1518, 96
      %v1542 = vpop.permute.xlu0 %1541
      %1543 = vrot.lane.b32.xlu0 %v1519, 96
      %v1544 = vpop.permute.xlu0 %1543
      %1545 = vrot.lane.b32.xlu0 %v1520, 96
      %v1546 = vpop.permute.xlu0 %1545
      %1547 = vrot.lane.b32.xlu0 %v1521, 96
      %v1548 = vpop.permute.xlu0 %1547
      %1549 = vrot.lane.b32.xlu0 %v1522, 96
      %v1550 = vpop.permute.xlu0 %1549
      %1551 = vrot.lane.b32.xlu0 %v1523, 96
      %v1552 = vpop.permute.xlu0 %1551
      %1553 = vrot.lane.b32.xlu0 %v1524, 96
      %v1554 = vpop.permute.xlu0 %1553
      %vm1565 = vcmask 913152
      %1566 = vst.msk [vmem:[#allocation4] sm:$0xf] %vm1565, %v1536
      %1567 = vst.msk [vmem:[#allocation4 + $0x8] sm:$0xf] %vm1565, %v1538
      %1568 = vst.msk [vmem:[#allocation4 + $0x10] sm:$0xf] %vm1565, %v1540
      %1569 = vst.msk [vmem:[#allocation4 + $0x18] sm:$0xf] %vm1565, %v1542
      %1570 = vst.msk [vmem:[#allocation4 + $0x20] sm:$0xf] %vm1565, %v1544
      %1571 = vst.msk [vmem:[#allocation4 + $0x28] sm:$0xf] %vm1565, %v1546
      %1572 = vst.msk [vmem:[#allocation4 + $0x30] sm:$0xf] %vm1565, %v1548
      %1573 = vst.msk [vmem:[#allocation4 + $0x38] sm:$0xf] %vm1565, %v1550
      %1574 = vst.msk [vmem:[#allocation4 + $0x40] sm:$0xf] %vm1565, %v1552
      %1575 = vst.msk [vmem:[#allocation4 + $0x48] sm:$0xf] %vm1565, %v1554
      %v1576 = vld [vmem:[%s332 + $0x1a] sm:$0xff]
      %v1577 = vld [vmem:[%s332 + $0x22] sm:$0xff]
      %v1578 = vld [vmem:[%s332 + $0x2a] sm:$0xff]
      %v1579 = vld [vmem:[%s332 + $0x32] sm:$0xff]
      %v1580 = vld [vmem:[%s332 + $0x3a] sm:$0xff]
      %v1581 = vld [vmem:[%s332 + $0x42] sm:$0xff]
      %v1582 = vld [vmem:[%s332 + $0x4a] sm:$0xff]
      %v1583 = vld [vmem:[%s332 + $0x52] sm:$0xff]
      %v1584 = vld [vmem:[%s332 + $0x5a] sm:$0xff]
      %v1585 = vld [vmem:[%s332 + $0x62] sm:$0xff]
      %v1586 = vpack.c.bf16 %v1576, %v1576
      %v1587 = vpack.c.bf16 %v1577, %v1577
      %v1588 = vpack.c.bf16 %v1578, %v1578
      %v1589 = vpack.c.bf16 %v1579, %v1579
      %v1590 = vpack.c.bf16 %v1580, %v1580
      %v1591 = vpack.c.bf16 %v1581, %v1581
      %v1592 = vpack.c.bf16 %v1582, %v1582
      %v1593 = vpack.c.bf16 %v1583, %v1583
      %v1594 = vpack.c.bf16 %v1584, %v1584
      %v1595 = vpack.c.bf16 %v1585, %v1585
      %1606 = vrot.lane.b32.xlu0 %v1586, 112
      %v1607 = vpop.permute.xlu0 %1606
      %1608 = vrot.lane.b32.xlu0 %v1587, 112
      %v1609 = vpop.permute.xlu0 %1608
      %1610 = vrot.lane.b32.xlu0 %v1588, 112
      %v1611 = vpop.permute.xlu0 %1610
      %1612 = vrot.lane.b32.xlu0 %v1589, 112
      %v1613 = vpop.permute.xlu0 %1612
      %1614 = vrot.lane.b32.xlu0 %v1590, 112
      %v1615 = vpop.permute.xlu0 %1614
      %1616 = vrot.lane.b32.xlu0 %v1591, 112
      %v1617 = vpop.permute.xlu0 %1616
      %1618 = vrot.lane.b32.xlu0 %v1592, 112
      %v1619 = vpop.permute.xlu0 %1618
      %1620 = vrot.lane.b32.xlu0 %v1593, 112
      %v1621 = vpop.permute.xlu0 %1620
      %1622 = vrot.lane.b32.xlu0 %v1594, 112
      %v1623 = vpop.permute.xlu0 %1622
      %1624 = vrot.lane.b32.xlu0 %v1595, 112
      %v1625 = vpop.permute.xlu0 %1624
      %vm1636 = vcmask 1044352
      %1637 = vst.msk [vmem:[#allocation4] sm:$0xf] %vm1636, %v1607
      %1638 = vst.msk [vmem:[#allocation4 + $0x8] sm:$0xf] %vm1636, %v1609
      %1639 = vst.msk [vmem:[#allocation4 + $0x10] sm:$0xf] %vm1636, %v1611
      %1640 = vst.msk [vmem:[#allocation4 + $0x18] sm:$0xf] %vm1636, %v1613
      %1641 = vst.msk [vmem:[#allocation4 + $0x20] sm:$0xf] %vm1636, %v1615
      %1642 = vst.msk [vmem:[#allocation4 + $0x28] sm:$0xf] %vm1636, %v1617
      %1643 = vst.msk [vmem:[#allocation4 + $0x30] sm:$0xf] %vm1636, %v1619
      %1644 = vst.msk [vmem:[#allocation4 + $0x38] sm:$0xf] %vm1636, %v1621
      %1645 = vst.msk [vmem:[#allocation4 + $0x40] sm:$0xf] %vm1636, %v1623
      %1646 = vst.msk [vmem:[#allocation4 + $0x48] sm:$0xf] %vm1636, %v1625
      %v1647 = vld [vmem:[%s332 + $0x1b] sm:$0xff]
      %v1648 = vld [vmem:[%s332 + $0x23] sm:$0xff]
      %v1649 = vld [vmem:[%s332 + $0x2b] sm:$0xff]
      %v1650 = vld [vmem:[%s332 + $0x33] sm:$0xff]
      %v1651 = vld [vmem:[%s332 + $0x3b] sm:$0xff]
      %v1652 = vld [vmem:[%s332 + $0x43] sm:$0xff]
      %v1653 = vld [vmem:[%s332 + $0x4b] sm:$0xff]
      %v1654 = vld [vmem:[%s332 + $0x53] sm:$0xff]
      %v1655 = vld [vmem:[%s332 + $0x5b] sm:$0xff]
      %v1656 = vld [vmem:[%s332 + $0x63] sm:$0xff]
      %v1657 = vpack.c.bf16 %v1647, %v1647
      %v1658 = vpack.c.bf16 %v1648, %v1648
      %v1659 = vpack.c.bf16 %v1649, %v1649
      %v1660 = vpack.c.bf16 %v1650, %v1650
      %v1661 = vpack.c.bf16 %v1651, %v1651
      %v1662 = vpack.c.bf16 %v1652, %v1652
      %v1663 = vpack.c.bf16 %v1653, %v1653
      %v1664 = vpack.c.bf16 %v1654, %v1654
      %v1665 = vpack.c.bf16 %v1655, %v1655
      %v1666 = vpack.c.bf16 %v1656, %v1656
      %1667 = vst.msk [vmem:[#allocation4 + $0x4] sm:$0xf] %vm1139, %v1657
      %1668 = vst.msk [vmem:[#allocation4 + $0xc] sm:$0xf] %vm1139, %v1658
      %1669 = vst.msk [vmem:[#allocation4 + $0x14] sm:$0xf] %vm1139, %v1659
      %1670 = vst.msk [vmem:[#allocation4 + $0x1c] sm:$0xf] %vm1139, %v1660
      %1671 = vst.msk [vmem:[#allocation4 + $0x24] sm:$0xf] %vm1139, %v1661
      %1672 = vst.msk [vmem:[#allocation4 + $0x2c] sm:$0xf] %vm1139, %v1662
      %1673 = vst.msk [vmem:[#allocation4 + $0x34] sm:$0xf] %vm1139, %v1663
      %1674 = vst.msk [vmem:[#allocation4 + $0x3c] sm:$0xf] %vm1139, %v1664
      %1675 = vst.msk [vmem:[#allocation4 + $0x44] sm:$0xf] %vm1139, %v1665
      %1676 = vst.msk [vmem:[#allocation4 + $0x4c] sm:$0xf] %vm1139, %v1666
      %s1677 = scalar_lea.vmem %s332, 112
      %v1678 = vld [vmem:[%s1677 + $0x5] sm:$0xff]
      %v1679 = vld [vmem:[%s1677 + $0xd] sm:$0xff]
      %v1680 = vld [vmem:[%s1677 + $0x15] sm:$0xff]
      %v1681 = vld [vmem:[%s1677 + $0x1d] sm:$0xff]
      %v1682 = vld [vmem:[%s1677 + $0x25] sm:$0xff]
      %v1683 = vld [vmem:[%s1677 + $0x2d] sm:$0xff]
      %v1684 = vld [vmem:[%s1677 + $0x35] sm:$0xff]
      %v1685 = vld [vmem:[%s1677 + $0x3d] sm:$0xff]
      %v1686 = vld [vmem:[%s1677 + $0x45] sm:$0xff]
      %v1687 = vld [vmem:[%s1677 + $0x4d] sm:$0xff]
      %v1688 = vpack.c.bf16 %v1678, %v1678
      %v1689 = vpack.c.bf16 %v1679, %v1679
      %v1690 = vpack.c.bf16 %v1680, %v1680
      %v1691 = vpack.c.bf16 %v1681, %v1681
      %v1692 = vpack.c.bf16 %v1682, %v1682
      %v1693 = vpack.c.bf16 %v1683, %v1683
      %v1694 = vpack.c.bf16 %v1684, %v1684
      %v1695 = vpack.c.bf16 %v1685, %v1685
      %v1696 = vpack.c.bf16 %v1686, %v1686
      %v1697 = vpack.c.bf16 %v1687, %v1687
      %1698 = vst.msk [vmem:[#allocation4 + $0x50] sm:$0xf] %vm1139, %v1688
      %1699 = vst.msk [vmem:[#allocation4 + $0x58] sm:$0xf] %vm1139, %v1689
      %1700 = vst.msk [vmem:[#allocation4 + $0x60] sm:$0xf] %vm1139, %v1690
      %1701 = vst.msk [vmem:[#allocation4 + $0x68] sm:$0xf] %vm1139, %v1691
      %1702 = vst.msk [vmem:[#allocation4 + $0x70] sm:$0xf] %vm1139, %v1692
      %1703 = vst.msk [vmem:[#allocation4 + $0x78] sm:$0xf] %vm1139, %v1693
      %1704 = vst.msk [vmem:[#allocation4 + $0x80] sm:$0xf] %vm1139, %v1694
      %1705 = vst.msk [vmem:[#allocation4 + $0x88] sm:$0xf] %vm1139, %v1695
      %1706 = vst.msk [vmem:[#allocation4 + $0x90] sm:$0xf] %vm1139, %v1696
      %1707 = vst.msk [vmem:[#allocation4 + $0x98] sm:$0xf] %vm1139, %v1697
      %v1708 = vld [vmem:[%s1677 + $0x6] sm:$0xff]
      %v1709 = vld [vmem:[%s1677 + $0xe] sm:$0xff]
      %v1710 = vld [vmem:[%s1677 + $0x16] sm:$0xff]
      %v1711 = vld [vmem:[%s1677 + $0x1e] sm:$0xff]
      %v1712 = vld [vmem:[%s1677 + $0x26] sm:$0xff]
      %v1713 = vld [vmem:[%s1677 + $0x2e] sm:$0xff]
      %v1714 = vld [vmem:[%s1677 + $0x36] sm:$0xff]
      %v1715 = vld [vmem:[%s1677 + $0x3e] sm:$0xff]
      %v1716 = vld [vmem:[%s1677 + $0x46] sm:$0xff]
      %v1717 = vld [vmem:[%s1677 + $0x4e] sm:$0xff]
      %v1718 = vpack.c.bf16 %v1708, %v1708
      %v1719 = vpack.c.bf16 %v1709, %v1709
      %v1720 = vpack.c.bf16 %v1710, %v1710
      %v1721 = vpack.c.bf16 %v1711, %v1711
      %v1722 = vpack.c.bf16 %v1712, %v1712
      %v1723 = vpack.c.bf16 %v1713, %v1713
      %v1724 = vpack.c.bf16 %v1714, %v1714
      %v1725 = vpack.c.bf16 %v1715, %v1715
      %v1726 = vpack.c.bf16 %v1716, %v1716
      %v1727 = vpack.c.bf16 %v1717, %v1717
      %1738 = vrot.lane.b32.xlu0 %v1718, 16
      %v1739 = vpop.permute.xlu0 %1738
      %1740 = vrot.lane.b32.xlu0 %v1719, 16
      %v1741 = vpop.permute.xlu0 %1740
      %1742 = vrot.lane.b32.xlu0 %v1720, 16
      %v1743 = vpop.permute.xlu0 %1742
      %1744 = vrot.lane.b32.xlu0 %v1721, 16
      %v1745 = vpop.permute.xlu0 %1744
      %1746 = vrot.lane.b32.xlu0 %v1722, 16
      %v1747 = vpop.permute.xlu0 %1746
      %1748 = vrot.lane.b32.xlu0 %v1723, 16
      %v1749 = vpop.permute.xlu0 %1748
      %1750 = vrot.lane.b32.xlu0 %v1724, 16
      %v1751 = vpop.permute.xlu0 %1750
      %1752 = vrot.lane.b32.xlu0 %v1725, 16
      %v1753 = vpop.permute.xlu0 %1752
      %1754 = vrot.lane.b32.xlu0 %v1726, 16
      %v1755 = vpop.permute.xlu0 %1754
      %1756 = vrot.lane.b32.xlu0 %v1727, 16
      %v1757 = vpop.permute.xlu0 %1756
      %1768 = vst.msk [vmem:[#allocation4 + $0x50] sm:$0xf] %vm1210, %v1739
      %1769 = vst.msk [vmem:[#allocation4 + $0x58] sm:$0xf] %vm1210, %v1741
      %1770 = vst.msk [vmem:[#allocation4 + $0x60] sm:$0xf] %vm1210, %v1743
      %1771 = vst.msk [vmem:[#allocation4 + $0x68] sm:$0xf] %vm1210, %v1745
      %1772 = vst.msk [vmem:[#allocation4 + $0x70] sm:$0xf] %vm1210, %v1747
      %1773 = vst.msk [vmem:[#allocation4 + $0x78] sm:$0xf] %vm1210, %v1749
      %1774 = vst.msk [vmem:[#allocation4 + $0x80] sm:$0xf] %vm1210, %v1751
      %1775 = vst.msk [vmem:[#allocation4 + $0x88] sm:$0xf] %vm1210, %v1753
      %1776 = vst.msk [vmem:[#allocation4 + $0x90] sm:$0xf] %vm1210, %v1755
      %1777 = vst.msk [vmem:[#allocation4 + $0x98] sm:$0xf] %vm1210, %v1757
      %v1778 = vld [vmem:[%s1677 + $0x7] sm:$0xff]
      %v1779 = vld [vmem:[%s1677 + $0xf] sm:$0xff]
      %v1780 = vld [vmem:[%s1677 + $0x17] sm:$0xff]
      %v1781 = vld [vmem:[%s1677 + $0x1f] sm:$0xff]
      %v1782 = vld [vmem:[%s1677 + $0x27] sm:$0xff]
      %v1783 = vld [vmem:[%s1677 + $0x2f] sm:$0xff]
      %v1784 = vld [vmem:[%s1677 + $0x37] sm:$0xff]
      %v1785 = vld [vmem:[%s1677 + $0x3f] sm:$0xff]
      %v1786 = vld [vmem:[%s1677 + $0x47] sm:$0xff]
      %v1787 = vld [vmem:[%s1677 + $0x4f] sm:$0xff]
      %v1788 = vpack.c.bf16 %v1778, %v1778
      %v1789 = vpack.c.bf16 %v1779, %v1779
      %v1790 = vpack.c.bf16 %v1780, %v1780
      %v1791 = vpack.c.bf16 %v1781, %v1781
      %v1792 = vpack.c.bf16 %v1782, %v1782
      %v1793 = vpack.c.bf16 %v1783, %v1783
      %v1794 = vpack.c.bf16 %v1784, %v1784
      %v1795 = vpack.c.bf16 %v1785, %v1785
      %v1796 = vpack.c.bf16 %v1786, %v1786
      %v1797 = vpack.c.bf16 %v1787, %v1787
      %1808 = vrot.lane.b32.xlu0 %v1788, 32
      %v1809 = vpop.permute.xlu0 %1808
      %1810 = vrot.lane.b32.xlu0 %v1789, 32
      %v1811 = vpop.permute.xlu0 %1810
      %1812 = vrot.lane.b32.xlu0 %v1790, 32
      %v1813 = vpop.permute.xlu0 %1812
      %1814 = vrot.lane.b32.xlu0 %v1791, 32
      %v1815 = vpop.permute.xlu0 %1814
      %1816 = vrot.lane.b32.xlu0 %v1792, 32
      %v1817 = vpop.permute.xlu0 %1816
      %1818 = vrot.lane.b32.xlu0 %v1793, 32
      %v1819 = vpop.permute.xlu0 %1818
      %1820 = vrot.lane.b32.xlu0 %v1794, 32
      %v1821 = vpop.permute.xlu0 %1820
      %1822 = vrot.lane.b32.xlu0 %v1795, 32
      %v1823 = vpop.permute.xlu0 %1822
      %1824 = vrot.lane.b32.xlu0 %v1796, 32
      %v1825 = vpop.permute.xlu0 %1824
      %1826 = vrot.lane.b32.xlu0 %v1797, 32
      %v1827 = vpop.permute.xlu0 %1826
      %1838 = vst.msk [vmem:[#allocation4 + $0x50] sm:$0xf] %vm1281, %v1809
      %1839 = vst.msk [vmem:[#allocation4 + $0x58] sm:$0xf] %vm1281, %v1811
      %1840 = vst.msk [vmem:[#allocation4 + $0x60] sm:$0xf] %vm1281, %v1813
      %1841 = vst.msk [vmem:[#allocation4 + $0x68] sm:$0xf] %vm1281, %v1815
      %1842 = vst.msk [vmem:[#allocation4 + $0x70] sm:$0xf] %vm1281, %v1817
      %1843 = vst.msk [vmem:[#allocation4 + $0x78] sm:$0xf] %vm1281, %v1819
      %1844 = vst.msk [vmem:[#allocation4 + $0x80] sm:$0xf] %vm1281, %v1821
      %1845 = vst.msk [vmem:[#allocation4 + $0x88] sm:$0xf] %vm1281, %v1823
      %1846 = vst.msk [vmem:[#allocation4 + $0x90] sm:$0xf] %vm1281, %v1825
      %1847 = vst.msk [vmem:[#allocation4 + $0x98] sm:$0xf] %vm1281, %v1827
      %v1848 = vld [vmem:[%s1677 + $0xf] sm:$0xff]
      %v1849 = vld [vmem:[%s1677 + $0x17] sm:$0xff]
      %v1850 = vld [vmem:[%s1677 + $0x1f] sm:$0xff]
      %v1851 = vld [vmem:[%s1677 + $0x27] sm:$0xff]
      %v1852 = vld [vmem:[%s1677 + $0x2f] sm:$0xff]
      %v1853 = vld [vmem:[%s1677 + $0x37] sm:$0xff]
      %v1854 = vld [vmem:[%s1677 + $0x3f] sm:$0xff]
      %v1855 = vld [vmem:[%s1677 + $0x47] sm:$0xff]
      %v1856 = vld [vmem:[%s1677 + $0x4f] sm:$0xff]
      %v1857 = vld [vmem:[%s1677 + $0x57] sm:$0xff]
      %v1858 = vpack.c.bf16 %v1848, %v1848
      %v1859 = vpack.c.bf16 %v1849, %v1849
      %v1860 = vpack.c.bf16 %v1850, %v1850
      %v1861 = vpack.c.bf16 %v1851, %v1851
      %v1862 = vpack.c.bf16 %v1852, %v1852
      %v1863 = vpack.c.bf16 %v1853, %v1853
      %v1864 = vpack.c.bf16 %v1854, %v1854
      %v1865 = vpack.c.bf16 %v1855, %v1855
      %v1866 = vpack.c.bf16 %v1856, %v1856
      %v1867 = vpack.c.bf16 %v1857, %v1857
      %1878 = vrot.lane.b32.xlu0 %v1858, 48
      %v1879 = vpop.permute.xlu0 %1878
      %1880 = vrot.lane.b32.xlu0 %v1859, 48
      %v1881 = vpop.permute.xlu0 %1880
      %1882 = vrot.lane.b32.xlu0 %v1860, 48
      %v1883 = vpop.permute.xlu0 %1882
      %1884 = vrot.lane.b32.xlu0 %v1861, 48
      %v1885 = vpop.permute.xlu0 %1884
      %1886 = vrot.lane.b32.xlu0 %v1862, 48
      %v1887 = vpop.permute.xlu0 %1886
      %1888 = vrot.lane.b32.xlu0 %v1863, 48
      %v1889 = vpop.permute.xlu0 %1888
      %1890 = vrot.lane.b32.xlu0 %v1864, 48
      %v1891 = vpop.permute.xlu0 %1890
      %1892 = vrot.lane.b32.xlu0 %v1865, 48
      %v1893 = vpop.permute.xlu0 %1892
      %1894 = vrot.lane.b32.xlu0 %v1866, 48
      %v1895 = vpop.permute.xlu0 %1894
      %1896 = vrot.lane.b32.xlu0 %v1867, 48
      %v1897 = vpop.permute.xlu0 %1896
      %1908 = vst.msk [vmem:[#allocation4 + $0x50] sm:$0xf] %vm1352, %v1879
      %1909 = vst.msk [vmem:[#allocation4 + $0x58] sm:$0xf] %vm1352, %v1881
      %1910 = vst.msk [vmem:[#allocation4 + $0x60] sm:$0xf] %vm1352, %v1883
      %1911 = vst.msk [vmem:[#allocation4 + $0x68] sm:$0xf] %vm1352, %v1885
      %1912 = vst.msk [vmem:[#allocation4 + $0x70] sm:$0xf] %vm1352, %v1887
      %1913 = vst.msk [vmem:[#allocation4 + $0x78] sm:$0xf] %vm1352, %v1889
      %1914 = vst.msk [vmem:[#allocation4 + $0x80] sm:$0xf] %vm1352, %v1891
      %1915 = vst.msk [vmem:[#allocation4 + $0x88] sm:$0xf] %vm1352, %v1893
      %1916 = vst.msk [vmem:[#allocation4 + $0x90] sm:$0xf] %vm1352, %v1895
      %1917 = vst.msk [vmem:[#allocation4 + $0x98] sm:$0xf] %vm1352, %v1897
      %v1918 = vld [vmem:[%s1677 + $0x10] sm:$0xff]
      %v1919 = vld [vmem:[%s1677 + $0x18] sm:$0xff]
      %v1920 = vld [vmem:[%s1677 + $0x20] sm:$0xff]
      %v1921 = vld [vmem:[%s1677 + $0x28] sm:$0xff]
      %v1922 = vld [vmem:[%s1677 + $0x30] sm:$0xff]
      %v1923 = vld [vmem:[%s1677 + $0x38] sm:$0xff]
      %v1924 = vld [vmem:[%s1677 + $0x40] sm:$0xff]
      %v1925 = vld [vmem:[%s1677 + $0x48] sm:$0xff]
      %v1926 = vld [vmem:[%s1677 + $0x50] sm:$0xff]
      %v1927 = vld [vmem:[%s1677 + $0x58] sm:$0xff]
      %v1928 = vpack.c.bf16 %v1918, %v1918
      %v1929 = vpack.c.bf16 %v1919, %v1919
      %v1930 = vpack.c.bf16 %v1920, %v1920
      %v1931 = vpack.c.bf16 %v1921, %v1921
      %v1932 = vpack.c.bf16 %v1922, %v1922
      %v1933 = vpack.c.bf16 %v1923, %v1923
      %v1934 = vpack.c.bf16 %v1924, %v1924
      %v1935 = vpack.c.bf16 %v1925, %v1925
      %v1936 = vpack.c.bf16 %v1926, %v1926
      %v1937 = vpack.c.bf16 %v1927, %v1927
      %1948 = vrot.lane.b32.xlu0 %v1928, 64
      %v1949 = vpop.permute.xlu0 %1948
      %1950 = vrot.lane.b32.xlu0 %v1929, 64
      %v1951 = vpop.permute.xlu0 %1950
      %1952 = vrot.lane.b32.xlu0 %v1930, 64
      %v1953 = vpop.permute.xlu0 %1952
      %1954 = vrot.lane.b32.xlu0 %v1931, 64
      %v1955 = vpop.permute.xlu0 %1954
      %1956 = vrot.lane.b32.xlu0 %v1932, 64
      %v1957 = vpop.permute.xlu0 %1956
      %1958 = vrot.lane.b32.xlu0 %v1933, 64
      %v1959 = vpop.permute.xlu0 %1958
      %1960 = vrot.lane.b32.xlu0 %v1934, 64
      %v1961 = vpop.permute.xlu0 %1960
      %1962 = vrot.lane.b32.xlu0 %v1935, 64
      %v1963 = vpop.permute.xlu0 %1962
      %1964 = vrot.lane.b32.xlu0 %v1936, 64
      %v1965 = vpop.permute.xlu0 %1964
      %1966 = vrot.lane.b32.xlu0 %v1937, 64
      %v1967 = vpop.permute.xlu0 %1966
      %1978 = vst.msk [vmem:[#allocation4 + $0x50] sm:$0xf] %vm1423, %v1949
      %1979 = vst.msk [vmem:[#allocation4 + $0x58] sm:$0xf] %vm1423, %v1951
      %1980 = vst.msk [vmem:[#allocation4 + $0x60] sm:$0xf] %vm1423, %v1953
      %1981 = vst.msk [vmem:[#allocation4 + $0x68] sm:$0xf] %vm1423, %v1955
      %1982 = vst.msk [vmem:[#allocation4 + $0x70] sm:$0xf] %vm1423, %v1957
      %1983 = vst.msk [vmem:[#allocation4 + $0x78] sm:$0xf] %vm1423, %v1959
      %1984 = vst.msk [vmem:[#allocation4 + $0x80] sm:$0xf] %vm1423, %v1961
      %1985 = vst.msk [vmem:[#allocation4 + $0x88] sm:$0xf] %vm1423, %v1963
      %1986 = vst.msk [vmem:[#allocation4 + $0x90] sm:$0xf] %vm1423, %v1965
      %1987 = vst.msk [vmem:[#allocation4 + $0x98] sm:$0xf] %vm1423, %v1967
      %v1988 = vld [vmem:[%s1677 + $0x11] sm:$0xff]
      %v1989 = vld [vmem:[%s1677 + $0x19] sm:$0xff]
      %v1990 = vld [vmem:[%s1677 + $0x21] sm:$0xff]
      %v1991 = vld [vmem:[%s1677 + $0x29] sm:$0xff]
      %v1992 = vld [vmem:[%s1677 + $0x31] sm:$0xff]
      %v1993 = vld [vmem:[%s1677 + $0x39] sm:$0xff]
      %v1994 = vld [vmem:[%s1677 + $0x41] sm:$0xff]
      %v1995 = vld [vmem:[%s1677 + $0x49] sm:$0xff]
      %v1996 = vld [vmem:[%s1677 + $0x51] sm:$0xff]
      %v1997 = vld [vmem:[%s1677 + $0x59] sm:$0xff]
      %v1998 = vpack.c.bf16 %v1988, %v1988
      %v1999 = vpack.c.bf16 %v1989, %v1989
      %v2000 = vpack.c.bf16 %v1990, %v1990
      %v2001 = vpack.c.bf16 %v1991, %v1991
      %v2002 = vpack.c.bf16 %v1992, %v1992
      %v2003 = vpack.c.bf16 %v1993, %v1993
      %v2004 = vpack.c.bf16 %v1994, %v1994
      %v2005 = vpack.c.bf16 %v1995, %v1995
      %v2006 = vpack.c.bf16 %v1996, %v1996
      %v2007 = vpack.c.bf16 %v1997, %v1997
      %2018 = vrot.lane.b32.xlu0 %v1998, 80
      %v2019 = vpop.permute.xlu0 %2018
      %2020 = vrot.lane.b32.xlu0 %v1999, 80
      %v2021 = vpop.permute.xlu0 %2020
      %2022 = vrot.lane.b32.xlu0 %v2000, 80
      %v2023 = vpop.permute.xlu0 %2022
      %2024 = vrot.lane.b32.xlu0 %v2001, 80
      %v2025 = vpop.permute.xlu0 %2024
      %2026 = vrot.lane.b32.xlu0 %v2002, 80
      %v2027 = vpop.permute.xlu0 %2026
      %2028 = vrot.lane.b32.xlu0 %v2003, 80
      %v2029 = vpop.permute.xlu0 %2028
      %2030 = vrot.lane.b32.xlu0 %v2004, 80
      %v2031 = vpop.permute.xlu0 %2030
      %2032 = vrot.lane.b32.xlu0 %v2005, 80
      %v2033 = vpop.permute.xlu0 %2032
      %2034 = vrot.lane.b32.xlu0 %v2006, 80
      %v2035 = vpop.permute.xlu0 %2034
      %2036 = vrot.lane.b32.xlu0 %v2007, 80
      %v2037 = vpop.permute.xlu0 %2036
      %2048 = vst.msk [vmem:[#allocation4 + $0x50] sm:$0xf] %vm1494, %v2019
      %2049 = vst.msk [vmem:[#allocation4 + $0x58] sm:$0xf] %vm1494, %v2021
      %2050 = vst.msk [vmem:[#allocation4 + $0x60] sm:$0xf] %vm1494, %v2023
      %2051 = vst.msk [vmem:[#allocation4 + $0x68] sm:$0xf] %vm1494, %v2025
      %2052 = vst.msk [vmem:[#allocation4 + $0x70] sm:$0xf] %vm1494, %v2027
      %2053 = vst.msk [vmem:[#allocation4 + $0x78] sm:$0xf] %vm1494, %v2029
      %2054 = vst.msk [vmem:[#allocation4 + $0x80] sm:$0xf] %vm1494, %v2031
      %2055 = vst.msk [vmem:[#allocation4 + $0x88] sm:$0xf] %vm1494, %v2033
      %2056 = vst.msk [vmem:[#allocation4 + $0x90] sm:$0xf] %vm1494, %v2035
      %2057 = vst.msk [vmem:[#allocation4 + $0x98] sm:$0xf] %vm1494, %v2037
      %v2058 = vld [vmem:[%s1677 + $0x19] sm:$0xff]
      %v2059 = vld [vmem:[%s1677 + $0x21] sm:$0xff]
      %v2060 = vld [vmem:[%s1677 + $0x29] sm:$0xff]
      %v2061 = vld [vmem:[%s1677 + $0x31] sm:$0xff]
      %v2062 = vld [vmem:[%s1677 + $0x39] sm:$0xff]
      %v2063 = vld [vmem:[%s1677 + $0x41] sm:$0xff]
      %v2064 = vld [vmem:[%s1677 + $0x49] sm:$0xff]
      %v2065 = vld [vmem:[%s1677 + $0x51] sm:$0xff]
      %v2066 = vld [vmem:[%s1677 + $0x59] sm:$0xff]
      %v2067 = vld [vmem:[%s1677 + $0x61] sm:$0xff]
      %v2068 = vpack.c.bf16 %v2058, %v2058
      %v2069 = vpack.c.bf16 %v2059, %v2059
      %v2070 = vpack.c.bf16 %v2060, %v2060
      %v2071 = vpack.c.bf16 %v2061, %v2061
      %v2072 = vpack.c.bf16 %v2062, %v2062
      %v2073 = vpack.c.bf16 %v2063, %v2063
      %v2074 = vpack.c.bf16 %v2064, %v2064
      %v2075 = vpack.c.bf16 %v2065, %v2065
      %v2076 = vpack.c.bf16 %v2066, %v2066
      %v2077 = vpack.c.bf16 %v2067, %v2067
      %2088 = vrot.lane.b32.xlu0 %v2068, 96
      %v2089 = vpop.permute.xlu0 %2088
      %2090 = vrot.lane.b32.xlu0 %v2069, 96
      %v2091 = vpop.permute.xlu0 %2090
      %2092 = vrot.lane.b32.xlu0 %v2070, 96
      %v2093 = vpop.permute.xlu0 %2092
      %2094 = vrot.lane.b32.xlu0 %v2071, 96
      %v2095 = vpop.permute.xlu0 %2094
      %2096 = vrot.lane.b32.xlu0 %v2072, 96
      %v2097 = vpop.permute.xlu0 %2096
      %2098 = vrot.lane.b32.xlu0 %v2073, 96
      %v2099 = vpop.permute.xlu0 %2098
      %2100 = vrot.lane.b32.xlu0 %v2074, 96
      %v2101 = vpop.permute.xlu0 %2100
      %2102 = vrot.lane.b32.xlu0 %v2075, 96
      %v2103 = vpop.permute.xlu0 %2102
      %2104 = vrot.lane.b32.xlu0 %v2076, 96
      %v2105 = vpop.permute.xlu0 %2104
      %2106 = vrot.lane.b32.xlu0 %v2077, 96
      %v2107 = vpop.permute.xlu0 %2106
      %2118 = vst.msk [vmem:[#allocation4 + $0x50] sm:$0xf] %vm1565, %v2089
      %2119 = vst.msk [vmem:[#allocation4 + $0x58] sm:$0xf] %vm1565, %v2091
      %2120 = vst.msk [vmem:[#allocation4 + $0x60] sm:$0xf] %vm1565, %v2093
      %2121 = vst.msk [vmem:[#allocation4 + $0x68] sm:$0xf] %vm1565, %v2095
      %2122 = vst.msk [vmem:[#allocation4 + $0x70] sm:$0xf] %vm1565, %v2097
      %2123 = vst.msk [vmem:[#allocation4 + $0x78] sm:$0xf] %vm1565, %v2099
      %2124 = vst.msk [vmem:[#allocation4 + $0x80] sm:$0xf] %vm1565, %v2101
      %2125 = vst.msk [vmem:[#allocation4 + $0x88] sm:$0xf] %vm1565, %v2103
      %2126 = vst.msk [vmem:[#allocation4 + $0x90] sm:$0xf] %vm1565, %v2105
      %2127 = vst.msk [vmem:[#allocation4 + $0x98] sm:$0xf] %vm1565, %v2107
      %v2128 = vld [vmem:[%s1677 + $0x1a] sm:$0xff]
      %v2129 = vld [vmem:[%s1677 + $0x22] sm:$0xff]
      %v2130 = vld [vmem:[%s1677 + $0x2a] sm:$0xff]
      %v2131 = vld [vmem:[%s1677 + $0x32] sm:$0xff]
      %v2132 = vld [vmem:[%s1677 + $0x3a] sm:$0xff]
      %v2133 = vld [vmem:[%s1677 + $0x42] sm:$0xff]
      %v2134 = vld [vmem:[%s1677 + $0x4a] sm:$0xff]
      %v2135 = vld [vmem:[%s1677 + $0x52] sm:$0xff]
      %v2136 = vld [vmem:[%s1677 + $0x5a] sm:$0xff]
      %v2137 = vld [vmem:[%s1677 + $0x62] sm:$0xff]
      %v2138 = vpack.c.bf16 %v2128, %v2128
      %v2139 = vpack.c.bf16 %v2129, %v2129
      %v2140 = vpack.c.bf16 %v2130, %v2130
      %v2141 = vpack.c.bf16 %v2131, %v2131
      %v2142 = vpack.c.bf16 %v2132, %v2132
      %v2143 = vpack.c.bf16 %v2133, %v2133
      %v2144 = vpack.c.bf16 %v2134, %v2134
      %v2145 = vpack.c.bf16 %v2135, %v2135
      %v2146 = vpack.c.bf16 %v2136, %v2136
      %v2147 = vpack.c.bf16 %v2137, %v2137
      %2158 = vrot.lane.b32.xlu0 %v2138, 112
      %v2159 = vpop.permute.xlu0 %2158
      %2160 = vrot.lane.b32.xlu0 %v2139, 112
      %v2161 = vpop.permute.xlu0 %2160
      %2162 = vrot.lane.b32.xlu0 %v2140, 112
      %v2163 = vpop.permute.xlu0 %2162
      %2164 = vrot.lane.b32.xlu0 %v2141, 112
      %v2165 = vpop.permute.xlu0 %2164
      %2166 = vrot.lane.b32.xlu0 %v2142, 112
      %v2167 = vpop.permute.xlu0 %2166
      %2168 = vrot.lane.b32.xlu0 %v2143, 112
      %v2169 = vpop.permute.xlu0 %2168
      %2170 = vrot.lane.b32.xlu0 %v2144, 112
      %v2171 = vpop.permute.xlu0 %2170
      %2172 = vrot.lane.b32.xlu0 %v2145, 112
      %v2173 = vpop.permute.xlu0 %2172
      %2174 = vrot.lane.b32.xlu0 %v2146, 112
      %v2175 = vpop.permute.xlu0 %2174
      %2176 = vrot.lane.b32.xlu0 %v2147, 112
      %v2177 = vpop.permute.xlu0 %2176
      %2188 = vst.msk [vmem:[#allocation4 + $0x50] sm:$0xf] %vm1636, %v2159
      %2189 = vst.msk [vmem:[#allocation4 + $0x58] sm:$0xf] %vm1636, %v2161
      %2190 = vst.msk [vmem:[#allocation4 + $0x60] sm:$0xf] %vm1636, %v2163
      %2191 = vst.msk [vmem:[#allocation4 + $0x68] sm:$0xf] %vm1636, %v2165
      %2192 = vst.msk [vmem:[#allocation4 + $0x70] sm:$0xf] %vm1636, %v2167
      %2193 = vst.msk [vmem:[#allocation4 + $0x78] sm:$0xf] %vm1636, %v2169
      %2194 = vst.msk [vmem:[#allocation4 + $0x80] sm:$0xf] %vm1636, %v2171
      %2195 = vst.msk [vmem:[#allocation4 + $0x88] sm:$0xf] %vm1636, %v2173
      %2196 = vst.msk [vmem:[#allocation4 + $0x90] sm:$0xf] %vm1636, %v2175
      %2197 = vst.msk [vmem:[#allocation4 + $0x98] sm:$0xf] %vm1636, %v2177
      %v2198 = vld [vmem:[%s1677 + $0x1b] sm:$0xff]
      %v2199 = vld [vmem:[%s1677 + $0x23] sm:$0xff]
      %v2200 = vld [vmem:[%s1677 + $0x2b] sm:$0xff]
      %v2201 = vld [vmem:[%s1677 + $0x33] sm:$0xff]
      %v2202 = vld [vmem:[%s1677 + $0x3b] sm:$0xff]
      %v2203 = vld [vmem:[%s1677 + $0x43] sm:$0xff]
      %v2204 = vld [vmem:[%s1677 + $0x4b] sm:$0xff]
      %v2205 = vld [vmem:[%s1677 + $0x53] sm:$0xff]
      %v2206 = vld [vmem:[%s1677 + $0x5b] sm:$0xff]
      %v2207 = vld [vmem:[%s1677 + $0x63] sm:$0xff]
      %v2208 = vpack.c.bf16 %v2198, %v2198
      %v2209 = vpack.c.bf16 %v2199, %v2199
      %v2210 = vpack.c.bf16 %v2200, %v2200
      %v2211 = vpack.c.bf16 %v2201, %v2201
      %v2212 = vpack.c.bf16 %v2202, %v2202
      %v2213 = vpack.c.bf16 %v2203, %v2203
      %v2214 = vpack.c.bf16 %v2204, %v2204
      %v2215 = vpack.c.bf16 %v2205, %v2205
      %v2216 = vpack.c.bf16 %v2206, %v2206
      %v2217 = vpack.c.bf16 %v2207, %v2207
      %2218 = vst.msk [vmem:[#allocation4 + $0x54] sm:$0xf] %vm1139, %v2208
      %2219 = vst.msk [vmem:[#allocation4 + $0x5c] sm:$0xf] %vm1139, %v2209
      %2220 = vst.msk [vmem:[#allocation4 + $0x64] sm:$0xf] %vm1139, %v2210
      %2221 = vst.msk [vmem:[#allocation4 + $0x6c] sm:$0xf] %vm1139, %v2211
      %2222 = vst.msk [vmem:[#allocation4 + $0x74] sm:$0xf] %vm1139, %v2212
      %2223 = vst.msk [vmem:[#allocation4 + $0x7c] sm:$0xf] %vm1139, %v2213
      %2224 = vst.msk [vmem:[#allocation4 + $0x84] sm:$0xf] %vm1139, %v2214
      %2225 = vst.msk [vmem:[#allocation4 + $0x8c] sm:$0xf] %vm1139, %v2215
      %2226 = vst.msk [vmem:[#allocation4 + $0x94] sm:$0xf] %vm1139, %v2216
      %2227 = vst.msk [vmem:[#allocation4 + $0x9c] sm:$0xf] %vm1139, %v2217
      %v2228 = vld [vmem:[#allocation4] sm:$0xff]
      %v2229 = vld [vmem:[#allocation4 + $0x8] sm:$0xff]
      %v2230 = vld [vmem:[#allocation4 + $0x10] sm:$0xff]
      %v2231 = vld [vmem:[#allocation4 + $0x18] sm:$0xff]
      %v2232 = vld [vmem:[#allocation4 + $0x20] sm:$0xff]
      %v2233 = vld [vmem:[#allocation4 + $0x28] sm:$0xff]
      %v2234 = vld [vmem:[#allocation4 + $0x30] sm:$0xff]
      %v2235 = vld [vmem:[#allocation4 + $0x38] sm:$0xff]
      %v2236 = vld [vmem:[#allocation4 + $0x40] sm:$0xff]
      %v2237 = vld [vmem:[#allocation4 + $0x48] sm:$0xff]
      %v2238 = vld [vmem:[#allocation4 + $0x50] sm:$0xff]
      %v2239 = vld [vmem:[#allocation4 + $0x58] sm:$0xff]
      %v2240 = vld [vmem:[#allocation4 + $0x60] sm:$0xff]
      %v2241 = vld [vmem:[#allocation4 + $0x68] sm:$0xff]
      %v2242 = vld [vmem:[#allocation4 + $0x70] sm:$0xff]
      %v2243 = vld [vmem:[#allocation4 + $0x78] sm:$0xff]
      %v2244 = vld [vmem:[#allocation4 + $0x80] sm:$0xff]
      %v2245 = vld [vmem:[#allocation4 + $0x88] sm:$0xff]
      %v2246 = vld [vmem:[#allocation4 + $0x90] sm:$0xff]
      %v2247 = vld [vmem:[#allocation4 + $0x98] sm:$0xff]
      %v2248 = vld [vmem:[%s1] sm:$0xf]
      %v2249 = vld [vmem:[%s1 + $0x4] sm:$0xf]
      %v2250 = vld [vmem:[%s1 + $0x8] sm:$0xf]
      %v2251 = vld [vmem:[%s1 + $0xc] sm:$0xf]
      %v2252 = vld [vmem:[%s1 + $0x10] sm:$0xf]
      %v2253 = vld [vmem:[%s1 + $0x14] sm:$0xf]
      %v2254 = vld [vmem:[%s1 + $0x18] sm:$0xf]
      %v2255 = vld [vmem:[%s1 + $0x1c] sm:$0xf]
      %v2256 = vld [vmem:[%s1 + $0x20] sm:$0xf]
      %v2257 = vld [vmem:[%s1 + $0x24] sm:$0xf]
      %v2258 = vld [vmem:[%s1 + $0x28] sm:$0xf]
      %v2259 = vld [vmem:[%s1 + $0x2c] sm:$0xf]
      %v2260 = vld [vmem:[%s1 + $0x30] sm:$0xf]
      %v2261 = vld [vmem:[%s1 + $0x34] sm:$0xf]
      %v2262 = vld [vmem:[%s1 + $0x38] sm:$0xf]
      %v2263 = vld [vmem:[%s1 + $0x3c] sm:$0xf]
      %v2264 = vld [vmem:[%s1 + $0x40] sm:$0xf]
      %v2265 = vld [vmem:[%s1 + $0x44] sm:$0xf]
      %v2266 = vld [vmem:[%s2] sm:$0x1]
      %v2268 = vperm.slane %v2266, 0
      %v2290 = vunpack.c.l.b16 %v2228
      %v2291 = vunpack.c.h.b16 %v2228
      %v2292 = vunpack.c.l.b16 %v2229
      %v2293 = vunpack.c.h.b16 %v2229
      %v2294 = vunpack.c.l.b16 %v2230
      %v2295 = vunpack.c.h.b16 %v2230
      %v2296 = vunpack.c.l.b16 %v2231
      %v2297 = vunpack.c.h.b16 %v2231
      %v2298 = vunpack.c.l.b16 %v2232
      %v2299 = vunpack.c.h.b16 %v2232
      %v2300 = vunpack.c.l.b16 %v2233
      %v2301 = vunpack.c.h.b16 %v2233
      %v2302 = vunpack.c.l.b16 %v2234
      %v2303 = vunpack.c.h.b16 %v2234
      %v2304 = vunpack.c.l.b16 %v2235
      %v2305 = vunpack.c.h.b16 %v2235
      %v2306 = vunpack.c.l.b16 %v2236
      %v2307 = vunpack.c.h.b16 %v2236
      %v2308 = vunpack.c.l.b16 %v2237
      %v2309 = vunpack.c.h.b16 %v2237
      %v2310 = vunpack.c.l.b16 %v2238
      %v2311 = vunpack.c.h.b16 %v2238
      %v2312 = vunpack.c.l.b16 %v2239
      %v2313 = vunpack.c.h.b16 %v2239
      %v2314 = vunpack.c.l.b16 %v2240
      %v2315 = vunpack.c.h.b16 %v2240
      %v2316 = vunpack.c.l.b16 %v2241
      %v2317 = vunpack.c.h.b16 %v2241
      %v2318 = vunpack.c.l.b16 %v2242
      %v2319 = vunpack.c.h.b16 %v2242
      %v2320 = vunpack.c.l.b16 %v2243
      %v2321 = vunpack.c.h.b16 %v2243
      %v2322 = vunpack.c.l.b16 %v2244
      %v2323 = vunpack.c.h.b16 %v2244
      %v2324 = vunpack.c.l.b16 %v2245
      %v2325 = vunpack.c.h.b16 %v2245
      %v2326 = vunpack.c.l.b16 %v2246
      %v2327 = vunpack.c.h.b16 %v2246
      %v2328 = vunpack.c.l.b16 %v2247
      %v2329 = vunpack.c.h.b16 %v2247
      %v2330 = vpack.c.b16 %v2292, %v2290
      %v2331 = vpack.c.b16 %v2293, %v2291
      %v2332 = vpack.c.b16 %v2296, %v2294
      %v2333 = vpack.c.b16 %v2297, %v2295
      %v2334 = vpack.c.b16 %v2300, %v2298
      %v2335 = vpack.c.b16 %v2301, %v2299
      %v2336 = vpack.c.b16 %v2304, %v2302
      %v2337 = vpack.c.b16 %v2305, %v2303
      %v2338 = vpack.c.b16 %v2308, %v2306
      %v2339 = vpack.c.b16 %v2309, %v2307
      %v2340 = vpack.c.b16 %v2312, %v2310
      %v2341 = vpack.c.b16 %v2313, %v2311
      %v2342 = vpack.c.b16 %v2316, %v2314
      %v2343 = vpack.c.b16 %v2317, %v2315
      %v2344 = vpack.c.b16 %v2320, %v2318
      %v2345 = vpack.c.b16 %v2321, %v2319
      %v2346 = vpack.c.b16 %v2324, %v2322
      %v2347 = vpack.c.b16 %v2325, %v2323
      %v2348 = vpack.c.b16 %v2328, %v2326
      %v2349 = vpack.c.b16 %v2329, %v2327
      %v2378 = vunpack.c.l.b16 %v2248
      %v2379 = vunpack.c.l.b16 %v2249
      %v2380 = vunpack.c.l.b16 %v2250
      %v2381 = vunpack.c.l.b16 %v2251
      %v2382 = vunpack.c.l.b16 %v2252
      %v2383 = vunpack.c.l.b16 %v2253
      %v2384 = vunpack.c.l.b16 %v2254
      %v2385 = vunpack.c.l.b16 %v2255
      %v2386 = vunpack.c.l.b16 %v2256
      %v2387 = vunpack.c.l.b16 %v2257
      %v2388 = vunpack.c.l.b16 %v2258
      %v2389 = vunpack.c.l.b16 %v2259
      %v2390 = vunpack.c.l.b16 %v2260
      %v2391 = vunpack.c.l.b16 %v2261
      %v2392 = vunpack.c.l.b16 %v2262
      %v2393 = vunpack.c.l.b16 %v2263
      %v2394 = vunpack.c.l.b16 %v2264
      %v2395 = vunpack.c.l.b16 %v2265
      %v2396 = vpack.c.b16 %v2379, %v2378
      %v2397 = vpack.c.b16 %v2381, %v2380
      %v2398 = vpack.c.b16 %v2383, %v2382
      %v2399 = vpack.c.b16 %v2385, %v2384
      %v2400 = vpack.c.b16 %v2387, %v2386
      %v2401 = vpack.c.b16 %v2389, %v2388
      %v2402 = vpack.c.b16 %v2391, %v2390
      %v2403 = vpack.c.b16 %v2393, %v2392
      %v2404 = vpack.c.b16 %v2395, %v2394
      %vm2414 = vcmask 130048
      %v2416 = vsel %vm2414, %v2331, 0
      %v2419 = vsel %vm2414, %v2333, 0
      %v2422 = vsel %vm2414, %v2335, 0
      %v2425 = vsel %vm2414, %v2337, 0
      %v2428 = vsel %vm2414, %v2339, 0
      %v2431 = vsel %vm2414, %v2341, 0
      %v2434 = vsel %vm2414, %v2343, 0
      %v2437 = vsel %vm2414, %v2345, 0
      %v2440 = vsel %vm2414, %v2347, 0
      %v2443 = vsel %vm2414, %v2349, 0
      %2445 = vmatpush.bf16.msra.mxu0 %v2403
      %2446 = vmatpush.bf16.msra.mxu0 %v2402
      %2447 = vmatpush.bf16.msra.mxu0 %v2401
      %2448 = vmatpush.bf16.msra.mxu0 %v2400
      %2449 = vmatpush.bf16.msra.mxu0 %v2399
      %2450 = vmatpush.bf16.msra.mxu0 %v2398
      %2451 = vmatpush.bf16.msra.mxu0 %v2397
      %2452 = vmatpush.bf16.msra.mxu0 %v2396
      %2453 = vmatmul.bf16.gmra.mxu0 %v2330
      %v2454 = vpop.f32.mrf.mxu0
      %v2455 = vadd.f32 %v2268, %v2454
      %v2456 = vpop.f32.mrf.mxu0
      %v2457 = vadd.f32 %v2268, %v2456
      %2458 = vmatmul.bf16.gmra.mxu0 %v2332
      %v2459 = vpop.f32.mrf.mxu0
      %v2460 = vadd.f32 %v2268, %v2459
      %v2461 = vpop.f32.mrf.mxu0
      %v2462 = vadd.f32 %v2268, %v2461
      %2463 = vmatmul.bf16.gmra.mxu0 %v2334
      %v2464 = vpop.f32.mrf.mxu0
      %v2465 = vadd.f32 %v2268, %v2464
      %v2466 = vpop.f32.mrf.mxu0
      %v2467 = vadd.f32 %v2268, %v2466
      %2468 = vmatmul.bf16.gmra.mxu0 %v2336
      %v2469 = vpop.f32.mrf.mxu0
      %v2470 = vadd.f32 %v2268, %v2469
      %v2471 = vpop.f32.mrf.mxu0
      %v2472 = vadd.f32 %v2268, %v2471
      %2473 = vmatmul.bf16.gmra.mxu0 %v2338
      %v2474 = vpop.f32.mrf.mxu0
      %v2475 = vadd.f32 %v2268, %v2474
      %v2476 = vpop.f32.mrf.mxu0
      %v2477 = vadd.f32 %v2268, %v2476
      %2478 = vmatmul.bf16.gmra.mxu0 %v2340
      %v2479 = vpop.f32.mrf.mxu0
      %v2480 = vadd.f32 %v2268, %v2479
      %v2481 = vpop.f32.mrf.mxu0
      %v2482 = vadd.f32 %v2268, %v2481
      %2483 = vmatmul.bf16.gmra.mxu0 %v2342
      %v2484 = vpop.f32.mrf.mxu0
      %v2485 = vadd.f32 %v2268, %v2484
      %v2486 = vpop.f32.mrf.mxu0
      %v2487 = vadd.f32 %v2268, %v2486
      %2488 = vmatmul.bf16.gmra.mxu0 %v2344
      %v2489 = vpop.f32.mrf.mxu0
      %v2490 = vadd.f32 %v2268, %v2489
      %v2491 = vpop.f32.mrf.mxu0
      %v2492 = vadd.f32 %v2268, %v2491
      %2493 = vmatmul.bf16.gmra.mxu0 %v2346
      %v2494 = vpop.f32.mrf.mxu0
      %v2495 = vadd.f32 %v2268, %v2494
      %v2496 = vpop.f32.mrf.mxu0
      %v2497 = vadd.f32 %v2268, %v2496
      %2498 = vmatmul.bf16.gmra.mxu0 %v2348
      %v2499 = vpop.f32.mrf.mxu0
      %v2500 = vadd.f32 %v2268, %v2499
      %v2501 = vpop.f32.mrf.mxu0
      %v2502 = vadd.f32 %v2268, %v2501
      %2503 = vdwg.mxu0
      %2504 = vmatpush.bf16.msra.mxu0 0
      %2505 = vmatpush.bf16.msra.mxu0 0
      %2506 = vmatpush.bf16.msra.mxu0 0
      %2507 = vmatpush.bf16.msra.mxu0 0
      %2508 = vmatpush.bf16.msra.mxu0 0
      %2509 = vmatpush.bf16.msra.mxu0 0
      %2510 = vmatpush.bf16.msra.mxu0 0
      %2511 = vmatpush.bf16.msra.mxu0 %v2404
      %2512 = vmatmul.bf16.gmra.mxu0 %v2416
      %v2513 = vpop.f32.mrf.mxu0
      %v2514 = vadd.f32 %v2455, %v2513
      %v2515 = vpop.f32.mrf.mxu0
      %v2516 = vadd.f32 %v2457, %v2515
      %2517 = vmatmul.bf16.gmra.mxu0 %v2419
      %v2518 = vpop.f32.mrf.mxu0
      %v2519 = vadd.f32 %v2460, %v2518
      %v2520 = vpop.f32.mrf.mxu0
      %v2521 = vadd.f32 %v2462, %v2520
      %2522 = vmatmul.bf16.gmra.mxu0 %v2422
      %v2523 = vpop.f32.mrf.mxu0
      %v2524 = vadd.f32 %v2465, %v2523
      %v2525 = vpop.f32.mrf.mxu0
      %v2526 = vadd.f32 %v2467, %v2525
      %2527 = vmatmul.bf16.gmra.mxu0 %v2425
      %v2528 = vpop.f32.mrf.mxu0
      %v2529 = vadd.f32 %v2470, %v2528
      %v2530 = vpop.f32.mrf.mxu0
      %v2531 = vadd.f32 %v2472, %v2530
      %2532 = vmatmul.bf16.gmra.mxu0 %v2428
      %v2533 = vpop.f32.mrf.mxu0
      %v2534 = vadd.f32 %v2475, %v2533
      %v2535 = vpop.f32.mrf.mxu0
      %v2536 = vadd.f32 %v2477, %v2535
      %2537 = vmatmul.bf16.gmra.mxu0 %v2431
      %v2538 = vpop.f32.mrf.mxu0
      %v2539 = vadd.f32 %v2480, %v2538
      %v2540 = vpop.f32.mrf.mxu0
      %v2541 = vadd.f32 %v2482, %v2540
      %2542 = vmatmul.bf16.gmra.mxu0 %v2434
      %v2543 = vpop.f32.mrf.mxu0
      %v2544 = vadd.f32 %v2485, %v2543
      %v2545 = vpop.f32.mrf.mxu0
      %v2546 = vadd.f32 %v2487, %v2545
      %2547 = vmatmul.bf16.gmra.mxu0 %v2437
      %v2548 = vpop.f32.mrf.mxu0
      %v2549 = vadd.f32 %v2490, %v2548
      %v2550 = vpop.f32.mrf.mxu0
      %v2551 = vadd.f32 %v2492, %v2550
      %2552 = vmatmul.bf16.gmra.mxu0 %v2440
      %v2553 = vpop.f32.mrf.mxu0
      %v2554 = vadd.f32 %v2495, %v2553
      %v2555 = vpop.f32.mrf.mxu0
      %v2556 = vadd.f32 %v2497, %v2555
      %2557 = vmatmul.bf16.gmra.mxu0 %v2443
      %v2558 = vpop.f32.mrf.mxu0
      %v2559 = vadd.f32 %v2500, %v2558
      %v2560 = vpop.f32.mrf.mxu0
      %v2561 = vadd.f32 %v2502, %v2560
      %2562 = vdwg.mxu0
      %v2563 = vmax.f32 %v2514, 0.0
      %v2564 = vmax.f32 %v2516, 0.0
      %v2565 = vmax.f32 %v2519, 0.0
      %v2566 = vmax.f32 %v2521, 0.0
      %v2567 = vmax.f32 %v2524, 0.0
      %v2568 = vmax.f32 %v2526, 0.0
      %v2569 = vmax.f32 %v2529, 0.0
      %v2570 = vmax.f32 %v2531, 0.0
      %v2571 = vmax.f32 %v2534, 0.0
      %v2572 = vmax.f32 %v2536, 0.0
      %v2573 = vmax.f32 %v2539, 0.0
      %v2574 = vmax.f32 %v2541, 0.0
      %v2575 = vmax.f32 %v2544, 0.0
      %v2576 = vmax.f32 %v2546, 0.0
      %v2577 = vmax.f32 %v2549, 0.0
      %v2578 = vmax.f32 %v2551, 0.0
      %v2579 = vmax.f32 %v2554, 0.0
      %v2580 = vmax.f32 %v2556, 0.0
      %v2581 = vmax.f32 %v2559, 0.0
      %v2582 = vmax.f32 %v2561, 0.0
      %v2583 = vmul.f32 %v2563, %v1080
      %v2584 = vmul.f32 %v2564, %v1081
      %v2585 = vmul.f32 %v2565, %v1082
      %v2586 = vmul.f32 %v2566, %v1083
      %v2587 = vmul.f32 %v2567, %v1084
      %v2588 = vmul.f32 %v2568, %v1085
      %v2589 = vmul.f32 %v2569, %v1086
      %v2590 = vmul.f32 %v2570, %v1087
      %v2591 = vmul.f32 %v2571, %v1088
      %v2592 = vmul.f32 %v2572, %v1089
      %v2593 = vmul.f32 %v2573, %v1090
      %v2594 = vmul.f32 %v2574, %v1091
      %v2595 = vmul.f32 %v2575, %v1092
      %v2596 = vmul.f32 %v2576, %v1093
      %v2597 = vmul.f32 %v2577, %v1094
      %v2598 = vmul.f32 %v2578, %v1095
      %v2599 = vmul.f32 %v2579, %v1096
      %v2600 = vmul.f32 %v2580, %v1097
      %v2601 = vmul.f32 %v2581, %v1098
      %v2602 = vmul.f32 %v2582, %v1099
      %2603 = vst.msk [vmem:[#allocation2 + $0x10] sm:$0xff] %vm1100, %v2583
      %2604 = vst.msk [vmem:[#allocation2 + $0x18] sm:$0xff] %vm1100, %v2584
      %2605 = vst.msk [vmem:[#allocation2 + $0x20] sm:$0xff] %vm1100, %v2585
      %2606 = vst.msk [vmem:[#allocation2 + $0x28] sm:$0xff] %vm1100, %v2586
      %2607 = vst.msk [vmem:[#allocation2 + $0x30] sm:$0xff] %vm1100, %v2587
      %2608 = vst.msk [vmem:[#allocation2 + $0x38] sm:$0xff] %vm1100, %v2588
      %2609 = vst.msk [vmem:[#allocation2 + $0x40] sm:$0xff] %vm1100, %v2589
      %2610 = vst.msk [vmem:[#allocation2 + $0x48] sm:$0xff] %vm1100, %v2590
      %2611 = vst.msk [vmem:[#allocation2 + $0x50] sm:$0xff] %vm1100, %v2591
      %2612 = vst.msk [vmem:[#allocation2 + $0x58] sm:$0xff] %vm1100, %v2592
      %2613 = vst.msk [vmem:[%s1109 + $0x10] sm:$0xff] %vm1100, %v2593
      %2614 = vst.msk [vmem:[%s1109 + $0x18] sm:$0xff] %vm1100, %v2594
      %2615 = vst.msk [vmem:[%s1109 + $0x20] sm:$0xff] %vm1100, %v2595
      %2616 = vst.msk [vmem:[%s1109 + $0x28] sm:$0xff] %vm1100, %v2596
      %2617 = vst.msk [vmem:[%s1109 + $0x30] sm:$0xff] %vm1100, %v2597
      %2618 = vst.msk [vmem:[%s1109 + $0x38] sm:$0xff] %vm1100, %v2598
      %2619 = vst.msk [vmem:[%s1109 + $0x40] sm:$0xff] %vm1100, %v2599
      %2620 = vst.msk [vmem:[%s1109 + $0x48] sm:$0xff] %vm1100, %v2600
      %2621 = vst.msk [vmem:[%s1109 + $0x50] sm:$0xff] %vm1100, %v2601
      %2622 = vst.msk [vmem:[%s1109 + $0x58] sm:$0xff] %vm1100, %v2602
      %v2623 = vld [vmem:[#allocation2 + $0x5] sm:$0xff]
      %v2624 = vld [vmem:[#allocation2 + $0xd] sm:$0xff]
      %v2625 = vld [vmem:[#allocation2 + $0x15] sm:$0xff]
      %v2626 = vld [vmem:[#allocation2 + $0x1d] sm:$0xff]
      %v2627 = vld [vmem:[#allocation2 + $0x25] sm:$0xff]
      %v2628 = vld [vmem:[#allocation2 + $0x2d] sm:$0xff]
      %v2629 = vld [vmem:[#allocation2 + $0x35] sm:$0xff]
      %v2630 = vld [vmem:[#allocation2 + $0x3d] sm:$0xff]
      %v2631 = vld [vmem:[#allocation2 + $0x45] sm:$0xff]
      %v2632 = vld [vmem:[#allocation2 + $0x4d] sm:$0xff]
      %v2633 = vpack.c.bf16 %v2623, %v2623
      %v2634 = vpack.c.bf16 %v2624, %v2624
      %v2635 = vpack.c.bf16 %v2625, %v2625
      %v2636 = vpack.c.bf16 %v2626, %v2626
      %v2637 = vpack.c.bf16 %v2627, %v2627
      %v2638 = vpack.c.bf16 %v2628, %v2628
      %v2639 = vpack.c.bf16 %v2629, %v2629
      %v2640 = vpack.c.bf16 %v2630, %v2630
      %v2641 = vpack.c.bf16 %v2631, %v2631
      %v2642 = vpack.c.bf16 %v2632, %v2632
      %vm2643 = vcmask 519168
      %2644 = vst.msk [vmem:[#allocation5] sm:$0xf] %vm2643, %v2633
      %2645 = vst.msk [vmem:[#allocation5 + $0x14] sm:$0xf] %vm2643, %v2634
      %2646 = vst.msk [vmem:[#allocation5 + $0x28] sm:$0xf] %vm2643, %v2635
      %2647 = vst.msk [vmem:[#allocation5 + $0x3c] sm:$0xf] %vm2643, %v2636
      %2648 = vst.msk [vmem:[#allocation5 + $0x50] sm:$0xf] %vm2643, %v2637
      %2649 = vst.msk [vmem:[#allocation5 + $0x64] sm:$0xf] %vm2643, %v2638
      %2650 = vst.msk [vmem:[#allocation5 + $0x78] sm:$0xf] %vm2643, %v2639
      %2651 = vst.msk [vmem:[#allocation5 + $0x8c] sm:$0xf] %vm2643, %v2640
      %2652 = vst.msk [vmem:[#allocation5 + $0xa0] sm:$0xf] %vm2643, %v2641
      %2653 = vst.msk [vmem:[#allocation5 + $0xb4] sm:$0xf] %vm2643, %v2642
      %v2654 = vld [vmem:[#allocation2 + $0x6] sm:$0xff]
      %v2655 = vld [vmem:[#allocation2 + $0xe] sm:$0xff]
      %v2656 = vld [vmem:[#allocation2 + $0x16] sm:$0xff]
      %v2657 = vld [vmem:[#allocation2 + $0x1e] sm:$0xff]
      %v2658 = vld [vmem:[#allocation2 + $0x26] sm:$0xff]
      %v2659 = vld [vmem:[#allocation2 + $0x2e] sm:$0xff]
      %v2660 = vld [vmem:[#allocation2 + $0x36] sm:$0xff]
      %v2661 = vld [vmem:[#allocation2 + $0x3e] sm:$0xff]
      %v2662 = vld [vmem:[#allocation2 + $0x46] sm:$0xff]
      %v2663 = vld [vmem:[#allocation2 + $0x4e] sm:$0xff]
      %v2664 = vpack.c.bf16 %v2654, %v2654
      %v2665 = vpack.c.bf16 %v2655, %v2655
      %v2666 = vpack.c.bf16 %v2656, %v2656
      %v2667 = vpack.c.bf16 %v2657, %v2657
      %v2668 = vpack.c.bf16 %v2658, %v2658
      %v2669 = vpack.c.bf16 %v2659, %v2659
      %v2670 = vpack.c.bf16 %v2660, %v2660
      %v2671 = vpack.c.bf16 %v2661, %v2661
      %v2672 = vpack.c.bf16 %v2662, %v2662
      %v2673 = vpack.c.bf16 %v2663, %v2663
      %2684 = vrot.lane.b32.xlu0 %v2664, 64
      %v2685 = vpop.permute.xlu0 %2684
      %2686 = vrot.lane.b32.xlu0 %v2665, 64
      %v2687 = vpop.permute.xlu0 %2686
      %2688 = vrot.lane.b32.xlu0 %v2666, 64
      %v2689 = vpop.permute.xlu0 %2688
      %2690 = vrot.lane.b32.xlu0 %v2667, 64
      %v2691 = vpop.permute.xlu0 %2690
      %2692 = vrot.lane.b32.xlu0 %v2668, 64
      %v2693 = vpop.permute.xlu0 %2692
      %2694 = vrot.lane.b32.xlu0 %v2669, 64
      %v2695 = vpop.permute.xlu0 %2694
      %2696 = vrot.lane.b32.xlu0 %v2670, 64
      %v2697 = vpop.permute.xlu0 %2696
      %2698 = vrot.lane.b32.xlu0 %v2671, 64
      %v2699 = vpop.permute.xlu0 %2698
      %2700 = vrot.lane.b32.xlu0 %v2672, 64
      %v2701 = vpop.permute.xlu0 %2700
      %2702 = vrot.lane.b32.xlu0 %v2673, 64
      %v2703 = vpop.permute.xlu0 %2702
      %vm2714 = vcmask 1043968
      %2715 = vst.msk [vmem:[#allocation5] sm:$0xf] %vm2714, %v2685
      %2716 = vst.msk [vmem:[#allocation5 + $0x14] sm:$0xf] %vm2714, %v2687
      %2717 = vst.msk [vmem:[#allocation5 + $0x28] sm:$0xf] %vm2714, %v2689
      %2718 = vst.msk [vmem:[#allocation5 + $0x3c] sm:$0xf] %vm2714, %v2691
      %2719 = vst.msk [vmem:[#allocation5 + $0x50] sm:$0xf] %vm2714, %v2693
      %2720 = vst.msk [vmem:[#allocation5 + $0x64] sm:$0xf] %vm2714, %v2695
      %2721 = vst.msk [vmem:[#allocation5 + $0x78] sm:$0xf] %vm2714, %v2697
      %2722 = vst.msk [vmem:[#allocation5 + $0x8c] sm:$0xf] %vm2714, %v2699
      %2723 = vst.msk [vmem:[#allocation5 + $0xa0] sm:$0xf] %vm2714, %v2701
      %2724 = vst.msk [vmem:[#allocation5 + $0xb4] sm:$0xf] %vm2714, %v2703
      %v2725 = vld [vmem:[#allocation2 + $0x7] sm:$0xff]
      %v2726 = vld [vmem:[#allocation2 + $0xf] sm:$0xff]
      %v2727 = vld [vmem:[#allocation2 + $0x17] sm:$0xff]
      %v2728 = vld [vmem:[#allocation2 + $0x1f] sm:$0xff]
      %v2729 = vld [vmem:[#allocation2 + $0x27] sm:$0xff]
      %v2730 = vld [vmem:[#allocation2 + $0x2f] sm:$0xff]
      %v2731 = vld [vmem:[#allocation2 + $0x37] sm:$0xff]
      %v2732 = vld [vmem:[#allocation2 + $0x3f] sm:$0xff]
      %v2733 = vld [vmem:[#allocation2 + $0x47] sm:$0xff]
      %v2734 = vld [vmem:[#allocation2 + $0x4f] sm:$0xff]
      %v2735 = vpack.c.bf16 %v2725, %v2725
      %v2736 = vpack.c.bf16 %v2726, %v2726
      %v2737 = vpack.c.bf16 %v2727, %v2727
      %v2738 = vpack.c.bf16 %v2728, %v2728
      %v2739 = vpack.c.bf16 %v2729, %v2729
      %v2740 = vpack.c.bf16 %v2730, %v2730
      %v2741 = vpack.c.bf16 %v2731, %v2731
      %v2742 = vpack.c.bf16 %v2732, %v2732
      %v2743 = vpack.c.bf16 %v2733, %v2733
      %v2744 = vpack.c.bf16 %v2734, %v2734
      %2745 = vst.msk [vmem:[#allocation5 + $0x4] sm:$0xf] %vm2643, %v2735
      %2746 = vst.msk [vmem:[#allocation5 + $0x18] sm:$0xf] %vm2643, %v2736
      %2747 = vst.msk [vmem:[#allocation5 + $0x2c] sm:$0xf] %vm2643, %v2737
      %2748 = vst.msk [vmem:[#allocation5 + $0x40] sm:$0xf] %vm2643, %v2738
      %2749 = vst.msk [vmem:[#allocation5 + $0x54] sm:$0xf] %vm2643, %v2739
      %2750 = vst.msk [vmem:[#allocation5 + $0x68] sm:$0xf] %vm2643, %v2740
      %2751 = vst.msk [vmem:[#allocation5 + $0x7c] sm:$0xf] %vm2643, %v2741
      %2752 = vst.msk [vmem:[#allocation5 + $0x90] sm:$0xf] %vm2643, %v2742
      %2753 = vst.msk [vmem:[#allocation5 + $0xa4] sm:$0xf] %vm2643, %v2743
      %2754 = vst.msk [vmem:[#allocation5 + $0xb8] sm:$0xf] %vm2643, %v2744
      %v2755 = vld [vmem:[#allocation2 + $0xf] sm:$0xff]
      %v2756 = vld [vmem:[#allocation2 + $0x17] sm:$0xff]
      %v2757 = vld [vmem:[#allocation2 + $0x1f] sm:$0xff]
      %v2758 = vld [vmem:[#allocation2 + $0x27] sm:$0xff]
      %v2759 = vld [vmem:[#allocation2 + $0x2f] sm:$0xff]
      %v2760 = vld [vmem:[#allocation2 + $0x37] sm:$0xff]
      %v2761 = vld [vmem:[#allocation2 + $0x3f] sm:$0xff]
      %v2762 = vld [vmem:[#allocation2 + $0x47] sm:$0xff]
      %v2763 = vld [vmem:[#allocation2 + $0x4f] sm:$0xff]
      %v2764 = vld [vmem:[#allocation2 + $0x57] sm:$0xff]
      %v2765 = vpack.c.bf16 %v2755, %v2755
      %v2766 = vpack.c.bf16 %v2756, %v2756
      %v2767 = vpack.c.bf16 %v2757, %v2757
      %v2768 = vpack.c.bf16 %v2758, %v2758
      %v2769 = vpack.c.bf16 %v2759, %v2759
      %v2770 = vpack.c.bf16 %v2760, %v2760
      %v2771 = vpack.c.bf16 %v2761, %v2761
      %v2772 = vpack.c.bf16 %v2762, %v2762
      %v2773 = vpack.c.bf16 %v2763, %v2763
      %v2774 = vpack.c.bf16 %v2764, %v2764
      %2785 = vrot.lane.b32.xlu0 %v2765, 64
      %v2786 = vpop.permute.xlu0 %2785
      %2787 = vrot.lane.b32.xlu0 %v2766, 64
      %v2788 = vpop.permute.xlu0 %2787
      %2789 = vrot.lane.b32.xlu0 %v2767, 64
      %v2790 = vpop.permute.xlu0 %2789
      %2791 = vrot.lane.b32.xlu0 %v2768, 64
      %v2792 = vpop.permute.xlu0 %2791
      %2793 = vrot.lane.b32.xlu0 %v2769, 64
      %v2794 = vpop.permute.xlu0 %2793
      %2795 = vrot.lane.b32.xlu0 %v2770, 64
      %v2796 = vpop.permute.xlu0 %2795
      %2797 = vrot.lane.b32.xlu0 %v2771, 64
      %v2798 = vpop.permute.xlu0 %2797
      %2799 = vrot.lane.b32.xlu0 %v2772, 64
      %v2800 = vpop.permute.xlu0 %2799
      %2801 = vrot.lane.b32.xlu0 %v2773, 64
      %v2802 = vpop.permute.xlu0 %2801
      %2803 = vrot.lane.b32.xlu0 %v2774, 64
      %v2804 = vpop.permute.xlu0 %2803
      %2815 = vst.msk [vmem:[#allocation5 + $0x4] sm:$0xf] %vm2714, %v2786
      %2816 = vst.msk [vmem:[#allocation5 + $0x18] sm:$0xf] %vm2714, %v2788
      %2817 = vst.msk [vmem:[#allocation5 + $0x2c] sm:$0xf] %vm2714, %v2790
      %2818 = vst.msk [vmem:[#allocation5 + $0x40] sm:$0xf] %vm2714, %v2792
      %2819 = vst.msk [vmem:[#allocation5 + $0x54] sm:$0xf] %vm2714, %v2794
      %2820 = vst.msk [vmem:[#allocation5 + $0x68] sm:$0xf] %vm2714, %v2796
      %2821 = vst.msk [vmem:[#allocation5 + $0x7c] sm:$0xf] %vm2714, %v2798
      %2822 = vst.msk [vmem:[#allocation5 + $0x90] sm:$0xf] %vm2714, %v2800
      %2823 = vst.msk [vmem:[#allocation5 + $0xa4] sm:$0xf] %vm2714, %v2802
      %2824 = vst.msk [vmem:[#allocation5 + $0xb8] sm:$0xf] %vm2714, %v2804
      %v2825 = vld [vmem:[#allocation2 + $0x10] sm:$0xff]
      %v2826 = vld [vmem:[#allocation2 + $0x18] sm:$0xff]
      %v2827 = vld [vmem:[#allocation2 + $0x20] sm:$0xff]
      %v2828 = vld [vmem:[#allocation2 + $0x28] sm:$0xff]
      %v2829 = vld [vmem:[#allocation2 + $0x30] sm:$0xff]
      %v2830 = vld [vmem:[#allocation2 + $0x38] sm:$0xff]
      %v2831 = vld [vmem:[#allocation2 + $0x40] sm:$0xff]
      %v2832 = vld [vmem:[#allocation2 + $0x48] sm:$0xff]
      %v2833 = vld [vmem:[#allocation2 + $0x50] sm:$0xff]
      %v2834 = vld [vmem:[#allocation2 + $0x58] sm:$0xff]
      %v2835 = vpack.c.bf16 %v2825, %v2825
      %v2836 = vpack.c.bf16 %v2826, %v2826
      %v2837 = vpack.c.bf16 %v2827, %v2827
      %v2838 = vpack.c.bf16 %v2828, %v2828
      %v2839 = vpack.c.bf16 %v2829, %v2829
      %v2840 = vpack.c.bf16 %v2830, %v2830
      %v2841 = vpack.c.bf16 %v2831, %v2831
      %v2842 = vpack.c.bf16 %v2832, %v2832
      %v2843 = vpack.c.bf16 %v2833, %v2833
      %v2844 = vpack.c.bf16 %v2834, %v2834
      %2845 = vst.msk [vmem:[#allocation5 + $0x8] sm:$0xf] %vm2643, %v2835
      %2846 = vst.msk [vmem:[#allocation5 + $0x1c] sm:$0xf] %vm2643, %v2836
      %2847 = vst.msk [vmem:[#allocation5 + $0x30] sm:$0xf] %vm2643, %v2837
      %2848 = vst.msk [vmem:[#allocation5 + $0x44] sm:$0xf] %vm2643, %v2838
      %2849 = vst.msk [vmem:[#allocation5 + $0x58] sm:$0xf] %vm2643, %v2839
      %2850 = vst.msk [vmem:[#allocation5 + $0x6c] sm:$0xf] %vm2643, %v2840
      %2851 = vst.msk [vmem:[#allocation5 + $0x80] sm:$0xf] %vm2643, %v2841
      %2852 = vst.msk [vmem:[#allocation5 + $0x94] sm:$0xf] %vm2643, %v2842
      %2853 = vst.msk [vmem:[#allocation5 + $0xa8] sm:$0xf] %vm2643, %v2843
      %2854 = vst.msk [vmem:[#allocation5 + $0xbc] sm:$0xf] %vm2643, %v2844
      %v2855 = vld [vmem:[#allocation2 + $0x11] sm:$0xff]
      %v2856 = vld [vmem:[#allocation2 + $0x19] sm:$0xff]
      %v2857 = vld [vmem:[#allocation2 + $0x21] sm:$0xff]
      %v2858 = vld [vmem:[#allocation2 + $0x29] sm:$0xff]
      %v2859 = vld [vmem:[#allocation2 + $0x31] sm:$0xff]
      %v2860 = vld [vmem:[#allocation2 + $0x39] sm:$0xff]
      %v2861 = vld [vmem:[#allocation2 + $0x41] sm:$0xff]
      %v2862 = vld [vmem:[#allocation2 + $0x49] sm:$0xff]
      %v2863 = vld [vmem:[#allocation2 + $0x51] sm:$0xff]
      %v2864 = vld [vmem:[#allocation2 + $0x59] sm:$0xff]
      %v2865 = vpack.c.bf16 %v2855, %v2855
      %v2866 = vpack.c.bf16 %v2856, %v2856
      %v2867 = vpack.c.bf16 %v2857, %v2857
      %v2868 = vpack.c.bf16 %v2858, %v2858
      %v2869 = vpack.c.bf16 %v2859, %v2859
      %v2870 = vpack.c.bf16 %v2860, %v2860
      %v2871 = vpack.c.bf16 %v2861, %v2861
      %v2872 = vpack.c.bf16 %v2862, %v2862
      %v2873 = vpack.c.bf16 %v2863, %v2863
      %v2874 = vpack.c.bf16 %v2864, %v2864
      %2885 = vrot.lane.b32.xlu0 %v2865, 64
      %v2886 = vpop.permute.xlu0 %2885
      %2887 = vrot.lane.b32.xlu0 %v2866, 64
      %v2888 = vpop.permute.xlu0 %2887
      %2889 = vrot.lane.b32.xlu0 %v2867, 64
      %v2890 = vpop.permute.xlu0 %2889
      %2891 = vrot.lane.b32.xlu0 %v2868, 64
      %v2892 = vpop.permute.xlu0 %2891
      %2893 = vrot.lane.b32.xlu0 %v2869, 64
      %v2894 = vpop.permute.xlu0 %2893
      %2895 = vrot.lane.b32.xlu0 %v2870, 64
      %v2896 = vpop.permute.xlu0 %2895
      %2897 = vrot.lane.b32.xlu0 %v2871, 64
      %v2898 = vpop.permute.xlu0 %2897
      %2899 = vrot.lane.b32.xlu0 %v2872, 64
      %v2900 = vpop.permute.xlu0 %2899
      %2901 = vrot.lane.b32.xlu0 %v2873, 64
      %v2902 = vpop.permute.xlu0 %2901
      %2903 = vrot.lane.b32.xlu0 %v2874, 64
      %v2904 = vpop.permute.xlu0 %2903
      %2915 = vst.msk [vmem:[#allocation5 + $0x8] sm:$0xf] %vm2714, %v2886
      %2916 = vst.msk [vmem:[#allocation5 + $0x1c] sm:$0xf] %vm2714, %v2888
      %2917 = vst.msk [vmem:[#allocation5 + $0x30] sm:$0xf] %vm2714, %v2890
      %2918 = vst.msk [vmem:[#allocation5 + $0x44] sm:$0xf] %vm2714, %v2892
      %2919 = vst.msk [vmem:[#allocation5 + $0x58] sm:$0xf] %vm2714, %v2894
      %2920 = vst.msk [vmem:[#allocation5 + $0x6c] sm:$0xf] %vm2714, %v2896
      %2921 = vst.msk [vmem:[#allocation5 + $0x80] sm:$0xf] %vm2714, %v2898
      %2922 = vst.msk [vmem:[#allocation5 + $0x94] sm:$0xf] %vm2714, %v2900
      %2923 = vst.msk [vmem:[#allocation5 + $0xa8] sm:$0xf] %vm2714, %v2902
      %2924 = vst.msk [vmem:[#allocation5 + $0xbc] sm:$0xf] %vm2714, %v2904
      %v2925 = vld [vmem:[#allocation2 + $0x19] sm:$0xff]
      %v2926 = vld [vmem:[#allocation2 + $0x21] sm:$0xff]
      %v2927 = vld [vmem:[#allocation2 + $0x29] sm:$0xff]
      %v2928 = vld [vmem:[#allocation2 + $0x31] sm:$0xff]
      %v2929 = vld [vmem:[#allocation2 + $0x39] sm:$0xff]
      %v2930 = vld [vmem:[#allocation2 + $0x41] sm:$0xff]
      %v2931 = vld [vmem:[#allocation2 + $0x49] sm:$0xff]
      %v2932 = vld [vmem:[#allocation2 + $0x51] sm:$0xff]
      %v2933 = vld [vmem:[#allocation2 + $0x59] sm:$0xff]
      %v2934 = vld [vmem:[#allocation2 + $0x61] sm:$0xff]
      %v2935 = vpack.c.bf16 %v2925, %v2925
      %v2936 = vpack.c.bf16 %v2926, %v2926
      %v2937 = vpack.c.bf16 %v2927, %v2927
      %v2938 = vpack.c.bf16 %v2928, %v2928
      %v2939 = vpack.c.bf16 %v2929, %v2929
      %v2940 = vpack.c.bf16 %v2930, %v2930
      %v2941 = vpack.c.bf16 %v2931, %v2931
      %v2942 = vpack.c.bf16 %v2932, %v2932
      %v2943 = vpack.c.bf16 %v2933, %v2933
      %v2944 = vpack.c.bf16 %v2934, %v2934
      %2945 = vst.msk [vmem:[#allocation5 + $0xc] sm:$0xf] %vm2643, %v2935
      %2946 = vst.msk [vmem:[#allocation5 + $0x20] sm:$0xf] %vm2643, %v2936
      %2947 = vst.msk [vmem:[#allocation5 + $0x34] sm:$0xf] %vm2643, %v2937
      %2948 = vst.msk [vmem:[#allocation5 + $0x48] sm:$0xf] %vm2643, %v2938
      %2949 = vst.msk [vmem:[#allocation5 + $0x5c] sm:$0xf] %vm2643, %v2939
      %2950 = vst.msk [vmem:[#allocation5 + $0x70] sm:$0xf] %vm2643, %v2940
      %2951 = vst.msk [vmem:[#allocation5 + $0x84] sm:$0xf] %vm2643, %v2941
      %2952 = vst.msk [vmem:[#allocation5 + $0x98] sm:$0xf] %vm2643, %v2942
      %2953 = vst.msk [vmem:[#allocation5 + $0xac] sm:$0xf] %vm2643, %v2943
      %2954 = vst.msk [vmem:[#allocation5 + $0xc0] sm:$0xf] %vm2643, %v2944
      %v2955 = vld [vmem:[#allocation2 + $0x1a] sm:$0xff]
      %v2956 = vld [vmem:[#allocation2 + $0x22] sm:$0xff]
      %v2957 = vld [vmem:[#allocation2 + $0x2a] sm:$0xff]
      %v2958 = vld [vmem:[#allocation2 + $0x32] sm:$0xff]
      %v2959 = vld [vmem:[#allocation2 + $0x3a] sm:$0xff]
      %v2960 = vld [vmem:[#allocation2 + $0x42] sm:$0xff]
      %v2961 = vld [vmem:[#allocation2 + $0x4a] sm:$0xff]
      %v2962 = vld [vmem:[#allocation2 + $0x52] sm:$0xff]
      %v2963 = vld [vmem:[#allocation2 + $0x5a] sm:$0xff]
      %v2964 = vld [vmem:[#allocation2 + $0x62] sm:$0xff]
      %v2965 = vpack.c.bf16 %v2955, %v2955
      %v2966 = vpack.c.bf16 %v2956, %v2956
      %v2967 = vpack.c.bf16 %v2957, %v2957
      %v2968 = vpack.c.bf16 %v2958, %v2958
      %v2969 = vpack.c.bf16 %v2959, %v2959
      %v2970 = vpack.c.bf16 %v2960, %v2960
      %v2971 = vpack.c.bf16 %v2961, %v2961
      %v2972 = vpack.c.bf16 %v2962, %v2962
      %v2973 = vpack.c.bf16 %v2963, %v2963
      %v2974 = vpack.c.bf16 %v2964, %v2964
      %2985 = vrot.lane.b32.xlu0 %v2965, 64
      %v2986 = vpop.permute.xlu0 %2985
      %2987 = vrot.lane.b32.xlu0 %v2966, 64
      %v2988 = vpop.permute.xlu0 %2987
      %2989 = vrot.lane.b32.xlu0 %v2967, 64
      %v2990 = vpop.permute.xlu0 %2989
      %2991 = vrot.lane.b32.xlu0 %v2968, 64
      %v2992 = vpop.permute.xlu0 %2991
      %2993 = vrot.lane.b32.xlu0 %v2969, 64
      %v2994 = vpop.permute.xlu0 %2993
      %2995 = vrot.lane.b32.xlu0 %v2970, 64
      %v2996 = vpop.permute.xlu0 %2995
      %2997 = vrot.lane.b32.xlu0 %v2971, 64
      %v2998 = vpop.permute.xlu0 %2997
      %2999 = vrot.lane.b32.xlu0 %v2972, 64
      %v3000 = vpop.permute.xlu0 %2999
      %3001 = vrot.lane.b32.xlu0 %v2973, 64
      %v3002 = vpop.permute.xlu0 %3001
      %3003 = vrot.lane.b32.xlu0 %v2974, 64
      %v3004 = vpop.permute.xlu0 %3003
      %3015 = vst.msk [vmem:[#allocation5 + $0xc] sm:$0xf] %vm2714, %v2986
      %3016 = vst.msk [vmem:[#allocation5 + $0x20] sm:$0xf] %vm2714, %v2988
      %3017 = vst.msk [vmem:[#allocation5 + $0x34] sm:$0xf] %vm2714, %v2990
      %3018 = vst.msk [vmem:[#allocation5 + $0x48] sm:$0xf] %vm2714, %v2992
      %3019 = vst.msk [vmem:[#allocation5 + $0x5c] sm:$0xf] %vm2714, %v2994
      %3020 = vst.msk [vmem:[#allocation5 + $0x70] sm:$0xf] %vm2714, %v2996
      %3021 = vst.msk [vmem:[#allocation5 + $0x84] sm:$0xf] %vm2714, %v2998
      %3022 = vst.msk [vmem:[#allocation5 + $0x98] sm:$0xf] %vm2714, %v3000
      %3023 = vst.msk [vmem:[#allocation5 + $0xac] sm:$0xf] %vm2714, %v3002
      %3024 = vst.msk [vmem:[#allocation5 + $0xc0] sm:$0xf] %vm2714, %v3004
      %v3025 = vld [vmem:[#allocation2 + $0x1b] sm:$0xff]
      %v3026 = vld [vmem:[#allocation2 + $0x23] sm:$0xff]
      %v3027 = vld [vmem:[#allocation2 + $0x2b] sm:$0xff]
      %v3028 = vld [vmem:[#allocation2 + $0x33] sm:$0xff]
      %v3029 = vld [vmem:[#allocation2 + $0x3b] sm:$0xff]
      %v3030 = vld [vmem:[#allocation2 + $0x43] sm:$0xff]
      %v3031 = vld [vmem:[#allocation2 + $0x4b] sm:$0xff]
      %v3032 = vld [vmem:[#allocation2 + $0x53] sm:$0xff]
      %v3033 = vld [vmem:[#allocation2 + $0x5b] sm:$0xff]
      %v3034 = vld [vmem:[#allocation2 + $0x63] sm:$0xff]
      %v3035 = vpack.c.bf16 %v3025, %v3025
      %v3036 = vpack.c.bf16 %v3026, %v3026
      %v3037 = vpack.c.bf16 %v3027, %v3027
      %v3038 = vpack.c.bf16 %v3028, %v3028
      %v3039 = vpack.c.bf16 %v3029, %v3029
      %v3040 = vpack.c.bf16 %v3030, %v3030
      %v3041 = vpack.c.bf16 %v3031, %v3031
      %v3042 = vpack.c.bf16 %v3032, %v3032
      %v3043 = vpack.c.bf16 %v3033, %v3033
      %v3044 = vpack.c.bf16 %v3034, %v3034
      %3045 = vst.msk [vmem:[#allocation5 + $0x10] sm:$0xf] %vm2643, %v3035
      %3046 = vst.msk [vmem:[#allocation5 + $0x24] sm:$0xf] %vm2643, %v3036
      %3047 = vst.msk [vmem:[#allocation5 + $0x38] sm:$0xf] %vm2643, %v3037
      %3048 = vst.msk [vmem:[#allocation5 + $0x4c] sm:$0xf] %vm2643, %v3038
      %3049 = vst.msk [vmem:[#allocation5 + $0x60] sm:$0xf] %vm2643, %v3039
      %3050 = vst.msk [vmem:[#allocation5 + $0x74] sm:$0xf] %vm2643, %v3040
      %3051 = vst.msk [vmem:[#allocation5 + $0x88] sm:$0xf] %vm2643, %v3041
      %3052 = vst.msk [vmem:[#allocation5 + $0x9c] sm:$0xf] %vm2643, %v3042
      %3053 = vst.msk [vmem:[#allocation5 + $0xb0] sm:$0xf] %vm2643, %v3043
      %3054 = vst.msk [vmem:[#allocation5 + $0xc4] sm:$0xf] %vm2643, %v3044
      %v3055 = vld [vmem:[%s1109 + $0x5] sm:$0xff]
      %v3056 = vld [vmem:[%s1109 + $0xd] sm:$0xff]
      %v3057 = vld [vmem:[%s1109 + $0x15] sm:$0xff]
      %v3058 = vld [vmem:[%s1109 + $0x1d] sm:$0xff]
      %v3059 = vld [vmem:[%s1109 + $0x25] sm:$0xff]
      %v3060 = vld [vmem:[%s1109 + $0x2d] sm:$0xff]
      %v3061 = vld [vmem:[%s1109 + $0x35] sm:$0xff]
      %v3062 = vld [vmem:[%s1109 + $0x3d] sm:$0xff]
      %v3063 = vld [vmem:[%s1109 + $0x45] sm:$0xff]
      %v3064 = vld [vmem:[%s1109 + $0x4d] sm:$0xff]
      %v3065 = vpack.c.bf16 %v3055, %v3055
      %v3066 = vpack.c.bf16 %v3056, %v3056
      %v3067 = vpack.c.bf16 %v3057, %v3057
      %v3068 = vpack.c.bf16 %v3058, %v3058
      %v3069 = vpack.c.bf16 %v3059, %v3059
      %v3070 = vpack.c.bf16 %v3060, %v3060
      %v3071 = vpack.c.bf16 %v3061, %v3061
      %v3072 = vpack.c.bf16 %v3062, %v3062
      %v3073 = vpack.c.bf16 %v3063, %v3063
      %v3074 = vpack.c.bf16 %v3064, %v3064
      %3075 = vst.msk [vmem:[#allocation5 + $0xc8] sm:$0xf] %vm2643, %v3065
      %3076 = vst.msk [vmem:[#allocation5 + $0xdc] sm:$0xf] %vm2643, %v3066
      %3077 = vst.msk [vmem:[#allocation5 + $0xf0] sm:$0xf] %vm2643, %v3067
      %3078 = vst.msk [vmem:[#allocation5 + $0x104] sm:$0xf] %vm2643, %v3068
      %3079 = vst.msk [vmem:[#allocation5 + $0x118] sm:$0xf] %vm2643, %v3069
      %3080 = vst.msk [vmem:[#allocation5 + $0x12c] sm:$0xf] %vm2643, %v3070
      %3081 = vst.msk [vmem:[#allocation5 + $0x140] sm:$0xf] %vm2643, %v3071
      %3082 = vst.msk [vmem:[#allocation5 + $0x154] sm:$0xf] %vm2643, %v3072
      %3083 = vst.msk [vmem:[#allocation5 + $0x168] sm:$0xf] %vm2643, %v3073
      %3084 = vst.msk [vmem:[#allocation5 + $0x17c] sm:$0xf] %vm2643, %v3074
      %v3085 = vld [vmem:[%s1109 + $0x6] sm:$0xff]
      %v3086 = vld [vmem:[%s1109 + $0xe] sm:$0xff]
      %v3087 = vld [vmem:[%s1109 + $0x16] sm:$0xff]
      %v3088 = vld [vmem:[%s1109 + $0x1e] sm:$0xff]
      %v3089 = vld [vmem:[%s1109 + $0x26] sm:$0xff]
      %v3090 = vld [vmem:[%s1109 + $0x2e] sm:$0xff]
      %v3091 = vld [vmem:[%s1109 + $0x36] sm:$0xff]
      %v3092 = vld [vmem:[%s1109 + $0x3e] sm:$0xff]
      %v3093 = vld [vmem:[%s1109 + $0x46] sm:$0xff]
      %v3094 = vld [vmem:[%s1109 + $0x4e] sm:$0xff]
      %v3095 = vpack.c.bf16 %v3085, %v3085
      %v3096 = vpack.c.bf16 %v3086, %v3086
      %v3097 = vpack.c.bf16 %v3087, %v3087
      %v3098 = vpack.c.bf16 %v3088, %v3088
      %v3099 = vpack.c.bf16 %v3089, %v3089
      %v3100 = vpack.c.bf16 %v3090, %v3090
      %v3101 = vpack.c.bf16 %v3091, %v3091
      %v3102 = vpack.c.bf16 %v3092, %v3092
      %v3103 = vpack.c.bf16 %v3093, %v3093
      %v3104 = vpack.c.bf16 %v3094, %v3094
      %3115 = vrot.lane.b32.xlu0 %v3095, 64
      %v3116 = vpop.permute.xlu0 %3115
      %3117 = vrot.lane.b32.xlu0 %v3096, 64
      %v3118 = vpop.permute.xlu0 %3117
      %3119 = vrot.lane.b32.xlu0 %v3097, 64
      %v3120 = vpop.permute.xlu0 %3119
      %3121 = vrot.lane.b32.xlu0 %v3098, 64
      %v3122 = vpop.permute.xlu0 %3121
      %3123 = vrot.lane.b32.xlu0 %v3099, 64
      %v3124 = vpop.permute.xlu0 %3123
      %3125 = vrot.lane.b32.xlu0 %v3100, 64
      %v3126 = vpop.permute.xlu0 %3125
      %3127 = vrot.lane.b32.xlu0 %v3101, 64
      %v3128 = vpop.permute.xlu0 %3127
      %3129 = vrot.lane.b32.xlu0 %v3102, 64
      %v3130 = vpop.permute.xlu0 %3129
      %3131 = vrot.lane.b32.xlu0 %v3103, 64
      %v3132 = vpop.permute.xlu0 %3131
      %3133 = vrot.lane.b32.xlu0 %v3104, 64
      %v3134 = vpop.permute.xlu0 %3133
      %3145 = vst.msk [vmem:[#allocation5 + $0xc8] sm:$0xf] %vm2714, %v3116
      %3146 = vst.msk [vmem:[#allocation5 + $0xdc] sm:$0xf] %vm2714, %v3118
      %3147 = vst.msk [vmem:[#allocation5 + $0xf0] sm:$0xf] %vm2714, %v3120
      %3148 = vst.msk [vmem:[#allocation5 + $0x104] sm:$0xf] %vm2714, %v3122
      %3149 = vst.msk [vmem:[#allocation5 + $0x118] sm:$0xf] %vm2714, %v3124
      %3150 = vst.msk [vmem:[#allocation5 + $0x12c] sm:$0xf] %vm2714, %v3126
      %3151 = vst.msk [vmem:[#allocation5 + $0x140] sm:$0xf] %vm2714, %v3128
      %3152 = vst.msk [vmem:[#allocation5 + $0x154] sm:$0xf] %vm2714, %v3130
      %3153 = vst.msk [vmem:[#allocation5 + $0x168] sm:$0xf] %vm2714, %v3132
      %3154 = vst.msk [vmem:[#allocation5 + $0x17c] sm:$0xf] %vm2714, %v3134
      %v3155 = vld [vmem:[%s1109 + $0x7] sm:$0xff]
      %v3156 = vld [vmem:[%s1109 + $0xf] sm:$0xff]
      %v3157 = vld [vmem:[%s1109 + $0x17] sm:$0xff]
      %v3158 = vld [vmem:[%s1109 + $0x1f] sm:$0xff]
      %v3159 = vld [vmem:[%s1109 + $0x27] sm:$0xff]
      %v3160 = vld [vmem:[%s1109 + $0x2f] sm:$0xff]
      %v3161 = vld [vmem:[%s1109 + $0x37] sm:$0xff]
      %v3162 = vld [vmem:[%s1109 + $0x3f] sm:$0xff]
      %v3163 = vld [vmem:[%s1109 + $0x47] sm:$0xff]
      %v3164 = vld [vmem:[%s1109 + $0x4f] sm:$0xff]
      %v3165 = vpack.c.bf16 %v3155, %v3155
      %v3166 = vpack.c.bf16 %v3156, %v3156
      %v3167 = vpack.c.bf16 %v3157, %v3157
      %v3168 = vpack.c.bf16 %v3158, %v3158
      %v3169 = vpack.c.bf16 %v3159, %v3159
      %v3170 = vpack.c.bf16 %v3160, %v3160
      %v3171 = vpack.c.bf16 %v3161, %v3161
      %v3172 = vpack.c.bf16 %v3162, %v3162
      %v3173 = vpack.c.bf16 %v3163, %v3163
      %v3174 = vpack.c.bf16 %v3164, %v3164
      %3175 = vst.msk [vmem:[#allocation5 + $0xcc] sm:$0xf] %vm2643, %v3165
      %3176 = vst.msk [vmem:[#allocation5 + $0xe0] sm:$0xf] %vm2643, %v3166
      %3177 = vst.msk [vmem:[#allocation5 + $0xf4] sm:$0xf] %vm2643, %v3167
      %3178 = vst.msk [vmem:[#allocation5 + $0x108] sm:$0xf] %vm2643, %v3168
      %3179 = vst.msk [vmem:[#allocation5 + $0x11c] sm:$0xf] %vm2643, %v3169
      %3180 = vst.msk [vmem:[#allocation5 + $0x130] sm:$0xf] %vm2643, %v3170
      %3181 = vst.msk [vmem:[#allocation5 + $0x144] sm:$0xf] %vm2643, %v3171
      %3182 = vst.msk [vmem:[#allocation5 + $0x158] sm:$0xf] %vm2643, %v3172
      %3183 = vst.msk [vmem:[#allocation5 + $0x16c] sm:$0xf] %vm2643, %v3173
      %3184 = vst.msk [vmem:[#allocation5 + $0x180] sm:$0xf] %vm2643, %v3174
      %v3185 = vld [vmem:[%s1109 + $0xf] sm:$0xff]
      %v3186 = vld [vmem:[%s1109 + $0x17] sm:$0xff]
      %v3187 = vld [vmem:[%s1109 + $0x1f] sm:$0xff]
      %v3188 = vld [vmem:[%s1109 + $0x27] sm:$0xff]
      %v3189 = vld [vmem:[%s1109 + $0x2f] sm:$0xff]
      %v3190 = vld [vmem:[%s1109 + $0x37] sm:$0xff]
      %v3191 = vld [vmem:[%s1109 + $0x3f] sm:$0xff]
      %v3192 = vld [vmem:[%s1109 + $0x47] sm:$0xff]
      %v3193 = vld [vmem:[%s1109 + $0x4f] sm:$0xff]
      %v3194 = vld [vmem:[%s1109 + $0x57] sm:$0xff]
      %v3195 = vpack.c.bf16 %v3185, %v3185
      %v3196 = vpack.c.bf16 %v3186, %v3186
      %v3197 = vpack.c.bf16 %v3187, %v3187
      %v3198 = vpack.c.bf16 %v3188, %v3188
      %v3199 = vpack.c.bf16 %v3189, %v3189
      %v3200 = vpack.c.bf16 %v3190, %v3190
      %v3201 = vpack.c.bf16 %v3191, %v3191
      %v3202 = vpack.c.bf16 %v3192, %v3192
      %v3203 = vpack.c.bf16 %v3193, %v3193
      %v3204 = vpack.c.bf16 %v3194, %v3194
      %3215 = vrot.lane.b32.xlu0 %v3195, 64
      %v3216 = vpop.permute.xlu0 %3215
      %3217 = vrot.lane.b32.xlu0 %v3196, 64
      %v3218 = vpop.permute.xlu0 %3217
      %3219 = vrot.lane.b32.xlu0 %v3197, 64
      %v3220 = vpop.permute.xlu0 %3219
      %3221 = vrot.lane.b32.xlu0 %v3198, 64
      %v3222 = vpop.permute.xlu0 %3221
      %3223 = vrot.lane.b32.xlu0 %v3199, 64
      %v3224 = vpop.permute.xlu0 %3223
      %3225 = vrot.lane.b32.xlu0 %v3200, 64
      %v3226 = vpop.permute.xlu0 %3225
      %3227 = vrot.lane.b32.xlu0 %v3201, 64
      %v3228 = vpop.permute.xlu0 %3227
      %3229 = vrot.lane.b32.xlu0 %v3202, 64
      %v3230 = vpop.permute.xlu0 %3229
      %3231 = vrot.lane.b32.xlu0 %v3203, 64
      %v3232 = vpop.permute.xlu0 %3231
      %3233 = vrot.lane.b32.xlu0 %v3204, 64
      %v3234 = vpop.permute.xlu0 %3233
      %3245 = vst.msk [vmem:[#allocation5 + $0xcc] sm:$0xf] %vm2714, %v3216
      %3246 = vst.msk [vmem:[#allocation5 + $0xe0] sm:$0xf] %vm2714, %v3218
      %3247 = vst.msk [vmem:[#allocation5 + $0xf4] sm:$0xf] %vm2714, %v3220
      %3248 = vst.msk [vmem:[#allocation5 + $0x108] sm:$0xf] %vm2714, %v3222
      %3249 = vst.msk [vmem:[#allocation5 + $0x11c] sm:$0xf] %vm2714, %v3224
      %3250 = vst.msk [vmem:[#allocation5 + $0x130] sm:$0xf] %vm2714, %v3226
      %3251 = vst.msk [vmem:[#allocation5 + $0x144] sm:$0xf] %vm2714, %v3228
      %3252 = vst.msk [vmem:[#allocation5 + $0x158] sm:$0xf] %vm2714, %v3230
      %3253 = vst.msk [vmem:[#allocation5 + $0x16c] sm:$0xf] %vm2714, %v3232
      %3254 = vst.msk [vmem:[#allocation5 + $0x180] sm:$0xf] %vm2714, %v3234
      %v3255 = vld [vmem:[%s1109 + $0x10] sm:$0xff]
      %v3256 = vld [vmem:[%s1109 + $0x18] sm:$0xff]
      %v3257 = vld [vmem:[%s1109 + $0x20] sm:$0xff]
      %v3258 = vld [vmem:[%s1109 + $0x28] sm:$0xff]
      %v3259 = vld [vmem:[%s1109 + $0x30] sm:$0xff]
      %v3260 = vld [vmem:[%s1109 + $0x38] sm:$0xff]
      %v3261 = vld [vmem:[%s1109 + $0x40] sm:$0xff]
      %v3262 = vld [vmem:[%s1109 + $0x48] sm:$0xff]
      %v3263 = vld [vmem:[%s1109 + $0x50] sm:$0xff]
      %v3264 = vld [vmem:[%s1109 + $0x58] sm:$0xff]
      %v3265 = vpack.c.bf16 %v3255, %v3255
      %v3266 = vpack.c.bf16 %v3256, %v3256
      %v3267 = vpack.c.bf16 %v3257, %v3257
      %v3268 = vpack.c.bf16 %v3258, %v3258
      %v3269 = vpack.c.bf16 %v3259, %v3259
      %v3270 = vpack.c.bf16 %v3260, %v3260
      %v3271 = vpack.c.bf16 %v3261, %v3261
      %v3272 = vpack.c.bf16 %v3262, %v3262
      %v3273 = vpack.c.bf16 %v3263, %v3263
      %v3274 = vpack.c.bf16 %v3264, %v3264
      %3275 = vst.msk [vmem:[#allocation5 + $0xd0] sm:$0xf] %vm2643, %v3265
      %3276 = vst.msk [vmem:[#allocation5 + $0xe4] sm:$0xf] %vm2643, %v3266
      %3277 = vst.msk [vmem:[#allocation5 + $0xf8] sm:$0xf] %vm2643, %v3267
      %3278 = vst.msk [vmem:[#allocation5 + $0x10c] sm:$0xf] %vm2643, %v3268
      %3279 = vst.msk [vmem:[#allocation5 + $0x120] sm:$0xf] %vm2643, %v3269
      %3280 = vst.msk [vmem:[#allocation5 + $0x134] sm:$0xf] %vm2643, %v3270
      %3281 = vst.msk [vmem:[#allocation5 + $0x148] sm:$0xf] %vm2643, %v3271
      %3282 = vst.msk [vmem:[#allocation5 + $0x15c] sm:$0xf] %vm2643, %v3272
      %3283 = vst.msk [vmem:[#allocation5 + $0x170] sm:$0xf] %vm2643, %v3273
      %3284 = vst.msk [vmem:[#allocation5 + $0x184] sm:$0xf] %vm2643, %v3274
      %v3285 = vld [vmem:[%s1109 + $0x11] sm:$0xff]
      %v3286 = vld [vmem:[%s1109 + $0x19] sm:$0xff]
      %v3287 = vld [vmem:[%s1109 + $0x21] sm:$0xff]
      %v3288 = vld [vmem:[%s1109 + $0x29] sm:$0xff]
      %v3289 = vld [vmem:[%s1109 + $0x31] sm:$0xff]
      %v3290 = vld [vmem:[%s1109 + $0x39] sm:$0xff]
      %v3291 = vld [vmem:[%s1109 + $0x41] sm:$0xff]
      %v3292 = vld [vmem:[%s1109 + $0x49] sm:$0xff]
      %v3293 = vld [vmem:[%s1109 + $0x51] sm:$0xff]
      %v3294 = vld [vmem:[%s1109 + $0x59] sm:$0xff]
      %v3295 = vpack.c.bf16 %v3285, %v3285
      %v3296 = vpack.c.bf16 %v3286, %v3286
      %v3297 = vpack.c.bf16 %v3287, %v3287
      %v3298 = vpack.c.bf16 %v3288, %v3288
      %v3299 = vpack.c.bf16 %v3289, %v3289
      %v3300 = vpack.c.bf16 %v3290, %v3290
      %v3301 = vpack.c.bf16 %v3291, %v3291
      %v3302 = vpack.c.bf16 %v3292, %v3292
      %v3303 = vpack.c.bf16 %v3293, %v3293
      %v3304 = vpack.c.bf16 %v3294, %v3294
      %3315 = vrot.lane.b32.xlu0 %v3295, 64
      %v3316 = vpop.permute.xlu0 %3315
      %3317 = vrot.lane.b32.xlu0 %v3296, 64
      %v3318 = vpop.permute.xlu0 %3317
      %3319 = vrot.lane.b32.xlu0 %v3297, 64
      %v3320 = vpop.permute.xlu0 %3319
      %3321 = vrot.lane.b32.xlu0 %v3298, 64
      %v3322 = vpop.permute.xlu0 %3321
      %3323 = vrot.lane.b32.xlu0 %v3299, 64
      %v3324 = vpop.permute.xlu0 %3323
      %3325 = vrot.lane.b32.xlu0 %v3300, 64
      %v3326 = vpop.permute.xlu0 %3325
      %3327 = vrot.lane.b32.xlu0 %v3301, 64
      %v3328 = vpop.permute.xlu0 %3327
      %3329 = vrot.lane.b32.xlu0 %v3302, 64
      %v3330 = vpop.permute.xlu0 %3329
      %3331 = vrot.lane.b32.xlu0 %v3303, 64
      %v3332 = vpop.permute.xlu0 %3331
      %3333 = vrot.lane.b32.xlu0 %v3304, 64
      %v3334 = vpop.permute.xlu0 %3333
      %3345 = vst.msk [vmem:[#allocation5 + $0xd0] sm:$0xf] %vm2714, %v3316
      %3346 = vst.msk [vmem:[#allocation5 + $0xe4] sm:$0xf] %vm2714, %v3318
      %3347 = vst.msk [vmem:[#allocation5 + $0xf8] sm:$0xf] %vm2714, %v3320
      %3348 = vst.msk [vmem:[#allocation5 + $0x10c] sm:$0xf] %vm2714, %v3322
      %3349 = vst.msk [vmem:[#allocation5 + $0x120] sm:$0xf] %vm2714, %v3324
      %3350 = vst.msk [vmem:[#allocation5 + $0x134] sm:$0xf] %vm2714, %v3326
      %3351 = vst.msk [vmem:[#allocation5 + $0x148] sm:$0xf] %vm2714, %v3328
      %3352 = vst.msk [vmem:[#allocation5 + $0x15c] sm:$0xf] %vm2714, %v3330
      %3353 = vst.msk [vmem:[#allocation5 + $0x170] sm:$0xf] %vm2714, %v3332
      %3354 = vst.msk [vmem:[#allocation5 + $0x184] sm:$0xf] %vm2714, %v3334
      %v3355 = vld [vmem:[%s1109 + $0x19] sm:$0xff]
      %v3356 = vld [vmem:[%s1109 + $0x21] sm:$0xff]
      %v3357 = vld [vmem:[%s1109 + $0x29] sm:$0xff]
      %v3358 = vld [vmem:[%s1109 + $0x31] sm:$0xff]
      %v3359 = vld [vmem:[%s1109 + $0x39] sm:$0xff]
      %v3360 = vld [vmem:[%s1109 + $0x41] sm:$0xff]
      %v3361 = vld [vmem:[%s1109 + $0x49] sm:$0xff]
      %v3362 = vld [vmem:[%s1109 + $0x51] sm:$0xff]
      %v3363 = vld [vmem:[%s1109 + $0x59] sm:$0xff]
      %v3364 = vld [vmem:[%s1109 + $0x61] sm:$0xff]
      %v3365 = vpack.c.bf16 %v3355, %v3355
      %v3366 = vpack.c.bf16 %v3356, %v3356
      %v3367 = vpack.c.bf16 %v3357, %v3357
      %v3368 = vpack.c.bf16 %v3358, %v3358
      %v3369 = vpack.c.bf16 %v3359, %v3359
      %v3370 = vpack.c.bf16 %v3360, %v3360
      %v3371 = vpack.c.bf16 %v3361, %v3361
      %v3372 = vpack.c.bf16 %v3362, %v3362
      %v3373 = vpack.c.bf16 %v3363, %v3363
      %v3374 = vpack.c.bf16 %v3364, %v3364
      %3375 = vst.msk [vmem:[#allocation5 + $0xd4] sm:$0xf] %vm2643, %v3365
      %3376 = vst.msk [vmem:[#allocation5 + $0xe8] sm:$0xf] %vm2643, %v3366
      %3377 = vst.msk [vmem:[#allocation5 + $0xfc] sm:$0xf] %vm2643, %v3367
      %3378 = vst.msk [vmem:[#allocation5 + $0x110] sm:$0xf] %vm2643, %v3368
      %3379 = vst.msk [vmem:[#allocation5 + $0x124] sm:$0xf] %vm2643, %v3369
      %3380 = vst.msk [vmem:[#allocation5 + $0x138] sm:$0xf] %vm2643, %v3370
      %3381 = vst.msk [vmem:[#allocation5 + $0x14c] sm:$0xf] %vm2643, %v3371
      %3382 = vst.msk [vmem:[#allocation5 + $0x160] sm:$0xf] %vm2643, %v3372
      %3383 = vst.msk [vmem:[#allocation5 + $0x174] sm:$0xf] %vm2643, %v3373
      %3384 = vst.msk [vmem:[#allocation5 + $0x188] sm:$0xf] %vm2643, %v3374
      %v3385 = vld [vmem:[%s1109 + $0x1a] sm:$0xff]
      %v3386 = vld [vmem:[%s1109 + $0x22] sm:$0xff]
      %v3387 = vld [vmem:[%s1109 + $0x2a] sm:$0xff]
      %v3388 = vld [vmem:[%s1109 + $0x32] sm:$0xff]
      %v3389 = vld [vmem:[%s1109 + $0x3a] sm:$0xff]
      %v3390 = vld [vmem:[%s1109 + $0x42] sm:$0xff]
      %v3391 = vld [vmem:[%s1109 + $0x4a] sm:$0xff]
      %v3392 = vld [vmem:[%s1109 + $0x52] sm:$0xff]
      %v3393 = vld [vmem:[%s1109 + $0x5a] sm:$0xff]
      %v3394 = vld [vmem:[%s1109 + $0x62] sm:$0xff]
      %v3395 = vpack.c.bf16 %v3385, %v3385
      %v3396 = vpack.c.bf16 %v3386, %v3386
      %v3397 = vpack.c.bf16 %v3387, %v3387
      %v3398 = vpack.c.bf16 %v3388, %v3388
      %v3399 = vpack.c.bf16 %v3389, %v3389
      %v3400 = vpack.c.bf16 %v3390, %v3390
      %v3401 = vpack.c.bf16 %v3391, %v3391
      %v3402 = vpack.c.bf16 %v3392, %v3392
      %v3403 = vpack.c.bf16 %v3393, %v3393
      %v3404 = vpack.c.bf16 %v3394, %v3394
      %3415 = vrot.lane.b32.xlu0 %v3395, 64
      %v3416 = vpop.permute.xlu0 %3415
      %3417 = vrot.lane.b32.xlu0 %v3396, 64
      %v3418 = vpop.permute.xlu0 %3417
      %3419 = vrot.lane.b32.xlu0 %v3397, 64
      %v3420 = vpop.permute.xlu0 %3419
      %3421 = vrot.lane.b32.xlu0 %v3398, 64
      %v3422 = vpop.permute.xlu0 %3421
      %3423 = vrot.lane.b32.xlu0 %v3399, 64
      %v3424 = vpop.permute.xlu0 %3423
      %3425 = vrot.lane.b32.xlu0 %v3400, 64
      %v3426 = vpop.permute.xlu0 %3425
      %3427 = vrot.lane.b32.xlu0 %v3401, 64
      %v3428 = vpop.permute.xlu0 %3427
      %3429 = vrot.lane.b32.xlu0 %v3402, 64
      %v3430 = vpop.permute.xlu0 %3429
      %3431 = vrot.lane.b32.xlu0 %v3403, 64
      %v3432 = vpop.permute.xlu0 %3431
      %3433 = vrot.lane.b32.xlu0 %v3404, 64
      %v3434 = vpop.permute.xlu0 %3433
      %3445 = vst.msk [vmem:[#allocation5 + $0xd4] sm:$0xf] %vm2714, %v3416
      %3446 = vst.msk [vmem:[#allocation5 + $0xe8] sm:$0xf] %vm2714, %v3418
      %3447 = vst.msk [vmem:[#allocation5 + $0xfc] sm:$0xf] %vm2714, %v3420
      %3448 = vst.msk [vmem:[#allocation5 + $0x110] sm:$0xf] %vm2714, %v3422
      %3449 = vst.msk [vmem:[#allocation5 + $0x124] sm:$0xf] %vm2714, %v3424
      %3450 = vst.msk [vmem:[#allocation5 + $0x138] sm:$0xf] %vm2714, %v3426
      %3451 = vst.msk [vmem:[#allocation5 + $0x14c] sm:$0xf] %vm2714, %v3428
      %3452 = vst.msk [vmem:[#allocation5 + $0x160] sm:$0xf] %vm2714, %v3430
      %3453 = vst.msk [vmem:[#allocation5 + $0x174] sm:$0xf] %vm2714, %v3432
      %3454 = vst.msk [vmem:[#allocation5 + $0x188] sm:$0xf] %vm2714, %v3434
      %v3455 = vld [vmem:[%s1109 + $0x1b] sm:$0xff]
      %v3456 = vld [vmem:[%s1109 + $0x23] sm:$0xff]
      %v3457 = vld [vmem:[%s1109 + $0x2b] sm:$0xff]
      %v3458 = vld [vmem:[%s1109 + $0x33] sm:$0xff]
      %v3459 = vld [vmem:[%s1109 + $0x3b] sm:$0xff]
      %v3460 = vld [vmem:[%s1109 + $0x43] sm:$0xff]
      %v3461 = vld [vmem:[%s1109 + $0x4b] sm:$0xff]
      %v3462 = vld [vmem:[%s1109 + $0x53] sm:$0xff]
      %v3463 = vld [vmem:[%s1109 + $0x5b] sm:$0xff]
      %v3464 = vld [vmem:[%s1109 + $0x63] sm:$0xff]
      %v3465 = vpack.c.bf16 %v3455, %v3455
      %v3466 = vpack.c.bf16 %v3456, %v3456
      %v3467 = vpack.c.bf16 %v3457, %v3457
      %v3468 = vpack.c.bf16 %v3458, %v3458
      %v3469 = vpack.c.bf16 %v3459, %v3459
      %v3470 = vpack.c.bf16 %v3460, %v3460
      %v3471 = vpack.c.bf16 %v3461, %v3461
      %v3472 = vpack.c.bf16 %v3462, %v3462
      %v3473 = vpack.c.bf16 %v3463, %v3463
      %v3474 = vpack.c.bf16 %v3464, %v3464
      %3475 = vst.msk [vmem:[#allocation5 + $0xd8] sm:$0xf] %vm2643, %v3465
      %3476 = vst.msk [vmem:[#allocation5 + $0xec] sm:$0xf] %vm2643, %v3466
      %3477 = vst.msk [vmem:[#allocation5 + $0x100] sm:$0xf] %vm2643, %v3467
      %3478 = vst.msk [vmem:[#allocation5 + $0x114] sm:$0xf] %vm2643, %v3468
      %3479 = vst.msk [vmem:[#allocation5 + $0x128] sm:$0xf] %vm2643, %v3469
      %3480 = vst.msk [vmem:[#allocation5 + $0x13c] sm:$0xf] %vm2643, %v3470
      %3481 = vst.msk [vmem:[#allocation5 + $0x150] sm:$0xf] %vm2643, %v3471
      %3482 = vst.msk [vmem:[#allocation5 + $0x164] sm:$0xf] %vm2643, %v3472
      %3483 = vst.msk [vmem:[#allocation5 + $0x178] sm:$0xf] %vm2643, %v3473
      %3484 = vst.msk [vmem:[#allocation5 + $0x18c] sm:$0xf] %vm2643, %v3474
      %v3485 = vld [vmem:[#allocation5] sm:$0xff]
      %v3486 = vld [vmem:[#allocation5 + $0x8] sm:$0xff]
      %v3487 = vld [vmem:[#allocation5 + $0x10] sm:$0xf]
      %v3488 = vld [vmem:[#allocation5 + $0x14] sm:$0xff]
      %v3489 = vld [vmem:[#allocation5 + $0x1c] sm:$0xff]
      %v3490 = vld [vmem:[#allocation5 + $0x24] sm:$0xf]
      %v3491 = vld [vmem:[#allocation5 + $0x28] sm:$0xff]
      %v3492 = vld [vmem:[#allocation5 + $0x30] sm:$0xff]
      %v3493 = vld [vmem:[#allocation5 + $0x38] sm:$0xf]
      %v3494 = vld [vmem:[#allocation5 + $0x3c] sm:$0xff]
      %v3495 = vld [vmem:[#allocation5 + $0x44] sm:$0xff]
      %v3496 = vld [vmem:[#allocation5 + $0x4c] sm:$0xf]
      %v3497 = vld [vmem:[#allocation5 + $0x50] sm:$0xff]
      %v3498 = vld [vmem:[#allocation5 + $0x58] sm:$0xff]
      %v3499 = vld [vmem:[#allocation5 + $0x60] sm:$0xf]
      %v3500 = vld [vmem:[#allocation5 + $0x64] sm:$0xff]
      %v3501 = vld [vmem:[#allocation5 + $0x6c] sm:$0xff]
      %v3502 = vld [vmem:[#allocation5 + $0x74] sm:$0xf]
      %v3503 = vld [vmem:[#allocation5 + $0x78] sm:$0xff]
      %v3504 = vld [vmem:[#allocation5 + $0x80] sm:$0xff]
      %v3505 = vld [vmem:[#allocation5 + $0x88] sm:$0xf]
      %v3506 = vld [vmem:[#allocation5 + $0x8c] sm:$0xff]
      %v3507 = vld [vmem:[#allocation5 + $0x94] sm:$0xff]
      %v3508 = vld [vmem:[#allocation5 + $0x9c] sm:$0xf]
      %v3509 = vld [vmem:[#allocation5 + $0xa0] sm:$0xff]
      %v3510 = vld [vmem:[#allocation5 + $0xa8] sm:$0xff]
      %v3511 = vld [vmem:[#allocation5 + $0xb0] sm:$0xf]
      %v3512 = vld [vmem:[#allocation5 + $0xb4] sm:$0xff]
      %v3513 = vld [vmem:[#allocation5 + $0xbc] sm:$0xff]
      %v3514 = vld [vmem:[#allocation5 + $0xc4] sm:$0xf]
      %v3515 = vld [vmem:[#allocation5 + $0xc8] sm:$0xff]
      %v3516 = vld [vmem:[#allocation5 + $0xd0] sm:$0xff]
      %v3517 = vld [vmem:[#allocation5 + $0xd8] sm:$0xf]
      %v3518 = vld [vmem:[#allocation5 + $0xdc] sm:$0xff]
      %v3519 = vld [vmem:[#allocation5 + $0xe4] sm:$0xff]
      %v3520 = vld [vmem:[#allocation5 + $0xec] sm:$0xf]
      %v3521 = vld [vmem:[#allocation5 + $0xf0] sm:$0xff]
      %v3522 = vld [vmem:[#allocation5 + $0xf8] sm:$0xff]
      %v3523 = vld [vmem:[#allocation5 + $0x100] sm:$0xf]
      %v3524 = vld [vmem:[#allocation5 + $0x104] sm:$0xff]
      %v3525 = vld [vmem:[#allocation5 + $0x10c] sm:$0xff]
      %v3526 = vld [vmem:[#allocation5 + $0x114] sm:$0xf]
      %v3527 = vld [vmem:[#allocation5 + $0x118] sm:$0xff]
      %v3528 = vld [vmem:[#allocation5 + $0x120] sm:$0xff]
      %v3529 = vld [vmem:[#allocation5 + $0x128] sm:$0xf]
      %v3530 = vld [vmem:[#allocation5 + $0x12c] sm:$0xff]
      %v3531 = vld [vmem:[#allocation5 + $0x134] sm:$0xff]
      %v3532 = vld [vmem:[#allocation5 + $0x13c] sm:$0xf]
      %v3533 = vld [vmem:[#allocation5 + $0x140] sm:$0xff]
      %v3534 = vld [vmem:[#allocation5 + $0x148] sm:$0xff]
      %v3535 = vld [vmem:[#allocation5 + $0x150] sm:$0xf]
      %v3536 = vld [vmem:[#allocation5 + $0x154] sm:$0xff]
      %v3537 = vld [vmem:[#allocation5 + $0x15c] sm:$0xff]
      %v3538 = vld [vmem:[#allocation5 + $0x164] sm:$0xf]
      %v3539 = vld [vmem:[#allocation5 + $0x168] sm:$0xff]
      %v3540 = vld [vmem:[#allocation5 + $0x170] sm:$0xff]
      %v3541 = vld [vmem:[#allocation5 + $0x178] sm:$0xf]
      %v3542 = vld [vmem:[#allocation5 + $0x17c] sm:$0xff]
      %v3543 = vld [vmem:[#allocation5 + $0x184] sm:$0xff]
      %v3544 = vld [vmem:[#allocation5 + $0x18c] sm:$0xf]
      %v3545 = vld [vmem:[%s3] sm:$0xf]
      %v3546 = vld [vmem:[%s3 + $0x4] sm:$0xf]
      %v3547 = vld [vmem:[%s3 + $0x8] sm:$0xf]
      %v3548 = vld [vmem:[%s3 + $0xc] sm:$0xf]
      %v3549 = vld [vmem:[%s3 + $0x10] sm:$0xf]
      %v3550 = vld [vmem:[%s3 + $0x14] sm:$0xf]
      %v3551 = vld [vmem:[%s3 + $0x18] sm:$0xf]
      %v3552 = vld [vmem:[%s3 + $0x1c] sm:$0xf]
      %v3553 = vld [vmem:[%s3 + $0x20] sm:$0xf]
      %v3554 = vld [vmem:[%s3 + $0x24] sm:$0xf]
      %v3555 = vld [vmem:[%s3 + $0x28] sm:$0xf]
      %v3556 = vld [vmem:[%s3 + $0x2c] sm:$0xf]
      %v3557 = vld [vmem:[%s3 + $0x30] sm:$0xf]
      %v3558 = vld [vmem:[%s3 + $0x34] sm:$0xf]
      %v3559 = vld [vmem:[%s3 + $0x38] sm:$0xf]
      %v3560 = vld [vmem:[%s3 + $0x3c] sm:$0xf]
      %v3561 = vld [vmem:[%s3 + $0x40] sm:$0xf]
      %v3562 = vld [vmem:[%s3 + $0x44] sm:$0xf]
      %v3563 = vld [vmem:[%s3 + $0x48] sm:$0xf]
      %v3564 = vld [vmem:[%s3 + $0x4c] sm:$0xf]
      %v3565 = vld [vmem:[%s3 + $0x50] sm:$0xf]
      %v3566 = vld [vmem:[%s3 + $0x54] sm:$0xf]
      %v3567 = vld [vmem:[%s3 + $0x58] sm:$0xf]
      %v3568 = vld [vmem:[%s3 + $0x5c] sm:$0xf]
      %v3569 = vld [vmem:[%s3 + $0x60] sm:$0xf]
      %v3570 = vld [vmem:[%s3 + $0x64] sm:$0xf]
      %v3571 = vld [vmem:[%s3 + $0x68] sm:$0xf]
      %v3572 = vld [vmem:[%s3 + $0x6c] sm:$0xf]
      %v3573 = vld [vmem:[%s3 + $0x70] sm:$0xf]
      %v3574 = vld [vmem:[%s3 + $0x74] sm:$0xf]
      %v3575 = vld [vmem:[%s3 + $0x78] sm:$0xf]
      %v3576 = vld [vmem:[%s3 + $0x7c] sm:$0xf]
      %v3577 = vld [vmem:[%s3 + $0x80] sm:$0xf]
      %v3578 = vld [vmem:[%s3 + $0x84] sm:$0xf]
      %v3579 = vld [vmem:[%s3 + $0x88] sm:$0xf]
      %v3580 = vld [vmem:[%s3 + $0x8c] sm:$0xf]
      %v3581 = vld [vmem:[%s3 + $0x90] sm:$0xf]
      %v3582 = vld [vmem:[%s3 + $0x94] sm:$0xf]
      %v3583 = vld [vmem:[%s3 + $0x98] sm:$0xf]
      %v3584 = vld [vmem:[%s3 + $0x9c] sm:$0xf]
      %v3585 = vld [vmem:[%s3 + $0xa0] sm:$0xf]
      %v3586 = vld [vmem:[%s3 + $0xa4] sm:$0xf]
      %v3587 = vld [vmem:[%s3 + $0xa8] sm:$0xf]
      %v3588 = vld [vmem:[%s3 + $0xac] sm:$0xf]
      %v3589 = vld [vmem:[%s3 + $0xb0] sm:$0xf]
      %v3590 = vld [vmem:[%s3 + $0xb4] sm:$0xf]
      %v3591 = vld [vmem:[%s3 + $0xb8] sm:$0xf]
      %v3592 = vld [vmem:[%s3 + $0xbc] sm:$0xf]
      %v3593 = vld [vmem:[%s3 + $0xc0] sm:$0xf]
      %v3594 = vld [vmem:[%s3 + $0xc4] sm:$0xf]
      %v3595 = vld [vmem:[%s3 + $0xc8] sm:$0xf]
      %v3596 = vld [vmem:[%s3 + $0xcc] sm:$0xf]
      %v3597 = vld [vmem:[%s3 + $0xd0] sm:$0xf]
      %v3598 = vld [vmem:[%s3 + $0xd4] sm:$0xf]
      %v3599 = vld [vmem:[%s3 + $0xd8] sm:$0xf]
      %v3600 = vld [vmem:[%s3 + $0xdc] sm:$0xf]
      %v3601 = vld [vmem:[%s3 + $0xe0] sm:$0xf]
      %v3602 = vld [vmem:[%s3 + $0xe4] sm:$0xf]
      %v3603 = vld [vmem:[%s3 + $0xe8] sm:$0xf]
      %v3604 = vld [vmem:[%s3 + $0xec] sm:$0xf]
      %v3605 = vld [vmem:[%s3 + $0xf0] sm:$0xf]
      %v3606 = vld [vmem:[%s3 + $0xf4] sm:$0xf]
      %v3607 = vld [vmem:[%s3 + $0xf8] sm:$0xf]
      %v3608 = vld [vmem:[%s3 + $0xfc] sm:$0xf]
      %v3609 = vld [vmem:[%s3 + $0x100] sm:$0xf]
      %v3610 = vld [vmem:[%s3 + $0x104] sm:$0xf]
      %v3611 = vld [vmem:[%s3 + $0x108] sm:$0xf]
      %v3612 = vld [vmem:[%s3 + $0x10c] sm:$0xf]
      %v3613 = vld [vmem:[%s3 + $0x110] sm:$0xf]
      %v3614 = vld [vmem:[%s3 + $0x114] sm:$0xf]
      %v3615 = vld [vmem:[%s3 + $0x118] sm:$0xf]
      %v3616 = vld [vmem:[%s3 + $0x11c] sm:$0xf]
      %v3617 = vld [vmem:[%s4] sm:$0x1]
      %v3619 = vperm.slane %v3617, 0
      %v3681 = vunpack.c.l.b16 %v3485
      %v3682 = vunpack.c.h.b16 %v3485
      %v3683 = vunpack.c.l.b16 %v3486
      %v3684 = vunpack.c.h.b16 %v3486
      %v3685 = vunpack.c.l.b16 %v3487
      %v3686 = vunpack.c.l.b16 %v3488
      %v3687 = vunpack.c.h.b16 %v3488
      %v3688 = vunpack.c.l.b16 %v3489
      %v3689 = vunpack.c.h.b16 %v3489
      %v3690 = vunpack.c.l.b16 %v3490
      %v3691 = vunpack.c.l.b16 %v3491
      %v3692 = vunpack.c.h.b16 %v3491
      %v3693 = vunpack.c.l.b16 %v3492
      %v3694 = vunpack.c.h.b16 %v3492
      %v3695 = vunpack.c.l.b16 %v3493
      %v3696 = vunpack.c.l.b16 %v3494
      %v3697 = vunpack.c.h.b16 %v3494
      %v3698 = vunpack.c.l.b16 %v3495
      %v3699 = vunpack.c.h.b16 %v3495
      %v3700 = vunpack.c.l.b16 %v3496
      %v3701 = vunpack.c.l.b16 %v3497
      %v3702 = vunpack.c.h.b16 %v3497
      %v3703 = vunpack.c.l.b16 %v3498
      %v3704 = vunpack.c.h.b16 %v3498
      %v3705 = vunpack.c.l.b16 %v3499
      %v3706 = vunpack.c.l.b16 %v3500
      %v3707 = vunpack.c.h.b16 %v3500
      %v3708 = vunpack.c.l.b16 %v3501
      %v3709 = vunpack.c.h.b16 %v3501
      %v3710 = vunpack.c.l.b16 %v3502
      %v3711 = vunpack.c.l.b16 %v3503
      %v3712 = vunpack.c.h.b16 %v3503
      %v3713 = vunpack.c.l.b16 %v3504
      %v3714 = vunpack.c.h.b16 %v3504
      %v3715 = vunpack.c.l.b16 %v3505
      %v3716 = vunpack.c.l.b16 %v3506
      %v3717 = vunpack.c.h.b16 %v3506
      %v3718 = vunpack.c.l.b16 %v3507
      %v3719 = vunpack.c.h.b16 %v3507
      %v3720 = vunpack.c.l.b16 %v3508
      %v3721 = vunpack.c.l.b16 %v3509
      %v3722 = vunpack.c.h.b16 %v3509
      %v3723 = vunpack.c.l.b16 %v3510
      %v3724 = vunpack.c.h.b16 %v3510
      %v3725 = vunpack.c.l.b16 %v3511
      %v3726 = vunpack.c.l.b16 %v3512
      %v3727 = vunpack.c.h.b16 %v3512
      %v3728 = vunpack.c.l.b16 %v3513
      %v3729 = vunpack.c.h.b16 %v3513
      %v3730 = vunpack.c.l.b16 %v3514
      %v3731 = vunpack.c.l.b16 %v3515
      %v3732 = vunpack.c.h.b16 %v3515
      %v3733 = vunpack.c.l.b16 %v3516
      %v3734 = vunpack.c.h.b16 %v3516
      %v3735 = vunpack.c.l.b16 %v3517
      %v3736 = vunpack.c.l.b16 %v3518
      %v3737 = vunpack.c.h.b16 %v3518
      %v3738 = vunpack.c.l.b16 %v3519
      %v3739 = vunpack.c.h.b16 %v3519
      %v3740 = vunpack.c.l.b16 %v3520
      %v3741 = vunpack.c.l.b16 %v3521
      %v3742 = vunpack.c.h.b16 %v3521
      %v3743 = vunpack.c.l.b16 %v3522
      %v3744 = vunpack.c.h.b16 %v3522
      %v3745 = vunpack.c.l.b16 %v3523
      %v3746 = vunpack.c.l.b16 %v3524
      %v3747 = vunpack.c.h.b16 %v3524
      %v3748 = vunpack.c.l.b16 %v3525
      %v3749 = vunpack.c.h.b16 %v3525
      %v3750 = vunpack.c.l.b16 %v3526
      %v3751 = vunpack.c.l.b16 %v3527
      %v3752 = vunpack.c.h.b16 %v3527
      %v3753 = vunpack.c.l.b16 %v3528
      %v3754 = vunpack.c.h.b16 %v3528
      %v3755 = vunpack.c.l.b16 %v3529
      %v3756 = vunpack.c.l.b16 %v3530
      %v3757 = vunpack.c.h.b16 %v3530
      %v3758 = vunpack.c.l.b16 %v3531
      %v3759 = vunpack.c.h.b16 %v3531
      %v3760 = vunpack.c.l.b16 %v3532
      %v3761 = vunpack.c.l.b16 %v3533
      %v3762 = vunpack.c.h.b16 %v3533
      %v3763 = vunpack.c.l.b16 %v3534
      %v3764 = vunpack.c.h.b16 %v3534
      %v3765 = vunpack.c.l.b16 %v3535
      %v3766 = vunpack.c.l.b16 %v3536
      %v3767 = vunpack.c.h.b16 %v3536
      %v3768 = vunpack.c.l.b16 %v3537
      %v3769 = vunpack.c.h.b16 %v3537
      %v3770 = vunpack.c.l.b16 %v3538
      %v3771 = vunpack.c.l.b16 %v3539
      %v3772 = vunpack.c.h.b16 %v3539
      %v3773 = vunpack.c.l.b16 %v3540
      %v3774 = vunpack.c.h.b16 %v3540
      %v3775 = vunpack.c.l.b16 %v3541
      %v3776 = vunpack.c.l.b16 %v3542
      %v3777 = vunpack.c.h.b16 %v3542
      %v3778 = vunpack.c.l.b16 %v3543
      %v3779 = vunpack.c.h.b16 %v3543
      %v3780 = vunpack.c.l.b16 %v3544
      %v3781 = vpack.c.b16 %v3686, %v3681
      %v3782 = vpack.c.b16 %v3687, %v3682
      %v3783 = vpack.c.b16 %v3688, %v3683
      %v3784 = vpack.c.b16 %v3689, %v3684
      %v3785 = vpack.c.b16 %v3690, %v3685
      %v3786 = vpack.c.b16 %v3696, %v3691
      %v3787 = vpack.c.b16 %v3697, %v3692
      %v3788 = vpack.c.b16 %v3698, %v3693
      %v3789 = vpack.c.b16 %v3699, %v3694
      %v3790 = vpack.c.b16 %v3700, %v3695
      %v3791 = vpack.c.b16 %v3706, %v3701
      %v3792 = vpack.c.b16 %v3707, %v3702
      %v3793 = vpack.c.b16 %v3708, %v3703
      %v3794 = vpack.c.b16 %v3709, %v3704
      %v3795 = vpack.c.b16 %v3710, %v3705
      %v3796 = vpack.c.b16 %v3716, %v3711
      %v3797 = vpack.c.b16 %v3717, %v3712
      %v3798 = vpack.c.b16 %v3718, %v3713
      %v3799 = vpack.c.b16 %v3719, %v3714
      %v3800 = vpack.c.b16 %v3720, %v3715
      %v3801 = vpack.c.b16 %v3726, %v3721
      %v3802 = vpack.c.b16 %v3727, %v3722
      %v3803 = vpack.c.b16 %v3728, %v3723
      %v3804 = vpack.c.b16 %v3729, %v3724
      %v3805 = vpack.c.b16 %v3730, %v3725
      %v3806 = vpack.c.b16 %v3736, %v3731
      %v3807 = vpack.c.b16 %v3737, %v3732
      %v3808 = vpack.c.b16 %v3738, %v3733
      %v3809 = vpack.c.b16 %v3739, %v3734
      %v3810 = vpack.c.b16 %v3740, %v3735
      %v3811 = vpack.c.b16 %v3746, %v3741
      %v3812 = vpack.c.b16 %v3747, %v3742
      %v3813 = vpack.c.b16 %v3748, %v3743
      %v3814 = vpack.c.b16 %v3749, %v3744
      %v3815 = vpack.c.b16 %v3750, %v3745
      %v3816 = vpack.c.b16 %v3756, %v3751
      %v3817 = vpack.c.b16 %v3757, %v3752
      %v3818 = vpack.c.b16 %v3758, %v3753
      %v3819 = vpack.c.b16 %v3759, %v3754
      %v3820 = vpack.c.b16 %v3760, %v3755
      %v3821 = vpack.c.b16 %v3766, %v3761
      %v3822 = vpack.c.b16 %v3767, %v3762
      %v3823 = vpack.c.b16 %v3768, %v3763
      %v3824 = vpack.c.b16 %v3769, %v3764
      %v3825 = vpack.c.b16 %v3770, %v3765
      %v3826 = vpack.c.b16 %v3776, %v3771
      %v3827 = vpack.c.b16 %v3777, %v3772
      %v3828 = vpack.c.b16 %v3778, %v3773
      %v3829 = vpack.c.b16 %v3779, %v3774
      %v3830 = vpack.c.b16 %v3780, %v3775
      %v3943 = vunpack.c.l.b16 %v3545
      %v3944 = vunpack.c.l.b16 %v3546
      %v3945 = vunpack.c.l.b16 %v3547
      %v3946 = vunpack.c.l.b16 %v3548
      %v3947 = vunpack.c.l.b16 %v3549
      %v3948 = vunpack.c.l.b16 %v3550
      %v3949 = vunpack.c.l.b16 %v3551
      %v3950 = vunpack.c.l.b16 %v3552
      %v3951 = vunpack.c.l.b16 %v3553
      %v3952 = vunpack.c.l.b16 %v3554
      %v3953 = vunpack.c.l.b16 %v3555
      %v3954 = vunpack.c.l.b16 %v3556
      %v3955 = vunpack.c.l.b16 %v3557
      %v3956 = vunpack.c.l.b16 %v3558
      %v3957 = vunpack.c.l.b16 %v3559
      %v3958 = vunpack.c.l.b16 %v3560
      %v3959 = vunpack.c.l.b16 %v3561
      %v3960 = vunpack.c.l.b16 %v3562
      %v3961 = vunpack.c.l.b16 %v3563
      %v3962 = vunpack.c.l.b16 %v3564
      %v3963 = vunpack.c.l.b16 %v3565
      %v3964 = vunpack.c.l.b16 %v3566
      %v3965 = vunpack.c.l.b16 %v3567
      %v3966 = vunpack.c.l.b16 %v3568
      %v3967 = vunpack.c.l.b16 %v3569
      %v3968 = vunpack.c.l.b16 %v3570
      %v3969 = vunpack.c.l.b16 %v3571
      %v3970 = vunpack.c.l.b16 %v3572
      %v3971 = vunpack.c.l.b16 %v3573
      %v3972 = vunpack.c.l.b16 %v3574
      %v3973 = vunpack.c.l.b16 %v3575
      %v3974 = vunpack.c.l.b16 %v3576
      %v3975 = vunpack.c.l.b16 %v3577
      %v3976 = vunpack.c.l.b16 %v3578
      %v3977 = vunpack.c.l.b16 %v3579
      %v3978 = vunpack.c.l.b16 %v3580
      %v3979 = vunpack.c.l.b16 %v3581
      %v3980 = vunpack.c.l.b16 %v3582
      %v3981 = vunpack.c.l.b16 %v3583
      %v3982 = vunpack.c.l.b16 %v3584
      %v3983 = vunpack.c.l.b16 %v3585
      %v3984 = vunpack.c.l.b16 %v3586
      %v3985 = vunpack.c.l.b16 %v3587
      %v3986 = vunpack.c.l.b16 %v3588
      %v3987 = vunpack.c.l.b16 %v3589
      %v3988 = vunpack.c.l.b16 %v3590
      %v3989 = vunpack.c.l.b16 %v3591
      %v3990 = vunpack.c.l.b16 %v3592
      %v3991 = vunpack.c.l.b16 %v3593
      %v3992 = vunpack.c.l.b16 %v3594
      %v3993 = vunpack.c.l.b16 %v3595
      %v3994 = vunpack.c.l.b16 %v3596
      %v3995 = vunpack.c.l.b16 %v3597
      %v3996 = vunpack.c.l.b16 %v3598
      %v3997 = vunpack.c.l.b16 %v3599
      %v3998 = vunpack.c.l.b16 %v3600
      %v3999 = vunpack.c.l.b16 %v3601
      %v4000 = vunpack.c.l.b16 %v3602
      %v4001 = vunpack.c.l.b16 %v3603
      %v4002 = vunpack.c.l.b16 %v3604
      %v4003 = vunpack.c.l.b16 %v3605
      %v4004 = vunpack.c.l.b16 %v3606
      %v4005 = vunpack.c.l.b16 %v3607
      %v4006 = vunpack.c.l.b16 %v3608
      %v4007 = vunpack.c.l.b16 %v3609
      %v4008 = vunpack.c.l.b16 %v3610
      %v4009 = vunpack.c.l.b16 %v3611
      %v4010 = vunpack.c.l.b16 %v3612
      %v4011 = vunpack.c.l.b16 %v3613
      %v4012 = vunpack.c.l.b16 %v3614
      %v4013 = vunpack.c.l.b16 %v3615
      %v4014 = vunpack.c.l.b16 %v3616
      %v4015 = vpack.c.b16 %v3944, %v3943
      %v4016 = vpack.c.b16 %v3946, %v3945
      %v4017 = vpack.c.b16 %v3948, %v3947
      %v4018 = vpack.c.b16 %v3950, %v3949
      %v4019 = vpack.c.b16 %v3952, %v3951
      %v4020 = vpack.c.b16 %v3954, %v3953
      %v4021 = vpack.c.b16 %v3956, %v3955
      %v4022 = vpack.c.b16 %v3958, %v3957
      %v4023 = vpack.c.b16 %v3960, %v3959
      %v4024 = vpack.c.b16 %v3962, %v3961
      %v4025 = vpack.c.b16 %v3964, %v3963
      %v4026 = vpack.c.b16 %v3966, %v3965
      %v4027 = vpack.c.b16 %v3968, %v3967
      %v4028 = vpack.c.b16 %v3970, %v3969
      %v4029 = vpack.c.b16 %v3972, %v3971
      %v4030 = vpack.c.b16 %v3974, %v3973
      %v4031 = vpack.c.b16 %v3976, %v3975
      %v4032 = vpack.c.b16 %v3978, %v3977
      %v4033 = vpack.c.b16 %v3980, %v3979
      %v4034 = vpack.c.b16 %v3982, %v3981
      %v4035 = vpack.c.b16 %v3984, %v3983
      %v4036 = vpack.c.b16 %v3986, %v3985
      %v4037 = vpack.c.b16 %v3988, %v3987
      %v4038 = vpack.c.b16 %v3990, %v3989
      %v4039 = vpack.c.b16 %v3992, %v3991
      %v4040 = vpack.c.b16 %v3994, %v3993
      %v4041 = vpack.c.b16 %v3996, %v3995
      %v4042 = vpack.c.b16 %v3998, %v3997
      %v4043 = vpack.c.b16 %v4000, %v3999
      %v4044 = vpack.c.b16 %v4002, %v4001
      %v4045 = vpack.c.b16 %v4004, %v4003
      %v4046 = vpack.c.b16 %v4006, %v4005
      %v4047 = vpack.c.b16 %v4008, %v4007
      %v4048 = vpack.c.b16 %v4010, %v4009
      %v4049 = vpack.c.b16 %v4012, %v4011
      %v4050 = vpack.c.b16 %v4014, %v4013
      %v4088 = vsel %vm1100, %v3785, 0
      %v4091 = vsel %vm1100, %v3790, 0
      %v4094 = vsel %vm1100, %v3795, 0
      %v4097 = vsel %vm1100, %v3800, 0
      %v4100 = vsel %vm1100, %v3805, 0
      %v4103 = vsel %vm1100, %v3810, 0
      %v4106 = vsel %vm1100, %v3815, 0
      %v4109 = vsel %vm1100, %v3820, 0
      %v4112 = vsel %vm1100, %v3825, 0
      %v4115 = vsel %vm1100, %v3830, 0
      %4117 = vmatpush.bf16.msra.mxu0 %v4022
      %4118 = vmatpush.bf16.msra.mxu0 %v4021
      %4119 = vmatpush.bf16.msra.mxu0 %v4020
      %4120 = vmatpush.bf16.msra.mxu0 %v4019
      %4121 = vmatpush.bf16.msra.mxu0 %v4018
      %4122 = vmatpush.bf16.msra.mxu0 %v4017
      %4123 = vmatpush.bf16.msra.mxu0 %v4016
      %4124 = vmatpush.bf16.msra.mxu0 %v4015
      %4125 = vmatmul.bf16.gmra.mxu0 %v3781
      %v4126 = vpop.f32.mrf.mxu0
      %v4127 = vadd.f32 %v3619, %v4126
      %v4128 = vpop.f32.mrf.mxu0
      %v4129 = vadd.f32 %v3619, %v4128
      %4130 = vmatmul.bf16.gmra.mxu0 %v3786
      %v4131 = vpop.f32.mrf.mxu0
      %v4132 = vadd.f32 %v3619, %v4131
      %v4133 = vpop.f32.mrf.mxu0
      %v4134 = vadd.f32 %v3619, %v4133
      %4135 = vmatmul.bf16.gmra.mxu0 %v3791
      %v4136 = vpop.f32.mrf.mxu0
      %v4137 = vadd.f32 %v3619, %v4136
      %v4138 = vpop.f32.mrf.mxu0
      %v4139 = vadd.f32 %v3619, %v4138
      %4140 = vmatmul.bf16.gmra.mxu0 %v3796
      %v4141 = vpop.f32.mrf.mxu0
      %v4142 = vadd.f32 %v3619, %v4141
      %v4143 = vpop.f32.mrf.mxu0
      %v4144 = vadd.f32 %v3619, %v4143
      %4145 = vmatmul.bf16.gmra.mxu0 %v3801
      %v4146 = vpop.f32.mrf.mxu0
      %v4147 = vadd.f32 %v3619, %v4146
      %v4148 = vpop.f32.mrf.mxu0
      %v4149 = vadd.f32 %v3619, %v4148
      %4150 = vmatmul.bf16.gmra.mxu0 %v3806
      %v4151 = vpop.f32.mrf.mxu0
      %v4152 = vadd.f32 %v3619, %v4151
      %v4153 = vpop.f32.mrf.mxu0
      %v4154 = vadd.f32 %v3619, %v4153
      %4155 = vmatmul.bf16.gmra.mxu0 %v3811
      %v4156 = vpop.f32.mrf.mxu0
      %v4157 = vadd.f32 %v3619, %v4156
      %v4158 = vpop.f32.mrf.mxu0
      %v4159 = vadd.f32 %v3619, %v4158
      %4160 = vmatmul.bf16.gmra.mxu0 %v3816
      %v4161 = vpop.f32.mrf.mxu0
      %v4162 = vadd.f32 %v3619, %v4161
      %v4163 = vpop.f32.mrf.mxu0
      %v4164 = vadd.f32 %v3619, %v4163
      %4165 = vmatmul.bf16.gmra.mxu0 %v3821
      %v4166 = vpop.f32.mrf.mxu0
      %v4167 = vadd.f32 %v3619, %v4166
      %v4168 = vpop.f32.mrf.mxu0
      %v4169 = vadd.f32 %v3619, %v4168
      %4170 = vmatmul.bf16.gmra.mxu0 %v3826
      %v4171 = vpop.f32.mrf.mxu0
      %v4172 = vadd.f32 %v3619, %v4171
      %v4173 = vpop.f32.mrf.mxu0
      %v4174 = vadd.f32 %v3619, %v4173
      %4175 = vdwg.mxu0
      %4176 = vmatpush.bf16.msra.mxu0 %v4030
      %4177 = vmatpush.bf16.msra.mxu0 %v4029
      %4178 = vmatpush.bf16.msra.mxu0 %v4028
      %4179 = vmatpush.bf16.msra.mxu0 %v4027
      %4180 = vmatpush.bf16.msra.mxu0 %v4026
      %4181 = vmatpush.bf16.msra.mxu0 %v4025
      %4182 = vmatpush.bf16.msra.mxu0 %v4024
      %4183 = vmatpush.bf16.msra.mxu0 %v4023
      %4184 = vmatmul.bf16.gmra.mxu0 %v3782
      %v4185 = vpop.f32.mrf.mxu0
      %v4186 = vadd.f32 %v4127, %v4185
      %v4187 = vpop.f32.mrf.mxu0
      %v4188 = vadd.f32 %v4129, %v4187
      %4189 = vmatmul.bf16.gmra.mxu0 %v3787
      %v4190 = vpop.f32.mrf.mxu0
      %v4191 = vadd.f32 %v4132, %v4190
      %v4192 = vpop.f32.mrf.mxu0
      %v4193 = vadd.f32 %v4134, %v4192
      %4194 = vmatmul.bf16.gmra.mxu0 %v3792
      %v4195 = vpop.f32.mrf.mxu0
      %v4196 = vadd.f32 %v4137, %v4195
      %v4197 = vpop.f32.mrf.mxu0
      %v4198 = vadd.f32 %v4139, %v4197
      %4199 = vmatmul.bf16.gmra.mxu0 %v3797
      %v4200 = vpop.f32.mrf.mxu0
      %v4201 = vadd.f32 %v4142, %v4200
      %v4202 = vpop.f32.mrf.mxu0
      %v4203 = vadd.f32 %v4144, %v4202
      %4204 = vmatmul.bf16.gmra.mxu0 %v3802
      %v4205 = vpop.f32.mrf.mxu0
      %v4206 = vadd.f32 %v4147, %v4205
      %v4207 = vpop.f32.mrf.mxu0
      %v4208 = vadd.f32 %v4149, %v4207
      %4209 = vmatmul.bf16.gmra.mxu0 %v3807
      %v4210 = vpop.f32.mrf.mxu0
      %v4211 = vadd.f32 %v4152, %v4210
      %v4212 = vpop.f32.mrf.mxu0
      %v4213 = vadd.f32 %v4154, %v4212
      %4214 = vmatmul.bf16.gmra.mxu0 %v3812
      %v4215 = vpop.f32.mrf.mxu0
      %v4216 = vadd.f32 %v4157, %v4215
      %v4217 = vpop.f32.mrf.mxu0
      %v4218 = vadd.f32 %v4159, %v4217
      %4219 = vmatmul.bf16.gmra.mxu0 %v3817
      %v4220 = vpop.f32.mrf.mxu0
      %v4221 = vadd.f32 %v4162, %v4220
      %v4222 = vpop.f32.mrf.mxu0
      %v4223 = vadd.f32 %v4164, %v4222
      %4224 = vmatmul.bf16.gmra.mxu0 %v3822
      %v4225 = vpop.f32.mrf.mxu0
      %v4226 = vadd.f32 %v4167, %v4225
      %v4227 = vpop.f32.mrf.mxu0
      %v4228 = vadd.f32 %v4169, %v4227
      %4229 = vmatmul.bf16.gmra.mxu0 %v3827
      %v4230 = vpop.f32.mrf.mxu0
      %v4231 = vadd.f32 %v4172, %v4230
      %v4232 = vpop.f32.mrf.mxu0
      %v4233 = vadd.f32 %v4174, %v4232
      %4234 = vdwg.mxu0
      %4235 = vmatpush.bf16.msra.mxu0 %v4038
      %4236 = vmatpush.bf16.msra.mxu0 %v4037
      %4237 = vmatpush.bf16.msra.mxu0 %v4036
      %4238 = vmatpush.bf16.msra.mxu0 %v4035
      %4239 = vmatpush.bf16.msra.mxu0 %v4034
      %4240 = vmatpush.bf16.msra.mxu0 %v4033
      %4241 = vmatpush.bf16.msra.mxu0 %v4032
      %4242 = vmatpush.bf16.msra.mxu0 %v4031
      %4243 = vmatmul.bf16.gmra.mxu0 %v3783
      %v4244 = vpop.f32.mrf.mxu0
      %v4245 = vadd.f32 %v4186, %v4244
      %v4246 = vpop.f32.mrf.mxu0
      %v4247 = vadd.f32 %v4188, %v4246
      %4248 = vmatmul.bf16.gmra.mxu0 %v3788
      %v4249 = vpop.f32.mrf.mxu0
      %v4250 = vadd.f32 %v4191, %v4249
      %v4251 = vpop.f32.mrf.mxu0
      %v4252 = vadd.f32 %v4193, %v4251
      %4253 = vmatmul.bf16.gmra.mxu0 %v3793
      %v4254 = vpop.f32.mrf.mxu0
      %v4255 = vadd.f32 %v4196, %v4254
      %v4256 = vpop.f32.mrf.mxu0
      %v4257 = vadd.f32 %v4198, %v4256
      %4258 = vmatmul.bf16.gmra.mxu0 %v3798
      %v4259 = vpop.f32.mrf.mxu0
      %v4260 = vadd.f32 %v4201, %v4259
      %v4261 = vpop.f32.mrf.mxu0
      %v4262 = vadd.f32 %v4203, %v4261
      %4263 = vmatmul.bf16.gmra.mxu0 %v3803
      %v4264 = vpop.f32.mrf.mxu0
      %v4265 = vadd.f32 %v4206, %v4264
      %v4266 = vpop.f32.mrf.mxu0
      %v4267 = vadd.f32 %v4208, %v4266
      %4268 = vmatmul.bf16.gmra.mxu0 %v3808
      %v4269 = vpop.f32.mrf.mxu0
      %v4270 = vadd.f32 %v4211, %v4269
      %v4271 = vpop.f32.mrf.mxu0
      %v4272 = vadd.f32 %v4213, %v4271
      %4273 = vmatmul.bf16.gmra.mxu0 %v3813
      %v4274 = vpop.f32.mrf.mxu0
      %v4275 = vadd.f32 %v4216, %v4274
      %v4276 = vpop.f32.mrf.mxu0
      %v4277 = vadd.f32 %v4218, %v4276
      %4278 = vmatmul.bf16.gmra.mxu0 %v3818
      %v4279 = vpop.f32.mrf.mxu0
      %v4280 = vadd.f32 %v4221, %v4279
      %v4281 = vpop.f32.mrf.mxu0
      %v4282 = vadd.f32 %v4223, %v4281
      %4283 = vmatmul.bf16.gmra.mxu0 %v3823
      %v4284 = vpop.f32.mrf.mxu0
      %v4285 = vadd.f32 %v4226, %v4284
      %v4286 = vpop.f32.mrf.mxu0
      %v4287 = vadd.f32 %v4228, %v4286
      %4288 = vmatmul.bf16.gmra.mxu0 %v3828
      %v4289 = vpop.f32.mrf.mxu0
      %v4290 = vadd.f32 %v4231, %v4289
      %v4291 = vpop.f32.mrf.mxu0
      %v4292 = vadd.f32 %v4233, %v4291
      %4293 = vdwg.mxu0
      %4294 = vmatpush.bf16.msra.mxu0 %v4046
      %4295 = vmatpush.bf16.msra.mxu0 %v4045
      %4296 = vmatpush.bf16.msra.mxu0 %v4044
      %4297 = vmatpush.bf16.msra.mxu0 %v4043
      %4298 = vmatpush.bf16.msra.mxu0 %v4042
      %4299 = vmatpush.bf16.msra.mxu0 %v4041
      %4300 = vmatpush.bf16.msra.mxu0 %v4040
      %4301 = vmatpush.bf16.msra.mxu0 %v4039
      %4302 = vmatmul.bf16.gmra.mxu0 %v3784
      %v4303 = vpop.f32.mrf.mxu0
      %v4304 = vadd.f32 %v4245, %v4303
      %v4305 = vpop.f32.mrf.mxu0
      %v4306 = vadd.f32 %v4247, %v4305
      %4307 = vmatmul.bf16.gmra.mxu0 %v3789
      %v4308 = vpop.f32.mrf.mxu0
      %v4309 = vadd.f32 %v4250, %v4308
      %v4310 = vpop.f32.mrf.mxu0
      %v4311 = vadd.f32 %v4252, %v4310
      %4312 = vmatmul.bf16.gmra.mxu0 %v3794
      %v4313 = vpop.f32.mrf.mxu0
      %v4314 = vadd.f32 %v4255, %v4313
      %v4315 = vpop.f32.mrf.mxu0
      %v4316 = vadd.f32 %v4257, %v4315
      %4317 = vmatmul.bf16.gmra.mxu0 %v3799
      %v4318 = vpop.f32.mrf.mxu0
      %v4319 = vadd.f32 %v4260, %v4318
      %v4320 = vpop.f32.mrf.mxu0
      %v4321 = vadd.f32 %v4262, %v4320
      %4322 = vmatmul.bf16.gmra.mxu0 %v3804
      %v4323 = vpop.f32.mrf.mxu0
      %v4324 = vadd.f32 %v4265, %v4323
      %v4325 = vpop.f32.mrf.mxu0
      %v4326 = vadd.f32 %v4267, %v4325
      %4327 = vmatmul.bf16.gmra.mxu0 %v3809
      %v4328 = vpop.f32.mrf.mxu0
      %v4329 = vadd.f32 %v4270, %v4328
      %v4330 = vpop.f32.mrf.mxu0
      %v4331 = vadd.f32 %v4272, %v4330
      %4332 = vmatmul.bf16.gmra.mxu0 %v3814
      %v4333 = vpop.f32.mrf.mxu0
      %v4334 = vadd.f32 %v4275, %v4333
      %v4335 = vpop.f32.mrf.mxu0
      %v4336 = vadd.f32 %v4277, %v4335
      %4337 = vmatmul.bf16.gmra.mxu0 %v3819
      %v4338 = vpop.f32.mrf.mxu0
      %v4339 = vadd.f32 %v4280, %v4338
      %v4340 = vpop.f32.mrf.mxu0
      %v4341 = vadd.f32 %v4282, %v4340
      %4342 = vmatmul.bf16.gmra.mxu0 %v3824
      %v4343 = vpop.f32.mrf.mxu0
      %v4344 = vadd.f32 %v4285, %v4343
      %v4345 = vpop.f32.mrf.mxu0
      %v4346 = vadd.f32 %v4287, %v4345
      %4347 = vmatmul.bf16.gmra.mxu0 %v3829
      %v4348 = vpop.f32.mrf.mxu0
      %v4349 = vadd.f32 %v4290, %v4348
      %v4350 = vpop.f32.mrf.mxu0
      %v4351 = vadd.f32 %v4292, %v4350
      %4352 = vdwg.mxu0
      %4353 = vmatpush.bf16.msra.mxu0 0
      %4354 = vmatpush.bf16.msra.mxu0 0
      %4355 = vmatpush.bf16.msra.mxu0 0
      %4356 = vmatpush.bf16.msra.mxu0 0
      %4357 = vmatpush.bf16.msra.mxu0 %v4050
      %4358 = vmatpush.bf16.msra.mxu0 %v4049
      %4359 = vmatpush.bf16.msra.mxu0 %v4048
      %4360 = vmatpush.bf16.msra.mxu0 %v4047
      %4361 = vmatmul.bf16.gmra.mxu0 %v4088
      %v4362 = vpop.f32.mrf.mxu0
      %v4363 = vadd.f32 %v4304, %v4362
      %v4364 = vpop.f32.mrf.mxu0
      %v4365 = vadd.f32 %v4306, %v4364
      %4366 = vmatmul.bf16.gmra.mxu0 %v4091
      %v4367 = vpop.f32.mrf.mxu0
      %v4368 = vadd.f32 %v4309, %v4367
      %v4369 = vpop.f32.mrf.mxu0
      %v4370 = vadd.f32 %v4311, %v4369
      %4371 = vmatmul.bf16.gmra.mxu0 %v4094
      %v4372 = vpop.f32.mrf.mxu0
      %v4373 = vadd.f32 %v4314, %v4372
      %v4374 = vpop.f32.mrf.mxu0
      %v4375 = vadd.f32 %v4316, %v4374
      %4376 = vmatmul.bf16.gmra.mxu0 %v4097
      %v4377 = vpop.f32.mrf.mxu0
      %v4378 = vadd.f32 %v4319, %v4377
      %v4379 = vpop.f32.mrf.mxu0
      %v4380 = vadd.f32 %v4321, %v4379
      %4381 = vmatmul.bf16.gmra.mxu0 %v4100
      %v4382 = vpop.f32.mrf.mxu0
      %v4383 = vadd.f32 %v4324, %v4382
      %v4384 = vpop.f32.mrf.mxu0
      %v4385 = vadd.f32 %v4326, %v4384
      %4386 = vmatmul.bf16.gmra.mxu0 %v4103
      %v4387 = vpop.f32.mrf.mxu0
      %v4388 = vadd.f32 %v4329, %v4387
      %v4389 = vpop.f32.mrf.mxu0
      %v4390 = vadd.f32 %v4331, %v4389
      %4391 = vmatmul.bf16.gmra.mxu0 %v4106
      %v4392 = vpop.f32.mrf.mxu0
      %v4393 = vadd.f32 %v4334, %v4392
      %v4394 = vpop.f32.mrf.mxu0
      %v4395 = vadd.f32 %v4336, %v4394
      %4396 = vmatmul.bf16.gmra.mxu0 %v4109
      %v4397 = vpop.f32.mrf.mxu0
      %v4398 = vadd.f32 %v4339, %v4397
      %v4399 = vpop.f32.mrf.mxu0
      %v4400 = vadd.f32 %v4341, %v4399
      %4401 = vmatmul.bf16.gmra.mxu0 %v4112
      %v4402 = vpop.f32.mrf.mxu0
      %v4403 = vadd.f32 %v4344, %v4402
      %v4404 = vpop.f32.mrf.mxu0
      %v4405 = vadd.f32 %v4346, %v4404
      %4406 = vmatmul.bf16.gmra.mxu0 %v4115
      %v4407 = vpop.f32.mrf.mxu0
      %v4408 = vadd.f32 %v4349, %v4407
      %v4409 = vpop.f32.mrf.mxu0
      %v4410 = vadd.f32 %v4351, %v4409
      %4411 = vdwg.mxu0
      %v4412 = vmax.f32 %v4363, 0.0
      %v4413 = vmax.f32 %v4365, 0.0
      %v4414 = vmax.f32 %v4368, 0.0
      %v4415 = vmax.f32 %v4370, 0.0
      %v4416 = vmax.f32 %v4373, 0.0
      %v4417 = vmax.f32 %v4375, 0.0
      %v4418 = vmax.f32 %v4378, 0.0
      %v4419 = vmax.f32 %v4380, 0.0
      %v4420 = vmax.f32 %v4383, 0.0
      %v4421 = vmax.f32 %v4385, 0.0
      %v4422 = vmax.f32 %v4388, 0.0
      %v4423 = vmax.f32 %v4390, 0.0
      %v4424 = vmax.f32 %v4393, 0.0
      %v4425 = vmax.f32 %v4395, 0.0
      %v4426 = vmax.f32 %v4398, 0.0
      %v4427 = vmax.f32 %v4400, 0.0
      %v4428 = vmax.f32 %v4403, 0.0
      %v4429 = vmax.f32 %v4405, 0.0
      %v4430 = vmax.f32 %v4408, 0.0
      %v4431 = vmax.f32 %v4410, 0.0
      %v4432 = vmul.f32 %v4412, %v1080
      %v4433 = vmul.f32 %v4413, %v1081
      %v4434 = vmul.f32 %v4414, %v1082
      %v4435 = vmul.f32 %v4415, %v1083
      %v4436 = vmul.f32 %v4416, %v1084
      %v4437 = vmul.f32 %v4417, %v1085
      %v4438 = vmul.f32 %v4418, %v1086
      %v4439 = vmul.f32 %v4419, %v1087
      %v4440 = vmul.f32 %v4420, %v1088
      %v4441 = vmul.f32 %v4421, %v1089
      %v4442 = vmul.f32 %v4422, %v1090
      %v4443 = vmul.f32 %v4423, %v1091
      %v4444 = vmul.f32 %v4424, %v1092
      %v4445 = vmul.f32 %v4425, %v1093
      %v4446 = vmul.f32 %v4426, %v1094
      %v4447 = vmul.f32 %v4427, %v1095
      %v4448 = vmul.f32 %v4428, %v1096
      %v4449 = vmul.f32 %v4429, %v1097
      %v4450 = vmul.f32 %v4430, %v1098
      %v4451 = vmul.f32 %v4431, %v1099
      %4452 = vst [vmem:[#allocation3 + $0x10] sm:$0xff] %v4432
      %4453 = vst [vmem:[#allocation3 + $0x18] sm:$0xff] %v4433
      %4454 = vst [vmem:[#allocation3 + $0x20] sm:$0xff] %v4434
      %4455 = vst [vmem:[#allocation3 + $0x28] sm:$0xff] %v4435
      %4456 = vst [vmem:[#allocation3 + $0x30] sm:$0xff] %v4436
      %4457 = vst [vmem:[#allocation3 + $0x38] sm:$0xff] %v4437
      %4458 = vst [vmem:[#allocation3 + $0x40] sm:$0xff] %v4438
      %4459 = vst [vmem:[#allocation3 + $0x48] sm:$0xff] %v4439
      %4460 = vst [vmem:[#allocation3 + $0x50] sm:$0xff] %v4440
      %4461 = vst [vmem:[#allocation3 + $0x58] sm:$0xff] %v4441
      %4462 = vst [vmem:[%s1114 + $0x10] sm:$0xff] %v4442
      %4463 = vst [vmem:[%s1114 + $0x18] sm:$0xff] %v4443
      %4464 = vst [vmem:[%s1114 + $0x20] sm:$0xff] %v4444
      %4465 = vst [vmem:[%s1114 + $0x28] sm:$0xff] %v4445
      %4466 = vst [vmem:[%s1114 + $0x30] sm:$0xff] %v4446
      %4467 = vst [vmem:[%s1114 + $0x38] sm:$0xff] %v4447
      %4468 = vst [vmem:[%s1114 + $0x40] sm:$0xff] %v4448
      %4469 = vst [vmem:[%s1114 + $0x48] sm:$0xff] %v4449
      %4470 = vst [vmem:[%s1114 + $0x50] sm:$0xff] %v4450
      %4471 = vst [vmem:[%s1114 + $0x58] sm:$0xff] %v4451
      %v4472 = vld [vmem:[#allocation3 + $0x5] sm:$0xff]
      %v4473 = vld [vmem:[#allocation3 + $0xd] sm:$0xff]
      %v4474 = vld [vmem:[#allocation3 + $0x15] sm:$0xff]
      %v4475 = vld [vmem:[#allocation3 + $0x1d] sm:$0xff]
      %v4476 = vld [vmem:[#allocation3 + $0x25] sm:$0xff]
      %v4477 = vld [vmem:[#allocation3 + $0x2d] sm:$0xff]
      %v4478 = vld [vmem:[#allocation3 + $0x35] sm:$0xff]
      %v4479 = vld [vmem:[#allocation3 + $0x3d] sm:$0xff]
      %v4480 = vld [vmem:[#allocation3 + $0x45] sm:$0xff]
      %v4481 = vld [vmem:[#allocation3 + $0x4d] sm:$0xff]
      %v4482 = vpack.c.bf16 %v4472, %v4472
      %v4483 = vpack.c.bf16 %v4473, %v4473
      %v4484 = vpack.c.bf16 %v4474, %v4474
      %v4485 = vpack.c.bf16 %v4475, %v4475
      %v4486 = vpack.c.bf16 %v4476, %v4476
      %v4487 = vpack.c.bf16 %v4477, %v4477
      %v4488 = vpack.c.bf16 %v4478, %v4478
      %v4489 = vpack.c.bf16 %v4479, %v4479
      %v4490 = vpack.c.bf16 %v4480, %v4480
      %v4491 = vpack.c.bf16 %v4481, %v4481
      %4492 = vst [vmem:[#allocation6] sm:$0xf] %v4482
      %4493 = vst [vmem:[#allocation6 + $0x24] sm:$0xf] %v4483
      %4494 = vst [vmem:[#allocation6 + $0x48] sm:$0xf] %v4484
      %4495 = vst [vmem:[#allocation6 + $0x6c] sm:$0xf] %v4485
      %4496 = vst [vmem:[#allocation6 + $0x90] sm:$0xf] %v4486
      %4497 = vst [vmem:[#allocation6 + $0xb4] sm:$0xf] %v4487
      %4498 = vst [vmem:[#allocation6 + $0xd8] sm:$0xf] %v4488
      %4499 = vst [vmem:[#allocation6 + $0xfc] sm:$0xf] %v4489
      %4500 = vst [vmem:[#allocation6 + $0x120] sm:$0xf] %v4490
      %4501 = vst [vmem:[#allocation6 + $0x144] sm:$0xf] %v4491
      %v4502 = vld [vmem:[#allocation3 + $0x6] sm:$0xff]
      %v4503 = vld [vmem:[#allocation3 + $0xe] sm:$0xff]
      %v4504 = vld [vmem:[#allocation3 + $0x16] sm:$0xff]
      %v4505 = vld [vmem:[#allocation3 + $0x1e] sm:$0xff]
      %v4506 = vld [vmem:[#allocation3 + $0x26] sm:$0xff]
      %v4507 = vld [vmem:[#allocation3 + $0x2e] sm:$0xff]
      %v4508 = vld [vmem:[#allocation3 + $0x36] sm:$0xff]
      %v4509 = vld [vmem:[#allocation3 + $0x3e] sm:$0xff]
      %v4510 = vld [vmem:[#allocation3 + $0x46] sm:$0xff]
      %v4511 = vld [vmem:[#allocation3 + $0x4e] sm:$0xff]
      %v4512 = vpack.c.bf16 %v4502, %v4502
      %v4513 = vpack.c.bf16 %v4503, %v4503
      %v4514 = vpack.c.bf16 %v4504, %v4504
      %v4515 = vpack.c.bf16 %v4505, %v4505
      %v4516 = vpack.c.bf16 %v4506, %v4506
      %v4517 = vpack.c.bf16 %v4507, %v4507
      %v4518 = vpack.c.bf16 %v4508, %v4508
      %v4519 = vpack.c.bf16 %v4509, %v4509
      %v4520 = vpack.c.bf16 %v4510, %v4510
      %v4521 = vpack.c.bf16 %v4511, %v4511
      %4522 = vst [vmem:[#allocation6 + $0x4] sm:$0xf] %v4512
      %4523 = vst [vmem:[#allocation6 + $0x28] sm:$0xf] %v4513
      %4524 = vst [vmem:[#allocation6 + $0x4c] sm:$0xf] %v4514
      %4525 = vst [vmem:[#allocation6 + $0x70] sm:$0xf] %v4515
      %4526 = vst [vmem:[#allocation6 + $0x94] sm:$0xf] %v4516
      %4527 = vst [vmem:[#allocation6 + $0xb8] sm:$0xf] %v4517
      %4528 = vst [vmem:[#allocation6 + $0xdc] sm:$0xf] %v4518
      %4529 = vst [vmem:[#allocation6 + $0x100] sm:$0xf] %v4519
      %4530 = vst [vmem:[#allocation6 + $0x124] sm:$0xf] %v4520
      %4531 = vst [vmem:[#allocation6 + $0x148] sm:$0xf] %v4521
      %v4532 = vld [vmem:[#allocation3 + $0x7] sm:$0xff]
      %v4533 = vld [vmem:[#allocation3 + $0xf] sm:$0xff]
      %v4534 = vld [vmem:[#allocation3 + $0x17] sm:$0xff]
      %v4535 = vld [vmem:[#allocation3 + $0x1f] sm:$0xff]
      %v4536 = vld [vmem:[#allocation3 + $0x27] sm:$0xff]
      %v4537 = vld [vmem:[#allocation3 + $0x2f] sm:$0xff]
      %v4538 = vld [vmem:[#allocation3 + $0x37] sm:$0xff]
      %v4539 = vld [vmem:[#allocation3 + $0x3f] sm:$0xff]
      %v4540 = vld [vmem:[#allocation3 + $0x47] sm:$0xff]
      %v4541 = vld [vmem:[#allocation3 + $0x4f] sm:$0xff]
      %v4542 = vpack.c.bf16 %v4532, %v4532
      %v4543 = vpack.c.bf16 %v4533, %v4533
      %v4544 = vpack.c.bf16 %v4534, %v4534
      %v4545 = vpack.c.bf16 %v4535, %v4535
      %v4546 = vpack.c.bf16 %v4536, %v4536
      %v4547 = vpack.c.bf16 %v4537, %v4537
      %v4548 = vpack.c.bf16 %v4538, %v4538
      %v4549 = vpack.c.bf16 %v4539, %v4539
      %v4550 = vpack.c.bf16 %v4540, %v4540
      %v4551 = vpack.c.bf16 %v4541, %v4541
      %4552 = vst [vmem:[#allocation6 + $0x8] sm:$0xf] %v4542
      %4553 = vst [vmem:[#allocation6 + $0x2c] sm:$0xf] %v4543
      %4554 = vst [vmem:[#allocation6 + $0x50] sm:$0xf] %v4544
      %4555 = vst [vmem:[#allocation6 + $0x74] sm:$0xf] %v4545
      %4556 = vst [vmem:[#allocation6 + $0x98] sm:$0xf] %v4546
      %4557 = vst [vmem:[#allocation6 + $0xbc] sm:$0xf] %v4547
      %4558 = vst [vmem:[#allocation6 + $0xe0] sm:$0xf] %v4548
      %4559 = vst [vmem:[#allocation6 + $0x104] sm:$0xf] %v4549
      %4560 = vst [vmem:[#allocation6 + $0x128] sm:$0xf] %v4550
      %4561 = vst [vmem:[#allocation6 + $0x14c] sm:$0xf] %v4551
      %v4562 = vld [vmem:[#allocation3 + $0xf] sm:$0xff]
      %v4563 = vld [vmem:[#allocation3 + $0x17] sm:$0xff]
      %v4564 = vld [vmem:[#allocation3 + $0x1f] sm:$0xff]
      %v4565 = vld [vmem:[#allocation3 + $0x27] sm:$0xff]
      %v4566 = vld [vmem:[#allocation3 + $0x2f] sm:$0xff]
      %v4567 = vld [vmem:[#allocation3 + $0x37] sm:$0xff]
      %v4568 = vld [vmem:[#allocation3 + $0x3f] sm:$0xff]
      %v4569 = vld [vmem:[#allocation3 + $0x47] sm:$0xff]
      %v4570 = vld [vmem:[#allocation3 + $0x4f] sm:$0xff]
      %v4571 = vld [vmem:[#allocation3 + $0x57] sm:$0xff]
      %v4572 = vpack.c.bf16 %v4562, %v4562
      %v4573 = vpack.c.bf16 %v4563, %v4563
      %v4574 = vpack.c.bf16 %v4564, %v4564
      %v4575 = vpack.c.bf16 %v4565, %v4565
      %v4576 = vpack.c.bf16 %v4566, %v4566
      %v4577 = vpack.c.bf16 %v4567, %v4567
      %v4578 = vpack.c.bf16 %v4568, %v4568
      %v4579 = vpack.c.bf16 %v4569, %v4569
      %v4580 = vpack.c.bf16 %v4570, %v4570
      %v4581 = vpack.c.bf16 %v4571, %v4571
      %4582 = vst [vmem:[#allocation6 + $0xc] sm:$0xf] %v4572
      %4583 = vst [vmem:[#allocation6 + $0x30] sm:$0xf] %v4573
      %4584 = vst [vmem:[#allocation6 + $0x54] sm:$0xf] %v4574
      %4585 = vst [vmem:[#allocation6 + $0x78] sm:$0xf] %v4575
      %4586 = vst [vmem:[#allocation6 + $0x9c] sm:$0xf] %v4576
      %4587 = vst [vmem:[#allocation6 + $0xc0] sm:$0xf] %v4577
      %4588 = vst [vmem:[#allocation6 + $0xe4] sm:$0xf] %v4578
      %4589 = vst [vmem:[#allocation6 + $0x108] sm:$0xf] %v4579
      %4590 = vst [vmem:[#allocation6 + $0x12c] sm:$0xf] %v4580
      %4591 = vst [vmem:[#allocation6 + $0x150] sm:$0xf] %v4581
      %v4592 = vld [vmem:[#allocation3 + $0x10] sm:$0xff]
      %v4593 = vld [vmem:[#allocation3 + $0x18] sm:$0xff]
      %v4594 = vld [vmem:[#allocation3 + $0x20] sm:$0xff]
      %v4595 = vld [vmem:[#allocation3 + $0x28] sm:$0xff]
      %v4596 = vld [vmem:[#allocation3 + $0x30] sm:$0xff]
      %v4597 = vld [vmem:[#allocation3 + $0x38] sm:$0xff]
      %v4598 = vld [vmem:[#allocation3 + $0x40] sm:$0xff]
      %v4599 = vld [vmem:[#allocation3 + $0x48] sm:$0xff]
      %v4600 = vld [vmem:[#allocation3 + $0x50] sm:$0xff]
      %v4601 = vld [vmem:[#allocation3 + $0x58] sm:$0xff]
      %v4602 = vpack.c.bf16 %v4592, %v4592
      %v4603 = vpack.c.bf16 %v4593, %v4593
      %v4604 = vpack.c.bf16 %v4594, %v4594
      %v4605 = vpack.c.bf16 %v4595, %v4595
      %v4606 = vpack.c.bf16 %v4596, %v4596
      %v4607 = vpack.c.bf16 %v4597, %v4597
      %v4608 = vpack.c.bf16 %v4598, %v4598
      %v4609 = vpack.c.bf16 %v4599, %v4599
      %v4610 = vpack.c.bf16 %v4600, %v4600
      %v4611 = vpack.c.bf16 %v4601, %v4601
      %4612 = vst [vmem:[#allocation6 + $0x10] sm:$0xf] %v4602
      %4613 = vst [vmem:[#allocation6 + $0x34] sm:$0xf] %v4603
      %4614 = vst [vmem:[#allocation6 + $0x58] sm:$0xf] %v4604
      %4615 = vst [vmem:[#allocation6 + $0x7c] sm:$0xf] %v4605
      %4616 = vst [vmem:[#allocation6 + $0xa0] sm:$0xf] %v4606
      %4617 = vst [vmem:[#allocation6 + $0xc4] sm:$0xf] %v4607
      %4618 = vst [vmem:[#allocation6 + $0xe8] sm:$0xf] %v4608
      %4619 = vst [vmem:[#allocation6 + $0x10c] sm:$0xf] %v4609
      %4620 = vst [vmem:[#allocation6 + $0x130] sm:$0xf] %v4610
      %4621 = vst [vmem:[#allocation6 + $0x154] sm:$0xf] %v4611
      %v4622 = vld [vmem:[#allocation3 + $0x11] sm:$0xff]
      %v4623 = vld [vmem:[#allocation3 + $0x19] sm:$0xff]
      %v4624 = vld [vmem:[#allocation3 + $0x21] sm:$0xff]
      %v4625 = vld [vmem:[#allocation3 + $0x29] sm:$0xff]
      %v4626 = vld [vmem:[#allocation3 + $0x31] sm:$0xff]
      %v4627 = vld [vmem:[#allocation3 + $0x39] sm:$0xff]
      %v4628 = vld [vmem:[#allocation3 + $0x41] sm:$0xff]
      %v4629 = vld [vmem:[#allocation3 + $0x49] sm:$0xff]
      %v4630 = vld [vmem:[#allocation3 + $0x51] sm:$0xff]
      %v4631 = vld [vmem:[#allocation3 + $0x59] sm:$0xff]
      %v4632 = vpack.c.bf16 %v4622, %v4622
      %v4633 = vpack.c.bf16 %v4623, %v4623
      %v4634 = vpack.c.bf16 %v4624, %v4624
      %v4635 = vpack.c.bf16 %v4625, %v4625
      %v4636 = vpack.c.bf16 %v4626, %v4626
      %v4637 = vpack.c.bf16 %v4627, %v4627
      %v4638 = vpack.c.bf16 %v4628, %v4628
      %v4639 = vpack.c.bf16 %v4629, %v4629
      %v4640 = vpack.c.bf16 %v4630, %v4630
      %v4641 = vpack.c.bf16 %v4631, %v4631
      %4642 = vst [vmem:[#allocation6 + $0x14] sm:$0xf] %v4632
      %4643 = vst [vmem:[#allocation6 + $0x38] sm:$0xf] %v4633
      %4644 = vst [vmem:[#allocation6 + $0x5c] sm:$0xf] %v4634
      %4645 = vst [vmem:[#allocation6 + $0x80] sm:$0xf] %v4635
      %4646 = vst [vmem:[#allocation6 + $0xa4] sm:$0xf] %v4636
      %4647 = vst [vmem:[#allocation6 + $0xc8] sm:$0xf] %v4637
      %4648 = vst [vmem:[#allocation6 + $0xec] sm:$0xf] %v4638
      %4649 = vst [vmem:[#allocation6 + $0x110] sm:$0xf] %v4639
      %4650 = vst [vmem:[#allocation6 + $0x134] sm:$0xf] %v4640
      %4651 = vst [vmem:[#allocation6 + $0x158] sm:$0xf] %v4641
      %v4652 = vld [vmem:[#allocation3 + $0x19] sm:$0xff]
      %v4653 = vld [vmem:[#allocation3 + $0x21] sm:$0xff]
      %v4654 = vld [vmem:[#allocation3 + $0x29] sm:$0xff]
      %v4655 = vld [vmem:[#allocation3 + $0x31] sm:$0xff]
      %v4656 = vld [vmem:[#allocation3 + $0x39] sm:$0xff]
      %v4657 = vld [vmem:[#allocation3 + $0x41] sm:$0xff]
      %v4658 = vld [vmem:[#allocation3 + $0x49] sm:$0xff]
      %v4659 = vld [vmem:[#allocation3 + $0x51] sm:$0xff]
      %v4660 = vld [vmem:[#allocation3 + $0x59] sm:$0xff]
      %v4661 = vld [vmem:[#allocation3 + $0x61] sm:$0xff]
      %v4662 = vpack.c.bf16 %v4652, %v4652
      %v4663 = vpack.c.bf16 %v4653, %v4653
      %v4664 = vpack.c.bf16 %v4654, %v4654
      %v4665 = vpack.c.bf16 %v4655, %v4655
      %v4666 = vpack.c.bf16 %v4656, %v4656
      %v4667 = vpack.c.bf16 %v4657, %v4657
      %v4668 = vpack.c.bf16 %v4658, %v4658
      %v4669 = vpack.c.bf16 %v4659, %v4659
      %v4670 = vpack.c.bf16 %v4660, %v4660
      %v4671 = vpack.c.bf16 %v4661, %v4661
      %4672 = vst [vmem:[#allocation6 + $0x18] sm:$0xf] %v4662
      %4673 = vst [vmem:[#allocation6 + $0x3c] sm:$0xf] %v4663
      %4674 = vst [vmem:[#allocation6 + $0x60] sm:$0xf] %v4664
      %4675 = vst [vmem:[#allocation6 + $0x84] sm:$0xf] %v4665
      %4676 = vst [vmem:[#allocation6 + $0xa8] sm:$0xf] %v4666
      %4677 = vst [vmem:[#allocation6 + $0xcc] sm:$0xf] %v4667
      %4678 = vst [vmem:[#allocation6 + $0xf0] sm:$0xf] %v4668
      %4679 = vst [vmem:[#allocation6 + $0x114] sm:$0xf] %v4669
      %4680 = vst [vmem:[#allocation6 + $0x138] sm:$0xf] %v4670
      %4681 = vst [vmem:[#allocation6 + $0x15c] sm:$0xf] %v4671
      %v4682 = vld [vmem:[#allocation3 + $0x1a] sm:$0xff]
      %v4683 = vld [vmem:[#allocation3 + $0x22] sm:$0xff]
      %v4684 = vld [vmem:[#allocation3 + $0x2a] sm:$0xff]
      %v4685 = vld [vmem:[#allocation3 + $0x32] sm:$0xff]
      %v4686 = vld [vmem:[#allocation3 + $0x3a] sm:$0xff]
      %v4687 = vld [vmem:[#allocation3 + $0x42] sm:$0xff]
      %v4688 = vld [vmem:[#allocation3 + $0x4a] sm:$0xff]
      %v4689 = vld [vmem:[#allocation3 + $0x52] sm:$0xff]
      %v4690 = vld [vmem:[#allocation3 + $0x5a] sm:$0xff]
      %v4691 = vld [vmem:[#allocation3 + $0x62] sm:$0xff]
      %v4692 = vpack.c.bf16 %v4682, %v4682
      %v4693 = vpack.c.bf16 %v4683, %v4683
      %v4694 = vpack.c.bf16 %v4684, %v4684
      %v4695 = vpack.c.bf16 %v4685, %v4685
      %v4696 = vpack.c.bf16 %v4686, %v4686
      %v4697 = vpack.c.bf16 %v4687, %v4687
      %v4698 = vpack.c.bf16 %v4688, %v4688
      %v4699 = vpack.c.bf16 %v4689, %v4689
      %v4700 = vpack.c.bf16 %v4690, %v4690
      %v4701 = vpack.c.bf16 %v4691, %v4691
      %4702 = vst [vmem:[#allocation6 + $0x1c] sm:$0xf] %v4692
      %4703 = vst [vmem:[#allocation6 + $0x40] sm:$0xf] %v4693
      %4704 = vst [vmem:[#allocation6 + $0x64] sm:$0xf] %v4694
      %4705 = vst [vmem:[#allocation6 + $0x88] sm:$0xf] %v4695
      %4706 = vst [vmem:[#allocation6 + $0xac] sm:$0xf] %v4696
      %4707 = vst [vmem:[#allocation6 + $0xd0] sm:$0xf] %v4697
      %4708 = vst [vmem:[#allocation6 + $0xf4] sm:$0xf] %v4698
      %4709 = vst [vmem:[#allocation6 + $0x118] sm:$0xf] %v4699
      %4710 = vst [vmem:[#allocation6 + $0x13c] sm:$0xf] %v4700
      %4711 = vst [vmem:[#allocation6 + $0x160] sm:$0xf] %v4701
      %v4712 = vld [vmem:[#allocation3 + $0x1b] sm:$0xff]
      %v4713 = vld [vmem:[#allocation3 + $0x23] sm:$0xff]
      %v4714 = vld [vmem:[#allocation3 + $0x2b] sm:$0xff]
      %v4715 = vld [vmem:[#allocation3 + $0x33] sm:$0xff]
      %v4716 = vld [vmem:[#allocation3 + $0x3b] sm:$0xff]
      %v4717 = vld [vmem:[#allocation3 + $0x43] sm:$0xff]
      %v4718 = vld [vmem:[#allocation3 + $0x4b] sm:$0xff]
      %v4719 = vld [vmem:[#allocation3 + $0x53] sm:$0xff]
      %v4720 = vld [vmem:[#allocation3 + $0x5b] sm:$0xff]
      %v4721 = vld [vmem:[#allocation3 + $0x63] sm:$0xff]
      %v4722 = vpack.c.bf16 %v4712, %v4712
      %v4723 = vpack.c.bf16 %v4713, %v4713
      %v4724 = vpack.c.bf16 %v4714, %v4714
      %v4725 = vpack.c.bf16 %v4715, %v4715
      %v4726 = vpack.c.bf16 %v4716, %v4716
      %v4727 = vpack.c.bf16 %v4717, %v4717
      %v4728 = vpack.c.bf16 %v4718, %v4718
      %v4729 = vpack.c.bf16 %v4719, %v4719
      %v4730 = vpack.c.bf16 %v4720, %v4720
      %v4731 = vpack.c.bf16 %v4721, %v4721
      %4732 = vst [vmem:[#allocation6 + $0x20] sm:$0xf] %v4722
      %4733 = vst [vmem:[#allocation6 + $0x44] sm:$0xf] %v4723
      %4734 = vst [vmem:[#allocation6 + $0x68] sm:$0xf] %v4724
      %4735 = vst [vmem:[#allocation6 + $0x8c] sm:$0xf] %v4725
      %4736 = vst [vmem:[#allocation6 + $0xb0] sm:$0xf] %v4726
      %4737 = vst [vmem:[#allocation6 + $0xd4] sm:$0xf] %v4727
      %4738 = vst [vmem:[#allocation6 + $0xf8] sm:$0xf] %v4728
      %4739 = vst [vmem:[#allocation6 + $0x11c] sm:$0xf] %v4729
      %4740 = vst [vmem:[#allocation6 + $0x140] sm:$0xf] %v4730
      %4741 = vst [vmem:[#allocation6 + $0x164] sm:$0xf] %v4731
      %v4742 = vld [vmem:[%s1114 + $0x5] sm:$0xff]
      %v4743 = vld [vmem:[%s1114 + $0xd] sm:$0xff]
      %v4744 = vld [vmem:[%s1114 + $0x15] sm:$0xff]
      %v4745 = vld [vmem:[%s1114 + $0x1d] sm:$0xff]
      %v4746 = vld [vmem:[%s1114 + $0x25] sm:$0xff]
      %v4747 = vld [vmem:[%s1114 + $0x2d] sm:$0xff]
      %v4748 = vld [vmem:[%s1114 + $0x35] sm:$0xff]
      %v4749 = vld [vmem:[%s1114 + $0x3d] sm:$0xff]
      %v4750 = vld [vmem:[%s1114 + $0x45] sm:$0xff]
      %v4751 = vld [vmem:[%s1114 + $0x4d] sm:$0xff]
      %v4752 = vpack.c.bf16 %v4742, %v4742
      %v4753 = vpack.c.bf16 %v4743, %v4743
      %v4754 = vpack.c.bf16 %v4744, %v4744
      %v4755 = vpack.c.bf16 %v4745, %v4745
      %v4756 = vpack.c.bf16 %v4746, %v4746
      %v4757 = vpack.c.bf16 %v4747, %v4747
      %v4758 = vpack.c.bf16 %v4748, %v4748
      %v4759 = vpack.c.bf16 %v4749, %v4749
      %v4760 = vpack.c.bf16 %v4750, %v4750
      %v4761 = vpack.c.bf16 %v4751, %v4751
      %4762 = vst [vmem:[#allocation6 + $0x168] sm:$0xf] %v4752
      %4763 = vst [vmem:[#allocation6 + $0x18c] sm:$0xf] %v4753
      %4764 = vst [vmem:[#allocation6 + $0x1b0] sm:$0xf] %v4754
      %4765 = vst [vmem:[#allocation6 + $0x1d4] sm:$0xf] %v4755
      %4766 = vst [vmem:[#allocation6 + $0x1f8] sm:$0xf] %v4756
      %4767 = vst [vmem:[#allocation6 + $0x21c] sm:$0xf] %v4757
      %4768 = vst [vmem:[#allocation6 + $0x240] sm:$0xf] %v4758
      %4769 = vst [vmem:[#allocation6 + $0x264] sm:$0xf] %v4759
      %4770 = vst [vmem:[#allocation6 + $0x288] sm:$0xf] %v4760
      %4771 = vst [vmem:[#allocation6 + $0x2ac] sm:$0xf] %v4761
      %v4772 = vld [vmem:[%s1114 + $0x6] sm:$0xff]
      %v4773 = vld [vmem:[%s1114 + $0xe] sm:$0xff]
      %v4774 = vld [vmem:[%s1114 + $0x16] sm:$0xff]
      %v4775 = vld [vmem:[%s1114 + $0x1e] sm:$0xff]
      %v4776 = vld [vmem:[%s1114 + $0x26] sm:$0xff]
      %v4777 = vld [vmem:[%s1114 + $0x2e] sm:$0xff]
      %v4778 = vld [vmem:[%s1114 + $0x36] sm:$0xff]
      %v4779 = vld [vmem:[%s1114 + $0x3e] sm:$0xff]
      %v4780 = vld [vmem:[%s1114 + $0x46] sm:$0xff]
      %v4781 = vld [vmem:[%s1114 + $0x4e] sm:$0xff]
      %v4782 = vpack.c.bf16 %v4772, %v4772
      %v4783 = vpack.c.bf16 %v4773, %v4773
      %v4784 = vpack.c.bf16 %v4774, %v4774
      %v4785 = vpack.c.bf16 %v4775, %v4775
      %v4786 = vpack.c.bf16 %v4776, %v4776
      %v4787 = vpack.c.bf16 %v4777, %v4777
      %v4788 = vpack.c.bf16 %v4778, %v4778
      %v4789 = vpack.c.bf16 %v4779, %v4779
      %v4790 = vpack.c.bf16 %v4780, %v4780
      %v4791 = vpack.c.bf16 %v4781, %v4781
      %4792 = vst [vmem:[#allocation6 + $0x16c] sm:$0xf] %v4782
      %4793 = vst [vmem:[#allocation6 + $0x190] sm:$0xf] %v4783
      %4794 = vst [vmem:[#allocation6 + $0x1b4] sm:$0xf] %v4784
      %4795 = vst [vmem:[#allocation6 + $0x1d8] sm:$0xf] %v4785
      %4796 = vst [vmem:[#allocation6 + $0x1fc] sm:$0xf] %v4786
      %4797 = vst [vmem:[#allocation6 + $0x220] sm:$0xf] %v4787
      %4798 = vst [vmem:[#allocation6 + $0x244] sm:$0xf] %v4788
      %4799 = vst [vmem:[#allocation6 + $0x268] sm:$0xf] %v4789
      %4800 = vst [vmem:[#allocation6 + $0x28c] sm:$0xf] %v4790
      %4801 = vst [vmem:[#allocation6 + $0x2b0] sm:$0xf] %v4791
      %v4802 = vld [vmem:[%s1114 + $0x7] sm:$0xff]
      %v4803 = vld [vmem:[%s1114 + $0xf] sm:$0xff]
      %v4804 = vld [vmem:[%s1114 + $0x17] sm:$0xff]
      %v4805 = vld [vmem:[%s1114 + $0x1f] sm:$0xff]
      %v4806 = vld [vmem:[%s1114 + $0x27] sm:$0xff]
      %v4807 = vld [vmem:[%s1114 + $0x2f] sm:$0xff]
      %v4808 = vld [vmem:[%s1114 + $0x37] sm:$0xff]
      %v4809 = vld [vmem:[%s1114 + $0x3f] sm:$0xff]
      %v4810 = vld [vmem:[%s1114 + $0x47] sm:$0xff]
      %v4811 = vld [vmem:[%s1114 + $0x4f] sm:$0xff]
      %v4812 = vpack.c.bf16 %v4802, %v4802
      %v4813 = vpack.c.bf16 %v4803, %v4803
      %v4814 = vpack.c.bf16 %v4804, %v4804
      %v4815 = vpack.c.bf16 %v4805, %v4805
      %v4816 = vpack.c.bf16 %v4806, %v4806
      %v4817 = vpack.c.bf16 %v4807, %v4807
      %v4818 = vpack.c.bf16 %v4808, %v4808
      %v4819 = vpack.c.bf16 %v4809, %v4809
      %v4820 = vpack.c.bf16 %v4810, %v4810
      %v4821 = vpack.c.bf16 %v4811, %v4811
      %4822 = vst [vmem:[#allocation6 + $0x170] sm:$0xf] %v4812
      %4823 = vst [vmem:[#allocation6 + $0x194] sm:$0xf] %v4813
      %4824 = vst [vmem:[#allocation6 + $0x1b8] sm:$0xf] %v4814
      %4825 = vst [vmem:[#allocation6 + $0x1dc] sm:$0xf] %v4815
      %4826 = vst [vmem:[#allocation6 + $0x200] sm:$0xf] %v4816
      %4827 = vst [vmem:[#allocation6 + $0x224] sm:$0xf] %v4817
      %4828 = vst [vmem:[#allocation6 + $0x248] sm:$0xf] %v4818
      %4829 = vst [vmem:[#allocation6 + $0x26c] sm:$0xf] %v4819
      %4830 = vst [vmem:[#allocation6 + $0x290] sm:$0xf] %v4820
      %4831 = vst [vmem:[#allocation6 + $0x2b4] sm:$0xf] %v4821
      %v4832 = vld [vmem:[%s1114 + $0xf] sm:$0xff]
      %v4833 = vld [vmem:[%s1114 + $0x17] sm:$0xff]
      %v4834 = vld [vmem:[%s1114 + $0x1f] sm:$0xff]
      %v4835 = vld [vmem:[%s1114 + $0x27] sm:$0xff]
      %v4836 = vld [vmem:[%s1114 + $0x2f] sm:$0xff]
      %v4837 = vld [vmem:[%s1114 + $0x37] sm:$0xff]
      %v4838 = vld [vmem:[%s1114 + $0x3f] sm:$0xff]
      %v4839 = vld [vmem:[%s1114 + $0x47] sm:$0xff]
      %v4840 = vld [vmem:[%s1114 + $0x4f] sm:$0xff]
      %v4841 = vld [vmem:[%s1114 + $0x57] sm:$0xff]
      %v4842 = vpack.c.bf16 %v4832, %v4832
      %v4843 = vpack.c.bf16 %v4833, %v4833
      %v4844 = vpack.c.bf16 %v4834, %v4834
      %v4845 = vpack.c.bf16 %v4835, %v4835
      %v4846 = vpack.c.bf16 %v4836, %v4836
      %v4847 = vpack.c.bf16 %v4837, %v4837
      %v4848 = vpack.c.bf16 %v4838, %v4838
      %v4849 = vpack.c.bf16 %v4839, %v4839
      %v4850 = vpack.c.bf16 %v4840, %v4840
      %v4851 = vpack.c.bf16 %v4841, %v4841
      %4852 = vst [vmem:[#allocation6 + $0x174] sm:$0xf] %v4842
      %4853 = vst [vmem:[#allocation6 + $0x198] sm:$0xf] %v4843
      %4854 = vst [vmem:[#allocation6 + $0x1bc] sm:$0xf] %v4844
      %4855 = vst [vmem:[#allocation6 + $0x1e0] sm:$0xf] %v4845
      %4856 = vst [vmem:[#allocation6 + $0x204] sm:$0xf] %v4846
      %4857 = vst [vmem:[#allocation6 + $0x228] sm:$0xf] %v4847
      %4858 = vst [vmem:[#allocation6 + $0x24c] sm:$0xf] %v4848
      %4859 = vst [vmem:[#allocation6 + $0x270] sm:$0xf] %v4849
      %4860 = vst [vmem:[#allocation6 + $0x294] sm:$0xf] %v4850
      %4861 = vst [vmem:[#allocation6 + $0x2b8] sm:$0xf] %v4851
      %v4862 = vld [vmem:[%s1114 + $0x10] sm:$0xff]
      %v4863 = vld [vmem:[%s1114 + $0x18] sm:$0xff]
      %v4864 = vld [vmem:[%s1114 + $0x20] sm:$0xff]
      %v4865 = vld [vmem:[%s1114 + $0x28] sm:$0xff]
      %v4866 = vld [vmem:[%s1114 + $0x30] sm:$0xff]
      %v4867 = vld [vmem:[%s1114 + $0x38] sm:$0xff]
      %v4868 = vld [vmem:[%s1114 + $0x40] sm:$0xff]
      %v4869 = vld [vmem:[%s1114 + $0x48] sm:$0xff]
      %v4870 = vld [vmem:[%s1114 + $0x50] sm:$0xff]
      %v4871 = vld [vmem:[%s1114 + $0x58] sm:$0xff]
      %v4872 = vpack.c.bf16 %v4862, %v4862
      %v4873 = vpack.c.bf16 %v4863, %v4863
      %v4874 = vpack.c.bf16 %v4864, %v4864
      %v4875 = vpack.c.bf16 %v4865, %v4865
      %v4876 = vpack.c.bf16 %v4866, %v4866
      %v4877 = vpack.c.bf16 %v4867, %v4867
      %v4878 = vpack.c.bf16 %v4868, %v4868
      %v4879 = vpack.c.bf16 %v4869, %v4869
      %v4880 = vpack.c.bf16 %v4870, %v4870
      %v4881 = vpack.c.bf16 %v4871, %v4871
      %4882 = vst [vmem:[#allocation6 + $0x178] sm:$0xf] %v4872
      %4883 = vst [vmem:[#allocation6 + $0x19c] sm:$0xf] %v4873
      %4884 = vst [vmem:[#allocation6 + $0x1c0] sm:$0xf] %v4874
      %4885 = vst [vmem:[#allocation6 + $0x1e4] sm:$0xf] %v4875
      %4886 = vst [vmem:[#allocation6 + $0x208] sm:$0xf] %v4876
      %4887 = vst [vmem:[#allocation6 + $0x22c] sm:$0xf] %v4877
      %4888 = vst [vmem:[#allocation6 + $0x250] sm:$0xf] %v4878
      %4889 = vst [vmem:[#allocation6 + $0x274] sm:$0xf] %v4879
      %4890 = vst [vmem:[#allocation6 + $0x298] sm:$0xf] %v4880
      %4891 = vst [vmem:[#allocation6 + $0x2bc] sm:$0xf] %v4881
      %v4892 = vld [vmem:[%s1114 + $0x11] sm:$0xff]
      %v4893 = vld [vmem:[%s1114 + $0x19] sm:$0xff]
      %v4894 = vld [vmem:[%s1114 + $0x21] sm:$0xff]
      %v4895 = vld [vmem:[%s1114 + $0x29] sm:$0xff]
      %v4896 = vld [vmem:[%s1114 + $0x31] sm:$0xff]
      %v4897 = vld [vmem:[%s1114 + $0x39] sm:$0xff]
      %v4898 = vld [vmem:[%s1114 + $0x41] sm:$0xff]
      %v4899 = vld [vmem:[%s1114 + $0x49] sm:$0xff]
      %v4900 = vld [vmem:[%s1114 + $0x51] sm:$0xff]
      %v4901 = vld [vmem:[%s1114 + $0x59] sm:$0xff]
      %v4902 = vpack.c.bf16 %v4892, %v4892
      %v4903 = vpack.c.bf16 %v4893, %v4893
      %v4904 = vpack.c.bf16 %v4894, %v4894
      %v4905 = vpack.c.bf16 %v4895, %v4895
      %v4906 = vpack.c.bf16 %v4896, %v4896
      %v4907 = vpack.c.bf16 %v4897, %v4897
      %v4908 = vpack.c.bf16 %v4898, %v4898
      %v4909 = vpack.c.bf16 %v4899, %v4899
      %v4910 = vpack.c.bf16 %v4900, %v4900
      %v4911 = vpack.c.bf16 %v4901, %v4901
      %4912 = vst [vmem:[#allocation6 + $0x17c] sm:$0xf] %v4902
      %4913 = vst [vmem:[#allocation6 + $0x1a0] sm:$0xf] %v4903
      %4914 = vst [vmem:[#allocation6 + $0x1c4] sm:$0xf] %v4904
      %4915 = vst [vmem:[#allocation6 + $0x1e8] sm:$0xf] %v4905
      %4916 = vst [vmem:[#allocation6 + $0x20c] sm:$0xf] %v4906
      %4917 = vst [vmem:[#allocation6 + $0x230] sm:$0xf] %v4907
      %4918 = vst [vmem:[#allocation6 + $0x254] sm:$0xf] %v4908
      %4919 = vst [vmem:[#allocation6 + $0x278] sm:$0xf] %v4909
      %4920 = vst [vmem:[#allocation6 + $0x29c] sm:$0xf] %v4910
      %4921 = vst [vmem:[#allocation6 + $0x2c0] sm:$0xf] %v4911
      %v4922 = vld [vmem:[%s1114 + $0x19] sm:$0xff]
      %v4923 = vld [vmem:[%s1114 + $0x21] sm:$0xff]
      %v4924 = vld [vmem:[%s1114 + $0x29] sm:$0xff]
      %v4925 = vld [vmem:[%s1114 + $0x31] sm:$0xff]
      %v4926 = vld [vmem:[%s1114 + $0x39] sm:$0xff]
      %v4927 = vld [vmem:[%s1114 + $0x41] sm:$0xff]
      %v4928 = vld [vmem:[%s1114 + $0x49] sm:$0xff]
      %v4929 = vld [vmem:[%s1114 + $0x51] sm:$0xff]
      %v4930 = vld [vmem:[%s1114 + $0x59] sm:$0xff]
      %v4931 = vld [vmem:[%s1114 + $0x61] sm:$0xff]
      %v4932 = vpack.c.bf16 %v4922, %v4922
      %v4933 = vpack.c.bf16 %v4923, %v4923
      %v4934 = vpack.c.bf16 %v4924, %v4924
      %v4935 = vpack.c.bf16 %v4925, %v4925
      %v4936 = vpack.c.bf16 %v4926, %v4926
      %v4937 = vpack.c.bf16 %v4927, %v4927
      %v4938 = vpack.c.bf16 %v4928, %v4928
      %v4939 = vpack.c.bf16 %v4929, %v4929
      %v4940 = vpack.c.bf16 %v4930, %v4930
      %v4941 = vpack.c.bf16 %v4931, %v4931
      %4942 = vst [vmem:[#allocation6 + $0x180] sm:$0xf] %v4932
      %4943 = vst [vmem:[#allocation6 + $0x1a4] sm:$0xf] %v4933
      %4944 = vst [vmem:[#allocation6 + $0x1c8] sm:$0xf] %v4934
      %4945 = vst [vmem:[#allocation6 + $0x1ec] sm:$0xf] %v4935
      %4946 = vst [vmem:[#allocation6 + $0x210] sm:$0xf] %v4936
      %4947 = vst [vmem:[#allocation6 + $0x234] sm:$0xf] %v4937
      %4948 = vst [vmem:[#allocation6 + $0x258] sm:$0xf] %v4938
      %4949 = vst [vmem:[#allocation6 + $0x27c] sm:$0xf] %v4939
      %4950 = vst [vmem:[#allocation6 + $0x2a0] sm:$0xf] %v4940
      %4951 = vst [vmem:[#allocation6 + $0x2c4] sm:$0xf] %v4941
      %v4952 = vld [vmem:[%s1114 + $0x1a] sm:$0xff]
      %v4953 = vld [vmem:[%s1114 + $0x22] sm:$0xff]
      %v4954 = vld [vmem:[%s1114 + $0x2a] sm:$0xff]
      %v4955 = vld [vmem:[%s1114 + $0x32] sm:$0xff]
      %v4956 = vld [vmem:[%s1114 + $0x3a] sm:$0xff]
      %v4957 = vld [vmem:[%s1114 + $0x42] sm:$0xff]
      %v4958 = vld [vmem:[%s1114 + $0x4a] sm:$0xff]
      %v4959 = vld [vmem:[%s1114 + $0x52] sm:$0xff]
      %v4960 = vld [vmem:[%s1114 + $0x5a] sm:$0xff]
      %v4961 = vld [vmem:[%s1114 + $0x62] sm:$0xff]
      %v4962 = vpack.c.bf16 %v4952, %v4952
      %v4963 = vpack.c.bf16 %v4953, %v4953
      %v4964 = vpack.c.bf16 %v4954, %v4954
      %v4965 = vpack.c.bf16 %v4955, %v4955
      %v4966 = vpack.c.bf16 %v4956, %v4956
      %v4967 = vpack.c.bf16 %v4957, %v4957
      %v4968 = vpack.c.bf16 %v4958, %v4958
      %v4969 = vpack.c.bf16 %v4959, %v4959
      %v4970 = vpack.c.bf16 %v4960, %v4960
      %v4971 = vpack.c.bf16 %v4961, %v4961
      %4972 = vst [vmem:[#allocation6 + $0x184] sm:$0xf] %v4962
      %4973 = vst [vmem:[#allocation6 + $0x1a8] sm:$0xf] %v4963
      %4974 = vst [vmem:[#allocation6 + $0x1cc] sm:$0xf] %v4964
      %4975 = vst [vmem:[#allocation6 + $0x1f0] sm:$0xf] %v4965
      %4976 = vst [vmem:[#allocation6 + $0x214] sm:$0xf] %v4966
      %4977 = vst [vmem:[#allocation6 + $0x238] sm:$0xf] %v4967
      %4978 = vst [vmem:[#allocation6 + $0x25c] sm:$0xf] %v4968
      %4979 = vst [vmem:[#allocation6 + $0x280] sm:$0xf] %v4969
      %4980 = vst [vmem:[#allocation6 + $0x2a4] sm:$0xf] %v4970
      %4981 = vst [vmem:[#allocation6 + $0x2c8] sm:$0xf] %v4971
      %v4982 = vld [vmem:[%s1114 + $0x1b] sm:$0xff]
      %v4983 = vld [vmem:[%s1114 + $0x23] sm:$0xff]
      %v4984 = vld [vmem:[%s1114 + $0x2b] sm:$0xff]
      %v4985 = vld [vmem:[%s1114 + $0x33] sm:$0xff]
      %v4986 = vld [vmem:[%s1114 + $0x3b] sm:$0xff]
      %v4987 = vld [vmem:[%s1114 + $0x43] sm:$0xff]
      %v4988 = vld [vmem:[%s1114 + $0x4b] sm:$0xff]
      %v4989 = vld [vmem:[%s1114 + $0x53] sm:$0xff]
      %v4990 = vld [vmem:[%s1114 + $0x5b] sm:$0xff]
      %v4991 = vld [vmem:[%s1114 + $0x63] sm:$0xff]
      %v4992 = vpack.c.bf16 %v4982, %v4982
      %v4993 = vpack.c.bf16 %v4983, %v4983
      %v4994 = vpack.c.bf16 %v4984, %v4984
      %v4995 = vpack.c.bf16 %v4985, %v4985
      %v4996 = vpack.c.bf16 %v4986, %v4986
      %v4997 = vpack.c.bf16 %v4987, %v4987
      %v4998 = vpack.c.bf16 %v4988, %v4988
      %v4999 = vpack.c.bf16 %v4989, %v4989
      %v5000 = vpack.c.bf16 %v4990, %v4990
      %v5001 = vpack.c.bf16 %v4991, %v4991
      %5002 = vst [vmem:[#allocation6 + $0x188] sm:$0xf] %v4992
      %5003 = vst [vmem:[#allocation6 + $0x1ac] sm:$0xf] %v4993
      %5004 = vst [vmem:[#allocation6 + $0x1d0] sm:$0xf] %v4994
      %5005 = vst [vmem:[#allocation6 + $0x1f4] sm:$0xf] %v4995
      %5006 = vst [vmem:[#allocation6 + $0x218] sm:$0xf] %v4996
      %5007 = vst [vmem:[#allocation6 + $0x23c] sm:$0xf] %v4997
      %5008 = vst [vmem:[#allocation6 + $0x260] sm:$0xf] %v4998
      %5009 = vst [vmem:[#allocation6 + $0x284] sm:$0xf] %v4999
      %5010 = vst [vmem:[#allocation6 + $0x2a8] sm:$0xf] %v5000
      %5011 = vst [vmem:[#allocation6 + $0x2cc] sm:$0xf] %v5001
      %v5012 = vld [vmem:[#allocation6] sm:$0xff]
      %v5013 = vld [vmem:[#allocation6 + $0x8] sm:$0xff]
      %v5014 = vld [vmem:[#allocation6 + $0x10] sm:$0xff]
      %v5015 = vld [vmem:[#allocation6 + $0x18] sm:$0xff]
      %v5016 = vld [vmem:[#allocation6 + $0x20] sm:$0xf]
      %v5017 = vld [vmem:[#allocation6 + $0x24] sm:$0xff]
      %v5018 = vld [vmem:[#allocation6 + $0x2c] sm:$0xff]
      %v5019 = vld [vmem:[#allocation6 + $0x34] sm:$0xff]
      %v5020 = vld [vmem:[#allocation6 + $0x3c] sm:$0xff]
      %v5021 = vld [vmem:[#allocation6 + $0x44] sm:$0xf]
      %v5022 = vld [vmem:[#allocation6 + $0x48] sm:$0xff]
      %v5023 = vld [vmem:[#allocation6 + $0x50] sm:$0xff]
      %v5024 = vld [vmem:[#allocation6 + $0x58] sm:$0xff]
      %v5025 = vld [vmem:[#allocation6 + $0x60] sm:$0xff]
      %v5026 = vld [vmem:[#allocation6 + $0x68] sm:$0xf]
      %v5027 = vld [vmem:[#allocation6 + $0x6c] sm:$0xff]
      %v5028 = vld [vmem:[#allocation6 + $0x74] sm:$0xff]
      %v5029 = vld [vmem:[#allocation6 + $0x7c] sm:$0xff]
      %v5030 = vld [vmem:[#allocation6 + $0x84] sm:$0xff]
      %v5031 = vld [vmem:[#allocation6 + $0x8c] sm:$0xf]
      %v5032 = vld [vmem:[#allocation6 + $0x90] sm:$0xff]
      %v5033 = vld [vmem:[#allocation6 + $0x98] sm:$0xff]
      %v5034 = vld [vmem:[#allocation6 + $0xa0] sm:$0xff]
      %v5035 = vld [vmem:[#allocation6 + $0xa8] sm:$0xff]
      %v5036 = vld [vmem:[#allocation6 + $0xb0] sm:$0xf]
      %v5037 = vld [vmem:[#allocation6 + $0xb4] sm:$0xff]
      %v5038 = vld [vmem:[#allocation6 + $0xbc] sm:$0xff]
      %v5039 = vld [vmem:[#allocation6 + $0xc4] sm:$0xff]
      %v5040 = vld [vmem:[#allocation6 + $0xcc] sm:$0xff]
      %v5041 = vld [vmem:[#allocation6 + $0xd4] sm:$0xf]
      %v5042 = vld [vmem:[#allocation6 + $0xd8] sm:$0xff]
      %v5043 = vld [vmem:[#allocation6 + $0xe0] sm:$0xff]
      %v5044 = vld [vmem:[#allocation6 + $0xe8] sm:$0xff]
      %v5045 = vld [vmem:[#allocation6 + $0xf0] sm:$0xff]
      %v5046 = vld [vmem:[#allocation6 + $0xf8] sm:$0xf]
      %v5047 = vld [vmem:[#allocation6 + $0xfc] sm:$0xff]
      %v5048 = vld [vmem:[#allocation6 + $0x104] sm:$0xff]
      %v5049 = vld [vmem:[#allocation6 + $0x10c] sm:$0xff]
      %v5050 = vld [vmem:[#allocation6 + $0x114] sm:$0xff]
      %v5051 = vld [vmem:[#allocation6 + $0x11c] sm:$0xf]
      %v5052 = vld [vmem:[#allocation6 + $0x120] sm:$0xff]
      %v5053 = vld [vmem:[#allocation6 + $0x128] sm:$0xff]
      %v5054 = vld [vmem:[#allocation6 + $0x130] sm:$0xff]
      %v5055 = vld [vmem:[#allocation6 + $0x138] sm:$0xff]
      %v5056 = vld [vmem:[#allocation6 + $0x140] sm:$0xf]
      %v5057 = vld [vmem:[#allocation6 + $0x144] sm:$0xff]
      %v5058 = vld [vmem:[#allocation6 + $0x14c] sm:$0xff]
      %v5059 = vld [vmem:[#allocation6 + $0x154] sm:$0xff]
      %v5060 = vld [vmem:[#allocation6 + $0x15c] sm:$0xff]
      %v5061 = vld [vmem:[#allocation6 + $0x164] sm:$0xf]
      %v5062 = vld [vmem:[#allocation6 + $0x168] sm:$0xff]
      %v5063 = vld [vmem:[#allocation6 + $0x170] sm:$0xff]
      %v5064 = vld [vmem:[#allocation6 + $0x178] sm:$0xff]
      %v5065 = vld [vmem:[#allocation6 + $0x180] sm:$0xff]
      %v5066 = vld [vmem:[#allocation6 + $0x188] sm:$0xf]
      %v5067 = vld [vmem:[#allocation6 + $0x18c] sm:$0xff]
      %v5068 = vld [vmem:[#allocation6 + $0x194] sm:$0xff]
      %v5069 = vld [vmem:[#allocation6 + $0x19c] sm:$0xff]
      %v5070 = vld [vmem:[#allocation6 + $0x1a4] sm:$0xff]
      %v5071 = vld [vmem:[#allocation6 + $0x1ac] sm:$0xf]
      %v5072 = vld [vmem:[#allocation6 + $0x1b0] sm:$0xff]
      %v5073 = vld [vmem:[#allocation6 + $0x1b8] sm:$0xff]
      %v5074 = vld [vmem:[#allocation6 + $0x1c0] sm:$0xff]
      %v5075 = vld [vmem:[#allocation6 + $0x1c8] sm:$0xff]
      %v5076 = vld [vmem:[#allocation6 + $0x1d0] sm:$0xf]
      %v5077 = vld [vmem:[#allocation6 + $0x1d4] sm:$0xff]
      %v5078 = vld [vmem:[#allocation6 + $0x1dc] sm:$0xff]
      %v5079 = vld [vmem:[#allocation6 + $0x1e4] sm:$0xff]
      %v5080 = vld [vmem:[#allocation6 + $0x1ec] sm:$0xff]
      %v5081 = vld [vmem:[#allocation6 + $0x1f4] sm:$0xf]
      %v5082 = vld [vmem:[#allocation6 + $0x1f8] sm:$0xff]
      %v5083 = vld [vmem:[#allocation6 + $0x200] sm:$0xff]
      %v5084 = vld [vmem:[#allocation6 + $0x208] sm:$0xff]
      %v5085 = vld [vmem:[#allocation6 + $0x210] sm:$0xff]
      %v5086 = vld [vmem:[#allocation6 + $0x218] sm:$0xf]
      %v5087 = vld [vmem:[#allocation6 + $0x21c] sm:$0xff]
      %v5088 = vld [vmem:[#allocation6 + $0x224] sm:$0xff]
      %v5089 = vld [vmem:[#allocation6 + $0x22c] sm:$0xff]
      %v5090 = vld [vmem:[#allocation6 + $0x234] sm:$0xff]
      %v5091 = vld [vmem:[#allocation6 + $0x23c] sm:$0xf]
      %v5092 = vld [vmem:[#allocation6 + $0x240] sm:$0xff]
      %v5093 = vld [vmem:[#allocation6 + $0x248] sm:$0xff]
      %v5094 = vld [vmem:[#allocation6 + $0x250] sm:$0xff]
      %v5095 = vld [vmem:[#allocation6 + $0x258] sm:$0xff]
      %v5096 = vld [vmem:[#allocation6 + $0x260] sm:$0xf]
      %v5097 = vld [vmem:[#allocation6 + $0x264] sm:$0xff]
      %v5098 = vld [vmem:[#allocation6 + $0x26c] sm:$0xff]
      %v5099 = vld [vmem:[#allocation6 + $0x274] sm:$0xff]
      %v5100 = vld [vmem:[#allocation6 + $0x27c] sm:$0xff]
      %v5101 = vld [vmem:[#allocation6 + $0x284] sm:$0xf]
      %v5102 = vld [vmem:[#allocation6 + $0x288] sm:$0xff]
      %v5103 = vld [vmem:[#allocation6 + $0x290] sm:$0xff]
      %v5104 = vld [vmem:[#allocation6 + $0x298] sm:$0xff]
      %v5105 = vld [vmem:[#allocation6 + $0x2a0] sm:$0xff]
      %v5106 = vld [vmem:[#allocation6 + $0x2a8] sm:$0xf]
      %v5107 = vld [vmem:[#allocation6 + $0x2ac] sm:$0xff]
      %v5108 = vld [vmem:[#allocation6 + $0x2b4] sm:$0xff]
      %v5109 = vld [vmem:[#allocation6 + $0x2bc] sm:$0xff]
      %v5110 = vld [vmem:[#allocation6 + $0x2c4] sm:$0xff]
      %v5111 = vld [vmem:[#allocation6 + $0x2cc] sm:$0xf]
      %v5112 = vld [vmem:[%s5] sm:$0xff]
      %v5113 = vld [vmem:[%s5 + $0x8] sm:$0xff]
      %v5114 = vld [vmem:[%s5 + $0x10] sm:$0xff]
      %v5115 = vld [vmem:[%s5 + $0x18] sm:$0xff]
      %v5116 = vld [vmem:[%s5 + $0x20] sm:$0xff]
      %v5117 = vld [vmem:[%s5 + $0x28] sm:$0xff]
      %v5118 = vld [vmem:[%s5 + $0x30] sm:$0xff]
      %v5119 = vld [vmem:[%s5 + $0x38] sm:$0xff]
      %v5120 = vld [vmem:[%s5 + $0x40] sm:$0xff]
      %v5121 = vld [vmem:[%s5 + $0x48] sm:$0xff]
      %v5122 = vld [vmem:[%s5 + $0x50] sm:$0xff]
      %v5123 = vld [vmem:[%s5 + $0x58] sm:$0xff]
      %v5124 = vld [vmem:[%s5 + $0x60] sm:$0xff]
      %v5125 = vld [vmem:[%s5 + $0x68] sm:$0xff]
      %v5126 = vld [vmem:[%s5 + $0x70] sm:$0xff]
      %v5127 = vld [vmem:[%s5 + $0x78] sm:$0xff]
      %v5128 = vld [vmem:[%s5 + $0x80] sm:$0xff]
      %v5129 = vld [vmem:[%s5 + $0x88] sm:$0xff]
      %v5130 = vld [vmem:[%s5 + $0x90] sm:$0xff]
      %v5131 = vld [vmem:[%s5 + $0x98] sm:$0xff]
      %v5132 = vld [vmem:[%s5 + $0xa0] sm:$0xff]
      %v5133 = vld [vmem:[%s5 + $0xa8] sm:$0xff]
      %v5134 = vld [vmem:[%s5 + $0xb0] sm:$0xff]
      %v5135 = vld [vmem:[%s5 + $0xb8] sm:$0xff]
      %v5136 = vld [vmem:[%s5 + $0xc0] sm:$0xff]
      %v5137 = vld [vmem:[%s5 + $0xc8] sm:$0xff]
      %v5138 = vld [vmem:[%s5 + $0xd0] sm:$0xff]
      %v5139 = vld [vmem:[%s5 + $0xd8] sm:$0xff]
      %v5140 = vld [vmem:[%s5 + $0xe0] sm:$0xff]
      %v5141 = vld [vmem:[%s5 + $0xe8] sm:$0xff]
      %v5142 = vld [vmem:[%s5 + $0xf0] sm:$0xff]
      %v5143 = vld [vmem:[%s5 + $0xf8] sm:$0xff]
      %v5144 = vld [vmem:[%s5 + $0x100] sm:$0xff]
      %v5145 = vld [vmem:[%s5 + $0x108] sm:$0xff]
      %v5146 = vld [vmem:[%s5 + $0x110] sm:$0xff]
      %v5147 = vld [vmem:[%s5 + $0x118] sm:$0xff]
      %v5148 = vld [vmem:[%s5 + $0x120] sm:$0xff]
      %v5149 = vld [vmem:[%s5 + $0x128] sm:$0xff]
      %v5150 = vld [vmem:[%s5 + $0x130] sm:$0xff]
      %v5151 = vld [vmem:[%s5 + $0x138] sm:$0xff]
      %v5152 = vld [vmem:[%s5 + $0x140] sm:$0xff]
      %v5153 = vld [vmem:[%s5 + $0x148] sm:$0xff]
      %v5154 = vld [vmem:[%s5 + $0x150] sm:$0xff]
      %v5155 = vld [vmem:[%s5 + $0x158] sm:$0xff]
      %v5156 = vld [vmem:[%s5 + $0x160] sm:$0xff]
      %v5157 = vld [vmem:[%s5 + $0x168] sm:$0xff]
      %v5158 = vld [vmem:[%s5 + $0x170] sm:$0xff]
      %v5159 = vld [vmem:[%s5 + $0x178] sm:$0xff]
      %v5160 = vld [vmem:[%s5 + $0x180] sm:$0xff]
      %v5161 = vld [vmem:[%s5 + $0x188] sm:$0xff]
      %v5162 = vld [vmem:[%s5 + $0x190] sm:$0xff]
      %v5163 = vld [vmem:[%s5 + $0x198] sm:$0xff]
      %v5164 = vld [vmem:[%s5 + $0x1a0] sm:$0xff]
      %v5165 = vld [vmem:[%s5 + $0x1a8] sm:$0xff]
      %v5166 = vld [vmem:[%s5 + $0x1b0] sm:$0xff]
      %v5167 = vld [vmem:[%s5 + $0x1b8] sm:$0xff]
      %v5168 = vld [vmem:[%s5 + $0x1c0] sm:$0xff]
      %v5169 = vld [vmem:[%s5 + $0x1c8] sm:$0xff]
      %v5170 = vld [vmem:[%s5 + $0x1d0] sm:$0xff]
      %v5171 = vld [vmem:[%s5 + $0x1d8] sm:$0xff]
      %v5172 = vld [vmem:[%s5 + $0x1e0] sm:$0xff]
      %v5173 = vld [vmem:[%s5 + $0x1e8] sm:$0xff]
      %v5174 = vld [vmem:[%s5 + $0x1f0] sm:$0xff]
      %v5175 = vld [vmem:[%s5 + $0x1f8] sm:$0xff]
      %v5176 = vld [vmem:[%s5 + $0x200] sm:$0xff]
      %v5177 = vld [vmem:[%s5 + $0x208] sm:$0xff]
      %v5178 = vld [vmem:[%s5 + $0x210] sm:$0xff]
      %v5179 = vld [vmem:[%s5 + $0x218] sm:$0xff]
      %v5180 = vld [vmem:[%s5 + $0x220] sm:$0xff]
      %v5181 = vld [vmem:[%s5 + $0x228] sm:$0xff]
      %v5182 = vld [vmem:[%s5 + $0x230] sm:$0xff]
      %v5183 = vld [vmem:[%s5 + $0x238] sm:$0xff]
      %v5184 = vld [vmem:[%s5 + $0x240] sm:$0xff]
      %v5185 = vld [vmem:[%s5 + $0x248] sm:$0xff]
      %v5186 = vld [vmem:[%s5 + $0x250] sm:$0xff]
      %v5187 = vld [vmem:[%s5 + $0x258] sm:$0xff]
      %v5188 = vld [vmem:[%s5 + $0x260] sm:$0xff]
      %v5189 = vld [vmem:[%s5 + $0x268] sm:$0xff]
      %v5190 = vld [vmem:[%s5 + $0x270] sm:$0xff]
      %v5191 = vld [vmem:[%s5 + $0x278] sm:$0xff]
      %v5192 = vld [vmem:[%s5 + $0x280] sm:$0xff]
      %v5193 = vld [vmem:[%s5 + $0x288] sm:$0xff]
      %v5194 = vld [vmem:[%s5 + $0x290] sm:$0xff]
      %v5195 = vld [vmem:[%s5 + $0x298] sm:$0xff]
      %v5196 = vld [vmem:[%s5 + $0x2a0] sm:$0xff]
      %v5197 = vld [vmem:[%s5 + $0x2a8] sm:$0xff]
      %v5198 = vld [vmem:[%s5 + $0x2b0] sm:$0xff]
      %v5199 = vld [vmem:[%s5 + $0x2b8] sm:$0xff]
      %v5200 = vld [vmem:[%s5 + $0x2c0] sm:$0xff]
      %v5201 = vld [vmem:[%s5 + $0x2c8] sm:$0xff]
      %v5202 = vld [vmem:[%s5 + $0x2d0] sm:$0xff]
      %v5203 = vld [vmem:[%s5 + $0x2d8] sm:$0xff]
      %v5204 = vld [vmem:[%s5 + $0x2e0] sm:$0xff]
      %v5205 = vld [vmem:[%s5 + $0x2e8] sm:$0xff]
      %v5206 = vld [vmem:[%s5 + $0x2f0] sm:$0xff]
      %v5207 = vld [vmem:[%s5 + $0x2f8] sm:$0xff]
      %v5208 = vld [vmem:[%s5 + $0x300] sm:$0xff]
      %v5209 = vld [vmem:[%s5 + $0x308] sm:$0xff]
      %v5210 = vld [vmem:[%s5 + $0x310] sm:$0xff]
      %v5211 = vld [vmem:[%s5 + $0x318] sm:$0xff]
      %v5212 = vld [vmem:[%s5 + $0x320] sm:$0xff]
      %v5213 = vld [vmem:[%s5 + $0x328] sm:$0xff]
      %v5214 = vld [vmem:[%s5 + $0x330] sm:$0xff]
      %v5215 = vld [vmem:[%s5 + $0x338] sm:$0xff]
      %v5216 = vld [vmem:[%s5 + $0x340] sm:$0xff]
      %v5217 = vld [vmem:[%s5 + $0x348] sm:$0xff]
      %v5218 = vld [vmem:[%s5 + $0x350] sm:$0xff]
      %v5219 = vld [vmem:[%s5 + $0x358] sm:$0xff]
      %v5220 = vld [vmem:[%s5 + $0x360] sm:$0xff]
      %v5221 = vld [vmem:[%s5 + $0x368] sm:$0xff]
      %v5222 = vld [vmem:[%s5 + $0x370] sm:$0xff]
      %v5223 = vld [vmem:[%s5 + $0x378] sm:$0xff]
      %v5224 = vld [vmem:[%s5 + $0x380] sm:$0xff]
      %v5225 = vld [vmem:[%s5 + $0x388] sm:$0xff]
      %v5226 = vld [vmem:[%s5 + $0x390] sm:$0xff]
      %v5227 = vld [vmem:[%s5 + $0x398] sm:$0xff]
      %v5228 = vld [vmem:[%s5 + $0x3a0] sm:$0xff]
      %v5229 = vld [vmem:[%s5 + $0x3a8] sm:$0xff]
      %v5230 = vld [vmem:[%s5 + $0x3b0] sm:$0xff]
      %v5231 = vld [vmem:[%s5 + $0x3b8] sm:$0xff]
      %v5232 = vld [vmem:[%s5 + $0x3c0] sm:$0xff]
      %v5233 = vld [vmem:[%s5 + $0x3c8] sm:$0xff]
      %v5234 = vld [vmem:[%s5 + $0x3d0] sm:$0xff]
      %v5235 = vld [vmem:[%s5 + $0x3d8] sm:$0xff]
      %v5236 = vld [vmem:[%s5 + $0x3e0] sm:$0xff]
      %v5237 = vld [vmem:[%s5 + $0x3e8] sm:$0xff]
      %v5238 = vld [vmem:[%s5 + $0x3f0] sm:$0xff]
      %v5239 = vld [vmem:[%s5 + $0x3f8] sm:$0xff]
      %v5240 = vld [vmem:[%s5 + $0x400] sm:$0xff]
      %v5241 = vld [vmem:[%s5 + $0x408] sm:$0xff]
      %v5242 = vld [vmem:[%s5 + $0x410] sm:$0xff]
      %v5243 = vld [vmem:[%s5 + $0x418] sm:$0xff]
      %v5244 = vld [vmem:[%s5 + $0x420] sm:$0xff]
      %v5245 = vld [vmem:[%s5 + $0x428] sm:$0xff]
      %v5246 = vld [vmem:[%s5 + $0x430] sm:$0xff]
      %v5247 = vld [vmem:[%s5 + $0x438] sm:$0xff]
      %v5248 = vld [vmem:[%s5 + $0x440] sm:$0xff]
      %v5249 = vld [vmem:[%s5 + $0x448] sm:$0xff]
      %v5250 = vld [vmem:[%s5 + $0x450] sm:$0xff]
      %v5251 = vld [vmem:[%s5 + $0x458] sm:$0xff]
      %v5252 = vld [vmem:[%s5 + $0x460] sm:$0xff]
      %v5253 = vld [vmem:[%s5 + $0x468] sm:$0xff]
      %v5254 = vld [vmem:[%s5 + $0x470] sm:$0xff]
      %v5255 = vld [vmem:[%s5 + $0x478] sm:$0xff]
      %v5256 = vld [vmem:[%s6] sm:$0x3]
      %v5258 = vperm.slane %v5256, 0
      %v5259 = vperm.slane %v5256, 1
      %v5362 = vunpack.c.l.b16 %v5012
      %v5363 = vunpack.c.h.b16 %v5012
      %v5364 = vunpack.c.l.b16 %v5013
      %v5365 = vunpack.c.h.b16 %v5013
      %v5366 = vunpack.c.l.b16 %v5014
      %v5367 = vunpack.c.h.b16 %v5014
      %v5368 = vunpack.c.l.b16 %v5015
      %v5369 = vunpack.c.h.b16 %v5015
      %v5370 = vunpack.c.l.b16 %v5016
      %v5371 = vunpack.c.l.b16 %v5017
      %v5372 = vunpack.c.h.b16 %v5017
      %v5373 = vunpack.c.l.b16 %v5018
      %v5374 = vunpack.c.h.b16 %v5018
      %v5375 = vunpack.c.l.b16 %v5019
      %v5376 = vunpack.c.h.b16 %v5019
      %v5377 = vunpack.c.l.b16 %v5020
      %v5378 = vunpack.c.h.b16 %v5020
      %v5379 = vunpack.c.l.b16 %v5021
      %v5380 = vunpack.c.l.b16 %v5022
      %v5381 = vunpack.c.h.b16 %v5022
      %v5382 = vunpack.c.l.b16 %v5023
      %v5383 = vunpack.c.h.b16 %v5023
      %v5384 = vunpack.c.l.b16 %v5024
      %v5385 = vunpack.c.h.b16 %v5024
      %v5386 = vunpack.c.l.b16 %v5025
      %v5387 = vunpack.c.h.b16 %v5025
      %v5388 = vunpack.c.l.b16 %v5026
      %v5389 = vunpack.c.l.b16 %v5027
      %v5390 = vunpack.c.h.b16 %v5027
      %v5391 = vunpack.c.l.b16 %v5028
      %v5392 = vunpack.c.h.b16 %v5028
      %v5393 = vunpack.c.l.b16 %v5029
      %v5394 = vunpack.c.h.b16 %v5029
      %v5395 = vunpack.c.l.b16 %v5030
      %v5396 = vunpack.c.h.b16 %v5030
      %v5397 = vunpack.c.l.b16 %v5031
      %v5398 = vunpack.c.l.b16 %v5032
      %v5399 = vunpack.c.h.b16 %v5032
      %v5400 = vunpack.c.l.b16 %v5033
      %v5401 = vunpack.c.h.b16 %v5033
      %v5402 = vunpack.c.l.b16 %v5034
      %v5403 = vunpack.c.h.b16 %v5034
      %v5404 = vunpack.c.l.b16 %v5035
      %v5405 = vunpack.c.h.b16 %v5035
      %v5406 = vunpack.c.l.b16 %v5036
      %v5407 = vunpack.c.l.b16 %v5037
      %v5408 = vunpack.c.h.b16 %v5037
      %v5409 = vunpack.c.l.b16 %v5038
      %v5410 = vunpack.c.h.b16 %v5038
      %v5411 = vunpack.c.l.b16 %v5039
      %v5412 = vunpack.c.h.b16 %v5039
      %v5413 = vunpack.c.l.b16 %v5040
      %v5414 = vunpack.c.h.b16 %v5040
      %v5415 = vunpack.c.l.b16 %v5041
      %v5416 = vunpack.c.l.b16 %v5042
      %v5417 = vunpack.c.h.b16 %v5042
      %v5418 = vunpack.c.l.b16 %v5043
      %v5419 = vunpack.c.h.b16 %v5043
      %v5420 = vunpack.c.l.b16 %v5044
      %v5421 = vunpack.c.h.b16 %v5044
      %v5422 = vunpack.c.l.b16 %v5045
      %v5423 = vunpack.c.h.b16 %v5045
      %v5424 = vunpack.c.l.b16 %v5046
      %v5425 = vunpack.c.l.b16 %v5047
      %v5426 = vunpack.c.h.b16 %v5047
      %v5427 = vunpack.c.l.b16 %v5048
      %v5428 = vunpack.c.h.b16 %v5048
      %v5429 = vunpack.c.l.b16 %v5049
      %v5430 = vunpack.c.h.b16 %v5049
      %v5431 = vunpack.c.l.b16 %v5050
      %v5432 = vunpack.c.h.b16 %v5050
      %v5433 = vunpack.c.l.b16 %v5051
      %v5434 = vunpack.c.l.b16 %v5052
      %v5435 = vunpack.c.h.b16 %v5052
      %v5436 = vunpack.c.l.b16 %v5053
      %v5437 = vunpack.c.h.b16 %v5053
      %v5438 = vunpack.c.l.b16 %v5054
      %v5439 = vunpack.c.h.b16 %v5054
      %v5440 = vunpack.c.l.b16 %v5055
      %v5441 = vunpack.c.h.b16 %v5055
      %v5442 = vunpack.c.l.b16 %v5056
      %v5443 = vunpack.c.l.b16 %v5057
      %v5444 = vunpack.c.h.b16 %v5057
      %v5445 = vunpack.c.l.b16 %v5058
      %v5446 = vunpack.c.h.b16 %v5058
      %v5447 = vunpack.c.l.b16 %v5059
      %v5448 = vunpack.c.h.b16 %v5059
      %v5449 = vunpack.c.l.b16 %v5060
      %v5450 = vunpack.c.h.b16 %v5060
      %v5451 = vunpack.c.l.b16 %v5061
      %v5452 = vunpack.c.l.b16 %v5062
      %v5453 = vunpack.c.h.b16 %v5062
      %v5454 = vunpack.c.l.b16 %v5063
      %v5455 = vunpack.c.h.b16 %v5063
      %v5456 = vunpack.c.l.b16 %v5064
      %v5457 = vunpack.c.h.b16 %v5064
      %v5458 = vunpack.c.l.b16 %v5065
      %v5459 = vunpack.c.h.b16 %v5065
      %v5460 = vunpack.c.l.b16 %v5066
      %v5461 = vunpack.c.l.b16 %v5067
      %v5462 = vunpack.c.h.b16 %v5067
      %v5463 = vunpack.c.l.b16 %v5068
      %v5464 = vunpack.c.h.b16 %v5068
      %v5465 = vunpack.c.l.b16 %v5069
      %v5466 = vunpack.c.h.b16 %v5069
      %v5467 = vunpack.c.l.b16 %v5070
      %v5468 = vunpack.c.h.b16 %v5070
      %v5469 = vunpack.c.l.b16 %v5071
      %v5470 = vunpack.c.l.b16 %v5072
      %v5471 = vunpack.c.h.b16 %v5072
      %v5472 = vunpack.c.l.b16 %v5073
      %v5473 = vunpack.c.h.b16 %v5073
      %v5474 = vunpack.c.l.b16 %v5074
      %v5475 = vunpack.c.h.b16 %v5074
      %v5476 = vunpack.c.l.b16 %v5075
      %v5477 = vunpack.c.h.b16 %v5075
      %v5478 = vunpack.c.l.b16 %v5076
      %v5479 = vunpack.c.l.b16 %v5077
      %v5480 = vunpack.c.h.b16 %v5077
      %v5481 = vunpack.c.l.b16 %v5078
      %v5482 = vunpack.c.h.b16 %v5078
      %v5483 = vunpack.c.l.b16 %v5079
      %v5484 = vunpack.c.h.b16 %v5079
      %v5485 = vunpack.c.l.b16 %v5080
      %v5486 = vunpack.c.h.b16 %v5080
      %v5487 = vunpack.c.l.b16 %v5081
      %v5488 = vunpack.c.l.b16 %v5082
      %v5489 = vunpack.c.h.b16 %v5082
      %v5490 = vunpack.c.l.b16 %v5083
      %v5491 = vunpack.c.h.b16 %v5083
      %v5492 = vunpack.c.l.b16 %v5084
      %v5493 = vunpack.c.h.b16 %v5084
      %v5494 = vunpack.c.l.b16 %v5085
      %v5495 = vunpack.c.h.b16 %v5085
      %v5496 = vunpack.c.l.b16 %v5086
      %v5497 = vunpack.c.l.b16 %v5087
      %v5498 = vunpack.c.h.b16 %v5087
      %v5499 = vunpack.c.l.b16 %v5088
      %v5500 = vunpack.c.h.b16 %v5088
      %v5501 = vunpack.c.l.b16 %v5089
      %v5502 = vunpack.c.h.b16 %v5089
      %v5503 = vunpack.c.l.b16 %v5090
      %v5504 = vunpack.c.h.b16 %v5090
      %v5505 = vunpack.c.l.b16 %v5091
      %v5506 = vunpack.c.l.b16 %v5092
      %v5507 = vunpack.c.h.b16 %v5092
      %v5508 = vunpack.c.l.b16 %v5093
      %v5509 = vunpack.c.h.b16 %v5093
      %v5510 = vunpack.c.l.b16 %v5094
      %v5511 = vunpack.c.h.b16 %v5094
      %v5512 = vunpack.c.l.b16 %v5095
      %v5513 = vunpack.c.h.b16 %v5095
      %v5514 = vunpack.c.l.b16 %v5096
      %v5515 = vunpack.c.l.b16 %v5097
      %v5516 = vunpack.c.h.b16 %v5097
      %v5517 = vunpack.c.l.b16 %v5098
      %v5518 = vunpack.c.h.b16 %v5098
      %v5519 = vunpack.c.l.b16 %v5099
      %v5520 = vunpack.c.h.b16 %v5099
      %v5521 = vunpack.c.l.b16 %v5100
      %v5522 = vunpack.c.h.b16 %v5100
      %v5523 = vunpack.c.l.b16 %v5101
      %v5524 = vunpack.c.l.b16 %v5102
      %v5525 = vunpack.c.h.b16 %v5102
      %v5526 = vunpack.c.l.b16 %v5103
      %v5527 = vunpack.c.h.b16 %v5103
      %v5528 = vunpack.c.l.b16 %v5104
      %v5529 = vunpack.c.h.b16 %v5104
      %v5530 = vunpack.c.l.b16 %v5105
      %v5531 = vunpack.c.h.b16 %v5105
      %v5532 = vunpack.c.l.b16 %v5106
      %v5533 = vunpack.c.l.b16 %v5107
      %v5534 = vunpack.c.h.b16 %v5107
      %v5535 = vunpack.c.l.b16 %v5108
      %v5536 = vunpack.c.h.b16 %v5108
      %v5537 = vunpack.c.l.b16 %v5109
      %v5538 = vunpack.c.h.b16 %v5109
      %v5539 = vunpack.c.l.b16 %v5110
      %v5540 = vunpack.c.h.b16 %v5110
      %v5541 = vunpack.c.l.b16 %v5111
      %v5542 = vpack.c.b16 %v5371, %v5362
      %v5543 = vpack.c.b16 %v5372, %v5363
      %v5544 = vpack.c.b16 %v5373, %v5364
      %v5545 = vpack.c.b16 %v5374, %v5365
      %v5546 = vpack.c.b16 %v5375, %v5366
      %v5547 = vpack.c.b16 %v5376, %v5367
      %v5548 = vpack.c.b16 %v5377, %v5368
      %v5549 = vpack.c.b16 %v5378, %v5369
      %v5550 = vpack.c.b16 %v5379, %v5370
      %v5551 = vpack.c.b16 %v5389, %v5380
      %v5552 = vpack.c.b16 %v5390, %v5381
      %v5553 = vpack.c.b16 %v5391, %v5382
      %v5554 = vpack.c.b16 %v5392, %v5383
      %v5555 = vpack.c.b16 %v5393, %v5384
      %v5556 = vpack.c.b16 %v5394, %v5385
      %v5557 = vpack.c.b16 %v5395, %v5386
      %v5558 = vpack.c.b16 %v5396, %v5387
      %v5559 = vpack.c.b16 %v5397, %v5388
      %v5560 = vpack.c.b16 %v5407, %v5398
      %v5561 = vpack.c.b16 %v5408, %v5399
      %v5562 = vpack.c.b16 %v5409, %v5400
      %v5563 = vpack.c.b16 %v5410, %v5401
      %v5564 = vpack.c.b16 %v5411, %v5402
      %v5565 = vpack.c.b16 %v5412, %v5403
      %v5566 = vpack.c.b16 %v5413, %v5404
      %v5567 = vpack.c.b16 %v5414, %v5405
      %v5568 = vpack.c.b16 %v5415, %v5406
      %v5569 = vpack.c.b16 %v5425, %v5416
      %v5570 = vpack.c.b16 %v5426, %v5417
      %v5571 = vpack.c.b16 %v5427, %v5418
      %v5572 = vpack.c.b16 %v5428, %v5419
      %v5573 = vpack.c.b16 %v5429, %v5420
      %v5574 = vpack.c.b16 %v5430, %v5421
      %v5575 = vpack.c.b16 %v5431, %v5422
      %v5576 = vpack.c.b16 %v5432, %v5423
      %v5577 = vpack.c.b16 %v5433, %v5424
      %v5578 = vpack.c.b16 %v5443, %v5434
      %v5579 = vpack.c.b16 %v5444, %v5435
      %v5580 = vpack.c.b16 %v5445, %v5436
      %v5581 = vpack.c.b16 %v5446, %v5437
      %v5582 = vpack.c.b16 %v5447, %v5438
      %v5583 = vpack.c.b16 %v5448, %v5439
      %v5584 = vpack.c.b16 %v5449, %v5440
      %v5585 = vpack.c.b16 %v5450, %v5441
      %v5586 = vpack.c.b16 %v5451, %v5442
      %v5587 = vpack.c.b16 %v5461, %v5452
      %v5588 = vpack.c.b16 %v5462, %v5453
      %v5589 = vpack.c.b16 %v5463, %v5454
      %v5590 = vpack.c.b16 %v5464, %v5455
      %v5591 = vpack.c.b16 %v5465, %v5456
      %v5592 = vpack.c.b16 %v5466, %v5457
      %v5593 = vpack.c.b16 %v5467, %v5458
      %v5594 = vpack.c.b16 %v5468, %v5459
      %v5595 = vpack.c.b16 %v5469, %v5460
      %v5596 = vpack.c.b16 %v5479, %v5470
      %v5597 = vpack.c.b16 %v5480, %v5471
      %v5598 = vpack.c.b16 %v5481, %v5472
      %v5599 = vpack.c.b16 %v5482, %v5473
      %v5600 = vpack.c.b16 %v5483, %v5474
      %v5601 = vpack.c.b16 %v5484, %v5475
      %v5602 = vpack.c.b16 %v5485, %v5476
      %v5603 = vpack.c.b16 %v5486, %v5477
      %v5604 = vpack.c.b16 %v5487, %v5478
      %v5605 = vpack.c.b16 %v5497, %v5488
      %v5606 = vpack.c.b16 %v5498, %v5489
      %v5607 = vpack.c.b16 %v5499, %v5490
      %v5608 = vpack.c.b16 %v5500, %v5491
      %v5609 = vpack.c.b16 %v5501, %v5492
      %v5610 = vpack.c.b16 %v5502, %v5493
      %v5611 = vpack.c.b16 %v5503, %v5494
      %v5612 = vpack.c.b16 %v5504, %v5495
      %v5613 = vpack.c.b16 %v5505, %v5496
      %v5614 = vpack.c.b16 %v5515, %v5506
      %v5615 = vpack.c.b16 %v5516, %v5507
      %v5616 = vpack.c.b16 %v5517, %v5508
      %v5617 = vpack.c.b16 %v5518, %v5509
      %v5618 = vpack.c.b16 %v5519, %v5510
      %v5619 = vpack.c.b16 %v5520, %v5511
      %v5620 = vpack.c.b16 %v5521, %v5512
      %v5621 = vpack.c.b16 %v5522, %v5513
      %v5622 = vpack.c.b16 %v5523, %v5514
      %v5623 = vpack.c.b16 %v5533, %v5524
      %v5624 = vpack.c.b16 %v5534, %v5525
      %v5625 = vpack.c.b16 %v5535, %v5526
      %v5626 = vpack.c.b16 %v5536, %v5527
      %v5627 = vpack.c.b16 %v5537, %v5528
      %v5628 = vpack.c.b16 %v5538, %v5529
      %v5629 = vpack.c.b16 %v5539, %v5530
      %v5630 = vpack.c.b16 %v5540, %v5531
      %v5631 = vpack.c.b16 %v5541, %v5532
      %v5866 = vunpack.c.l.b16 %v5112
      %v5867 = vunpack.c.h.b16 %v5112
      %v5868 = vunpack.c.l.b16 %v5113
      %v5869 = vunpack.c.h.b16 %v5113
      %v5870 = vunpack.c.l.b16 %v5114
      %v5871 = vunpack.c.h.b16 %v5114
      %v5872 = vunpack.c.l.b16 %v5115
      %v5873 = vunpack.c.h.b16 %v5115
      %v5874 = vunpack.c.l.b16 %v5116
      %v5875 = vunpack.c.h.b16 %v5116
      %v5876 = vunpack.c.l.b16 %v5117
      %v5877 = vunpack.c.h.b16 %v5117
      %v5878 = vunpack.c.l.b16 %v5118
      %v5879 = vunpack.c.h.b16 %v5118
      %v5880 = vunpack.c.l.b16 %v5119
      %v5881 = vunpack.c.h.b16 %v5119
      %v5882 = vunpack.c.l.b16 %v5120
      %v5883 = vunpack.c.h.b16 %v5120
      %v5884 = vunpack.c.l.b16 %v5121
      %v5885 = vunpack.c.h.b16 %v5121
      %v5886 = vunpack.c.l.b16 %v5122
      %v5887 = vunpack.c.h.b16 %v5122
      %v5888 = vunpack.c.l.b16 %v5123
      %v5889 = vunpack.c.h.b16 %v5123
      %v5890 = vunpack.c.l.b16 %v5124
      %v5891 = vunpack.c.h.b16 %v5124
      %v5892 = vunpack.c.l.b16 %v5125
      %v5893 = vunpack.c.h.b16 %v5125
      %v5894 = vunpack.c.l.b16 %v5126
      %v5895 = vunpack.c.h.b16 %v5126
      %v5896 = vunpack.c.l.b16 %v5127
      %v5897 = vunpack.c.h.b16 %v5127
      %v5898 = vunpack.c.l.b16 %v5128
      %v5899 = vunpack.c.h.b16 %v5128
      %v5900 = vunpack.c.l.b16 %v5129
      %v5901 = vunpack.c.h.b16 %v5129
      %v5902 = vunpack.c.l.b16 %v5130
      %v5903 = vunpack.c.h.b16 %v5130
      %v5904 = vunpack.c.l.b16 %v5131
      %v5905 = vunpack.c.h.b16 %v5131
      %v5906 = vunpack.c.l.b16 %v5132
      %v5907 = vunpack.c.h.b16 %v5132
      %v5908 = vunpack.c.l.b16 %v5133
      %v5909 = vunpack.c.h.b16 %v5133
      %v5910 = vunpack.c.l.b16 %v5134
      %v5911 = vunpack.c.h.b16 %v5134
      %v5912 = vunpack.c.l.b16 %v5135
      %v5913 = vunpack.c.h.b16 %v5135
      %v5914 = vunpack.c.l.b16 %v5136
      %v5915 = vunpack.c.h.b16 %v5136
      %v5916 = vunpack.c.l.b16 %v5137
      %v5917 = vunpack.c.h.b16 %v5137
      %v5918 = vunpack.c.l.b16 %v5138
      %v5919 = vunpack.c.h.b16 %v5138
      %v5920 = vunpack.c.l.b16 %v5139
      %v5921 = vunpack.c.h.b16 %v5139
      %v5922 = vunpack.c.l.b16 %v5140
      %v5923 = vunpack.c.h.b16 %v5140
      %v5924 = vunpack.c.l.b16 %v5141
      %v5925 = vunpack.c.h.b16 %v5141
      %v5926 = vunpack.c.l.b16 %v5142
      %v5927 = vunpack.c.h.b16 %v5142
      %v5928 = vunpack.c.l.b16 %v5143
      %v5929 = vunpack.c.h.b16 %v5143
      %v5930 = vunpack.c.l.b16 %v5144
      %v5931 = vunpack.c.h.b16 %v5144
      %v5932 = vunpack.c.l.b16 %v5145
      %v5933 = vunpack.c.h.b16 %v5145
      %v5934 = vunpack.c.l.b16 %v5146
      %v5935 = vunpack.c.h.b16 %v5146
      %v5936 = vunpack.c.l.b16 %v5147
      %v5937 = vunpack.c.h.b16 %v5147
      %v5938 = vunpack.c.l.b16 %v5148
      %v5939 = vunpack.c.h.b16 %v5148
      %v5940 = vunpack.c.l.b16 %v5149
      %v5941 = vunpack.c.h.b16 %v5149
      %v5942 = vunpack.c.l.b16 %v5150
      %v5943 = vunpack.c.h.b16 %v5150
      %v5944 = vunpack.c.l.b16 %v5151
      %v5945 = vunpack.c.h.b16 %v5151
      %v5946 = vunpack.c.l.b16 %v5152
      %v5947 = vunpack.c.h.b16 %v5152
      %v5948 = vunpack.c.l.b16 %v5153
      %v5949 = vunpack.c.h.b16 %v5153
      %v5950 = vunpack.c.l.b16 %v5154
      %v5951 = vunpack.c.h.b16 %v5154
      %v5952 = vunpack.c.l.b16 %v5155
      %v5953 = vunpack.c.h.b16 %v5155
      %v5954 = vunpack.c.l.b16 %v5156
      %v5955 = vunpack.c.h.b16 %v5156
      %v5956 = vunpack.c.l.b16 %v5157
      %v5957 = vunpack.c.h.b16 %v5157
      %v5958 = vunpack.c.l.b16 %v5158
      %v5959 = vunpack.c.h.b16 %v5158
      %v5960 = vunpack.c.l.b16 %v5159
      %v5961 = vunpack.c.h.b16 %v5159
      %v5962 = vunpack.c.l.b16 %v5160
      %v5963 = vunpack.c.h.b16 %v5160
      %v5964 = vunpack.c.l.b16 %v5161
      %v5965 = vunpack.c.h.b16 %v5161
      %v5966 = vunpack.c.l.b16 %v5162
      %v5967 = vunpack.c.h.b16 %v5162
      %v5968 = vunpack.c.l.b16 %v5163
      %v5969 = vunpack.c.h.b16 %v5163
      %v5970 = vunpack.c.l.b16 %v5164
      %v5971 = vunpack.c.h.b16 %v5164
      %v5972 = vunpack.c.l.b16 %v5165
      %v5973 = vunpack.c.h.b16 %v5165
      %v5974 = vunpack.c.l.b16 %v5166
      %v5975 = vunpack.c.h.b16 %v5166
      %v5976 = vunpack.c.l.b16 %v5167
      %v5977 = vunpack.c.h.b16 %v5167
      %v5978 = vunpack.c.l.b16 %v5168
      %v5979 = vunpack.c.h.b16 %v5168
      %v5980 = vunpack.c.l.b16 %v5169
      %v5981 = vunpack.c.h.b16 %v5169
      %v5982 = vunpack.c.l.b16 %v5170
      %v5983 = vunpack.c.h.b16 %v5170
      %v5984 = vunpack.c.l.b16 %v5171
      %v5985 = vunpack.c.h.b16 %v5171
      %v5986 = vunpack.c.l.b16 %v5172
      %v5987 = vunpack.c.h.b16 %v5172
      %v5988 = vunpack.c.l.b16 %v5173
      %v5989 = vunpack.c.h.b16 %v5173
      %v5990 = vunpack.c.l.b16 %v5174
      %v5991 = vunpack.c.h.b16 %v5174
      %v5992 = vunpack.c.l.b16 %v5175
      %v5993 = vunpack.c.h.b16 %v5175
      %v5994 = vunpack.c.l.b16 %v5176
      %v5995 = vunpack.c.h.b16 %v5176
      %v5996 = vunpack.c.l.b16 %v5177
      %v5997 = vunpack.c.h.b16 %v5177
      %v5998 = vunpack.c.l.b16 %v5178
      %v5999 = vunpack.c.h.b16 %v5178
      %v6000 = vunpack.c.l.b16 %v5179
      %v6001 = vunpack.c.h.b16 %v5179
      %v6002 = vunpack.c.l.b16 %v5180
      %v6003 = vunpack.c.h.b16 %v5180
      %v6004 = vunpack.c.l.b16 %v5181
      %v6005 = vunpack.c.h.b16 %v5181
      %v6006 = vunpack.c.l.b16 %v5182
      %v6007 = vunpack.c.h.b16 %v5182
      %v6008 = vunpack.c.l.b16 %v5183
      %v6009 = vunpack.c.h.b16 %v5183
      %v6010 = vunpack.c.l.b16 %v5184
      %v6011 = vunpack.c.h.b16 %v5184
      %v6012 = vunpack.c.l.b16 %v5185
      %v6013 = vunpack.c.h.b16 %v5185
      %v6014 = vunpack.c.l.b16 %v5186
      %v6015 = vunpack.c.h.b16 %v5186
      %v6016 = vunpack.c.l.b16 %v5187
      %v6017 = vunpack.c.h.b16 %v5187
      %v6018 = vunpack.c.l.b16 %v5188
      %v6019 = vunpack.c.h.b16 %v5188
      %v6020 = vunpack.c.l.b16 %v5189
      %v6021 = vunpack.c.h.b16 %v5189
      %v6022 = vunpack.c.l.b16 %v5190
      %v6023 = vunpack.c.h.b16 %v5190
      %v6024 = vunpack.c.l.b16 %v5191
      %v6025 = vunpack.c.h.b16 %v5191
      %v6026 = vunpack.c.l.b16 %v5192
      %v6027 = vunpack.c.h.b16 %v5192
      %v6028 = vunpack.c.l.b16 %v5193
      %v6029 = vunpack.c.h.b16 %v5193
      %v6030 = vunpack.c.l.b16 %v5194
      %v6031 = vunpack.c.h.b16 %v5194
      %v6032 = vunpack.c.l.b16 %v5195
      %v6033 = vunpack.c.h.b16 %v5195
      %v6034 = vunpack.c.l.b16 %v5196
      %v6035 = vunpack.c.h.b16 %v5196
      %v6036 = vunpack.c.l.b16 %v5197
      %v6037 = vunpack.c.h.b16 %v5197
      %v6038 = vunpack.c.l.b16 %v5198
      %v6039 = vunpack.c.h.b16 %v5198
      %v6040 = vunpack.c.l.b16 %v5199
      %v6041 = vunpack.c.h.b16 %v5199
      %v6042 = vunpack.c.l.b16 %v5200
      %v6043 = vunpack.c.h.b16 %v5200
      %v6044 = vunpack.c.l.b16 %v5201
      %v6045 = vunpack.c.h.b16 %v5201
      %v6046 = vunpack.c.l.b16 %v5202
      %v6047 = vunpack.c.h.b16 %v5202
      %v6048 = vunpack.c.l.b16 %v5203
      %v6049 = vunpack.c.h.b16 %v5203
      %v6050 = vunpack.c.l.b16 %v5204
      %v6051 = vunpack.c.h.b16 %v5204
      %v6052 = vunpack.c.l.b16 %v5205
      %v6053 = vunpack.c.h.b16 %v5205
      %v6054 = vunpack.c.l.b16 %v5206
      %v6055 = vunpack.c.h.b16 %v5206
      %v6056 = vunpack.c.l.b16 %v5207
      %v6057 = vunpack.c.h.b16 %v5207
      %v6058 = vunpack.c.l.b16 %v5208
      %v6059 = vunpack.c.h.b16 %v5208
      %v6060 = vunpack.c.l.b16 %v5209
      %v6061 = vunpack.c.h.b16 %v5209
      %v6062 = vunpack.c.l.b16 %v5210
      %v6063 = vunpack.c.h.b16 %v5210
      %v6064 = vunpack.c.l.b16 %v5211
      %v6065 = vunpack.c.h.b16 %v5211
      %v6066 = vunpack.c.l.b16 %v5212
      %v6067 = vunpack.c.h.b16 %v5212
      %v6068 = vunpack.c.l.b16 %v5213
      %v6069 = vunpack.c.h.b16 %v5213
      %v6070 = vunpack.c.l.b16 %v5214
      %v6071 = vunpack.c.h.b16 %v5214
      %v6072 = vunpack.c.l.b16 %v5215
      %v6073 = vunpack.c.h.b16 %v5215
      %v6074 = vunpack.c.l.b16 %v5216
      %v6075 = vunpack.c.h.b16 %v5216
      %v6076 = vunpack.c.l.b16 %v5217
      %v6077 = vunpack.c.h.b16 %v5217
      %v6078 = vunpack.c.l.b16 %v5218
      %v6079 = vunpack.c.h.b16 %v5218
      %v6080 = vunpack.c.l.b16 %v5219
      %v6081 = vunpack.c.h.b16 %v5219
      %v6082 = vunpack.c.l.b16 %v5220
      %v6083 = vunpack.c.h.b16 %v5220
      %v6084 = vunpack.c.l.b16 %v5221
      %v6085 = vunpack.c.h.b16 %v5221
      %v6086 = vunpack.c.l.b16 %v5222
      %v6087 = vunpack.c.h.b16 %v5222
      %v6088 = vunpack.c.l.b16 %v5223
      %v6089 = vunpack.c.h.b16 %v5223
      %v6090 = vunpack.c.l.b16 %v5224
      %v6091 = vunpack.c.h.b16 %v5224
      %v6092 = vunpack.c.l.b16 %v5225
      %v6093 = vunpack.c.h.b16 %v5225
      %v6094 = vunpack.c.l.b16 %v5226
      %v6095 = vunpack.c.h.b16 %v5226
      %v6096 = vunpack.c.l.b16 %v5227
      %v6097 = vunpack.c.h.b16 %v5227
      %v6098 = vunpack.c.l.b16 %v5228
      %v6099 = vunpack.c.h.b16 %v5228
      %v6100 = vunpack.c.l.b16 %v5229
      %v6101 = vunpack.c.h.b16 %v5229
      %v6102 = vunpack.c.l.b16 %v5230
      %v6103 = vunpack.c.h.b16 %v5230
      %v6104 = vunpack.c.l.b16 %v5231
      %v6105 = vunpack.c.h.b16 %v5231
      %v6106 = vunpack.c.l.b16 %v5232
      %v6107 = vunpack.c.h.b16 %v5232
      %v6108 = vunpack.c.l.b16 %v5233
      %v6109 = vunpack.c.h.b16 %v5233
      %v6110 = vunpack.c.l.b16 %v5234
      %v6111 = vunpack.c.h.b16 %v5234
      %v6112 = vunpack.c.l.b16 %v5235
      %v6113 = vunpack.c.h.b16 %v5235
      %v6114 = vunpack.c.l.b16 %v5236
      %v6115 = vunpack.c.h.b16 %v5236
      %v6116 = vunpack.c.l.b16 %v5237
      %v6117 = vunpack.c.h.b16 %v5237
      %v6118 = vunpack.c.l.b16 %v5238
      %v6119 = vunpack.c.h.b16 %v5238
      %v6120 = vunpack.c.l.b16 %v5239
      %v6121 = vunpack.c.h.b16 %v5239
      %v6122 = vunpack.c.l.b16 %v5240
      %v6123 = vunpack.c.h.b16 %v5240
      %v6124 = vunpack.c.l.b16 %v5241
      %v6125 = vunpack.c.h.b16 %v5241
      %v6126 = vunpack.c.l.b16 %v5242
      %v6127 = vunpack.c.h.b16 %v5242
      %v6128 = vunpack.c.l.b16 %v5243
      %v6129 = vunpack.c.h.b16 %v5243
      %v6130 = vunpack.c.l.b16 %v5244
      %v6131 = vunpack.c.h.b16 %v5244
      %v6132 = vunpack.c.l.b16 %v5245
      %v6133 = vunpack.c.h.b16 %v5245
      %v6134 = vunpack.c.l.b16 %v5246
      %v6135 = vunpack.c.h.b16 %v5246
      %v6136 = vunpack.c.l.b16 %v5247
      %v6137 = vunpack.c.h.b16 %v5247
      %v6138 = vunpack.c.l.b16 %v5248
      %v6139 = vunpack.c.h.b16 %v5248
      %v6140 = vunpack.c.l.b16 %v5249
      %v6141 = vunpack.c.h.b16 %v5249
      %v6142 = vunpack.c.l.b16 %v5250
      %v6143 = vunpack.c.h.b16 %v5250
      %v6144 = vunpack.c.l.b16 %v5251
      %v6145 = vunpack.c.h.b16 %v5251
      %v6146 = vunpack.c.l.b16 %v5252
      %v6147 = vunpack.c.h.b16 %v5252
      %v6148 = vunpack.c.l.b16 %v5253
      %v6149 = vunpack.c.h.b16 %v5253
      %v6150 = vunpack.c.l.b16 %v5254
      %v6151 = vunpack.c.h.b16 %v5254
      %v6152 = vunpack.c.l.b16 %v5255
      %v6153 = vunpack.c.h.b16 %v5255
      %v6154 = vpack.c.b16 %v5868, %v5866
      %v6155 = vpack.c.b16 %v5869, %v5867
      %v6156 = vpack.c.b16 %v5872, %v5870
      %v6157 = vpack.c.b16 %v5873, %v5871
      %v6158 = vpack.c.b16 %v5876, %v5874
      %v6159 = vpack.c.b16 %v5877, %v5875
      %v6160 = vpack.c.b16 %v5880, %v5878
      %v6161 = vpack.c.b16 %v5881, %v5879
      %v6162 = vpack.c.b16 %v5884, %v5882
      %v6163 = vpack.c.b16 %v5885, %v5883
      %v6164 = vpack.c.b16 %v5888, %v5886
      %v6165 = vpack.c.b16 %v5889, %v5887
      %v6166 = vpack.c.b16 %v5892, %v5890
      %v6167 = vpack.c.b16 %v5893, %v5891
      %v6168 = vpack.c.b16 %v5896, %v5894
      %v6169 = vpack.c.b16 %v5897, %v5895
      %v6170 = vpack.c.b16 %v5900, %v5898
      %v6171 = vpack.c.b16 %v5901, %v5899
      %v6172 = vpack.c.b16 %v5904, %v5902
      %v6173 = vpack.c.b16 %v5905, %v5903
      %v6174 = vpack.c.b16 %v5908, %v5906
      %v6175 = vpack.c.b16 %v5909, %v5907
      %v6176 = vpack.c.b16 %v5912, %v5910
      %v6177 = vpack.c.b16 %v5913, %v5911
      %v6178 = vpack.c.b16 %v5916, %v5914
      %v6179 = vpack.c.b16 %v5917, %v5915
      %v6180 = vpack.c.b16 %v5920, %v5918
      %v6181 = vpack.c.b16 %v5921, %v5919
      %v6182 = vpack.c.b16 %v5924, %v5922
      %v6183 = vpack.c.b16 %v5925, %v5923
      %v6184 = vpack.c.b16 %v5928, %v5926
      %v6185 = vpack.c.b16 %v5929, %v5927
      %v6186 = vpack.c.b16 %v5932, %v5930
      %v6187 = vpack.c.b16 %v5933, %v5931
      %v6188 = vpack.c.b16 %v5936, %v5934
      %v6189 = vpack.c.b16 %v5937, %v5935
      %v6190 = vpack.c.b16 %v5940, %v5938
      %v6191 = vpack.c.b16 %v5941, %v5939
      %v6192 = vpack.c.b16 %v5944, %v5942
      %v6193 = vpack.c.b16 %v5945, %v5943
      %v6194 = vpack.c.b16 %v5948, %v5946
      %v6195 = vpack.c.b16 %v5949, %v5947
      %v6196 = vpack.c.b16 %v5952, %v5950
      %v6197 = vpack.c.b16 %v5953, %v5951
      %v6198 = vpack.c.b16 %v5956, %v5954
      %v6199 = vpack.c.b16 %v5957, %v5955
      %v6200 = vpack.c.b16 %v5960, %v5958
      %v6201 = vpack.c.b16 %v5961, %v5959
      %v6202 = vpack.c.b16 %v5964, %v5962
      %v6203 = vpack.c.b16 %v5965, %v5963
      %v6204 = vpack.c.b16 %v5968, %v5966
      %v6205 = vpack.c.b16 %v5969, %v5967
      %v6206 = vpack.c.b16 %v5972, %v5970
      %v6207 = vpack.c.b16 %v5973, %v5971
      %v6208 = vpack.c.b16 %v5976, %v5974
      %v6209 = vpack.c.b16 %v5977, %v5975
      %v6210 = vpack.c.b16 %v5980, %v5978
      %v6211 = vpack.c.b16 %v5981, %v5979
      %v6212 = vpack.c.b16 %v5984, %v5982
      %v6213 = vpack.c.b16 %v5985, %v5983
      %v6214 = vpack.c.b16 %v5988, %v5986
      %v6215 = vpack.c.b16 %v5989, %v5987
      %v6216 = vpack.c.b16 %v5992, %v5990
      %v6217 = vpack.c.b16 %v5993, %v5991
      %v6218 = vpack.c.b16 %v5996, %v5994
      %v6219 = vpack.c.b16 %v5997, %v5995
      %v6220 = vpack.c.b16 %v6000, %v5998
      %v6221 = vpack.c.b16 %v6001, %v5999
      %v6222 = vpack.c.b16 %v6004, %v6002
      %v6223 = vpack.c.b16 %v6005, %v6003
      %v6224 = vpack.c.b16 %v6008, %v6006
      %v6225 = vpack.c.b16 %v6009, %v6007
      %v6226 = vpack.c.b16 %v6012, %v6010
      %v6227 = vpack.c.b16 %v6013, %v6011
      %v6228 = vpack.c.b16 %v6016, %v6014
      %v6229 = vpack.c.b16 %v6017, %v6015
      %v6230 = vpack.c.b16 %v6020, %v6018
      %v6231 = vpack.c.b16 %v6021, %v6019
      %v6232 = vpack.c.b16 %v6024, %v6022
      %v6233 = vpack.c.b16 %v6025, %v6023
      %v6234 = vpack.c.b16 %v6028, %v6026
      %v6235 = vpack.c.b16 %v6029, %v6027
      %v6236 = vpack.c.b16 %v6032, %v6030
      %v6237 = vpack.c.b16 %v6033, %v6031
      %v6238 = vpack.c.b16 %v6036, %v6034
      %v6239 = vpack.c.b16 %v6037, %v6035
      %v6240 = vpack.c.b16 %v6040, %v6038
      %v6241 = vpack.c.b16 %v6041, %v6039
      %v6242 = vpack.c.b16 %v6044, %v6042
      %v6243 = vpack.c.b16 %v6045, %v6043
      %v6244 = vpack.c.b16 %v6048, %v6046
      %v6245 = vpack.c.b16 %v6049, %v6047
      %v6246 = vpack.c.b16 %v6052, %v6050
      %v6247 = vpack.c.b16 %v6053, %v6051
      %v6248 = vpack.c.b16 %v6056, %v6054
      %v6249 = vpack.c.b16 %v6057, %v6055
      %v6250 = vpack.c.b16 %v6060, %v6058
      %v6251 = vpack.c.b16 %v6061, %v6059
      %v6252 = vpack.c.b16 %v6064, %v6062
      %v6253 = vpack.c.b16 %v6065, %v6063
      %v6254 = vpack.c.b16 %v6068, %v6066
      %v6255 = vpack.c.b16 %v6069, %v6067
      %v6256 = vpack.c.b16 %v6072, %v6070
      %v6257 = vpack.c.b16 %v6073, %v6071
      %v6258 = vpack.c.b16 %v6076, %v6074
      %v6259 = vpack.c.b16 %v6077, %v6075
      %v6260 = vpack.c.b16 %v6080, %v6078
      %v6261 = vpack.c.b16 %v6081, %v6079
      %v6262 = vpack.c.b16 %v6084, %v6082
      %v6263 = vpack.c.b16 %v6085, %v6083
      %v6264 = vpack.c.b16 %v6088, %v6086
      %v6265 = vpack.c.b16 %v6089, %v6087
      %v6266 = vpack.c.b16 %v6092, %v6090
      %v6267 = vpack.c.b16 %v6093, %v6091
      %v6268 = vpack.c.b16 %v6096, %v6094
      %v6269 = vpack.c.b16 %v6097, %v6095
      %v6270 = vpack.c.b16 %v6100, %v6098
      %v6271 = vpack.c.b16 %v6101, %v6099
      %v6272 = vpack.c.b16 %v6104, %v6102
      %v6273 = vpack.c.b16 %v6105, %v6103
      %v6274 = vpack.c.b16 %v6108, %v6106
      %v6275 = vpack.c.b16 %v6109, %v6107
      %v6276 = vpack.c.b16 %v6112, %v6110
      %v6277 = vpack.c.b16 %v6113, %v6111
      %v6278 = vpack.c.b16 %v6116, %v6114
      %v6279 = vpack.c.b16 %v6117, %v6115
      %v6280 = vpack.c.b16 %v6120, %v6118
      %v6281 = vpack.c.b16 %v6121, %v6119
      %v6282 = vpack.c.b16 %v6124, %v6122
      %v6283 = vpack.c.b16 %v6125, %v6123
      %v6284 = vpack.c.b16 %v6128, %v6126
      %v6285 = vpack.c.b16 %v6129, %v6127
      %v6286 = vpack.c.b16 %v6132, %v6130
      %v6287 = vpack.c.b16 %v6133, %v6131
      %v6288 = vpack.c.b16 %v6136, %v6134
      %v6289 = vpack.c.b16 %v6137, %v6135
      %v6290 = vpack.c.b16 %v6140, %v6138
      %v6291 = vpack.c.b16 %v6141, %v6139
      %v6292 = vpack.c.b16 %v6144, %v6142
      %v6293 = vpack.c.b16 %v6145, %v6143
      %v6294 = vpack.c.b16 %v6148, %v6146
      %v6295 = vpack.c.b16 %v6149, %v6147
      %v6296 = vpack.c.b16 %v6152, %v6150
      %v6297 = vpack.c.b16 %v6153, %v6151
      %6442 = vmatpush.bf16.msra.mxu0 %v6168
      %6443 = vmatpush.bf16.msra.mxu0 %v6166
      %6444 = vmatpush.bf16.msra.mxu0 %v6164
      %6445 = vmatpush.bf16.msra.mxu0 %v6162
      %6446 = vmatpush.bf16.msra.mxu0 %v6160
      %6447 = vmatpush.bf16.msra.mxu0 %v6158
      %6448 = vmatpush.bf16.msra.mxu0 %v6156
      %6449 = vmatpush.bf16.msra.mxu0 %v6154
      %6450 = vmatmul.bf16.gmra.mxu0 %v5542
      %v6451 = vpop.f32.mrf.mxu0
      %v6452 = vadd.f32 %v5258, %v6451
      %v6453 = vpop.f32.mrf.mxu0
      %v6454 = vadd.f32 %v5258, %v6453
      %6455 = vmatmul.bf16.gmra.mxu0 %v5551
      %v6456 = vpop.f32.mrf.mxu0
      %v6457 = vadd.f32 %v5258, %v6456
      %v6458 = vpop.f32.mrf.mxu0
      %v6459 = vadd.f32 %v5258, %v6458
      %6460 = vmatmul.bf16.gmra.mxu0 %v5560
      %v6461 = vpop.f32.mrf.mxu0
      %v6462 = vadd.f32 %v5258, %v6461
      %v6463 = vpop.f32.mrf.mxu0
      %v6464 = vadd.f32 %v5258, %v6463
      %6465 = vmatmul.bf16.gmra.mxu0 %v5569
      %v6466 = vpop.f32.mrf.mxu0
      %v6467 = vadd.f32 %v5258, %v6466
      %v6468 = vpop.f32.mrf.mxu0
      %v6469 = vadd.f32 %v5258, %v6468
      %6470 = vmatmul.bf16.gmra.mxu0 %v5578
      %v6471 = vpop.f32.mrf.mxu0
      %v6472 = vadd.f32 %v5258, %v6471
      %v6473 = vpop.f32.mrf.mxu0
      %v6474 = vadd.f32 %v5258, %v6473
      %6475 = vmatmul.bf16.gmra.mxu0 %v5587
      %v6476 = vpop.f32.mrf.mxu0
      %v6477 = vadd.f32 %v5258, %v6476
      %v6478 = vpop.f32.mrf.mxu0
      %v6479 = vadd.f32 %v5258, %v6478
      %6480 = vmatmul.bf16.gmra.mxu0 %v5596
      %v6481 = vpop.f32.mrf.mxu0
      %v6482 = vadd.f32 %v5258, %v6481
      %v6483 = vpop.f32.mrf.mxu0
      %v6484 = vadd.f32 %v5258, %v6483
      %6485 = vmatmul.bf16.gmra.mxu0 %v5605
      %v6486 = vpop.f32.mrf.mxu0
      %v6487 = vadd.f32 %v5258, %v6486
      %v6488 = vpop.f32.mrf.mxu0
      %v6489 = vadd.f32 %v5258, %v6488
      %6490 = vmatmul.bf16.gmra.mxu0 %v5614
      %v6491 = vpop.f32.mrf.mxu0
      %v6492 = vadd.f32 %v5258, %v6491
      %v6493 = vpop.f32.mrf.mxu0
      %v6494 = vadd.f32 %v5258, %v6493
      %6495 = vmatmul.bf16.gmra.mxu0 %v5623
      %v6496 = vpop.f32.mrf.mxu0
      %v6497 = vadd.f32 %v5258, %v6496
      %v6498 = vpop.f32.mrf.mxu0
      %v6499 = vadd.f32 %v5258, %v6498
      %6500 = vdwg.mxu0
      %6501 = vmatpush.bf16.msra.mxu0 %v6184
      %6502 = vmatpush.bf16.msra.mxu0 %v6182
      %6503 = vmatpush.bf16.msra.mxu0 %v6180
      %6504 = vmatpush.bf16.msra.mxu0 %v6178
      %6505 = vmatpush.bf16.msra.mxu0 %v6176
      %6506 = vmatpush.bf16.msra.mxu0 %v6174
      %6507 = vmatpush.bf16.msra.mxu0 %v6172
      %6508 = vmatpush.bf16.msra.mxu0 %v6170
      %6509 = vmatmul.bf16.gmra.mxu0 %v5543
      %v6510 = vpop.f32.mrf.mxu0
      %v6511 = vadd.f32 %v6452, %v6510
      %v6512 = vpop.f32.mrf.mxu0
      %v6513 = vadd.f32 %v6454, %v6512
      %6514 = vmatmul.bf16.gmra.mxu0 %v5552
      %v6515 = vpop.f32.mrf.mxu0
      %v6516 = vadd.f32 %v6457, %v6515
      %v6517 = vpop.f32.mrf.mxu0
      %v6518 = vadd.f32 %v6459, %v6517
      %6519 = vmatmul.bf16.gmra.mxu0 %v5561
      %v6520 = vpop.f32.mrf.mxu0
      %v6521 = vadd.f32 %v6462, %v6520
      %v6522 = vpop.f32.mrf.mxu0
      %v6523 = vadd.f32 %v6464, %v6522
      %6524 = vmatmul.bf16.gmra.mxu0 %v5570
      %v6525 = vpop.f32.mrf.mxu0
      %v6526 = vadd.f32 %v6467, %v6525
      %v6527 = vpop.f32.mrf.mxu0
      %v6528 = vadd.f32 %v6469, %v6527
      %6529 = vmatmul.bf16.gmra.mxu0 %v5579
      %v6530 = vpop.f32.mrf.mxu0
      %v6531 = vadd.f32 %v6472, %v6530
      %v6532 = vpop.f32.mrf.mxu0
      %v6533 = vadd.f32 %v6474, %v6532
      %6534 = vmatmul.bf16.gmra.mxu0 %v5588
      %v6535 = vpop.f32.mrf.mxu0
      %v6536 = vadd.f32 %v6477, %v6535
      %v6537 = vpop.f32.mrf.mxu0
      %v6538 = vadd.f32 %v6479, %v6537
      %6539 = vmatmul.bf16.gmra.mxu0 %v5597
      %v6540 = vpop.f32.mrf.mxu0
      %v6541 = vadd.f32 %v6482, %v6540
      %v6542 = vpop.f32.mrf.mxu0
      %v6543 = vadd.f32 %v6484, %v6542
      %6544 = vmatmul.bf16.gmra.mxu0 %v5606
      %v6545 = vpop.f32.mrf.mxu0
      %v6546 = vadd.f32 %v6487, %v6545
      %v6547 = vpop.f32.mrf.mxu0
      %v6548 = vadd.f32 %v6489, %v6547
      %6549 = vmatmul.bf16.gmra.mxu0 %v5615
      %v6550 = vpop.f32.mrf.mxu0
      %v6551 = vadd.f32 %v6492, %v6550
      %v6552 = vpop.f32.mrf.mxu0
      %v6553 = vadd.f32 %v6494, %v6552
      %6554 = vmatmul.bf16.gmra.mxu0 %v5624
      %v6555 = vpop.f32.mrf.mxu0
      %v6556 = vadd.f32 %v6497, %v6555
      %v6557 = vpop.f32.mrf.mxu0
      %v6558 = vadd.f32 %v6499, %v6557
      %6559 = vdwg.mxu0
      %6560 = vmatpush.bf16.msra.mxu0 %v6200
      %6561 = vmatpush.bf16.msra.mxu0 %v6198
      %6562 = vmatpush.bf16.msra.mxu0 %v6196
      %6563 = vmatpush.bf16.msra.mxu0 %v6194
      %6564 = vmatpush.bf16.msra.mxu0 %v6192
      %6565 = vmatpush.bf16.msra.mxu0 %v6190
      %6566 = vmatpush.bf16.msra.mxu0 %v6188
      %6567 = vmatpush.bf16.msra.mxu0 %v6186
      %6568 = vmatmul.bf16.gmra.mxu0 %v5544
      %v6569 = vpop.f32.mrf.mxu0
      %v6570 = vadd.f32 %v6511, %v6569
      %v6571 = vpop.f32.mrf.mxu0
      %v6572 = vadd.f32 %v6513, %v6571
      %6573 = vmatmul.bf16.gmra.mxu0 %v5553
      %v6574 = vpop.f32.mrf.mxu0
      %v6575 = vadd.f32 %v6516, %v6574
      %v6576 = vpop.f32.mrf.mxu0
      %v6577 = vadd.f32 %v6518, %v6576
      %6578 = vmatmul.bf16.gmra.mxu0 %v5562
      %v6579 = vpop.f32.mrf.mxu0
      %v6580 = vadd.f32 %v6521, %v6579
      %v6581 = vpop.f32.mrf.mxu0
      %v6582 = vadd.f32 %v6523, %v6581
      %6583 = vmatmul.bf16.gmra.mxu0 %v5571
      %v6584 = vpop.f32.mrf.mxu0
      %v6585 = vadd.f32 %v6526, %v6584
      %v6586 = vpop.f32.mrf.mxu0
      %v6587 = vadd.f32 %v6528, %v6586
      %6588 = vmatmul.bf16.gmra.mxu0 %v5580
      %v6589 = vpop.f32.mrf.mxu0
      %v6590 = vadd.f32 %v6531, %v6589
      %v6591 = vpop.f32.mrf.mxu0
      %v6592 = vadd.f32 %v6533, %v6591
      %6593 = vmatmul.bf16.gmra.mxu0 %v5589
      %v6594 = vpop.f32.mrf.mxu0
      %v6595 = vadd.f32 %v6536, %v6594
      %v6596 = vpop.f32.mrf.mxu0
      %v6597 = vadd.f32 %v6538, %v6596
      %6598 = vmatmul.bf16.gmra.mxu0 %v5598
      %v6599 = vpop.f32.mrf.mxu0
      %v6600 = vadd.f32 %v6541, %v6599
      %v6601 = vpop.f32.mrf.mxu0
      %v6602 = vadd.f32 %v6543, %v6601
      %6603 = vmatmul.bf16.gmra.mxu0 %v5607
      %v6604 = vpop.f32.mrf.mxu0
      %v6605 = vadd.f32 %v6546, %v6604
      %v6606 = vpop.f32.mrf.mxu0
      %v6607 = vadd.f32 %v6548, %v6606
      %6608 = vmatmul.bf16.gmra.mxu0 %v5616
      %v6609 = vpop.f32.mrf.mxu0
      %v6610 = vadd.f32 %v6551, %v6609
      %v6611 = vpop.f32.mrf.mxu0
      %v6612 = vadd.f32 %v6553, %v6611
      %6613 = vmatmul.bf16.gmra.mxu0 %v5625
      %v6614 = vpop.f32.mrf.mxu0
      %v6615 = vadd.f32 %v6556, %v6614
      %v6616 = vpop.f32.mrf.mxu0
      %v6617 = vadd.f32 %v6558, %v6616
      %6618 = vdwg.mxu0
      %6619 = vmatpush.bf16.msra.mxu0 %v6216
      %6620 = vmatpush.bf16.msra.mxu0 %v6214
      %6621 = vmatpush.bf16.msra.mxu0 %v6212
      %6622 = vmatpush.bf16.msra.mxu0 %v6210
      %6623 = vmatpush.bf16.msra.mxu0 %v6208
      %6624 = vmatpush.bf16.msra.mxu0 %v6206
      %6625 = vmatpush.bf16.msra.mxu0 %v6204
      %6626 = vmatpush.bf16.msra.mxu0 %v6202
      %6627 = vmatmul.bf16.gmra.mxu0 %v5545
      %v6628 = vpop.f32.mrf.mxu0
      %v6629 = vadd.f32 %v6570, %v6628
      %v6630 = vpop.f32.mrf.mxu0
      %v6631 = vadd.f32 %v6572, %v6630
      %6632 = vmatmul.bf16.gmra.mxu0 %v5554
      %v6633 = vpop.f32.mrf.mxu0
      %v6634 = vadd.f32 %v6575, %v6633
      %v6635 = vpop.f32.mrf.mxu0
      %v6636 = vadd.f32 %v6577, %v6635
      %6637 = vmatmul.bf16.gmra.mxu0 %v5563
      %v6638 = vpop.f32.mrf.mxu0
      %v6639 = vadd.f32 %v6580, %v6638
      %v6640 = vpop.f32.mrf.mxu0
      %v6641 = vadd.f32 %v6582, %v6640
      %6642 = vmatmul.bf16.gmra.mxu0 %v5572
      %v6643 = vpop.f32.mrf.mxu0
      %v6644 = vadd.f32 %v6585, %v6643
      %v6645 = vpop.f32.mrf.mxu0
      %v6646 = vadd.f32 %v6587, %v6645
      %6647 = vmatmul.bf16.gmra.mxu0 %v5581
      %v6648 = vpop.f32.mrf.mxu0
      %v6649 = vadd.f32 %v6590, %v6648
      %v6650 = vpop.f32.mrf.mxu0
      %v6651 = vadd.f32 %v6592, %v6650
      %6652 = vmatmul.bf16.gmra.mxu0 %v5590
      %v6653 = vpop.f32.mrf.mxu0
      %v6654 = vadd.f32 %v6595, %v6653
      %v6655 = vpop.f32.mrf.mxu0
      %v6656 = vadd.f32 %v6597, %v6655
      %6657 = vmatmul.bf16.gmra.mxu0 %v5599
      %v6658 = vpop.f32.mrf.mxu0
      %v6659 = vadd.f32 %v6600, %v6658
      %v6660 = vpop.f32.mrf.mxu0
      %v6661 = vadd.f32 %v6602, %v6660
      %6662 = vmatmul.bf16.gmra.mxu0 %v5608
      %v6663 = vpop.f32.mrf.mxu0
      %v6664 = vadd.f32 %v6605, %v6663
      %v6665 = vpop.f32.mrf.mxu0
      %v6666 = vadd.f32 %v6607, %v6665
      %6667 = vmatmul.bf16.gmra.mxu0 %v5617
      %v6668 = vpop.f32.mrf.mxu0
      %v6669 = vadd.f32 %v6610, %v6668
      %v6670 = vpop.f32.mrf.mxu0
      %v6671 = vadd.f32 %v6612, %v6670
      %6672 = vmatmul.bf16.gmra.mxu0 %v5626
      %v6673 = vpop.f32.mrf.mxu0
      %v6674 = vadd.f32 %v6615, %v6673
      %v6675 = vpop.f32.mrf.mxu0
      %v6676 = vadd.f32 %v6617, %v6675
      %6677 = vdwg.mxu0
      %6678 = vmatpush.bf16.msra.mxu0 %v6232
      %6679 = vmatpush.bf16.msra.mxu0 %v6230
      %6680 = vmatpush.bf16.msra.mxu0 %v6228
      %6681 = vmatpush.bf16.msra.mxu0 %v6226
      %6682 = vmatpush.bf16.msra.mxu0 %v6224
      %6683 = vmatpush.bf16.msra.mxu0 %v6222
      %6684 = vmatpush.bf16.msra.mxu0 %v6220
      %6685 = vmatpush.bf16.msra.mxu0 %v6218
      %6686 = vmatmul.bf16.gmra.mxu0 %v5546
      %v6687 = vpop.f32.mrf.mxu0
      %v6688 = vadd.f32 %v6629, %v6687
      %v6689 = vpop.f32.mrf.mxu0
      %v6690 = vadd.f32 %v6631, %v6689
      %6691 = vmatmul.bf16.gmra.mxu0 %v5555
      %v6692 = vpop.f32.mrf.mxu0
      %v6693 = vadd.f32 %v6634, %v6692
      %v6694 = vpop.f32.mrf.mxu0
      %v6695 = vadd.f32 %v6636, %v6694
      %6696 = vmatmul.bf16.gmra.mxu0 %v5564
      %v6697 = vpop.f32.mrf.mxu0
      %v6698 = vadd.f32 %v6639, %v6697
      %v6699 = vpop.f32.mrf.mxu0
      %v6700 = vadd.f32 %v6641, %v6699
      %6701 = vmatmul.bf16.gmra.mxu0 %v5573
      %v6702 = vpop.f32.mrf.mxu0
      %v6703 = vadd.f32 %v6644, %v6702
      %v6704 = vpop.f32.mrf.mxu0
      %v6705 = vadd.f32 %v6646, %v6704
      %6706 = vmatmul.bf16.gmra.mxu0 %v5582
      %v6707 = vpop.f32.mrf.mxu0
      %v6708 = vadd.f32 %v6649, %v6707
      %v6709 = vpop.f32.mrf.mxu0
      %v6710 = vadd.f32 %v6651, %v6709
      %6711 = vmatmul.bf16.gmra.mxu0 %v5591
      %v6712 = vpop.f32.mrf.mxu0
      %v6713 = vadd.f32 %v6654, %v6712
      %v6714 = vpop.f32.mrf.mxu0
      %v6715 = vadd.f32 %v6656, %v6714
      %6716 = vmatmul.bf16.gmra.mxu0 %v5600
      %v6717 = vpop.f32.mrf.mxu0
      %v6718 = vadd.f32 %v6659, %v6717
      %v6719 = vpop.f32.mrf.mxu0
      %v6720 = vadd.f32 %v6661, %v6719
      %6721 = vmatmul.bf16.gmra.mxu0 %v5609
      %v6722 = vpop.f32.mrf.mxu0
      %v6723 = vadd.f32 %v6664, %v6722
      %v6724 = vpop.f32.mrf.mxu0
      %v6725 = vadd.f32 %v6666, %v6724
      %6726 = vmatmul.bf16.gmra.mxu0 %v5618
      %v6727 = vpop.f32.mrf.mxu0
      %v6728 = vadd.f32 %v6669, %v6727
      %v6729 = vpop.f32.mrf.mxu0
      %v6730 = vadd.f32 %v6671, %v6729
      %6731 = vmatmul.bf16.gmra.mxu0 %v5627
      %v6732 = vpop.f32.mrf.mxu0
      %v6733 = vadd.f32 %v6674, %v6732
      %v6734 = vpop.f32.mrf.mxu0
      %v6735 = vadd.f32 %v6676, %v6734
      %6736 = vdwg.mxu0
      %6737 = vmatpush.bf16.msra.mxu0 %v6248
      %6738 = vmatpush.bf16.msra.mxu0 %v6246
      %6739 = vmatpush.bf16.msra.mxu0 %v6244
      %6740 = vmatpush.bf16.msra.mxu0 %v6242
      %6741 = vmatpush.bf16.msra.mxu0 %v6240
      %6742 = vmatpush.bf16.msra.mxu0 %v6238
      %6743 = vmatpush.bf16.msra.mxu0 %v6236
      %6744 = vmatpush.bf16.msra.mxu0 %v6234
      %6745 = vmatmul.bf16.gmra.mxu0 %v5547
      %v6746 = vpop.f32.mrf.mxu0
      %v6747 = vadd.f32 %v6688, %v6746
      %v6748 = vpop.f32.mrf.mxu0
      %v6749 = vadd.f32 %v6690, %v6748
      %6750 = vmatmul.bf16.gmra.mxu0 %v5556
      %v6751 = vpop.f32.mrf.mxu0
      %v6752 = vadd.f32 %v6693, %v6751
      %v6753 = vpop.f32.mrf.mxu0
      %v6754 = vadd.f32 %v6695, %v6753
      %6755 = vmatmul.bf16.gmra.mxu0 %v5565
      %v6756 = vpop.f32.mrf.mxu0
      %v6757 = vadd.f32 %v6698, %v6756
      %v6758 = vpop.f32.mrf.mxu0
      %v6759 = vadd.f32 %v6700, %v6758
      %6760 = vmatmul.bf16.gmra.mxu0 %v5574
      %v6761 = vpop.f32.mrf.mxu0
      %v6762 = vadd.f32 %v6703, %v6761
      %v6763 = vpop.f32.mrf.mxu0
      %v6764 = vadd.f32 %v6705, %v6763
      %6765 = vmatmul.bf16.gmra.mxu0 %v5583
      %v6766 = vpop.f32.mrf.mxu0
      %v6767 = vadd.f32 %v6708, %v6766
      %v6768 = vpop.f32.mrf.mxu0
      %v6769 = vadd.f32 %v6710, %v6768
      %6770 = vmatmul.bf16.gmra.mxu0 %v5592
      %v6771 = vpop.f32.mrf.mxu0
      %v6772 = vadd.f32 %v6713, %v6771
      %v6773 = vpop.f32.mrf.mxu0
      %v6774 = vadd.f32 %v6715, %v6773
      %6775 = vmatmul.bf16.gmra.mxu0 %v5601
      %v6776 = vpop.f32.mrf.mxu0
      %v6777 = vadd.f32 %v6718, %v6776
      %v6778 = vpop.f32.mrf.mxu0
      %v6779 = vadd.f32 %v6720, %v6778
      %6780 = vmatmul.bf16.gmra.mxu0 %v5610
      %v6781 = vpop.f32.mrf.mxu0
      %v6782 = vadd.f32 %v6723, %v6781
      %v6783 = vpop.f32.mrf.mxu0
      %v6784 = vadd.f32 %v6725, %v6783
      %6785 = vmatmul.bf16.gmra.mxu0 %v5619
      %v6786 = vpop.f32.mrf.mxu0
      %v6787 = vadd.f32 %v6728, %v6786
      %v6788 = vpop.f32.mrf.mxu0
      %v6789 = vadd.f32 %v6730, %v6788
      %6790 = vmatmul.bf16.gmra.mxu0 %v5628
      %v6791 = vpop.f32.mrf.mxu0
      %v6792 = vadd.f32 %v6733, %v6791
      %v6793 = vpop.f32.mrf.mxu0
      %v6794 = vadd.f32 %v6735, %v6793
      %6795 = vdwg.mxu0
      %6796 = vmatpush.bf16.msra.mxu0 %v6264
      %6797 = vmatpush.bf16.msra.mxu0 %v6262
      %6798 = vmatpush.bf16.msra.mxu0 %v6260
      %6799 = vmatpush.bf16.msra.mxu0 %v6258
      %6800 = vmatpush.bf16.msra.mxu0 %v6256
      %6801 = vmatpush.bf16.msra.mxu0 %v6254
      %6802 = vmatpush.bf16.msra.mxu0 %v6252
      %6803 = vmatpush.bf16.msra.mxu0 %v6250
      %6804 = vmatmul.bf16.gmra.mxu0 %v5548
      %v6805 = vpop.f32.mrf.mxu0
      %v6806 = vadd.f32 %v6747, %v6805
      %v6807 = vpop.f32.mrf.mxu0
      %v6808 = vadd.f32 %v6749, %v6807
      %6809 = vmatmul.bf16.gmra.mxu0 %v5557
      %v6810 = vpop.f32.mrf.mxu0
      %v6811 = vadd.f32 %v6752, %v6810
      %v6812 = vpop.f32.mrf.mxu0
      %v6813 = vadd.f32 %v6754, %v6812
      %6814 = vmatmul.bf16.gmra.mxu0 %v5566
      %v6815 = vpop.f32.mrf.mxu0
      %v6816 = vadd.f32 %v6757, %v6815
      %v6817 = vpop.f32.mrf.mxu0
      %v6818 = vadd.f32 %v6759, %v6817
      %6819 = vmatmul.bf16.gmra.mxu0 %v5575
      %v6820 = vpop.f32.mrf.mxu0
      %v6821 = vadd.f32 %v6762, %v6820
      %v6822 = vpop.f32.mrf.mxu0
      %v6823 = vadd.f32 %v6764, %v6822
      %6824 = vmatmul.bf16.gmra.mxu0 %v5584
      %v6825 = vpop.f32.mrf.mxu0
      %v6826 = vadd.f32 %v6767, %v6825
      %v6827 = vpop.f32.mrf.mxu0
      %v6828 = vadd.f32 %v6769, %v6827
      %6829 = vmatmul.bf16.gmra.mxu0 %v5593
      %v6830 = vpop.f32.mrf.mxu0
      %v6831 = vadd.f32 %v6772, %v6830
      %v6832 = vpop.f32.mrf.mxu0
      %v6833 = vadd.f32 %v6774, %v6832
      %6834 = vmatmul.bf16.gmra.mxu0 %v5602
      %v6835 = vpop.f32.mrf.mxu0
      %v6836 = vadd.f32 %v6777, %v6835
      %v6837 = vpop.f32.mrf.mxu0
      %v6838 = vadd.f32 %v6779, %v6837
      %6839 = vmatmul.bf16.gmra.mxu0 %v5611
      %v6840 = vpop.f32.mrf.mxu0
      %v6841 = vadd.f32 %v6782, %v6840
      %v6842 = vpop.f32.mrf.mxu0
      %v6843 = vadd.f32 %v6784, %v6842
      %6844 = vmatmul.bf16.gmra.mxu0 %v5620
      %v6845 = vpop.f32.mrf.mxu0
      %v6846 = vadd.f32 %v6787, %v6845
      %v6847 = vpop.f32.mrf.mxu0
      %v6848 = vadd.f32 %v6789, %v6847
      %6849 = vmatmul.bf16.gmra.mxu0 %v5629
      %v6850 = vpop.f32.mrf.mxu0
      %v6851 = vadd.f32 %v6792, %v6850
      %v6852 = vpop.f32.mrf.mxu0
      %v6853 = vadd.f32 %v6794, %v6852
      %6854 = vdwg.mxu0
      %6855 = vmatpush.bf16.msra.mxu0 %v6280
      %6856 = vmatpush.bf16.msra.mxu0 %v6278
      %6857 = vmatpush.bf16.msra.mxu0 %v6276
      %6858 = vmatpush.bf16.msra.mxu0 %v6274
      %6859 = vmatpush.bf16.msra.mxu0 %v6272
      %6860 = vmatpush.bf16.msra.mxu0 %v6270
      %6861 = vmatpush.bf16.msra.mxu0 %v6268
      %6862 = vmatpush.bf16.msra.mxu0 %v6266
      %6863 = vmatmul.bf16.gmra.mxu0 %v5549
      %v6864 = vpop.f32.mrf.mxu0
      %v6865 = vadd.f32 %v6806, %v6864
      %v6866 = vpop.f32.mrf.mxu0
      %v6867 = vadd.f32 %v6808, %v6866
      %6868 = vmatmul.bf16.gmra.mxu0 %v5558
      %v6869 = vpop.f32.mrf.mxu0
      %v6870 = vadd.f32 %v6811, %v6869
      %v6871 = vpop.f32.mrf.mxu0
      %v6872 = vadd.f32 %v6813, %v6871
      %6873 = vmatmul.bf16.gmra.mxu0 %v5567
      %v6874 = vpop.f32.mrf.mxu0
      %v6875 = vadd.f32 %v6816, %v6874
      %v6876 = vpop.f32.mrf.mxu0
      %v6877 = vadd.f32 %v6818, %v6876
      %6878 = vmatmul.bf16.gmra.mxu0 %v5576
      %v6879 = vpop.f32.mrf.mxu0
      %v6880 = vadd.f32 %v6821, %v6879
      %v6881 = vpop.f32.mrf.mxu0
      %v6882 = vadd.f32 %v6823, %v6881
      %6883 = vmatmul.bf16.gmra.mxu0 %v5585
      %v6884 = vpop.f32.mrf.mxu0
      %v6885 = vadd.f32 %v6826, %v6884
      %v6886 = vpop.f32.mrf.mxu0
      %v6887 = vadd.f32 %v6828, %v6886
      %6888 = vmatmul.bf16.gmra.mxu0 %v5594
      %v6889 = vpop.f32.mrf.mxu0
      %v6890 = vadd.f32 %v6831, %v6889
      %v6891 = vpop.f32.mrf.mxu0
      %v6892 = vadd.f32 %v6833, %v6891
      %6893 = vmatmul.bf16.gmra.mxu0 %v5603
      %v6894 = vpop.f32.mrf.mxu0
      %v6895 = vadd.f32 %v6836, %v6894
      %v6896 = vpop.f32.mrf.mxu0
      %v6897 = vadd.f32 %v6838, %v6896
      %6898 = vmatmul.bf16.gmra.mxu0 %v5612
      %v6899 = vpop.f32.mrf.mxu0
      %v6900 = vadd.f32 %v6841, %v6899
      %v6901 = vpop.f32.mrf.mxu0
      %v6902 = vadd.f32 %v6843, %v6901
      %6903 = vmatmul.bf16.gmra.mxu0 %v5621
      %v6904 = vpop.f32.mrf.mxu0
      %v6905 = vadd.f32 %v6846, %v6904
      %v6906 = vpop.f32.mrf.mxu0
      %v6907 = vadd.f32 %v6848, %v6906
      %6908 = vmatmul.bf16.gmra.mxu0 %v5630
      %v6909 = vpop.f32.mrf.mxu0
      %v6910 = vadd.f32 %v6851, %v6909
      %v6911 = vpop.f32.mrf.mxu0
      %v6912 = vadd.f32 %v6853, %v6911
      %6913 = vdwg.mxu0
      %6914 = vmatpush.bf16.msra.mxu0 %v6296
      %6915 = vmatpush.bf16.msra.mxu0 %v6294
      %6916 = vmatpush.bf16.msra.mxu0 %v6292
      %6917 = vmatpush.bf16.msra.mxu0 %v6290
      %6918 = vmatpush.bf16.msra.mxu0 %v6288
      %6919 = vmatpush.bf16.msra.mxu0 %v6286
      %6920 = vmatpush.bf16.msra.mxu0 %v6284
      %6921 = vmatpush.bf16.msra.mxu0 %v6282
      %6922 = vmatmul.bf16.gmra.mxu0 %v5550
      %v6923 = vpop.f32.mrf.mxu0
      %v6924 = vadd.f32 %v6865, %v6923
      %v6925 = vpop.f32.mrf.mxu0
      %v6926 = vadd.f32 %v6867, %v6925
      %6927 = vmatmul.bf16.gmra.mxu0 %v5559
      %v6928 = vpop.f32.mrf.mxu0
      %v6929 = vadd.f32 %v6870, %v6928
      %v6930 = vpop.f32.mrf.mxu0
      %v6931 = vadd.f32 %v6872, %v6930
      %6932 = vmatmul.bf16.gmra.mxu0 %v5568
      %v6933 = vpop.f32.mrf.mxu0
      %v6934 = vadd.f32 %v6875, %v6933
      %v6935 = vpop.f32.mrf.mxu0
      %v6936 = vadd.f32 %v6877, %v6935
      %6937 = vmatmul.bf16.gmra.mxu0 %v5577
      %v6938 = vpop.f32.mrf.mxu0
      %v6939 = vadd.f32 %v6880, %v6938
      %v6940 = vpop.f32.mrf.mxu0
      %v6941 = vadd.f32 %v6882, %v6940
      %6942 = vmatmul.bf16.gmra.mxu0 %v5586
      %v6943 = vpop.f32.mrf.mxu0
      %v6944 = vadd.f32 %v6885, %v6943
      %v6945 = vpop.f32.mrf.mxu0
      %v6946 = vadd.f32 %v6887, %v6945
      %6947 = vmatmul.bf16.gmra.mxu0 %v5595
      %v6948 = vpop.f32.mrf.mxu0
      %v6949 = vadd.f32 %v6890, %v6948
      %v6950 = vpop.f32.mrf.mxu0
      %v6951 = vadd.f32 %v6892, %v6950
      %6952 = vmatmul.bf16.gmra.mxu0 %v5604
      %v6953 = vpop.f32.mrf.mxu0
      %v6954 = vadd.f32 %v6895, %v6953
      %v6955 = vpop.f32.mrf.mxu0
      %v6956 = vadd.f32 %v6897, %v6955
      %6957 = vmatmul.bf16.gmra.mxu0 %v5613
      %v6958 = vpop.f32.mrf.mxu0
      %v6959 = vadd.f32 %v6900, %v6958
      %v6960 = vpop.f32.mrf.mxu0
      %v6961 = vadd.f32 %v6902, %v6960
      %6962 = vmatmul.bf16.gmra.mxu0 %v5622
      %v6963 = vpop.f32.mrf.mxu0
      %v6964 = vadd.f32 %v6905, %v6963
      %v6965 = vpop.f32.mrf.mxu0
      %v6966 = vadd.f32 %v6907, %v6965
      %6967 = vmatmul.bf16.gmra.mxu0 %v5631
      %v6968 = vpop.f32.mrf.mxu0
      %v6969 = vadd.f32 %v6910, %v6968
      %v6970 = vpop.f32.mrf.mxu0
      %v6971 = vadd.f32 %v6912, %v6970
      %6972 = vdwg.mxu0
      %6973 = vmatpush.bf16.msra.mxu0 %v6169
      %6974 = vmatpush.bf16.msra.mxu0 %v6167
      %6975 = vmatpush.bf16.msra.mxu0 %v6165
      %6976 = vmatpush.bf16.msra.mxu0 %v6163
      %6977 = vmatpush.bf16.msra.mxu0 %v6161
      %6978 = vmatpush.bf16.msra.mxu0 %v6159
      %6979 = vmatpush.bf16.msra.mxu0 %v6157
      %6980 = vmatpush.bf16.msra.mxu0 %v6155
      %6981 = vmatmul.bf16.gmra.mxu0 %v5542
      %v6982 = vpop.f32.mrf.mxu0
      %v6983 = vadd.f32 %v5259, %v6982
      %v6984 = vpop.f32.mrf.mxu0
      %v6985 = vadd.f32 %v5259, %v6984
      %6986 = vmatmul.bf16.gmra.mxu0 %v5551
      %v6987 = vpop.f32.mrf.mxu0
      %v6988 = vadd.f32 %v5259, %v6987
      %v6989 = vpop.f32.mrf.mxu0
      %v6990 = vadd.f32 %v5259, %v6989
      %6991 = vmatmul.bf16.gmra.mxu0 %v5560
      %v6992 = vpop.f32.mrf.mxu0
      %v6993 = vadd.f32 %v5259, %v6992
      %v6994 = vpop.f32.mrf.mxu0
      %v6995 = vadd.f32 %v5259, %v6994
      %6996 = vmatmul.bf16.gmra.mxu0 %v5569
      %v6997 = vpop.f32.mrf.mxu0
      %v6998 = vadd.f32 %v5259, %v6997
      %v6999 = vpop.f32.mrf.mxu0
      %v7000 = vadd.f32 %v5259, %v6999
      %7001 = vmatmul.bf16.gmra.mxu0 %v5578
      %v7002 = vpop.f32.mrf.mxu0
      %v7003 = vadd.f32 %v5259, %v7002
      %v7004 = vpop.f32.mrf.mxu0
      %v7005 = vadd.f32 %v5259, %v7004
      %7006 = vmatmul.bf16.gmra.mxu0 %v5587
      %v7007 = vpop.f32.mrf.mxu0
      %v7008 = vadd.f32 %v5259, %v7007
      %v7009 = vpop.f32.mrf.mxu0
      %v7010 = vadd.f32 %v5259, %v7009
      %7011 = vmatmul.bf16.gmra.mxu0 %v5596
      %v7012 = vpop.f32.mrf.mxu0
      %v7013 = vadd.f32 %v5259, %v7012
      %v7014 = vpop.f32.mrf.mxu0
      %v7015 = vadd.f32 %v5259, %v7014
      %7016 = vmatmul.bf16.gmra.mxu0 %v5605
      %v7017 = vpop.f32.mrf.mxu0
      %v7018 = vadd.f32 %v5259, %v7017
      %v7019 = vpop.f32.mrf.mxu0
      %v7020 = vadd.f32 %v5259, %v7019
      %7021 = vmatmul.bf16.gmra.mxu0 %v5614
      %v7022 = vpop.f32.mrf.mxu0
      %v7023 = vadd.f32 %v5259, %v7022
      %v7024 = vpop.f32.mrf.mxu0
      %v7025 = vadd.f32 %v5259, %v7024
      %7026 = vmatmul.bf16.gmra.mxu0 %v5623
      %v7027 = vpop.f32.mrf.mxu0
      %v7028 = vadd.f32 %v5259, %v7027
      %v7029 = vpop.f32.mrf.mxu0
      %v7030 = vadd.f32 %v5259, %v7029
      %7031 = vdwg.mxu0
      %7032 = vmatpush.bf16.msra.mxu0 %v6185
      %7033 = vmatpush.bf16.msra.mxu0 %v6183
      %7034 = vmatpush.bf16.msra.mxu0 %v6181
      %7035 = vmatpush.bf16.msra.mxu0 %v6179
      %7036 = vmatpush.bf16.msra.mxu0 %v6177
      %7037 = vmatpush.bf16.msra.mxu0 %v6175
      %7038 = vmatpush.bf16.msra.mxu0 %v6173
      %7039 = vmatpush.bf16.msra.mxu0 %v6171
      %7040 = vmatmul.bf16.gmra.mxu0 %v5543
      %v7041 = vpop.f32.mrf.mxu0
      %v7042 = vadd.f32 %v6983, %v7041
      %v7043 = vpop.f32.mrf.mxu0
      %v7044 = vadd.f32 %v6985, %v7043
      %7045 = vmatmul.bf16.gmra.mxu0 %v5552
      %v7046 = vpop.f32.mrf.mxu0
      %v7047 = vadd.f32 %v6988, %v7046
      %v7048 = vpop.f32.mrf.mxu0
      %v7049 = vadd.f32 %v6990, %v7048
      %7050 = vmatmul.bf16.gmra.mxu0 %v5561
      %v7051 = vpop.f32.mrf.mxu0
      %v7052 = vadd.f32 %v6993, %v7051
      %v7053 = vpop.f32.mrf.mxu0
      %v7054 = vadd.f32 %v6995, %v7053
      %7055 = vmatmul.bf16.gmra.mxu0 %v5570
      %v7056 = vpop.f32.mrf.mxu0
      %v7057 = vadd.f32 %v6998, %v7056
      %v7058 = vpop.f32.mrf.mxu0
      %v7059 = vadd.f32 %v7000, %v7058
      %7060 = vmatmul.bf16.gmra.mxu0 %v5579
      %v7061 = vpop.f32.mrf.mxu0
      %v7062 = vadd.f32 %v7003, %v7061
      %v7063 = vpop.f32.mrf.mxu0
      %v7064 = vadd.f32 %v7005, %v7063
      %7065 = vmatmul.bf16.gmra.mxu0 %v5588
      %v7066 = vpop.f32.mrf.mxu0
      %v7067 = vadd.f32 %v7008, %v7066
      %v7068 = vpop.f32.mrf.mxu0
      %v7069 = vadd.f32 %v7010, %v7068
      %7070 = vmatmul.bf16.gmra.mxu0 %v5597
      %v7071 = vpop.f32.mrf.mxu0
      %v7072 = vadd.f32 %v7013, %v7071
      %v7073 = vpop.f32.mrf.mxu0
      %v7074 = vadd.f32 %v7015, %v7073
      %7075 = vmatmul.bf16.gmra.mxu0 %v5606
      %v7076 = vpop.f32.mrf.mxu0
      %v7077 = vadd.f32 %v7018, %v7076
      %v7078 = vpop.f32.mrf.mxu0
      %v7079 = vadd.f32 %v7020, %v7078
      %7080 = vmatmul.bf16.gmra.mxu0 %v5615
      %v7081 = vpop.f32.mrf.mxu0
      %v7082 = vadd.f32 %v7023, %v7081
      %v7083 = vpop.f32.mrf.mxu0
      %v7084 = vadd.f32 %v7025, %v7083
      %7085 = vmatmul.bf16.gmra.mxu0 %v5624
      %v7086 = vpop.f32.mrf.mxu0
      %v7087 = vadd.f32 %v7028, %v7086
      %v7088 = vpop.f32.mrf.mxu0
      %v7089 = vadd.f32 %v7030, %v7088
      %7090 = vdwg.mxu0
      %7091 = vmatpush.bf16.msra.mxu0 %v6201
      %7092 = vmatpush.bf16.msra.mxu0 %v6199
      %7093 = vmatpush.bf16.msra.mxu0 %v6197
      %7094 = vmatpush.bf16.msra.mxu0 %v6195
      %7095 = vmatpush.bf16.msra.mxu0 %v6193
      %7096 = vmatpush.bf16.msra.mxu0 %v6191
      %7097 = vmatpush.bf16.msra.mxu0 %v6189
      %7098 = vmatpush.bf16.msra.mxu0 %v6187
      %7099 = vmatmul.bf16.gmra.mxu0 %v5544
      %v7100 = vpop.f32.mrf.mxu0
      %v7101 = vadd.f32 %v7042, %v7100
      %v7102 = vpop.f32.mrf.mxu0
      %v7103 = vadd.f32 %v7044, %v7102
      %7104 = vmatmul.bf16.gmra.mxu0 %v5553
      %v7105 = vpop.f32.mrf.mxu0
      %v7106 = vadd.f32 %v7047, %v7105
      %v7107 = vpop.f32.mrf.mxu0
      %v7108 = vadd.f32 %v7049, %v7107
      %7109 = vmatmul.bf16.gmra.mxu0 %v5562
      %v7110 = vpop.f32.mrf.mxu0
      %v7111 = vadd.f32 %v7052, %v7110
      %v7112 = vpop.f32.mrf.mxu0
      %v7113 = vadd.f32 %v7054, %v7112
      %7114 = vmatmul.bf16.gmra.mxu0 %v5571
      %v7115 = vpop.f32.mrf.mxu0
      %v7116 = vadd.f32 %v7057, %v7115
      %v7117 = vpop.f32.mrf.mxu0
      %v7118 = vadd.f32 %v7059, %v7117
      %7119 = vmatmul.bf16.gmra.mxu0 %v5580
      %v7120 = vpop.f32.mrf.mxu0
      %v7121 = vadd.f32 %v7062, %v7120
      %v7122 = vpop.f32.mrf.mxu0
      %v7123 = vadd.f32 %v7064, %v7122
      %7124 = vmatmul.bf16.gmra.mxu0 %v5589
      %v7125 = vpop.f32.mrf.mxu0
      %v7126 = vadd.f32 %v7067, %v7125
      %v7127 = vpop.f32.mrf.mxu0
      %v7128 = vadd.f32 %v7069, %v7127
      %7129 = vmatmul.bf16.gmra.mxu0 %v5598
      %v7130 = vpop.f32.mrf.mxu0
      %v7131 = vadd.f32 %v7072, %v7130
      %v7132 = vpop.f32.mrf.mxu0
      %v7133 = vadd.f32 %v7074, %v7132
      %7134 = vmatmul.bf16.gmra.mxu0 %v5607
      %v7135 = vpop.f32.mrf.mxu0
      %v7136 = vadd.f32 %v7077, %v7135
      %v7137 = vpop.f32.mrf.mxu0
      %v7138 = vadd.f32 %v7079, %v7137
      %7139 = vmatmul.bf16.gmra.mxu0 %v5616
      %v7140 = vpop.f32.mrf.mxu0
      %v7141 = vadd.f32 %v7082, %v7140
      %v7142 = vpop.f32.mrf.mxu0
      %v7143 = vadd.f32 %v7084, %v7142
      %7144 = vmatmul.bf16.gmra.mxu0 %v5625
      %v7145 = vpop.f32.mrf.mxu0
      %v7146 = vadd.f32 %v7087, %v7145
      %v7147 = vpop.f32.mrf.mxu0
      %v7148 = vadd.f32 %v7089, %v7147
      %7149 = vdwg.mxu0
      %7150 = vmatpush.bf16.msra.mxu0 %v6217
      %7151 = vmatpush.bf16.msra.mxu0 %v6215
      %7152 = vmatpush.bf16.msra.mxu0 %v6213
      %7153 = vmatpush.bf16.msra.mxu0 %v6211
      %7154 = vmatpush.bf16.msra.mxu0 %v6209
      %7155 = vmatpush.bf16.msra.mxu0 %v6207
      %7156 = vmatpush.bf16.msra.mxu0 %v6205
      %7157 = vmatpush.bf16.msra.mxu0 %v6203
      %7158 = vmatmul.bf16.gmra.mxu0 %v5545
      %v7159 = vpop.f32.mrf.mxu0
      %v7160 = vadd.f32 %v7101, %v7159
      %v7161 = vpop.f32.mrf.mxu0
      %v7162 = vadd.f32 %v7103, %v7161
      %7163 = vmatmul.bf16.gmra.mxu0 %v5554
      %v7164 = vpop.f32.mrf.mxu0
      %v7165 = vadd.f32 %v7106, %v7164
      %v7166 = vpop.f32.mrf.mxu0
      %v7167 = vadd.f32 %v7108, %v7166
      %7168 = vmatmul.bf16.gmra.mxu0 %v5563
      %v7169 = vpop.f32.mrf.mxu0
      %v7170 = vadd.f32 %v7111, %v7169
      %v7171 = vpop.f32.mrf.mxu0
      %v7172 = vadd.f32 %v7113, %v7171
      %7173 = vmatmul.bf16.gmra.mxu0 %v5572
      %v7174 = vpop.f32.mrf.mxu0
      %v7175 = vadd.f32 %v7116, %v7174
      %v7176 = vpop.f32.mrf.mxu0
      %v7177 = vadd.f32 %v7118, %v7176
      %7178 = vmatmul.bf16.gmra.mxu0 %v5581
      %v7179 = vpop.f32.mrf.mxu0
      %v7180 = vadd.f32 %v7121, %v7179
      %v7181 = vpop.f32.mrf.mxu0
      %v7182 = vadd.f32 %v7123, %v7181
      %7183 = vmatmul.bf16.gmra.mxu0 %v5590
      %v7184 = vpop.f32.mrf.mxu0
      %v7185 = vadd.f32 %v7126, %v7184
      %v7186 = vpop.f32.mrf.mxu0
      %v7187 = vadd.f32 %v7128, %v7186
      %7188 = vmatmul.bf16.gmra.mxu0 %v5599
      %v7189 = vpop.f32.mrf.mxu0
      %v7190 = vadd.f32 %v7131, %v7189
      %v7191 = vpop.f32.mrf.mxu0
      %v7192 = vadd.f32 %v7133, %v7191
      %7193 = vmatmul.bf16.gmra.mxu0 %v5608
      %v7194 = vpop.f32.mrf.mxu0
      %v7195 = vadd.f32 %v7136, %v7194
      %v7196 = vpop.f32.mrf.mxu0
      %v7197 = vadd.f32 %v7138, %v7196
      %7198 = vmatmul.bf16.gmra.mxu0 %v5617
      %v7199 = vpop.f32.mrf.mxu0
      %v7200 = vadd.f32 %v7141, %v7199
      %v7201 = vpop.f32.mrf.mxu0
      %v7202 = vadd.f32 %v7143, %v7201
      %7203 = vmatmul.bf16.gmra.mxu0 %v5626
      %v7204 = vpop.f32.mrf.mxu0
      %v7205 = vadd.f32 %v7146, %v7204
      %v7206 = vpop.f32.mrf.mxu0
      %v7207 = vadd.f32 %v7148, %v7206
      %7208 = vdwg.mxu0
      %7209 = vmatpush.bf16.msra.mxu0 %v6233
      %7210 = vmatpush.bf16.msra.mxu0 %v6231
      %7211 = vmatpush.bf16.msra.mxu0 %v6229
      %7212 = vmatpush.bf16.msra.mxu0 %v6227
      %7213 = vmatpush.bf16.msra.mxu0 %v6225
      %7214 = vmatpush.bf16.msra.mxu0 %v6223
      %7215 = vmatpush.bf16.msra.mxu0 %v6221
      %7216 = vmatpush.bf16.msra.mxu0 %v6219
      %7217 = vmatmul.bf16.gmra.mxu0 %v5546
      %v7218 = vpop.f32.mrf.mxu0
      %v7219 = vadd.f32 %v7160, %v7218
      %v7220 = vpop.f32.mrf.mxu0
      %v7221 = vadd.f32 %v7162, %v7220
      %7222 = vmatmul.bf16.gmra.mxu0 %v5555
      %v7223 = vpop.f32.mrf.mxu0
      %v7224 = vadd.f32 %v7165, %v7223
      %v7225 = vpop.f32.mrf.mxu0
      %v7226 = vadd.f32 %v7167, %v7225
      %7227 = vmatmul.bf16.gmra.mxu0 %v5564
      %v7228 = vpop.f32.mrf.mxu0
      %v7229 = vadd.f32 %v7170, %v7228
      %v7230 = vpop.f32.mrf.mxu0
      %v7231 = vadd.f32 %v7172, %v7230
      %7232 = vmatmul.bf16.gmra.mxu0 %v5573
      %v7233 = vpop.f32.mrf.mxu0
      %v7234 = vadd.f32 %v7175, %v7233
      %v7235 = vpop.f32.mrf.mxu0
      %v7236 = vadd.f32 %v7177, %v7235
      %7237 = vmatmul.bf16.gmra.mxu0 %v5582
      %v7238 = vpop.f32.mrf.mxu0
      %v7239 = vadd.f32 %v7180, %v7238
      %v7240 = vpop.f32.mrf.mxu0
      %v7241 = vadd.f32 %v7182, %v7240
      %7242 = vmatmul.bf16.gmra.mxu0 %v5591
      %v7243 = vpop.f32.mrf.mxu0
      %v7244 = vadd.f32 %v7185, %v7243
      %v7245 = vpop.f32.mrf.mxu0
      %v7246 = vadd.f32 %v7187, %v7245
      %7247 = vmatmul.bf16.gmra.mxu0 %v5600
      %v7248 = vpop.f32.mrf.mxu0
      %v7249 = vadd.f32 %v7190, %v7248
      %v7250 = vpop.f32.mrf.mxu0
      %v7251 = vadd.f32 %v7192, %v7250
      %7252 = vmatmul.bf16.gmra.mxu0 %v5609
      %v7253 = vpop.f32.mrf.mxu0
      %v7254 = vadd.f32 %v7195, %v7253
      %v7255 = vpop.f32.mrf.mxu0
      %v7256 = vadd.f32 %v7197, %v7255
      %7257 = vmatmul.bf16.gmra.mxu0 %v5618
      %v7258 = vpop.f32.mrf.mxu0
      %v7259 = vadd.f32 %v7200, %v7258
      %v7260 = vpop.f32.mrf.mxu0
      %v7261 = vadd.f32 %v7202, %v7260
      %7262 = vmatmul.bf16.gmra.mxu0 %v5627
      %v7263 = vpop.f32.mrf.mxu0
      %v7264 = vadd.f32 %v7205, %v7263
      %v7265 = vpop.f32.mrf.mxu0
      %v7266 = vadd.f32 %v7207, %v7265
      %7267 = vdwg.mxu0
      %7268 = vmatpush.bf16.msra.mxu0 %v6249
      %7269 = vmatpush.bf16.msra.mxu0 %v6247
      %7270 = vmatpush.bf16.msra.mxu0 %v6245
      %7271 = vmatpush.bf16.msra.mxu0 %v6243
      %7272 = vmatpush.bf16.msra.mxu0 %v6241
      %7273 = vmatpush.bf16.msra.mxu0 %v6239
      %7274 = vmatpush.bf16.msra.mxu0 %v6237
      %7275 = vmatpush.bf16.msra.mxu0 %v6235
      %7276 = vmatmul.bf16.gmra.mxu0 %v5547
      %v7277 = vpop.f32.mrf.mxu0
      %v7278 = vadd.f32 %v7219, %v7277
      %v7279 = vpop.f32.mrf.mxu0
      %v7280 = vadd.f32 %v7221, %v7279
      %7281 = vmatmul.bf16.gmra.mxu0 %v5556
      %v7282 = vpop.f32.mrf.mxu0
      %v7283 = vadd.f32 %v7224, %v7282
      %v7284 = vpop.f32.mrf.mxu0
      %v7285 = vadd.f32 %v7226, %v7284
      %7286 = vmatmul.bf16.gmra.mxu0 %v5565
      %v7287 = vpop.f32.mrf.mxu0
      %v7288 = vadd.f32 %v7229, %v7287
      %v7289 = vpop.f32.mrf.mxu0
      %v7290 = vadd.f32 %v7231, %v7289
      %7291 = vmatmul.bf16.gmra.mxu0 %v5574
      %v7292 = vpop.f32.mrf.mxu0
      %v7293 = vadd.f32 %v7234, %v7292
      %v7294 = vpop.f32.mrf.mxu0
      %v7295 = vadd.f32 %v7236, %v7294
      %7296 = vmatmul.bf16.gmra.mxu0 %v5583
      %v7297 = vpop.f32.mrf.mxu0
      %v7298 = vadd.f32 %v7239, %v7297
      %v7299 = vpop.f32.mrf.mxu0
      %v7300 = vadd.f32 %v7241, %v7299
      %7301 = vmatmul.bf16.gmra.mxu0 %v5592
      %v7302 = vpop.f32.mrf.mxu0
      %v7303 = vadd.f32 %v7244, %v7302
      %v7304 = vpop.f32.mrf.mxu0
      %v7305 = vadd.f32 %v7246, %v7304
      %7306 = vmatmul.bf16.gmra.mxu0 %v5601
      %v7307 = vpop.f32.mrf.mxu0
      %v7308 = vadd.f32 %v7249, %v7307
      %v7309 = vpop.f32.mrf.mxu0
      %v7310 = vadd.f32 %v7251, %v7309
      %7311 = vmatmul.bf16.gmra.mxu0 %v5610
      %v7312 = vpop.f32.mrf.mxu0
      %v7313 = vadd.f32 %v7254, %v7312
      %v7314 = vpop.f32.mrf.mxu0
      %v7315 = vadd.f32 %v7256, %v7314
      %7316 = vmatmul.bf16.gmra.mxu0 %v5619
      %v7317 = vpop.f32.mrf.mxu0
      %v7318 = vadd.f32 %v7259, %v7317
      %v7319 = vpop.f32.mrf.mxu0
      %v7320 = vadd.f32 %v7261, %v7319
      %7321 = vmatmul.bf16.gmra.mxu0 %v5628
      %v7322 = vpop.f32.mrf.mxu0
      %v7323 = vadd.f32 %v7264, %v7322
      %v7324 = vpop.f32.mrf.mxu0
      %v7325 = vadd.f32 %v7266, %v7324
      %7326 = vdwg.mxu0
      %7327 = vmatpush.bf16.msra.mxu0 %v6265
      %7328 = vmatpush.bf16.msra.mxu0 %v6263
      %7329 = vmatpush.bf16.msra.mxu0 %v6261
      %7330 = vmatpush.bf16.msra.mxu0 %v6259
      %7331 = vmatpush.bf16.msra.mxu0 %v6257
      %7332 = vmatpush.bf16.msra.mxu0 %v6255
      %7333 = vmatpush.bf16.msra.mxu0 %v6253
      %7334 = vmatpush.bf16.msra.mxu0 %v6251
      %7335 = vmatmul.bf16.gmra.mxu0 %v5548
      %v7336 = vpop.f32.mrf.mxu0
      %v7337 = vadd.f32 %v7278, %v7336
      %v7338 = vpop.f32.mrf.mxu0
      %v7339 = vadd.f32 %v7280, %v7338
      %7340 = vmatmul.bf16.gmra.mxu0 %v5557
      %v7341 = vpop.f32.mrf.mxu0
      %v7342 = vadd.f32 %v7283, %v7341
      %v7343 = vpop.f32.mrf.mxu0
      %v7344 = vadd.f32 %v7285, %v7343
      %7345 = vmatmul.bf16.gmra.mxu0 %v5566
      %v7346 = vpop.f32.mrf.mxu0
      %v7347 = vadd.f32 %v7288, %v7346
      %v7348 = vpop.f32.mrf.mxu0
      %v7349 = vadd.f32 %v7290, %v7348
      %7350 = vmatmul.bf16.gmra.mxu0 %v5575
      %v7351 = vpop.f32.mrf.mxu0
      %v7352 = vadd.f32 %v7293, %v7351
      %v7353 = vpop.f32.mrf.mxu0
      %v7354 = vadd.f32 %v7295, %v7353
      %7355 = vmatmul.bf16.gmra.mxu0 %v5584
      %v7356 = vpop.f32.mrf.mxu0
      %v7357 = vadd.f32 %v7298, %v7356
      %v7358 = vpop.f32.mrf.mxu0
      %v7359 = vadd.f32 %v7300, %v7358
      %7360 = vmatmul.bf16.gmra.mxu0 %v5593
      %v7361 = vpop.f32.mrf.mxu0
      %v7362 = vadd.f32 %v7303, %v7361
      %v7363 = vpop.f32.mrf.mxu0
      %v7364 = vadd.f32 %v7305, %v7363
      %7365 = vmatmul.bf16.gmra.mxu0 %v5602
      %v7366 = vpop.f32.mrf.mxu0
      %v7367 = vadd.f32 %v7308, %v7366
      %v7368 = vpop.f32.mrf.mxu0
      %v7369 = vadd.f32 %v7310, %v7368
      %7370 = vmatmul.bf16.gmra.mxu0 %v5611
      %v7371 = vpop.f32.mrf.mxu0
      %v7372 = vadd.f32 %v7313, %v7371
      %v7373 = vpop.f32.mrf.mxu0
      %v7374 = vadd.f32 %v7315, %v7373
      %7375 = vmatmul.bf16.gmra.mxu0 %v5620
      %v7376 = vpop.f32.mrf.mxu0
      %v7377 = vadd.f32 %v7318, %v7376
      %v7378 = vpop.f32.mrf.mxu0
      %v7379 = vadd.f32 %v7320, %v7378
      %7380 = vmatmul.bf16.gmra.mxu0 %v5629
      %v7381 = vpop.f32.mrf.mxu0
      %v7382 = vadd.f32 %v7323, %v7381
      %v7383 = vpop.f32.mrf.mxu0
      %v7384 = vadd.f32 %v7325, %v7383
      %7385 = vdwg.mxu0
      %7386 = vmatpush.bf16.msra.mxu0 %v6281
      %7387 = vmatpush.bf16.msra.mxu0 %v6279
      %7388 = vmatpush.bf16.msra.mxu0 %v6277
      %7389 = vmatpush.bf16.msra.mxu0 %v6275
      %7390 = vmatpush.bf16.msra.mxu0 %v6273
      %7391 = vmatpush.bf16.msra.mxu0 %v6271
      %7392 = vmatpush.bf16.msra.mxu0 %v6269
      %7393 = vmatpush.bf16.msra.mxu0 %v6267
      %7394 = vmatmul.bf16.gmra.mxu0 %v5549
      %v7395 = vpop.f32.mrf.mxu0
      %v7396 = vadd.f32 %v7337, %v7395
      %v7397 = vpop.f32.mrf.mxu0
      %v7398 = vadd.f32 %v7339, %v7397
      %7399 = vmatmul.bf16.gmra.mxu0 %v5558
      %v7400 = vpop.f32.mrf.mxu0
      %v7401 = vadd.f32 %v7342, %v7400
      %v7402 = vpop.f32.mrf.mxu0
      %v7403 = vadd.f32 %v7344, %v7402
      %7404 = vmatmul.bf16.gmra.mxu0 %v5567
      %v7405 = vpop.f32.mrf.mxu0
      %v7406 = vadd.f32 %v7347, %v7405
      %v7407 = vpop.f32.mrf.mxu0
      %v7408 = vadd.f32 %v7349, %v7407
      %7409 = vmatmul.bf16.gmra.mxu0 %v5576
      %v7410 = vpop.f32.mrf.mxu0
      %v7411 = vadd.f32 %v7352, %v7410
      %v7412 = vpop.f32.mrf.mxu0
      %v7413 = vadd.f32 %v7354, %v7412
      %7414 = vmatmul.bf16.gmra.mxu0 %v5585
      %v7415 = vpop.f32.mrf.mxu0
      %v7416 = vadd.f32 %v7357, %v7415
      %v7417 = vpop.f32.mrf.mxu0
      %v7418 = vadd.f32 %v7359, %v7417
      %7419 = vmatmul.bf16.gmra.mxu0 %v5594
      %v7420 = vpop.f32.mrf.mxu0
      %v7421 = vadd.f32 %v7362, %v7420
      %v7422 = vpop.f32.mrf.mxu0
      %v7423 = vadd.f32 %v7364, %v7422
      %7424 = vmatmul.bf16.gmra.mxu0 %v5603
      %v7425 = vpop.f32.mrf.mxu0
      %v7426 = vadd.f32 %v7367, %v7425
      %v7427 = vpop.f32.mrf.mxu0
      %v7428 = vadd.f32 %v7369, %v7427
      %7429 = vmatmul.bf16.gmra.mxu0 %v5612
      %v7430 = vpop.f32.mrf.mxu0
      %v7431 = vadd.f32 %v7372, %v7430
      %v7432 = vpop.f32.mrf.mxu0
      %v7433 = vadd.f32 %v7374, %v7432
      %7434 = vmatmul.bf16.gmra.mxu0 %v5621
      %v7435 = vpop.f32.mrf.mxu0
      %v7436 = vadd.f32 %v7377, %v7435
      %v7437 = vpop.f32.mrf.mxu0
      %v7438 = vadd.f32 %v7379, %v7437
      %7439 = vmatmul.bf16.gmra.mxu0 %v5630
      %v7440 = vpop.f32.mrf.mxu0
      %v7441 = vadd.f32 %v7382, %v7440
      %v7442 = vpop.f32.mrf.mxu0
      %v7443 = vadd.f32 %v7384, %v7442
      %7444 = vdwg.mxu0
      %7445 = vmatpush.bf16.msra.mxu0 %v6297
      %7446 = vmatpush.bf16.msra.mxu0 %v6295
      %7447 = vmatpush.bf16.msra.mxu0 %v6293
      %7448 = vmatpush.bf16.msra.mxu0 %v6291
      %7449 = vmatpush.bf16.msra.mxu0 %v6289
      %7450 = vmatpush.bf16.msra.mxu0 %v6287
      %7451 = vmatpush.bf16.msra.mxu0 %v6285
      %7452 = vmatpush.bf16.msra.mxu0 %v6283
      %7453 = vmatmul.bf16.gmra.mxu0 %v5550
      %v7454 = vpop.f32.mrf.mxu0
      %v7455 = vadd.f32 %v7396, %v7454
      %v7456 = vpop.f32.mrf.mxu0
      %v7457 = vadd.f32 %v7398, %v7456
      %7458 = vmatmul.bf16.gmra.mxu0 %v5559
      %v7459 = vpop.f32.mrf.mxu0
      %v7460 = vadd.f32 %v7401, %v7459
      %v7461 = vpop.f32.mrf.mxu0
      %v7462 = vadd.f32 %v7403, %v7461
      %7463 = vmatmul.bf16.gmra.mxu0 %v5568
      %v7464 = vpop.f32.mrf.mxu0
      %v7465 = vadd.f32 %v7406, %v7464
      %v7466 = vpop.f32.mrf.mxu0
      %v7467 = vadd.f32 %v7408, %v7466
      %7468 = vmatmul.bf16.gmra.mxu0 %v5577
      %v7469 = vpop.f32.mrf.mxu0
      %v7470 = vadd.f32 %v7411, %v7469
      %v7471 = vpop.f32.mrf.mxu0
      %v7472 = vadd.f32 %v7413, %v7471
      %7473 = vmatmul.bf16.gmra.mxu0 %v5586
      %v7474 = vpop.f32.mrf.mxu0
      %v7475 = vadd.f32 %v7416, %v7474
      %v7476 = vpop.f32.mrf.mxu0
      %v7477 = vadd.f32 %v7418, %v7476
      %7478 = vmatmul.bf16.gmra.mxu0 %v5595
      %v7479 = vpop.f32.mrf.mxu0
      %v7480 = vadd.f32 %v7421, %v7479
      %v7481 = vpop.f32.mrf.mxu0
      %v7482 = vadd.f32 %v7423, %v7481
      %7483 = vmatmul.bf16.gmra.mxu0 %v5604
      %v7484 = vpop.f32.mrf.mxu0
      %v7485 = vadd.f32 %v7426, %v7484
      %v7486 = vpop.f32.mrf.mxu0
      %v7487 = vadd.f32 %v7428, %v7486
      %7488 = vmatmul.bf16.gmra.mxu0 %v5613
      %v7489 = vpop.f32.mrf.mxu0
      %v7490 = vadd.f32 %v7431, %v7489
      %v7491 = vpop.f32.mrf.mxu0
      %v7492 = vadd.f32 %v7433, %v7491
      %7493 = vmatmul.bf16.gmra.mxu0 %v5622
      %v7494 = vpop.f32.mrf.mxu0
      %v7495 = vadd.f32 %v7436, %v7494
      %v7496 = vpop.f32.mrf.mxu0
      %v7497 = vadd.f32 %v7438, %v7496
      %7498 = vmatmul.bf16.gmra.mxu0 %v5631
      %v7499 = vpop.f32.mrf.mxu0
      %v7500 = vadd.f32 %v7441, %v7499
      %v7501 = vpop.f32.mrf.mxu0
      %v7502 = vadd.f32 %v7443, %v7501
      %7503 = vdwg.mxu0
      %v7504 = vmax.f32 %v6924, 0.0
      %v7505 = vmax.f32 %v7455, 0.0
      %v7506 = vmax.f32 %v6926, 0.0
      %v7507 = vmax.f32 %v7457, 0.0
      %v7508 = vmax.f32 %v6929, 0.0
      %v7509 = vmax.f32 %v7460, 0.0
      %v7510 = vmax.f32 %v6931, 0.0
      %v7511 = vmax.f32 %v7462, 0.0
      %v7512 = vmax.f32 %v6934, 0.0
      %v7513 = vmax.f32 %v7465, 0.0
      %v7514 = vmax.f32 %v6936, 0.0
      %v7515 = vmax.f32 %v7467, 0.0
      %v7516 = vmax.f32 %v6939, 0.0
      %v7517 = vmax.f32 %v7470, 0.0
      %v7518 = vmax.f32 %v6941, 0.0
      %v7519 = vmax.f32 %v7472, 0.0
      %v7520 = vmax.f32 %v6944, 0.0
      %v7521 = vmax.f32 %v7475, 0.0
      %v7522 = vmax.f32 %v6946, 0.0
      %v7523 = vmax.f32 %v7477, 0.0
      %v7524 = vmax.f32 %v6949, 0.0
      %v7525 = vmax.f32 %v7480, 0.0
      %v7526 = vmax.f32 %v6951, 0.0
      %v7527 = vmax.f32 %v7482, 0.0
      %v7528 = vmax.f32 %v6954, 0.0
      %v7529 = vmax.f32 %v7485, 0.0
      %v7530 = vmax.f32 %v6956, 0.0
      %v7531 = vmax.f32 %v7487, 0.0
      %v7532 = vmax.f32 %v6959, 0.0
      %v7533 = vmax.f32 %v7490, 0.0
      %v7534 = vmax.f32 %v6961, 0.0
      %v7535 = vmax.f32 %v7492, 0.0
      %v7536 = vmax.f32 %v6964, 0.0
      %v7537 = vmax.f32 %v7495, 0.0
      %v7538 = vmax.f32 %v6966, 0.0
      %v7539 = vmax.f32 %v7497, 0.0
      %v7540 = vmax.f32 %v6969, 0.0
      %v7541 = vmax.f32 %v7500, 0.0
      %v7542 = vmax.f32 %v6971, 0.0
      %v7543 = vmax.f32 %v7502, 0.0
      %v7544 = vmul.f32 %v7504, %v1080
      %v7545 = vmul.f32 %v7505, %v1080
      %v7546 = vmul.f32 %v7506, %v1081
      %v7547 = vmul.f32 %v7507, %v1081
      %v7548 = vmul.f32 %v7508, %v1082
      %v7549 = vmul.f32 %v7509, %v1082
      %v7550 = vmul.f32 %v7510, %v1083
      %v7551 = vmul.f32 %v7511, %v1083
      %v7552 = vmul.f32 %v7512, %v1084
      %v7553 = vmul.f32 %v7513, %v1084
      %v7554 = vmul.f32 %v7514, %v1085
      %v7555 = vmul.f32 %v7515, %v1085
      %v7556 = vmul.f32 %v7516, %v1086
      %v7557 = vmul.f32 %v7517, %v1086
      %v7558 = vmul.f32 %v7518, %v1087
      %v7559 = vmul.f32 %v7519, %v1087
      %v7560 = vmul.f32 %v7520, %v1088
      %v7561 = vmul.f32 %v7521, %v1088
      %v7562 = vmul.f32 %v7522, %v1089
      %v7563 = vmul.f32 %v7523, %v1089
      %v7564 = vmul.f32 %v7524, %v1090
      %v7565 = vmul.f32 %v7525, %v1090
      %v7566 = vmul.f32 %v7526, %v1091
      %v7567 = vmul.f32 %v7527, %v1091
      %v7568 = vmul.f32 %v7528, %v1092
      %v7569 = vmul.f32 %v7529, %v1092
      %v7570 = vmul.f32 %v7530, %v1093
      %v7571 = vmul.f32 %v7531, %v1093
      %v7572 = vmul.f32 %v7532, %v1094
      %v7573 = vmul.f32 %v7533, %v1094
      %v7574 = vmul.f32 %v7534, %v1095
      %v7575 = vmul.f32 %v7535, %v1095
      %v7576 = vmul.f32 %v7536, %v1096
      %v7577 = vmul.f32 %v7537, %v1096
      %v7578 = vmul.f32 %v7538, %v1097
      %v7579 = vmul.f32 %v7539, %v1097
      %v7580 = vmul.f32 %v7540, %v1098
      %v7581 = vmul.f32 %v7541, %v1098
      %v7582 = vmul.f32 %v7542, %v1099
      %v7583 = vmul.f32 %v7543, %v1099
      %v7584 = vadd.f32 %v7544, %v7546
      %v7585 = vadd.f32 %v7584, %v7548
      %v7586 = vadd.f32 %v7585, %v7550
      %v7587 = vadd.f32 %v7586, %v7552
      %v7588 = vadd.f32 %v7587, %v7554
      %v7589 = vadd.f32 %v7588, %v7556
      %v7590 = vadd.f32 %v7589, %v7558
      %v7591 = vadd.f32 %v7590, %v7560
      %v7592 = vadd.f32 %v7591, %v7562
      %v7593 = vrot.slane %v7592, 4
      %v7594 = vadd.f32 %v7592, %v7593
      %v7595 = vrot.slane %v7594, 2
      %v7596 = vadd.f32 %v7594, %v7595
      %v7597 = vrot.slane %v7596, 1
      %v7598 = vadd.f32 %v7596, %v7597
      %v7599 = vadd.f32 %v7545, %v7547
      %v7600 = vadd.f32 %v7599, %v7549
      %v7601 = vadd.f32 %v7600, %v7551
      %v7602 = vadd.f32 %v7601, %v7553
      %v7603 = vadd.f32 %v7602, %v7555
      %v7604 = vadd.f32 %v7603, %v7557
      %v7605 = vadd.f32 %v7604, %v7559
      %v7606 = vadd.f32 %v7605, %v7561
      %v7607 = vadd.f32 %v7606, %v7563
      %v7608 = vrot.slane %v7607, 4
      %v7609 = vadd.f32 %v7607, %v7608
      %v7610 = vrot.slane %v7609, 2
      %v7611 = vadd.f32 %v7609, %v7610
      %v7612 = vrot.slane %v7611, 1
      %v7613 = vadd.f32 %v7611, %v7612
      %v7614 = vadd.f32 %v7564, %v7566
      %v7615 = vadd.f32 %v7614, %v7568
      %v7616 = vadd.f32 %v7615, %v7570
      %v7617 = vadd.f32 %v7616, %v7572
      %v7618 = vadd.f32 %v7617, %v7574
      %v7619 = vadd.f32 %v7618, %v7576
      %v7620 = vadd.f32 %v7619, %v7578
      %v7621 = vadd.f32 %v7620, %v7580
      %v7622 = vadd.f32 %v7621, %v7582
      %v7623 = vrot.slane %v7622, 4
      %v7624 = vadd.f32 %v7622, %v7623
      %v7625 = vrot.slane %v7624, 2
      %v7626 = vadd.f32 %v7624, %v7625
      %v7627 = vrot.slane %v7626, 1
      %v7628 = vadd.f32 %v7626, %v7627
      %v7629 = vadd.f32 %v7565, %v7567
      %v7630 = vadd.f32 %v7629, %v7569
      %v7631 = vadd.f32 %v7630, %v7571
      %v7632 = vadd.f32 %v7631, %v7573
      %v7633 = vadd.f32 %v7632, %v7575
      %v7634 = vadd.f32 %v7633, %v7577
      %v7635 = vadd.f32 %v7634, %v7579
      %v7636 = vadd.f32 %v7635, %v7581
      %v7637 = vadd.f32 %v7636, %v7583
      %v7638 = vrot.slane %v7637, 4
      %v7639 = vadd.f32 %v7637, %v7638
      %v7640 = vrot.slane %v7639, 2
      %v7641 = vadd.f32 %v7639, %v7640
      %v7642 = vrot.slane %v7641, 1
      %v7643 = vadd.f32 %v7641, %v7642
      %vm7644 = vcmask 1040384
      %v7645 = vsel %vm7644, %v7598, %v7628
      %v7646 = vsel %vm7644, %v7613, %v7643
      %v7647 = vld [vmem:[%s7] sm:$0x3]
      %v7649 = vperm.slane %v7647, 0
      %v7650 = vperm.slane %v7647, 1
      %v7653 = vmul.f32 %v7645, %v7649
      %v7654 = vmul.f32 %v7646, %v7650
      %vm7655 = vcmask 1041408
      %v7656 = vsel %vm7655, %v7653, 0.0
      %v7657 = vsel %vm7655, %v7654, 0.0
      %v7658 = vadd.f32 %v7656, %v7657
      %7659 = vadd.xlane.f32.xlu0 %v7658
      %v7660 = vpop.xlane.xlu0 %7659
      %v7661 = vmul.f32 %v7660, 0.015625
      %v7662 = vld [vmem:[#allocation7] sm:$0x1]
      %v7664 = vperm.slane %v7662, 0
      %v7666 = vadd.f32 %v7661, %v7664
      %vm7667 = vcmask 1024
      %7668 = vst.msk [vmem:[%s337] sm:$0x3] %vm7667, %v7666
      %p7669 = scmp.lt.s32.totalorder %s22, 1
      %s7670 = scalar_select %p7669, %s22, 1
      %s7671 = smul.addr %s7670, 2
      %s7672 = scalar_lea.vmem %s9, %s7671
      // Predicated region
      $region57: #{_lambda_.1} parent=55 // pred_check
        %p7673 = pneg %p234
      $region58: #{_lambda_.1} parent=55 // pred_check_branch
        %7675 = sbr.rel (%p7673) target = $region60
      $region59: #{_lambda_.1} parent=55 // pred_region
        _
      $region60: #{_lambda_.1} parent=55 // pred_fallthru
        _
    $region56: #{_lambda_.1} parent=5 // pred_fallthru
      _
    %p7676 = scmp.le.s32.totalorder 2, %s17
    // Predicated region
    $region61: #{_lambda_.1} parent=5 // pred_check
      %p7677 = pneg %p7676
    $region62: #{_lambda_.1} parent=5 // pred_check_branch
      %7679 = sbr.rel (%p7677) target = $region64
    $region63: #{_lambda_.1} parent=5 // pred_region
      %s7680 = ssub.s32 %s17, 2
      // Predicated region
      $region65: #{_lambda_.1} parent=63 // pred_check
        %p7681 = pneg %p240
      $region66: #{_lambda_.1} parent=63 // pred_check_branch
        %7683 = sbr.rel (%p7681) target = $region68
      $region67: #{_lambda_.1} parent=63 // pred_region
        %p7684 = scmp.lt.s32.totalorder %s23, 1
        %s7685 = scalar_select %p7684, %s23, 1
        %s7686 = smul.addr %s7685, 2
        %s7687 = scalar_lea.vmem %s9, %s7686
      $region68: #{_lambda_.1} parent=63 // pred_fallthru
        _
    $region64: #{_lambda_.1} parent=5 // pred_fallthru
      _
  $region6: #{_lambda_.1} parent=0 // loop_footer
    %s21 = sadd.s32 1, %s17
  $region7: #{_lambda_.1} parent=0 // loop_footer_branch
    %16 = sbr.rel target = $region3
  $region8: #{_lambda_.1} parent=0 // loop_exit
    _

</llo_original>
